<compile_context>
chip_gen: v5e
topology: v5e:2x2
jax: 0.10.0
libtpu: 0.0.40
codegen_flags: <defaults>
</compile_context>

<pallas_src>
import jax
import jax.numpy as jnp
from jax.experimental import pallas as pl
from jax.experimental.pallas import tpu as pltpu

# ----------------------------------------------------------------------------
# Static LeNet geometry (CIFAR-style 3x32x32 input so the 16*5*5 flatten holds).
# ----------------------------------------------------------------------------
H = W = 32                   # input spatial size
K = 5                        # conv kernel size
C0, C1, C2 = 3, 6, 16        # channels: input -> conv1 -> conv2
H1 = H - K + 1               # 28  conv1 output spatial
P1 = H1 // 2                 # 14  pool1 output spatial
H2 = P1 - K + 1              # 10  conv2 output spatial
P2 = H2 // 2                 # 5   pool2 output spatial
S0 = H * W                   # 1024 flattened input columns (col = 32*h + w)

# Column strides of the flattened spatial axis at each stage.  We never
# compact after pooling; valid values simply live on a sparser column grid.
SH0, SW0 = W, 1              # conv1 domain:  col = 32*h + 1*w
SH1, SW1 = 2 * SH0, 2 * SW0  # after pool1:   col = 64*h + 2*w
SH2, SW2 = 2 * SH1, 2 * SW1  # after pool2:   col = 128*h + 4*w

W_ACC1 = SH0 * (H1 - 1) + SW0 * (H1 - 1) + 1   # 892  conv1 accumulator width
W_Q1   = SH1 * (P1 - 1) + SW1 * (P1 - 1) + 1   # 859  pool1 result width
W_ACC2 = SH1 * (H2 - 1) + SW1 * (H2 - 1) + 1   # 595  conv2 accumulator width
W_Q2   = SH2 * (P2 - 1) + SW2 * (P2 - 1) + 1   # 529  pool2 result width
CHUNK  = SW2 * (P2 - 1) + 1                    # 17   per-row slice for compaction


# ----------------------------------------------------------------------------
# Fused kernel: one grid step == one image.
# ----------------------------------------------------------------------------
def lenet_kernel(x_ref, w1_ref, b1_ref, w2_ref, b2_ref, o_ref):
    f32 = jnp.float32
    x = x_ref[0]                                        # (3, 1024), col = 32*h + w

    # --- conv1 + bias + ReLU: 25 tap matmuls (6,3)x(3,892) on the MXU -------
    acc1 = jnp.zeros((C1, W_ACC1), f32)
    for kh in range(K):
        for kw in range(K):
            off = SH0 * kh + SW0 * kw
            acc1 = acc1 + jnp.dot(w1_ref[K * kh + kw], x[:, off:off + W_ACC1],
                                  preferred_element_type=f32)
    r1 = jnp.maximum(acc1 + b1_ref[...], 0.0)           # valid at col 32*ho + wo

    # --- max-pool 2x2 stride 2 (shifted maxima, no strided indexing) --------
    t1 = jnp.maximum(r1[:, :W_ACC1 - SW0], r1[:, SW0:W_ACC1])   # pair along w
    q1 = jnp.maximum(t1[:, :W_Q1], t1[:, SH0:SH0 + W_Q1])       # pair along h
    # q1: (6, 859), valid at col 64*po + 2*pw

    # --- conv2 + bias + ReLU: 25 tap matmuls (16,6)x(6,595) -----------------
    acc2 = jnp.zeros((C2, W_ACC2), f32)
    for kh in range(K):
        for kw in range(K):
            off = SH1 * kh + SW1 * kw
            acc2 = acc2 + jnp.dot(w2_ref[K * kh + kw], q1[:, off:off + W_ACC2],
                                  preferred_element_type=f32)
    r2 = jnp.maximum(acc2 + b2_ref[...], 0.0)           # valid at col 64*h2 + 2*w2

    # --- max-pool 2x2 stride 2 ----------------------------------------------
    t2 = jnp.maximum(r2[:, :W_ACC2 - SW1], r2[:, SW1:W_ACC2])
    q2 = jnp.maximum(t2[:, :W_Q2], t2[:, SH1:SH1 + W_Q2])
    # q2: (16, 529), valid at col 128*po + 4*pw

    # --- compact the 5x5 valid columns -> (16, 25) in NCHW flatten order ----
    rows = jax.lax.broadcasted_iota(jnp.int32, (CHUNK, P2 * P2), 0)
    cols = jax.lax.broadcasted_iota(jnp.int32, (CHUNK, P2 * P2), 1)
    out = jnp.zeros((C2, P2 * P2), f32)
    for p in range(P2):
        # one-hot selector: chunk row 4*pw  ->  output column 5*p + pw
        sel = (rows == SW2 * (cols - P2 * p)).astype(f32)        # (17, 25)
        out = out + jnp.dot(q2[:, SH2 * p:SH2 * p + CHUNK], sel,
                            preferred_element_type=f32)
    o_ref[0] = out.astype(o_ref.dtype)                  # (16, 25) == (16, 5, 5)


# ----------------------------------------------------------------------------
# Wrapper: single pallas_call over the batch.
# ----------------------------------------------------------------------------
def _lenet_forward_impl(params, x_nchw):
    n = x_nchw.shape[0]
    x = x_nchw.reshape(n, C0, S0)                       # free reshape, keeps NCHW

    # Tap-major weights: w_t[5*kh + kw, co, ci] = w[co, ci, kh, kw]
    w1t = jnp.transpose(params["w1"], (2, 3, 0, 1)).reshape(K * K, C1, C0)
    w2t = jnp.transpose(params["w2"], (2, 3, 0, 1)).reshape(K * K, C2, C1)
    b1c = params["b1"].reshape(C1, 1)
    b2c = params["b2"].reshape(C2, 1)

    out = pl.pallas_call(
        lenet_kernel,
        out_shape=jax.ShapeDtypeStruct((n, C2, P2 * P2), jnp.float32),
        grid=(n,),
        in_specs=[
            pl.BlockSpec((1, C0, S0), lambda i: (i, 0, 0)),
            pl.BlockSpec((K * K, C1, C0), lambda i: (0, 0, 0)),
            pl.BlockSpec((C1, 1), lambda i: (0, 0)),
            pl.BlockSpec((K * K, C2, C1), lambda i: (0, 0, 0)),
            pl.BlockSpec((C2, 1), lambda i: (0, 0)),
        ],
        out_specs=pl.BlockSpec((1, C2, P2 * P2), lambda i: (i, 0, 0)),
        compiler_params=pltpu.CompilerParams(
            dimension_semantics=("parallel",)),         # batch axis -> both TCs on v7x
    )(x, w1t, b1c, w2t, b2c)

    return out.reshape(n, C2 * P2 * P2)                 # (N, 400), NCHW flatten order


lenet_forward = jax.jit(_lenet_forward_impl)


# ----------------------------------------------------------------------------
# Deterministic parameter init (PyTorch-default-style uniform(-1/sqrt(fan_in))).
# Weights kept in PyTorch OIHW layout; biases are 1-D.
# ----------------------------------------------------------------------------
def init_params(key):
    def conv_init(kw_key, kb_key, cin, cout, k):
        fan_in = cin * k * k
        bound = 1.0 / (fan_in ** 0.5)
        w = jax.random.uniform(kw_key, (cout, cin, k, k), jnp.float32, -bound, bound)
        b = jax.random.uniform(kb_key, (cout,), jnp.float32, -bound, bound)
        return w, b

    k1, k2, k3, k4 = jax.random.split(key, 4)
    w1, b1 = conv_init(k1, k2, C0, C1, K)
    w2, b2 = conv_init(k3, k4, C1, C2, K)
    return {"w1": w1, "b1": b1, "w2": w2, "b2": b2}


# ----------------------------------------------------------------------------
# Pure-JAX reference (correctness check only).
# ----------------------------------------------------------------------------
def lenet_ref(params, x_nchw):
    def block(y, w, b):
        y = jax.lax.conv_general_dilated(
            y, w, window_strides=(1, 1), padding="VALID",
            dimension_numbers=("NCHW", "OIHW", "NCHW"))
        y = jax.nn.relu(y + b[None, :, None, None])
        return jax.lax.reduce_window(y, -jnp.inf, jax.lax.max,
                                     (1, 1, 2, 2), (1, 1, 2, 2), "VALID")

    y = block(x_nchw, params["w1"], params["b1"])
    y = block(y, params["w2"], params["b2"])
    return y.reshape(y.shape[0], -1)


# ----------------------------------------------------------------------------
if __name__ == "__main__":
    key = jax.random.PRNGKey(0)
    pkey, xkey = jax.random.split(key)
    params = init_params(pkey)

    # LeNet's 16*5*5 flatten implies 3-channel 32x32 input; batch = 2.
    x = jax.random.normal(xkey, (2, C0, H, W), jnp.float32)

    out = jax.block_until_ready(lenet_forward(params, x))
    assert out.shape == (2, C2 * P2 * P2), out.shape

    ref = lenet_ref(params, x)
    if not jnp.allclose(out, ref, rtol=2e-3, atol=2e-3):
        max_err = float(jnp.max(jnp.abs(out - ref)))
        raise AssertionError(f"Pallas LeNet mismatch vs reference, max|err|={max_err}")

    print("KERNEL_OK")
</pallas_src>

<mosaic_0001>
module attributes {stable_mosaic.version = 11 : i64} {
  func.func @lenet_kernel(%arg0: i32, %arg1: memref<1x3x1024xf32, #tpu.memory_space<vmem>>, %arg2: memref<25x6x3xf32, #tpu.memory_space<vmem>>, %arg3: memref<6x1xf32, #tpu.memory_space<vmem>>, %arg4: memref<25x16x6xf32, #tpu.memory_space<vmem>>, %arg5: memref<16x1xf32, #tpu.memory_space<vmem>>, %arg6: memref<1x16x25xf32, #tpu.memory_space<vmem>>) attributes {dimension_semantics = [#tpu.dimension_semantics<parallel>], iteration_bounds = array<i64: 2>, scalar_prefetch = 0 : i64, scratch_operands = 0 : i64, tpu.core_type = #tpu.core_type<tc>, window_params = [{transform_indices = @transform_0, window_bounds = array<i64: 1, 3, 1024>}, {pipeline_mode = #tpu.pipeline_mode<synchronous>, transform_indices = @transform_1, window_bounds = array<i64: 25, 6, 3>}, {pipeline_mode = #tpu.pipeline_mode<synchronous>, transform_indices = @transform_2, window_bounds = array<i64: 6, 1>}, {pipeline_mode = #tpu.pipeline_mode<synchronous>, transform_indices = @transform_3, window_bounds = array<i64: 25, 16, 6>}, {pipeline_mode = #tpu.pipeline_mode<synchronous>, transform_indices = @transform_4, window_bounds = array<i64: 16, 1>}, {transform_indices = @transform_5, window_bounds = array<i64: 1, 16, 25>}]} {
    %c0 = arith.constant 0 : index
    %c0_0 = arith.constant 0 : index
    %c0_1 = arith.constant 0 : index
    %0 = vector.load %arg1[%c0, %c0_0, %c0_1] : memref<1x3x1024xf32, #tpu.memory_space<vmem>>, vector<1x3x1024xf32>
    %1 = vector.shape_cast %0 : vector<1x3x1024xf32> to vector<3x1024xf32>
    %cst = arith.constant 0.000000e+00 : f32
    %2 = vector.broadcast %cst : f32 to vector<6x892xf32>
    %c0_2 = arith.constant 0 : index
    %c0_3 = arith.constant 0 : index
    %c0_4 = arith.constant 0 : index
    %3 = vector.load %arg2[%c0_2, %c0_3, %c0_4] : memref<25x6x3xf32, #tpu.memory_space<vmem>>, vector<1x6x3xf32>
    %4 = vector.shape_cast %3 : vector<1x6x3xf32> to vector<6x3xf32>
    %5 = vector.extract_strided_slice %1 {offsets = [0, 0], sizes = [3, 892], strides = [1, 1]} : vector<3x1024xf32> to vector<3x892xf32>
    %cst_5 = arith.constant dense<0.000000e+00> : vector<6x892xf32>
    %6 = tpu.matmul %4, %5, %cst_5 {dimension_numbers = #tpu.dot_dimension_numbers<[1], [0], [0], [1], [0, 0, 1, 1], [], []>} : vector<6x3xf32>, vector<3x892xf32>, vector<6x892xf32> -> vector<6x892xf32>
    %7 = arith.addf %2, %6 : vector<6x892xf32>
    %c1 = arith.constant 1 : index
    %c0_6 = arith.constant 0 : index
    %c0_7 = arith.constant 0 : index
    %8 = vector.load %arg2[%c1, %c0_6, %c0_7] : memref<25x6x3xf32, #tpu.memory_space<vmem>>, vector<1x6x3xf32>
    %9 = vector.shape_cast %8 : vector<1x6x3xf32> to vector<6x3xf32>
    %10 = vector.extract_strided_slice %1 {offsets = [0, 1], sizes = [3, 892], strides = [1, 1]} : vector<3x1024xf32> to vector<3x892xf32>
    %cst_8 = arith.constant dense<0.000000e+00> : vector<6x892xf32>
    %11 = tpu.matmul %9, %10, %cst_8 {dimension_numbers = #tpu.dot_dimension_numbers<[1], [0], [0], [1], [0, 0, 1, 1], [], []>} : vector<6x3xf32>, vector<3x892xf32>, vector<6x892xf32> -> vector<6x892xf32>
    %12 = arith.addf %7, %11 : vector<6x892xf32>
    %c2 = arith.constant 2 : index
    %c0_9 = arith.constant 0 : index
    %c0_10 = arith.constant 0 : index
    %13 = vector.load %arg2[%c2, %c0_9, %c0_10] : memref<25x6x3xf32, #tpu.memory_space<vmem>>, vector<1x6x3xf32>
    %14 = vector.shape_cast %13 : vector<1x6x3xf32> to vector<6x3xf32>
    %15 = vector.extract_strided_slice %1 {offsets = [0, 2], sizes = [3, 892], strides = [1, 1]} : vector<3x1024xf32> to vector<3x892xf32>
    %cst_11 = arith.constant dense<0.000000e+00> : vector<6x892xf32>
    %16 = tpu.matmul %14, %15, %cst_11 {dimension_numbers = #tpu.dot_dimension_numbers<[1], [0], [0], [1], [0, 0, 1, 1], [], []>} : vector<6x3xf32>, vector<3x892xf32>, vector<6x892xf32> -> vector<6x892xf32>
    %17 = arith.addf %12, %16 : vector<6x892xf32>
    %c3 = arith.constant 3 : index
    %c0_12 = arith.constant 0 : index
    %c0_13 = arith.constant 0 : index
    %18 = vector.load %arg2[%c3, %c0_12, %c0_13] : memref<25x6x3xf32, #tpu.memory_space<vmem>>, vector<1x6x3xf32>
    %19 = vector.shape_cast %18 : vector<1x6x3xf32> to vector<6x3xf32>
    %20 = vector.extract_strided_slice %1 {offsets = [0, 3], sizes = [3, 892], strides = [1, 1]} : vector<3x1024xf32> to vector<3x892xf32>
    %cst_14 = arith.constant dense<0.000000e+00> : vector<6x892xf32>
    %21 = tpu.matmul %19, %20, %cst_14 {dimension_numbers = #tpu.dot_dimension_numbers<[1], [0], [0], [1], [0, 0, 1, 1], [], []>} : vector<6x3xf32>, vector<3x892xf32>, vector<6x892xf32> -> vector<6x892xf32>
    %22 = arith.addf %17, %21 : vector<6x892xf32>
    %c4 = arith.constant 4 : index
    %c0_15 = arith.constant 0 : index
    %c0_16 = arith.constant 0 : index
    %23 = vector.load %arg2[%c4, %c0_15, %c0_16] : memref<25x6x3xf32, #tpu.memory_space<vmem>>, vector<1x6x3xf32>
    %24 = vector.shape_cast %23 : vector<1x6x3xf32> to vector<6x3xf32>
    %25 = vector.extract_strided_slice %1 {offsets = [0, 4], sizes = [3, 892], strides = [1, 1]} : vector<3x1024xf32> to vector<3x892xf32>
    %cst_17 = arith.constant dense<0.000000e+00> : vector<6x892xf32>
    %26 = tpu.matmul %24, %25, %cst_17 {dimension_numbers = #tpu.dot_dimension_numbers<[1], [0], [0], [1], [0, 0, 1, 1], [], []>} : vector<6x3xf32>, vector<3x892xf32>, vector<6x892xf32> -> vector<6x892xf32>
    %27 = arith.addf %22, %26 : vector<6x892xf32>
    %c5 = arith.constant 5 : index
    %c0_18 = arith.constant 0 : index
    %c0_19 = arith.constant 0 : index
    %28 = vector.load %arg2[%c5, %c0_18, %c0_19] : memref<25x6x3xf32, #tpu.memory_space<vmem>>, vector<1x6x3xf32>
    %29 = vector.shape_cast %28 : vector<1x6x3xf32> to vector<6x3xf32>
    %30 = vector.extract_strided_slice %1 {offsets = [0, 32], sizes = [3, 892], strides = [1, 1]} : vector<3x1024xf32> to vector<3x892xf32>
    %cst_20 = arith.constant dense<0.000000e+00> : vector<6x892xf32>
    %31 = tpu.matmul %29, %30, %cst_20 {dimension_numbers = #tpu.dot_dimension_numbers<[1], [0], [0], [1], [0, 0, 1, 1], [], []>} : vector<6x3xf32>, vector<3x892xf32>, vector<6x892xf32> -> vector<6x892xf32>
    %32 = arith.addf %27, %31 : vector<6x892xf32>
    %c6 = arith.constant 6 : index
    %c0_21 = arith.constant 0 : index
    %c0_22 = arith.constant 0 : index
    %33 = vector.load %arg2[%c6, %c0_21, %c0_22] : memref<25x6x3xf32, #tpu.memory_space<vmem>>, vector<1x6x3xf32>
    %34 = vector.shape_cast %33 : vector<1x6x3xf32> to vector<6x3xf32>
    %35 = vector.extract_strided_slice %1 {offsets = [0, 33], sizes = [3, 892], strides = [1, 1]} : vector<3x1024xf32> to vector<3x892xf32>
    %cst_23 = arith.constant dense<0.000000e+00> : vector<6x892xf32>
    %36 = tpu.matmul %34, %35, %cst_23 {dimension_numbers = #tpu.dot_dimension_numbers<[1], [0], [0], [1], [0, 0, 1, 1], [], []>} : vector<6x3xf32>, vector<3x892xf32>, vector<6x892xf32> -> vector<6x892xf32>
    %37 = arith.addf %32, %36 : vector<6x892xf32>
    %c7 = arith.constant 7 : index
    %c0_24 = arith.constant 0 : index
    %c0_25 = arith.constant 0 : index
    %38 = vector.load %arg2[%c7, %c0_24, %c0_25] : memref<25x6x3xf32, #tpu.memory_space<vmem>>, vector<1x6x3xf32>
    %39 = vector.shape_cast %38 : vector<1x6x3xf32> to vector<6x3xf32>
    %40 = vector.extract_strided_slice %1 {offsets = [0, 34], sizes = [3, 892], strides = [1, 1]} : vector<3x1024xf32> to vector<3x892xf32>
    %cst_26 = arith.constant dense<0.000000e+00> : vector<6x892xf32>
    %41 = tpu.matmul %39, %40, %cst_26 {dimension_numbers = #tpu.dot_dimension_numbers<[1], [0], [0], [1], [0, 0, 1, 1], [], []>} : vector<6x3xf32>, vector<3x892xf32>, vector<6x892xf32> -> vector<6x892xf32>
    %42 = arith.addf %37, %41 : vector<6x892xf32>
    %c8 = arith.constant 8 : index
    %c0_27 = arith.constant 0 : index
    %c0_28 = arith.constant 0 : index
    %43 = vector.load %arg2[%c8, %c0_27, %c0_28] : memref<25x6x3xf32, #tpu.memory_space<vmem>>, vector<1x6x3xf32>
    %44 = vector.shape_cast %43 : vector<1x6x3xf32> to vector<6x3xf32>
    %45 = vector.extract_strided_slice %1 {offsets = [0, 35], sizes = [3, 892], strides = [1, 1]} : vector<3x1024xf32> to vector<3x892xf32>
    %cst_29 = arith.constant dense<0.000000e+00> : vector<6x892xf32>
    %46 = tpu.matmul %44, %45, %cst_29 {dimension_numbers = #tpu.dot_dimension_numbers<[1], [0], [0], [1], [0, 0, 1, 1], [], []>} : vector<6x3xf32>, vector<3x892xf32>, vector<6x892xf32> -> vector<6x892xf32>
    %47 = arith.addf %42, %46 : vector<6x892xf32>
    %c9 = arith.constant 9 : index
    %c0_30 = arith.constant 0 : index
    %c0_31 = arith.constant 0 : index
    %48 = vector.load %arg2[%c9, %c0_30, %c0_31] : memref<25x6x3xf32, #tpu.memory_space<vmem>>, vector<1x6x3xf32>
    %49 = vector.shape_cast %48 : vector<1x6x3xf32> to vector<6x3xf32>
    %50 = vector.extract_strided_slice %1 {offsets = [0, 36], sizes = [3, 892], strides = [1, 1]} : vector<3x1024xf32> to vector<3x892xf32>
    %cst_32 = arith.constant dense<0.000000e+00> : vector<6x892xf32>
    %51 = tpu.matmul %49, %50, %cst_32 {dimension_numbers = #tpu.dot_dimension_numbers<[1], [0], [0], [1], [0, 0, 1, 1], [], []>} : vector<6x3xf32>, vector<3x892xf32>, vector<6x892xf32> -> vector<6x892xf32>
    %52 = arith.addf %47, %51 : vector<6x892xf32>
    %c10 = arith.constant 10 : index
    %c0_33 = arith.constant 0 : index
    %c0_34 = arith.constant 0 : index
    %53 = vector.load %arg2[%c10, %c0_33, %c0_34] : memref<25x6x3xf32, #tpu.memory_space<vmem>>, vector<1x6x3xf32>
    %54 = vector.shape_cast %53 : vector<1x6x3xf32> to vector<6x3xf32>
    %55 = vector.extract_strided_slice %1 {offsets = [0, 64], sizes = [3, 892], strides = [1, 1]} : vector<3x1024xf32> to vector<3x892xf32>
    %cst_35 = arith.constant dense<0.000000e+00> : vector<6x892xf32>
    %56 = tpu.matmul %54, %55, %cst_35 {dimension_numbers = #tpu.dot_dimension_numbers<[1], [0], [0], [1], [0, 0, 1, 1], [], []>} : vector<6x3xf32>, vector<3x892xf32>, vector<6x892xf32> -> vector<6x892xf32>
    %57 = arith.addf %52, %56 : vector<6x892xf32>
    %c11 = arith.constant 11 : index
    %c0_36 = arith.constant 0 : index
    %c0_37 = arith.constant 0 : index
    %58 = vector.load %arg2[%c11, %c0_36, %c0_37] : memref<25x6x3xf32, #tpu.memory_space<vmem>>, vector<1x6x3xf32>
    %59 = vector.shape_cast %58 : vector<1x6x3xf32> to vector<6x3xf32>
    %60 = vector.extract_strided_slice %1 {offsets = [0, 65], sizes = [3, 892], strides = [1, 1]} : vector<3x1024xf32> to vector<3x892xf32>
    %cst_38 = arith.constant dense<0.000000e+00> : vector<6x892xf32>
    %61 = tpu.matmul %59, %60, %cst_38 {dimension_numbers = #tpu.dot_dimension_numbers<[1], [0], [0], [1], [0, 0, 1, 1], [], []>} : vector<6x3xf32>, vector<3x892xf32>, vector<6x892xf32> -> vector<6x892xf32>
    %62 = arith.addf %57, %61 : vector<6x892xf32>
    %c12 = arith.constant 12 : index
    %c0_39 = arith.constant 0 : index
    %c0_40 = arith.constant 0 : index
    %63 = vector.load %arg2[%c12, %c0_39, %c0_40] : memref<25x6x3xf32, #tpu.memory_space<vmem>>, vector<1x6x3xf32>
    %64 = vector.shape_cast %63 : vector<1x6x3xf32> to vector<6x3xf32>
    %65 = vector.extract_strided_slice %1 {offsets = [0, 66], sizes = [3, 892], strides = [1, 1]} : vector<3x1024xf32> to vector<3x892xf32>
    %cst_41 = arith.constant dense<0.000000e+00> : vector<6x892xf32>
    %66 = tpu.matmul %64, %65, %cst_41 {dimension_numbers = #tpu.dot_dimension_numbers<[1], [0], [0], [1], [0, 0, 1, 1], [], []>} : vector<6x3xf32>, vector<3x892xf32>, vector<6x892xf32> -> vector<6x892xf32>
    %67 = arith.addf %62, %66 : vector<6x892xf32>
    %c13 = arith.constant 13 : index
    %c0_42 = arith.constant 0 : index
    %c0_43 = arith.constant 0 : index
    %68 = vector.load %arg2[%c13, %c0_42, %c0_43] : memref<25x6x3xf32, #tpu.memory_space<vmem>>, vector<1x6x3xf32>
    %69 = vector.shape_cast %68 : vector<1x6x3xf32> to vector<6x3xf32>
    %70 = vector.extract_strided_slice %1 {offsets = [0, 67], sizes = [3, 892], strides = [1, 1]} : vector<3x1024xf32> to vector<3x892xf32>
    %cst_44 = arith.constant dense<0.000000e+00> : vector<6x892xf32>
    %71 = tpu.matmul %69, %70, %cst_44 {dimension_numbers = #tpu.dot_dimension_numbers<[1], [0], [0], [1], [0, 0, 1, 1], [], []>} : vector<6x3xf32>, vector<3x892xf32>, vector<6x892xf32> -> vector<6x892xf32>
    %72 = arith.addf %67, %71 : vector<6x892xf32>
    %c14 = arith.constant 14 : index
    %c0_45 = arith.constant 0 : index
    %c0_46 = arith.constant 0 : index
    %73 = vector.load %arg2[%c14, %c0_45, %c0_46] : memref<25x6x3xf32, #tpu.memory_space<vmem>>, vector<1x6x3xf32>
    %74 = vector.shape_cast %73 : vector<1x6x3xf32> to vector<6x3xf32>
    %75 = vector.extract_strided_slice %1 {offsets = [0, 68], sizes = [3, 892], strides = [1, 1]} : vector<3x1024xf32> to vector<3x892xf32>
    %cst_47 = arith.constant dense<0.000000e+00> : vector<6x892xf32>
    %76 = tpu.matmul %74, %75, %cst_47 {dimension_numbers = #tpu.dot_dimension_numbers<[1], [0], [0], [1], [0, 0, 1, 1], [], []>} : vector<6x3xf32>, vector<3x892xf32>, vector<6x892xf32> -> vector<6x892xf32>
    %77 = arith.addf %72, %76 : vector<6x892xf32>
    %c15 = arith.constant 15 : index
    %c0_48 = arith.constant 0 : index
    %c0_49 = arith.constant 0 : index
    %78 = vector.load %arg2[%c15, %c0_48, %c0_49] : memref<25x6x3xf32, #tpu.memory_space<vmem>>, vector<1x6x3xf32>
    %79 = vector.shape_cast %78 : vector<1x6x3xf32> to vector<6x3xf32>
    %80 = vector.extract_strided_slice %1 {offsets = [0, 96], sizes = [3, 892], strides = [1, 1]} : vector<3x1024xf32> to vector<3x892xf32>
    %cst_50 = arith.constant dense<0.000000e+00> : vector<6x892xf32>
    %81 = tpu.matmul %79, %80, %cst_50 {dimension_numbers = #tpu.dot_dimension_numbers<[1], [0], [0], [1], [0, 0, 1, 1], [], []>} : vector<6x3xf32>, vector<3x892xf32>, vector<6x892xf32> -> vector<6x892xf32>
    %82 = arith.addf %77, %81 : vector<6x892xf32>
    %c16 = arith.constant 16 : index
    %c0_51 = arith.constant 0 : index
    %c0_52 = arith.constant 0 : index
    %83 = vector.load %arg2[%c16, %c0_51, %c0_52] : memref<25x6x3xf32, #tpu.memory_space<vmem>>, vector<1x6x3xf32>
    %84 = vector.shape_cast %83 : vector<1x6x3xf32> to vector<6x3xf32>
    %85 = vector.extract_strided_slice %1 {offsets = [0, 97], sizes = [3, 892], strides = [1, 1]} : vector<3x1024xf32> to vector<3x892xf32>
    %cst_53 = arith.constant dense<0.000000e+00> : vector<6x892xf32>
    %86 = tpu.matmul %84, %85, %cst_53 {dimension_numbers = #tpu.dot_dimension_numbers<[1], [0], [0], [1], [0, 0, 1, 1], [], []>} : vector<6x3xf32>, vector<3x892xf32>, vector<6x892xf32> -> vector<6x892xf32>
    %87 = arith.addf %82, %86 : vector<6x892xf32>
    %c17 = arith.constant 17 : index
    %c0_54 = arith.constant 0 : index
    %c0_55 = arith.constant 0 : index
    %88 = vector.load %arg2[%c17, %c0_54, %c0_55] : memref<25x6x3xf32, #tpu.memory_space<vmem>>, vector<1x6x3xf32>
    %89 = vector.shape_cast %88 : vector<1x6x3xf32> to vector<6x3xf32>
    %90 = vector.extract_strided_slice %1 {offsets = [0, 98], sizes = [3, 892], strides = [1, 1]} : vector<3x1024xf32> to vector<3x892xf32>
    %cst_56 = arith.constant dense<0.000000e+00> : vector<6x892xf32>
    %91 = tpu.matmul %89, %90, %cst_56 {dimension_numbers = #tpu.dot_dimension_numbers<[1], [0], [0], [1], [0, 0, 1, 1], [], []>} : vector<6x3xf32>, vector<3x892xf32>, vector<6x892xf32> -> vector<6x892xf32>
    %92 = arith.addf %87, %91 : vector<6x892xf32>
    %c18 = arith.constant 18 : index
    %c0_57 = arith.constant 0 : index
    %c0_58 = arith.constant 0 : index
    %93 = vector.load %arg2[%c18, %c0_57, %c0_58] : memref<25x6x3xf32, #tpu.memory_space<vmem>>, vector<1x6x3xf32>
    %94 = vector.shape_cast %93 : vector<1x6x3xf32> to vector<6x3xf32>
    %95 = vector.extract_strided_slice %1 {offsets = [0, 99], sizes = [3, 892], strides = [1, 1]} : vector<3x1024xf32> to vector<3x892xf32>
    %cst_59 = arith.constant dense<0.000000e+00> : vector<6x892xf32>
    %96 = tpu.matmul %94, %95, %cst_59 {dimension_numbers = #tpu.dot_dimension_numbers<[1], [0], [0], [1], [0, 0, 1, 1], [], []>} : vector<6x3xf32>, vector<3x892xf32>, vector<6x892xf32> -> vector<6x892xf32>
    %97 = arith.addf %92, %96 : vector<6x892xf32>
    %c19 = arith.constant 19 : index
    %c0_60 = arith.constant 0 : index
    %c0_61 = arith.constant 0 : index
    %98 = vector.load %arg2[%c19, %c0_60, %c0_61] : memref<25x6x3xf32, #tpu.memory_space<vmem>>, vector<1x6x3xf32>
    %99 = vector.shape_cast %98 : vector<1x6x3xf32> to vector<6x3xf32>
    %100 = vector.extract_strided_slice %1 {offsets = [0, 100], sizes = [3, 892], strides = [1, 1]} : vector<3x1024xf32> to vector<3x892xf32>
    %cst_62 = arith.constant dense<0.000000e+00> : vector<6x892xf32>
    %101 = tpu.matmul %99, %100, %cst_62 {dimension_numbers = #tpu.dot_dimension_numbers<[1], [0], [0], [1], [0, 0, 1, 1], [], []>} : vector<6x3xf32>, vector<3x892xf32>, vector<6x892xf32> -> vector<6x892xf32>
    %102 = arith.addf %97, %101 : vector<6x892xf32>
    %c20 = arith.constant 20 : index
    %c0_63 = arith.constant 0 : index
    %c0_64 = arith.constant 0 : index
    %103 = vector.load %arg2[%c20, %c0_63, %c0_64] : memref<25x6x3xf32, #tpu.memory_space<vmem>>, vector<1x6x3xf32>
    %104 = vector.shape_cast %103 : vector<1x6x3xf32> to vector<6x3xf32>
    %105 = vector.extract_strided_slice %1 {offsets = [0, 128], sizes = [3, 892], strides = [1, 1]} : vector<3x1024xf32> to vector<3x892xf32>
    %cst_65 = arith.constant dense<0.000000e+00> : vector<6x892xf32>
    %106 = tpu.matmul %104, %105, %cst_65 {dimension_numbers = #tpu.dot_dimension_numbers<[1], [0], [0], [1], [0, 0, 1, 1], [], []>} : vector<6x3xf32>, vector<3x892xf32>, vector<6x892xf32> -> vector<6x892xf32>
    %107 = arith.addf %102, %106 : vector<6x892xf32>
    %c21 = arith.constant 21 : index
    %c0_66 = arith.constant 0 : index
    %c0_67 = arith.constant 0 : index
    %108 = vector.load %arg2[%c21, %c0_66, %c0_67] : memref<25x6x3xf32, #tpu.memory_space<vmem>>, vector<1x6x3xf32>
    %109 = vector.shape_cast %108 : vector<1x6x3xf32> to vector<6x3xf32>
    %110 = vector.extract_strided_slice %1 {offsets = [0, 129], sizes = [3, 892], strides = [1, 1]} : vector<3x1024xf32> to vector<3x892xf32>
    %cst_68 = arith.constant dense<0.000000e+00> : vector<6x892xf32>
    %111 = tpu.matmul %109, %110, %cst_68 {dimension_numbers = #tpu.dot_dimension_numbers<[1], [0], [0], [1], [0, 0, 1, 1], [], []>} : vector<6x3xf32>, vector<3x892xf32>, vector<6x892xf32> -> vector<6x892xf32>
    %112 = arith.addf %107, %111 : vector<6x892xf32>
    %c22 = arith.constant 22 : index
    %c0_69 = arith.constant 0 : index
    %c0_70 = arith.constant 0 : index
    %113 = vector.load %arg2[%c22, %c0_69, %c0_70] : memref<25x6x3xf32, #tpu.memory_space<vmem>>, vector<1x6x3xf32>
    %114 = vector.shape_cast %113 : vector<1x6x3xf32> to vector<6x3xf32>
    %115 = vector.extract_strided_slice %1 {offsets = [0, 130], sizes = [3, 892], strides = [1, 1]} : vector<3x1024xf32> to vector<3x892xf32>
    %cst_71 = arith.constant dense<0.000000e+00> : vector<6x892xf32>
    %116 = tpu.matmul %114, %115, %cst_71 {dimension_numbers = #tpu.dot_dimension_numbers<[1], [0], [0], [1], [0, 0, 1, 1], [], []>} : vector<6x3xf32>, vector<3x892xf32>, vector<6x892xf32> -> vector<6x892xf32>
    %117 = arith.addf %112, %116 : vector<6x892xf32>
    %c23 = arith.constant 23 : index
    %c0_72 = arith.constant 0 : index
    %c0_73 = arith.constant 0 : index
    %118 = vector.load %arg2[%c23, %c0_72, %c0_73] : memref<25x6x3xf32, #tpu.memory_space<vmem>>, vector<1x6x3xf32>
    %119 = vector.shape_cast %118 : vector<1x6x3xf32> to vector<6x3xf32>
    %120 = vector.extract_strided_slice %1 {offsets = [0, 131], sizes = [3, 892], strides = [1, 1]} : vector<3x1024xf32> to vector<3x892xf32>
    %cst_74 = arith.constant dense<0.000000e+00> : vector<6x892xf32>
    %121 = tpu.matmul %119, %120, %cst_74 {dimension_numbers = #tpu.dot_dimension_numbers<[1], [0], [0], [1], [0, 0, 1, 1], [], []>} : vector<6x3xf32>, vector<3x892xf32>, vector<6x892xf32> -> vector<6x892xf32>
    %122 = arith.addf %117, %121 : vector<6x892xf32>
    %c24 = arith.constant 24 : index
    %c0_75 = arith.constant 0 : index
    %c0_76 = arith.constant 0 : index
    %123 = vector.load %arg2[%c24, %c0_75, %c0_76] : memref<25x6x3xf32, #tpu.memory_space<vmem>>, vector<1x6x3xf32>
    %124 = vector.shape_cast %123 : vector<1x6x3xf32> to vector<6x3xf32>
    %125 = vector.extract_strided_slice %1 {offsets = [0, 132], sizes = [3, 892], strides = [1, 1]} : vector<3x1024xf32> to vector<3x892xf32>
    %cst_77 = arith.constant dense<0.000000e+00> : vector<6x892xf32>
    %126 = tpu.matmul %124, %125, %cst_77 {dimension_numbers = #tpu.dot_dimension_numbers<[1], [0], [0], [1], [0, 0, 1, 1], [], []>} : vector<6x3xf32>, vector<3x892xf32>, vector<6x892xf32> -> vector<6x892xf32>
    %127 = arith.addf %122, %126 : vector<6x892xf32>
    %c0_78 = arith.constant 0 : index
    %c0_79 = arith.constant 0 : index
    %128 = vector.load %arg3[%c0_78, %c0_79] : memref<6x1xf32, #tpu.memory_space<vmem>>, vector<6x1xf32>
    %129 = vector.broadcast %128 : vector<6x1xf32> to vector<6x892xf32>
    %130 = arith.addf %127, %129 : vector<6x892xf32>
    %cst_80 = arith.constant 0.000000e+00 : f32
    %131 = vector.broadcast %cst_80 : f32 to vector<6x892xf32>
    %132 = arith.maximumf %130, %131 : vector<6x892xf32>
    %133 = vector.extract_strided_slice %132 {offsets = [0, 0], sizes = [6, 891], strides = [1, 1]} : vector<6x892xf32> to vector<6x891xf32>
    %134 = vector.extract_strided_slice %132 {offsets = [0, 1], sizes = [6, 891], strides = [1, 1]} : vector<6x892xf32> to vector<6x891xf32>
    %135 = arith.maximumf %133, %134 : vector<6x891xf32>
    %136 = vector.extract_strided_slice %135 {offsets = [0, 0], sizes = [6, 859], strides = [1, 1]} : vector<6x891xf32> to vector<6x859xf32>
    %137 = vector.extract_strided_slice %135 {offsets = [0, 32], sizes = [6, 859], strides = [1, 1]} : vector<6x891xf32> to vector<6x859xf32>
    %138 = arith.maximumf %136, %137 : vector<6x859xf32>
    %cst_81 = arith.constant 0.000000e+00 : f32
    %139 = vector.broadcast %cst_81 : f32 to vector<16x595xf32>
    %c0_82 = arith.constant 0 : index
    %c0_83 = arith.constant 0 : index
    %c0_84 = arith.constant 0 : index
    %140 = vector.load %arg4[%c0_82, %c0_83, %c0_84] : memref<25x16x6xf32, #tpu.memory_space<vmem>>, vector<1x16x6xf32>
    %141 = vector.shape_cast %140 : vector<1x16x6xf32> to vector<16x6xf32>
    %142 = vector.extract_strided_slice %138 {offsets = [0, 0], sizes = [6, 595], strides = [1, 1]} : vector<6x859xf32> to vector<6x595xf32>
    %cst_85 = arith.constant dense<0.000000e+00> : vector<16x595xf32>
    %143 = tpu.matmul %141, %142, %cst_85 {dimension_numbers = #tpu.dot_dimension_numbers<[1], [0], [0], [1], [0, 0, 1, 1], [], []>} : vector<16x6xf32>, vector<6x595xf32>, vector<16x595xf32> -> vector<16x595xf32>
    %144 = arith.addf %139, %143 : vector<16x595xf32>
    %c1_86 = arith.constant 1 : index
    %c0_87 = arith.constant 0 : index
    %c0_88 = arith.constant 0 : index
    %145 = vector.load %arg4[%c1_86, %c0_87, %c0_88] : memref<25x16x6xf32, #tpu.memory_space<vmem>>, vector<1x16x6xf32>
    %146 = vector.shape_cast %145 : vector<1x16x6xf32> to vector<16x6xf32>
    %147 = vector.extract_strided_slice %138 {offsets = [0, 2], sizes = [6, 595], strides = [1, 1]} : vector<6x859xf32> to vector<6x595xf32>
    %cst_89 = arith.constant dense<0.000000e+00> : vector<16x595xf32>
    %148 = tpu.matmul %146, %147, %cst_89 {dimension_numbers = #tpu.dot_dimension_numbers<[1], [0], [0], [1], [0, 0, 1, 1], [], []>} : vector<16x6xf32>, vector<6x595xf32>, vector<16x595xf32> -> vector<16x595xf32>
    %149 = arith.addf %144, %148 : vector<16x595xf32>
    %c2_90 = arith.constant 2 : index
    %c0_91 = arith.constant 0 : index
    %c0_92 = arith.constant 0 : index
    %150 = vector.load %arg4[%c2_90, %c0_91, %c0_92] : memref<25x16x6xf32, #tpu.memory_space<vmem>>, vector<1x16x6xf32>
    %151 = vector.shape_cast %150 : vector<1x16x6xf32> to vector<16x6xf32>
    %152 = vector.extract_strided_slice %138 {offsets = [0, 4], sizes = [6, 595], strides = [1, 1]} : vector<6x859xf32> to vector<6x595xf32>
    %cst_93 = arith.constant dense<0.000000e+00> : vector<16x595xf32>
    %153 = tpu.matmul %151, %152, %cst_93 {dimension_numbers = #tpu.dot_dimension_numbers<[1], [0], [0], [1], [0, 0, 1, 1], [], []>} : vector<16x6xf32>, vector<6x595xf32>, vector<16x595xf32> -> vector<16x595xf32>
    %154 = arith.addf %149, %153 : vector<16x595xf32>
    %c3_94 = arith.constant 3 : index
    %c0_95 = arith.constant 0 : index
    %c0_96 = arith.constant 0 : index
    %155 = vector.load %arg4[%c3_94, %c0_95, %c0_96] : memref<25x16x6xf32, #tpu.memory_space<vmem>>, vector<1x16x6xf32>
    %156 = vector.shape_cast %155 : vector<1x16x6xf32> to vector<16x6xf32>
    %157 = vector.extract_strided_slice %138 {offsets = [0, 6], sizes = [6, 595], strides = [1, 1]} : vector<6x859xf32> to vector<6x595xf32>
    %cst_97 = arith.constant dense<0.000000e+00> : vector<16x595xf32>
    %158 = tpu.matmul %156, %157, %cst_97 {dimension_numbers = #tpu.dot_dimension_numbers<[1], [0], [0], [1], [0, 0, 1, 1], [], []>} : vector<16x6xf32>, vector<6x595xf32>, vector<16x595xf32> -> vector<16x595xf32>
    %159 = arith.addf %154, %158 : vector<16x595xf32>
    %c4_98 = arith.constant 4 : index
    %c0_99 = arith.constant 0 : index
    %c0_100 = arith.constant 0 : index
    %160 = vector.load %arg4[%c4_98, %c0_99, %c0_100] : memref<25x16x6xf32, #tpu.memory_space<vmem>>, vector<1x16x6xf32>
    %161 = vector.shape_cast %160 : vector<1x16x6xf32> to vector<16x6xf32>
    %162 = vector.extract_strided_slice %138 {offsets = [0, 8], sizes = [6, 595], strides = [1, 1]} : vector<6x859xf32> to vector<6x595xf32>
    %cst_101 = arith.constant dense<0.000000e+00> : vector<16x595xf32>
    %163 = tpu.matmul %161, %162, %cst_101 {dimension_numbers = #tpu.dot_dimension_numbers<[1], [0], [0], [1], [0, 0, 1, 1], [], []>} : vector<16x6xf32>, vector<6x595xf32>, vector<16x595xf32> -> vector<16x595xf32>
    %164 = arith.addf %159, %163 : vector<16x595xf32>
    %c5_102 = arith.constant 5 : index
    %c0_103 = arith.constant 0 : index
    %c0_104 = arith.constant 0 : index
    %165 = vector.load %arg4[%c5_102, %c0_103, %c0_104] : memref<25x16x6xf32, #tpu.memory_space<vmem>>, vector<1x16x6xf32>
    %166 = vector.shape_cast %165 : vector<1x16x6xf32> to vector<16x6xf32>
    %167 = vector.extract_strided_slice %138 {offsets = [0, 64], sizes = [6, 595], strides = [1, 1]} : vector<6x859xf32> to vector<6x595xf32>
    %cst_105 = arith.constant dense<0.000000e+00> : vector<16x595xf32>
    %168 = tpu.matmul %166, %167, %cst_105 {dimension_numbers = #tpu.dot_dimension_numbers<[1], [0], [0], [1], [0, 0, 1, 1], [], []>} : vector<16x6xf32>, vector<6x595xf32>, vector<16x595xf32> -> vector<16x595xf32>
    %169 = arith.addf %164, %168 : vector<16x595xf32>
    %c6_106 = arith.constant 6 : index
    %c0_107 = arith.constant 0 : index
    %c0_108 = arith.constant 0 : index
    %170 = vector.load %arg4[%c6_106, %c0_107, %c0_108] : memref<25x16x6xf32, #tpu.memory_space<vmem>>, vector<1x16x6xf32>
    %171 = vector.shape_cast %170 : vector<1x16x6xf32> to vector<16x6xf32>
    %172 = vector.extract_strided_slice %138 {offsets = [0, 66], sizes = [6, 595], strides = [1, 1]} : vector<6x859xf32> to vector<6x595xf32>
    %cst_109 = arith.constant dense<0.000000e+00> : vector<16x595xf32>
    %173 = tpu.matmul %171, %172, %cst_109 {dimension_numbers = #tpu.dot_dimension_numbers<[1], [0], [0], [1], [0, 0, 1, 1], [], []>} : vector<16x6xf32>, vector<6x595xf32>, vector<16x595xf32> -> vector<16x595xf32>
    %174 = arith.addf %169, %173 : vector<16x595xf32>
    %c7_110 = arith.constant 7 : index
    %c0_111 = arith.constant 0 : index
    %c0_112 = arith.constant 0 : index
    %175 = vector.load %arg4[%c7_110, %c0_111, %c0_112] : memref<25x16x6xf32, #tpu.memory_space<vmem>>, vector<1x16x6xf32>
    %176 = vector.shape_cast %175 : vector<1x16x6xf32> to vector<16x6xf32>
    %177 = vector.extract_strided_slice %138 {offsets = [0, 68], sizes = [6, 595], strides = [1, 1]} : vector<6x859xf32> to vector<6x595xf32>
    %cst_113 = arith.constant dense<0.000000e+00> : vector<16x595xf32>
    %178 = tpu.matmul %176, %177, %cst_113 {dimension_numbers = #tpu.dot_dimension_numbers<[1], [0], [0], [1], [0, 0, 1, 1], [], []>} : vector<16x6xf32>, vector<6x595xf32>, vector<16x595xf32> -> vector<16x595xf32>
    %179 = arith.addf %174, %178 : vector<16x595xf32>
    %c8_114 = arith.constant 8 : index
    %c0_115 = arith.constant 0 : index
    %c0_116 = arith.constant 0 : index
    %180 = vector.load %arg4[%c8_114, %c0_115, %c0_116] : memref<25x16x6xf32, #tpu.memory_space<vmem>>, vector<1x16x6xf32>
    %181 = vector.shape_cast %180 : vector<1x16x6xf32> to vector<16x6xf32>
    %182 = vector.extract_strided_slice %138 {offsets = [0, 70], sizes = [6, 595], strides = [1, 1]} : vector<6x859xf32> to vector<6x595xf32>
    %cst_117 = arith.constant dense<0.000000e+00> : vector<16x595xf32>
    %183 = tpu.matmul %181, %182, %cst_117 {dimension_numbers = #tpu.dot_dimension_numbers<[1], [0], [0], [1], [0, 0, 1, 1], [], []>} : vector<16x6xf32>, vector<6x595xf32>, vector<16x595xf32> -> vector<16x595xf32>
    %184 = arith.addf %179, %183 : vector<16x595xf32>
    %c9_118 = arith.constant 9 : index
    %c0_119 = arith.constant 0 : index
    %c0_120 = arith.constant 0 : index
    %185 = vector.load %arg4[%c9_118, %c0_119, %c0_120] : memref<25x16x6xf32, #tpu.memory_space<vmem>>, vector<1x16x6xf32>
    %186 = vector.shape_cast %185 : vector<1x16x6xf32> to vector<16x6xf32>
    %187 = vector.extract_strided_slice %138 {offsets = [0, 72], sizes = [6, 595], strides = [1, 1]} : vector<6x859xf32> to vector<6x595xf32>
    %cst_121 = arith.constant dense<0.000000e+00> : vector<16x595xf32>
    %188 = tpu.matmul %186, %187, %cst_121 {dimension_numbers = #tpu.dot_dimension_numbers<[1], [0], [0], [1], [0, 0, 1, 1], [], []>} : vector<16x6xf32>, vector<6x595xf32>, vector<16x595xf32> -> vector<16x595xf32>
    %189 = arith.addf %184, %188 : vector<16x595xf32>
    %c10_122 = arith.constant 10 : index
    %c0_123 = arith.constant 0 : index
    %c0_124 = arith.constant 0 : index
    %190 = vector.load %arg4[%c10_122, %c0_123, %c0_124] : memref<25x16x6xf32, #tpu.memory_space<vmem>>, vector<1x16x6xf32>
    %191 = vector.shape_cast %190 : vector<1x16x6xf32> to vector<16x6xf32>
    %192 = vector.extract_strided_slice %138 {offsets = [0, 128], sizes = [6, 595], strides = [1, 1]} : vector<6x859xf32> to vector<6x595xf32>
    %cst_125 = arith.constant dense<0.000000e+00> : vector<16x595xf32>
    %193 = tpu.matmul %191, %192, %cst_125 {dimension_numbers = #tpu.dot_dimension_numbers<[1], [0], [0], [1], [0, 0, 1, 1], [], []>} : vector<16x6xf32>, vector<6x595xf32>, vector<16x595xf32> -> vector<16x595xf32>
    %194 = arith.addf %189, %193 : vector<16x595xf32>
    %c11_126 = arith.constant 11 : index
    %c0_127 = arith.constant 0 : index
    %c0_128 = arith.constant 0 : index
    %195 = vector.load %arg4[%c11_126, %c0_127, %c0_128] : memref<25x16x6xf32, #tpu.memory_space<vmem>>, vector<1x16x6xf32>
    %196 = vector.shape_cast %195 : vector<1x16x6xf32> to vector<16x6xf32>
    %197 = vector.extract_strided_slice %138 {offsets = [0, 130], sizes = [6, 595], strides = [1, 1]} : vector<6x859xf32> to vector<6x595xf32>
    %cst_129 = arith.constant dense<0.000000e+00> : vector<16x595xf32>
    %198 = tpu.matmul %196, %197, %cst_129 {dimension_numbers = #tpu.dot_dimension_numbers<[1], [0], [0], [1], [0, 0, 1, 1], [], []>} : vector<16x6xf32>, vector<6x595xf32>, vector<16x595xf32> -> vector<16x595xf32>
    %199 = arith.addf %194, %198 : vector<16x595xf32>
    %c12_130 = arith.constant 12 : index
    %c0_131 = arith.constant 0 : index
    %c0_132 = arith.constant 0 : index
    %200 = vector.load %arg4[%c12_130, %c0_131, %c0_132] : memref<25x16x6xf32, #tpu.memory_space<vmem>>, vector<1x16x6xf32>
    %201 = vector.shape_cast %200 : vector<1x16x6xf32> to vector<16x6xf32>
    %202 = vector.extract_strided_slice %138 {offsets = [0, 132], sizes = [6, 595], strides = [1, 1]} : vector<6x859xf32> to vector<6x595xf32>
    %cst_133 = arith.constant dense<0.000000e+00> : vector<16x595xf32>
    %203 = tpu.matmul %201, %202, %cst_133 {dimension_numbers = #tpu.dot_dimension_numbers<[1], [0], [0], [1], [0, 0, 1, 1], [], []>} : vector<16x6xf32>, vector<6x595xf32>, vector<16x595xf32> -> vector<16x595xf32>
    %204 = arith.addf %199, %203 : vector<16x595xf32>
    %c13_134 = arith.constant 13 : index
    %c0_135 = arith.constant 0 : index
    %c0_136 = arith.constant 0 : index
    %205 = vector.load %arg4[%c13_134, %c0_135, %c0_136] : memref<25x16x6xf32, #tpu.memory_space<vmem>>, vector<1x16x6xf32>
    %206 = vector.shape_cast %205 : vector<1x16x6xf32> to vector<16x6xf32>
    %207 = vector.extract_strided_slice %138 {offsets = [0, 134], sizes = [6, 595], strides = [1, 1]} : vector<6x859xf32> to vector<6x595xf32>
    %cst_137 = arith.constant dense<0.000000e+00> : vector<16x595xf32>
    %208 = tpu.matmul %206, %207, %cst_137 {dimension_numbers = #tpu.dot_dimension_numbers<[1], [0], [0], [1], [0, 0, 1, 1], [], []>} : vector<16x6xf32>, vector<6x595xf32>, vector<16x595xf32> -> vector<16x595xf32>
    %209 = arith.addf %204, %208 : vector<16x595xf32>
    %c14_138 = arith.constant 14 : index
    %c0_139 = arith.constant 0 : index
    %c0_140 = arith.constant 0 : index
    %210 = vector.load %arg4[%c14_138, %c0_139, %c0_140] : memref<25x16x6xf32, #tpu.memory_space<vmem>>, vector<1x16x6xf32>
    %211 = vector.shape_cast %210 : vector<1x16x6xf32> to vector<16x6xf32>
    %212 = vector.extract_strided_slice %138 {offsets = [0, 136], sizes = [6, 595], strides = [1, 1]} : vector<6x859xf32> to vector<6x595xf32>
    %cst_141 = arith.constant dense<0.000000e+00> : vector<16x595xf32>
    %213 = tpu.matmul %211, %212, %cst_141 {dimension_numbers = #tpu.dot_dimension_numbers<[1], [0], [0], [1], [0, 0, 1, 1], [], []>} : vector<16x6xf32>, vector<6x595xf32>, vector<16x595xf32> -> vector<16x595xf32>
    %214 = arith.addf %209, %213 : vector<16x595xf32>
    %c15_142 = arith.constant 15 : index
    %c0_143 = arith.constant 0 : index
    %c0_144 = arith.constant 0 : index
    %215 = vector.load %arg4[%c15_142, %c0_143, %c0_144] : memref<25x16x6xf32, #tpu.memory_space<vmem>>, vector<1x16x6xf32>
    %216 = vector.shape_cast %215 : vector<1x16x6xf32> to vector<16x6xf32>
    %217 = vector.extract_strided_slice %138 {offsets = [0, 192], sizes = [6, 595], strides = [1, 1]} : vector<6x859xf32> to vector<6x595xf32>
    %cst_145 = arith.constant dense<0.000000e+00> : vector<16x595xf32>
    %218 = tpu.matmul %216, %217, %cst_145 {dimension_numbers = #tpu.dot_dimension_numbers<[1], [0], [0], [1], [0, 0, 1, 1], [], []>} : vector<16x6xf32>, vector<6x595xf32>, vector<16x595xf32> -> vector<16x595xf32>
    %219 = arith.addf %214, %218 : vector<16x595xf32>
    %c16_146 = arith.constant 16 : index
    %c0_147 = arith.constant 0 : index
    %c0_148 = arith.constant 0 : index
    %220 = vector.load %arg4[%c16_146, %c0_147, %c0_148] : memref<25x16x6xf32, #tpu.memory_space<vmem>>, vector<1x16x6xf32>
    %221 = vector.shape_cast %220 : vector<1x16x6xf32> to vector<16x6xf32>
    %222 = vector.extract_strided_slice %138 {offsets = [0, 194], sizes = [6, 595], strides = [1, 1]} : vector<6x859xf32> to vector<6x595xf32>
    %cst_149 = arith.constant dense<0.000000e+00> : vector<16x595xf32>
    %223 = tpu.matmul %221, %222, %cst_149 {dimension_numbers = #tpu.dot_dimension_numbers<[1], [0], [0], [1], [0, 0, 1, 1], [], []>} : vector<16x6xf32>, vector<6x595xf32>, vector<16x595xf32> -> vector<16x595xf32>
    %224 = arith.addf %219, %223 : vector<16x595xf32>
    %c17_150 = arith.constant 17 : index
    %c0_151 = arith.constant 0 : index
    %c0_152 = arith.constant 0 : index
    %225 = vector.load %arg4[%c17_150, %c0_151, %c0_152] : memref<25x16x6xf32, #tpu.memory_space<vmem>>, vector<1x16x6xf32>
    %226 = vector.shape_cast %225 : vector<1x16x6xf32> to vector<16x6xf32>
    %227 = vector.extract_strided_slice %138 {offsets = [0, 196], sizes = [6, 595], strides = [1, 1]} : vector<6x859xf32> to vector<6x595xf32>
    %cst_153 = arith.constant dense<0.000000e+00> : vector<16x595xf32>
    %228 = tpu.matmul %226, %227, %cst_153 {dimension_numbers = #tpu.dot_dimension_numbers<[1], [0], [0], [1], [0, 0, 1, 1], [], []>} : vector<16x6xf32>, vector<6x595xf32>, vector<16x595xf32> -> vector<16x595xf32>
    %229 = arith.addf %224, %228 : vector<16x595xf32>
    %c18_154 = arith.constant 18 : index
    %c0_155 = arith.constant 0 : index
    %c0_156 = arith.constant 0 : index
    %230 = vector.load %arg4[%c18_154, %c0_155, %c0_156] : memref<25x16x6xf32, #tpu.memory_space<vmem>>, vector<1x16x6xf32>
    %231 = vector.shape_cast %230 : vector<1x16x6xf32> to vector<16x6xf32>
    %232 = vector.extract_strided_slice %138 {offsets = [0, 198], sizes = [6, 595], strides = [1, 1]} : vector<6x859xf32> to vector<6x595xf32>
    %cst_157 = arith.constant dense<0.000000e+00> : vector<16x595xf32>
    %233 = tpu.matmul %231, %232, %cst_157 {dimension_numbers = #tpu.dot_dimension_numbers<[1], [0], [0], [1], [0, 0, 1, 1], [], []>} : vector<16x6xf32>, vector<6x595xf32>, vector<16x595xf32> -> vector<16x595xf32>
    %234 = arith.addf %229, %233 : vector<16x595xf32>
    %c19_158 = arith.constant 19 : index
    %c0_159 = arith.constant 0 : index
    %c0_160 = arith.constant 0 : index
    %235 = vector.load %arg4[%c19_158, %c0_159, %c0_160] : memref<25x16x6xf32, #tpu.memory_space<vmem>>, vector<1x16x6xf32>
    %236 = vector.shape_cast %235 : vector<1x16x6xf32> to vector<16x6xf32>
    %237 = vector.extract_strided_slice %138 {offsets = [0, 200], sizes = [6, 595], strides = [1, 1]} : vector<6x859xf32> to vector<6x595xf32>
    %cst_161 = arith.constant dense<0.000000e+00> : vector<16x595xf32>
    %238 = tpu.matmul %236, %237, %cst_161 {dimension_numbers = #tpu.dot_dimension_numbers<[1], [0], [0], [1], [0, 0, 1, 1], [], []>} : vector<16x6xf32>, vector<6x595xf32>, vector<16x595xf32> -> vector<16x595xf32>
    %239 = arith.addf %234, %238 : vector<16x595xf32>
    %c20_162 = arith.constant 20 : index
    %c0_163 = arith.constant 0 : index
    %c0_164 = arith.constant 0 : index
    %240 = vector.load %arg4[%c20_162, %c0_163, %c0_164] : memref<25x16x6xf32, #tpu.memory_space<vmem>>, vector<1x16x6xf32>
    %241 = vector.shape_cast %240 : vector<1x16x6xf32> to vector<16x6xf32>
    %242 = vector.extract_strided_slice %138 {offsets = [0, 256], sizes = [6, 595], strides = [1, 1]} : vector<6x859xf32> to vector<6x595xf32>
    %cst_165 = arith.constant dense<0.000000e+00> : vector<16x595xf32>
    %243 = tpu.matmul %241, %242, %cst_165 {dimension_numbers = #tpu.dot_dimension_numbers<[1], [0], [0], [1], [0, 0, 1, 1], [], []>} : vector<16x6xf32>, vector<6x595xf32>, vector<16x595xf32> -> vector<16x595xf32>
    %244 = arith.addf %239, %243 : vector<16x595xf32>
    %c21_166 = arith.constant 21 : index
    %c0_167 = arith.constant 0 : index
    %c0_168 = arith.constant 0 : index
    %245 = vector.load %arg4[%c21_166, %c0_167, %c0_168] : memref<25x16x6xf32, #tpu.memory_space<vmem>>, vector<1x16x6xf32>
    %246 = vector.shape_cast %245 : vector<1x16x6xf32> to vector<16x6xf32>
    %247 = vector.extract_strided_slice %138 {offsets = [0, 258], sizes = [6, 595], strides = [1, 1]} : vector<6x859xf32> to vector<6x595xf32>
    %cst_169 = arith.constant dense<0.000000e+00> : vector<16x595xf32>
    %248 = tpu.matmul %246, %247, %cst_169 {dimension_numbers = #tpu.dot_dimension_numbers<[1], [0], [0], [1], [0, 0, 1, 1], [], []>} : vector<16x6xf32>, vector<6x595xf32>, vector<16x595xf32> -> vector<16x595xf32>
    %249 = arith.addf %244, %248 : vector<16x595xf32>
    %c22_170 = arith.constant 22 : index
    %c0_171 = arith.constant 0 : index
    %c0_172 = arith.constant 0 : index
    %250 = vector.load %arg4[%c22_170, %c0_171, %c0_172] : memref<25x16x6xf32, #tpu.memory_space<vmem>>, vector<1x16x6xf32>
    %251 = vector.shape_cast %250 : vector<1x16x6xf32> to vector<16x6xf32>
    %252 = vector.extract_strided_slice %138 {offsets = [0, 260], sizes = [6, 595], strides = [1, 1]} : vector<6x859xf32> to vector<6x595xf32>
    %cst_173 = arith.constant dense<0.000000e+00> : vector<16x595xf32>
    %253 = tpu.matmul %251, %252, %cst_173 {dimension_numbers = #tpu.dot_dimension_numbers<[1], [0], [0], [1], [0, 0, 1, 1], [], []>} : vector<16x6xf32>, vector<6x595xf32>, vector<16x595xf32> -> vector<16x595xf32>
    %254 = arith.addf %249, %253 : vector<16x595xf32>
    %c23_174 = arith.constant 23 : index
    %c0_175 = arith.constant 0 : index
    %c0_176 = arith.constant 0 : index
    %255 = vector.load %arg4[%c23_174, %c0_175, %c0_176] : memref<25x16x6xf32, #tpu.memory_space<vmem>>, vector<1x16x6xf32>
    %256 = vector.shape_cast %255 : vector<1x16x6xf32> to vector<16x6xf32>
    %257 = vector.extract_strided_slice %138 {offsets = [0, 262], sizes = [6, 595], strides = [1, 1]} : vector<6x859xf32> to vector<6x595xf32>
    %cst_177 = arith.constant dense<0.000000e+00> : vector<16x595xf32>
    %258 = tpu.matmul %256, %257, %cst_177 {dimension_numbers = #tpu.dot_dimension_numbers<[1], [0], [0], [1], [0, 0, 1, 1], [], []>} : vector<16x6xf32>, vector<6x595xf32>, vector<16x595xf32> -> vector<16x595xf32>
    %259 = arith.addf %254, %258 : vector<16x595xf32>
    %c24_178 = arith.constant 24 : index
    %c0_179 = arith.constant 0 : index
    %c0_180 = arith.constant 0 : index
    %260 = vector.load %arg4[%c24_178, %c0_179, %c0_180] : memref<25x16x6xf32, #tpu.memory_space<vmem>>, vector<1x16x6xf32>
    %261 = vector.shape_cast %260 : vector<1x16x6xf32> to vector<16x6xf32>
    %262 = vector.extract_strided_slice %138 {offsets = [0, 264], sizes = [6, 595], strides = [1, 1]} : vector<6x859xf32> to vector<6x595xf32>
    %cst_181 = arith.constant dense<0.000000e+00> : vector<16x595xf32>
    %263 = tpu.matmul %261, %262, %cst_181 {dimension_numbers = #tpu.dot_dimension_numbers<[1], [0], [0], [1], [0, 0, 1, 1], [], []>} : vector<16x6xf32>, vector<6x595xf32>, vector<16x595xf32> -> vector<16x595xf32>
    %264 = arith.addf %259, %263 : vector<16x595xf32>
    %c0_182 = arith.constant 0 : index
    %c0_183 = arith.constant 0 : index
    %265 = vector.load %arg5[%c0_182, %c0_183] : memref<16x1xf32, #tpu.memory_space<vmem>>, vector<16x1xf32>
    %266 = vector.broadcast %265 : vector<16x1xf32> to vector<16x595xf32>
    %267 = arith.addf %264, %266 : vector<16x595xf32>
    %cst_184 = arith.constant 0.000000e+00 : f32
    %268 = vector.broadcast %cst_184 : f32 to vector<16x595xf32>
    %269 = arith.maximumf %267, %268 : vector<16x595xf32>
    %270 = vector.extract_strided_slice %269 {offsets = [0, 0], sizes = [16, 593], strides = [1, 1]} : vector<16x595xf32> to vector<16x593xf32>
    %271 = vector.extract_strided_slice %269 {offsets = [0, 2], sizes = [16, 593], strides = [1, 1]} : vector<16x595xf32> to vector<16x593xf32>
    %272 = arith.maximumf %270, %271 : vector<16x593xf32>
    %273 = vector.extract_strided_slice %272 {offsets = [0, 0], sizes = [16, 529], strides = [1, 1]} : vector<16x593xf32> to vector<16x529xf32>
    %274 = vector.extract_strided_slice %272 {offsets = [0, 64], sizes = [16, 529], strides = [1, 1]} : vector<16x593xf32> to vector<16x529xf32>
    %275 = arith.maximumf %273, %274 : vector<16x529xf32>
    %276 = tpu.iota {dimensions = array<i32: 0>} : vector<17x25xi32>
    %277 = tpu.iota {dimensions = array<i32: 1>} : vector<17x25xi32>
    %cst_185 = arith.constant 0.000000e+00 : f32
    %278 = vector.broadcast %cst_185 : f32 to vector<16x25xf32>
    %c0_i32 = arith.constant 0 : i32
    %279 = vector.broadcast %c0_i32 : i32 to vector<17x25xi32>
    %280 = arith.subi %277, %279 : vector<17x25xi32>
    %c4_i32 = arith.constant 4 : i32
    %281 = vector.broadcast %c4_i32 : i32 to vector<17x25xi32>
    %282 = arith.muli %281, %280 : vector<17x25xi32>
    %283 = arith.cmpi eq, %276, %282 : vector<17x25xi32>
    %284 = arith.extui %283 : vector<17x25xi1> to vector<17x25xi32>
    %285 = arith.sitofp %284 : vector<17x25xi32> to vector<17x25xf32>
    %286 = vector.extract_strided_slice %275 {offsets = [0, 0], sizes = [16, 17], strides = [1, 1]} : vector<16x529xf32> to vector<16x17xf32>
    %cst_186 = arith.constant dense<0.000000e+00> : vector<16x25xf32>
    %287 = tpu.matmul %286, %285, %cst_186 {dimension_numbers = #tpu.dot_dimension_numbers<[1], [0], [0], [1], [0, 0, 1, 1], [], []>} : vector<16x17xf32>, vector<17x25xf32>, vector<16x25xf32> -> vector<16x25xf32>
    %288 = arith.addf %278, %287 : vector<16x25xf32>
    %c5_i32 = arith.constant 5 : i32
    %289 = vector.broadcast %c5_i32 : i32 to vector<17x25xi32>
    %290 = arith.subi %277, %289 : vector<17x25xi32>
    %c4_i32_187 = arith.constant 4 : i32
    %291 = vector.broadcast %c4_i32_187 : i32 to vector<17x25xi32>
    %292 = arith.muli %291, %290 : vector<17x25xi32>
    %293 = arith.cmpi eq, %276, %292 : vector<17x25xi32>
    %294 = arith.extui %293 : vector<17x25xi1> to vector<17x25xi32>
    %295 = arith.sitofp %294 : vector<17x25xi32> to vector<17x25xf32>
    %296 = vector.extract_strided_slice %275 {offsets = [0, 128], sizes = [16, 17], strides = [1, 1]} : vector<16x529xf32> to vector<16x17xf32>
    %cst_188 = arith.constant dense<0.000000e+00> : vector<16x25xf32>
    %297 = tpu.matmul %296, %295, %cst_188 {dimension_numbers = #tpu.dot_dimension_numbers<[1], [0], [0], [1], [0, 0, 1, 1], [], []>} : vector<16x17xf32>, vector<17x25xf32>, vector<16x25xf32> -> vector<16x25xf32>
    %298 = arith.addf %288, %297 : vector<16x25xf32>
    %c10_i32 = arith.constant 10 : i32
    %299 = vector.broadcast %c10_i32 : i32 to vector<17x25xi32>
    %300 = arith.subi %277, %299 : vector<17x25xi32>
    %c4_i32_189 = arith.constant 4 : i32
    %301 = vector.broadcast %c4_i32_189 : i32 to vector<17x25xi32>
    %302 = arith.muli %301, %300 : vector<17x25xi32>
    %303 = arith.cmpi eq, %276, %302 : vector<17x25xi32>
    %304 = arith.extui %303 : vector<17x25xi1> to vector<17x25xi32>
    %305 = arith.sitofp %304 : vector<17x25xi32> to vector<17x25xf32>
    %306 = vector.extract_strided_slice %275 {offsets = [0, 256], sizes = [16, 17], strides = [1, 1]} : vector<16x529xf32> to vector<16x17xf32>
    %cst_190 = arith.constant dense<0.000000e+00> : vector<16x25xf32>
    %307 = tpu.matmul %306, %305, %cst_190 {dimension_numbers = #tpu.dot_dimension_numbers<[1], [0], [0], [1], [0, 0, 1, 1], [], []>} : vector<16x17xf32>, vector<17x25xf32>, vector<16x25xf32> -> vector<16x25xf32>
    %308 = arith.addf %298, %307 : vector<16x25xf32>
    %c15_i32 = arith.constant 15 : i32
    %309 = vector.broadcast %c15_i32 : i32 to vector<17x25xi32>
    %310 = arith.subi %277, %309 : vector<17x25xi32>
    %c4_i32_191 = arith.constant 4 : i32
    %311 = vector.broadcast %c4_i32_191 : i32 to vector<17x25xi32>
    %312 = arith.muli %311, %310 : vector<17x25xi32>
    %313 = arith.cmpi eq, %276, %312 : vector<17x25xi32>
    %314 = arith.extui %313 : vector<17x25xi1> to vector<17x25xi32>
    %315 = arith.sitofp %314 : vector<17x25xi32> to vector<17x25xf32>
    %316 = vector.extract_strided_slice %275 {offsets = [0, 384], sizes = [16, 17], strides = [1, 1]} : vector<16x529xf32> to vector<16x17xf32>
    %cst_192 = arith.constant dense<0.000000e+00> : vector<16x25xf32>
    %317 = tpu.matmul %316, %315, %cst_192 {dimension_numbers = #tpu.dot_dimension_numbers<[1], [0], [0], [1], [0, 0, 1, 1], [], []>} : vector<16x17xf32>, vector<17x25xf32>, vector<16x25xf32> -> vector<16x25xf32>
    %318 = arith.addf %308, %317 : vector<16x25xf32>
    %c20_i32 = arith.constant 20 : i32
    %319 = vector.broadcast %c20_i32 : i32 to vector<17x25xi32>
    %320 = arith.subi %277, %319 : vector<17x25xi32>
    %c4_i32_193 = arith.constant 4 : i32
    %321 = vector.broadcast %c4_i32_193 : i32 to vector<17x25xi32>
    %322 = arith.muli %321, %320 : vector<17x25xi32>
    %323 = arith.cmpi eq, %276, %322 : vector<17x25xi32>
    %324 = arith.extui %323 : vector<17x25xi1> to vector<17x25xi32>
    %325 = arith.sitofp %324 : vector<17x25xi32> to vector<17x25xf32>
    %326 = vector.extract_strided_slice %275 {offsets = [0, 512], sizes = [16, 17], strides = [1, 1]} : vector<16x529xf32> to vector<16x17xf32>
    %cst_194 = arith.constant dense<0.000000e+00> : vector<16x25xf32>
    %327 = tpu.matmul %326, %325, %cst_194 {dimension_numbers = #tpu.dot_dimension_numbers<[1], [0], [0], [1], [0, 0, 1, 1], [], []>} : vector<16x17xf32>, vector<17x25xf32>, vector<16x25xf32> -> vector<16x25xf32>
    %328 = arith.addf %318, %327 : vector<16x25xf32>
    %c0_195 = arith.constant 0 : index
    %c0_196 = arith.constant 0 : index
    %c0_197 = arith.constant 0 : index
    %329 = vector.load %arg6[%c0_195, %c0_196, %c0_197] : memref<1x16x25xf32, #tpu.memory_space<vmem>>, vector<1x16x25xf32>
    %330 = vector.shape_cast %329 : vector<1x16x25xf32> to vector<16x25xf32>
    %331 = vector.shape_cast %328 : vector<16x25xf32> to vector<1x16x25xf32>
    tpu.vector_store %arg6[%c0_195, %c0_196, %c0_197], %331 {strides = array<i32>} : memref<1x16x25xf32, #tpu.memory_space<vmem>>, vector<1x16x25xf32>,
    return
  }
  func.func @transform_0(%arg0: i32) -> (i32, i32, i32) {
    %c0_i32 = arith.constant 0 : i32
    %c0_i32_0 = arith.constant 0 : i32
    %c0_i32_1 = arith.constant 0 : i32
    return %arg0, %c0_i32, %c0_i32_0 : i32, i32, i32
  }
  func.func @transform_1(%arg0: i32) -> (i32, i32, i32) {
    %c0_i32 = arith.constant 0 : i32
    %c0_i32_0 = arith.constant 0 : i32
    %c0_i32_1 = arith.constant 0 : i32
    %c0_i32_2 = arith.constant 0 : i32
    return %c0_i32, %c0_i32_0, %c0_i32_1 : i32, i32, i32
  }
  func.func @transform_2(%arg0: i32) -> (i32, i32) {
    %c0_i32 = arith.constant 0 : i32
    %c0_i32_0 = arith.constant 0 : i32
    %c0_i32_1 = arith.constant 0 : i32
    return %c0_i32, %c0_i32_0 : i32, i32
  }
  func.func @transform_3(%arg0: i32) -> (i32, i32, i32) {
    %c0_i32 = arith.constant 0 : i32
    %c0_i32_0 = arith.constant 0 : i32
    %c0_i32_1 = arith.constant 0 : i32
    %c0_i32_2 = arith.constant 0 : i32
    return %c0_i32, %c0_i32_0, %c0_i32_1 : i32, i32, i32
  }
  func.func @transform_4(%arg0: i32) -> (i32, i32) {
    %c0_i32 = arith.constant 0 : i32
    %c0_i32_0 = arith.constant 0 : i32
    %c0_i32_1 = arith.constant 0 : i32
    return %c0_i32, %c0_i32_0 : i32, i32
  }
  func.func @transform_5(%arg0: i32) -> (i32, i32, i32) {
    %c0_i32 = arith.constant 0 : i32
    %c0_i32_0 = arith.constant 0 : i32
    %c0_i32_1 = arith.constant 0 : i32
    return %arg0, %c0_i32, %c0_i32_0 : i32, i32, i32
  }
}

</mosaic_0001>

<llo_original>
// kernel: _lenet_forward_impl.1
$region0: #{_lenet_forward_impl.1}
  #allocation0 [shape = 'u32[]', space=smem, size = 0x4, offset = 0x4, fixed_abs, tag = 'smem constant byte address 0x4 - core index']
  #allocation1 [shape = 'u32[72,128]{1,0:T(1,128)}', space=vmem, size = 0x9000, scoped, tag = 'internal scratch']
  %s0 = inlined_call_operand.vmem [shape: f32[2,3,1024], index: 0, kind: input, shape index: {}]
  %s1 = inlined_call_operand.vmem [shape: f32[25,6,3], index: 1, kind: input, shape index: {}]
  %s2 = inlined_call_operand.vmem [shape: f32[6,1], index: 2, kind: input, shape index: {}]
  %s3 = inlined_call_operand.vmem [shape: f32[25,16,6], index: 3, kind: input, shape index: {}]
  %s4 = inlined_call_operand.vmem [shape: f32[16,1], index: 4, kind: input, shape index: {}]
  %s5 = inlined_call_operand.vmem [shape: f32[2,16,25], index: 5, kind: output, shape index: {}]
  %s6 = sld [smem:[#allocation0]]
  $region53: #{_lenet_forward_impl.1} parent=0
    _
  %s8 = ssub.s32 1, %s6
  %s9 = scalar_select 0, %s8, %s6
  loop: start=0, step=1, limit=4
  $region2: #{_lenet_forward_impl.1} parent=0 // loop_pre_header
    _
  $region3: #{_lenet_forward_impl.1} parent=0 // loop_header
    %s11 = sphi 0, %s15
    %p12 = scmp.ge.s32.totalorder %s11, 4
    %s21 = sphi 0, %s23
    %s24 = sphi 0, %s21
    %s25 = sphi 0, %s24
    %s41 = sphi 0, %s25
    %s45 = sphi 0, %s45
    %s47 = sphi 0, %s45
    %s48 = sphi 0, %s47
    %s62 = sphi 0, %s48
    %s66 = sphi 0, %s66
    %s68 = sphi 0, %s66
    %s69 = sphi 0, %s68
    %s83 = sphi 0, %s69
    %s87 = sphi 0, %s87
    %s89 = sphi 0, %s87
    %s90 = sphi 0, %s89
    %s104 = sphi 0, %s90
    %s108 = sphi 0, %s108
    %s110 = sphi 0, %s108
    %s111 = sphi 0, %s110
    %s125 = sphi 0, %s111
    %s131 = sphi 0, %s133
    %s134 = sphi 0, %s131
    %s135 = sphi 0, %s134
    %s151 = sphi 0, %s135
  $region4: #{_lenet_forward_impl.1} parent=0 // loop_header_branch
    %14 = sbr.rel (%p12) target = $region8
  $region5: #{_lenet_forward_impl.1} parent=0 // loop_body
    %s16 = ssub.s32 %s11, 1
    %s17 = ssub.s32 %s11, 2
    %s18 = sadd.s32 %s11, 1
    %s19 = ssub.s32 %s11, %s18
    %p20 = scmp.eq.s32.totalorder %s19, 0
    %s22 = sadd.s32 %s21, 1
    %s23 = scalar_select %p20, %s21, %s22
    %p26 = pneg %p20
    %p27 = scmp.eq.s32.totalorder %s11, 1
    %p28 = por %p26, %p27
    %p29 = scmp.ne.s32.totalorder %s21, %s24
    %p30 = scmp.eq.s32.totalorder %s11, 0
    %p31 = por %p29, %p30
    %p32 = scmp.ne.s32.totalorder %s21, %s24
    %p33 = scmp.eq.s32.totalorder %s16, 1
    %p34 = por %p32, %p33
    %p35 = scmp.ne.s32.totalorder %s24, %s25
    %p36 = scmp.eq.s32.totalorder %s16, 0
    %p37 = por %p35, %p36
    %p38 = scmp.ne.s32.totalorder %s24, %s25
    %p39 = scmp.eq.s32.totalorder %s17, 1
    %p40 = por %p38, %p39
    %p42 = scmp.ne.s32.totalorder %s25, %s41
    %p43 = scmp.eq.s32.totalorder %s17, 0
    %p44 = por %p42, %p43
    %s46 = sadd.s32 %s45, 1
    %p49 = scmp.eq.s32.totalorder %s11, 1
    %p50 = scmp.ne.s32.totalorder %s45, %s47
    %p51 = scmp.eq.s32.totalorder %s11, 0
    %p52 = por %p50, %p51
    %p53 = scmp.ne.s32.totalorder %s45, %s47
    %p54 = scmp.eq.s32.totalorder %s16, 1
    %p55 = por %p53, %p54
    %p56 = scmp.ne.s32.totalorder %s47, %s48
    %p57 = scmp.eq.s32.totalorder %s16, 0
    %p58 = por %p56, %p57
    %p59 = scmp.ne.s32.totalorder %s47, %s48
    %p60 = scmp.eq.s32.totalorder %s17, 1
    %p61 = por %p59, %p60
    %p63 = scmp.ne.s32.totalorder %s48, %s62
    %p64 = scmp.eq.s32.totalorder %s17, 0
    %p65 = por %p63, %p64
    %s67 = sadd.s32 %s66, 1
    %p70 = scmp.eq.s32.totalorder %s11, 1
    %p71 = scmp.ne.s32.totalorder %s66, %s68
    %p72 = scmp.eq.s32.totalorder %s11, 0
    %p73 = por %p71, %p72
    %p74 = scmp.ne.s32.totalorder %s66, %s68
    %p75 = scmp.eq.s32.totalorder %s16, 1
    %p76 = por %p74, %p75
    %p77 = scmp.ne.s32.totalorder %s68, %s69
    %p78 = scmp.eq.s32.totalorder %s16, 0
    %p79 = por %p77, %p78
    %p80 = scmp.ne.s32.totalorder %s68, %s69
    %p81 = scmp.eq.s32.totalorder %s17, 1
    %p82 = por %p80, %p81
    %p84 = scmp.ne.s32.totalorder %s69, %s83
    %p85 = scmp.eq.s32.totalorder %s17, 0
    %p86 = por %p84, %p85
    %s88 = sadd.s32 %s87, 1
    %p91 = scmp.eq.s32.totalorder %s11, 1
    %p92 = scmp.ne.s32.totalorder %s87, %s89
    %p93 = scmp.eq.s32.totalorder %s11, 0
    %p94 = por %p92, %p93
    %p95 = scmp.ne.s32.totalorder %s87, %s89
    %p96 = scmp.eq.s32.totalorder %s16, 1
    %p97 = por %p95, %p96
    %p98 = scmp.ne.s32.totalorder %s89, %s90
    %p99 = scmp.eq.s32.totalorder %s16, 0
    %p100 = por %p98, %p99
    %p101 = scmp.ne.s32.totalorder %s89, %s90
    %p102 = scmp.eq.s32.totalorder %s17, 1
    %p103 = por %p101, %p102
    %p105 = scmp.ne.s32.totalorder %s90, %s104
    %p106 = scmp.eq.s32.totalorder %s17, 0
    %p107 = por %p105, %p106
    %s109 = sadd.s32 %s108, 1
    %p112 = scmp.eq.s32.totalorder %s11, 1
    %p113 = scmp.ne.s32.totalorder %s108, %s110
    %p114 = scmp.eq.s32.totalorder %s11, 0
    %p115 = por %p113, %p114
    %p116 = scmp.ne.s32.totalorder %s108, %s110
    %p117 = scmp.eq.s32.totalorder %s16, 1
    %p118 = por %p116, %p117
    %p119 = scmp.ne.s32.totalorder %s110, %s111
    %p120 = scmp.eq.s32.totalorder %s16, 0
    %p121 = por %p119, %p120
    %p122 = scmp.ne.s32.totalorder %s110, %s111
    %p123 = scmp.eq.s32.totalorder %s17, 1
    %p124 = por %p122, %p123
    %p126 = scmp.ne.s32.totalorder %s111, %s125
    %p127 = scmp.eq.s32.totalorder %s17, 0
    %p128 = por %p126, %p127
    %s129 = ssub.s32 %s11, %s18
    %p130 = scmp.eq.s32.totalorder %s129, 0
    %s132 = sadd.s32 %s131, 1
    %s133 = scalar_select %p130, %s131, %s132
    %p136 = pneg %p130
    %p137 = scmp.eq.s32.totalorder %s11, 1
    %p138 = por %p136, %p137
    %p139 = scmp.ne.s32.totalorder %s131, %s134
    %p140 = scmp.eq.s32.totalorder %s11, 0
    %p141 = por %p139, %p140
    %p142 = scmp.ne.s32.totalorder %s131, %s134
    %p143 = scmp.eq.s32.totalorder %s16, 1
    %p144 = por %p142, %p143
    %p145 = scmp.ne.s32.totalorder %s134, %s135
    %p146 = scmp.eq.s32.totalorder %s16, 0
    %p147 = por %p145, %p146
    %p148 = scmp.ne.s32.totalorder %s134, %s135
    %p149 = scmp.eq.s32.totalorder %s17, 1
    %p150 = por %p148, %p149
    %p152 = scmp.ne.s32.totalorder %s135, %s151
    %p153 = scmp.eq.s32.totalorder %s17, 0
    %p154 = por %p152, %p153
    %p155 = scmp.le.s32.totalorder 1, %s11
    %p156 = scmp.lt.s32.totalorder %s11, 3
    %p157 = pnand %p155, %p156
    %p158 = pneg %p157
    // Predicated region
    $region9: #{_lenet_forward_impl.1} parent=5 // pred_check
      _
    $region10: #{_lenet_forward_impl.1} parent=5 // pred_check_branch
      %160 = sbr.rel (%p157) target = $region12
    $region11: #{_lenet_forward_impl.1} parent=5 // pred_region
      %s161 = ssub.s32 %s11, 1
      // Predicated region
      $region13: #{_lenet_forward_impl.1} parent=11 // pred_check
        %p162 = pneg %p58
      $region14: #{_lenet_forward_impl.1} parent=11 // pred_check_branch
        %164 = sbr.rel (%p162) target = $region16
      $region15: #{_lenet_forward_impl.1} parent=11 // pred_region
        _
      $region16: #{_lenet_forward_impl.1} parent=11 // pred_fallthru
        _
      // Predicated region
      $region17: #{_lenet_forward_impl.1} parent=11 // pred_check
        %p165 = pneg %p79
      $region18: #{_lenet_forward_impl.1} parent=11 // pred_check_branch
        %167 = sbr.rel (%p165) target = $region20
      $region19: #{_lenet_forward_impl.1} parent=11 // pred_region
        _
      $region20: #{_lenet_forward_impl.1} parent=11 // pred_fallthru
        _
      // Predicated region
      $region21: #{_lenet_forward_impl.1} parent=11 // pred_check
        %p168 = pneg %p100
      $region22: #{_lenet_forward_impl.1} parent=11 // pred_check_branch
        %170 = sbr.rel (%p168) target = $region24
      $region23: #{_lenet_forward_impl.1} parent=11 // pred_region
        _
      $region24: #{_lenet_forward_impl.1} parent=11 // pred_fallthru
        _
      // Predicated region
      $region25: #{_lenet_forward_impl.1} parent=11 // pred_check
        %p171 = pneg %p121
      $region26: #{_lenet_forward_impl.1} parent=11 // pred_check_branch
        %173 = sbr.rel (%p171) target = $region28
      $region27: #{_lenet_forward_impl.1} parent=11 // pred_region
        _
      $region28: #{_lenet_forward_impl.1} parent=11 // pred_fallthru
        _
    $region12: #{_lenet_forward_impl.1} parent=5 // pred_fallthru
      _
    %p174 = scmp.lt.s32.totalorder %s11, 2
    // Predicated region
    $region29: #{_lenet_forward_impl.1} parent=5 // pred_check
      %p175 = pneg %p174
    $region30: #{_lenet_forward_impl.1} parent=5 // pred_check_branch
      %177 = sbr.rel (%p175) target = $region32
    $region31: #{_lenet_forward_impl.1} parent=5 // pred_region
      // Predicated region
      $region33: #{_lenet_forward_impl.1} parent=31 // pred_check
        %p178 = pneg %p31
      $region34: #{_lenet_forward_impl.1} parent=31 // pred_check_branch
        %180 = sbr.rel (%p178) target = $region36
      $region35: #{_lenet_forward_impl.1} parent=31 // pred_region
        %p181 = scmp.lt.s32.totalorder %s11, 1
        %s182 = scalar_select %p181, %s11, 1
        %s183 = smul.addr %s182, 8
        %s184 = smul.addr %s183, 4
        %s185 = scalar_lea.vmem %s0, %s184
      $region36: #{_lenet_forward_impl.1} parent=31 // pred_fallthru
        _
    $region32: #{_lenet_forward_impl.1} parent=5 // pred_fallthru
      _
    %p186 = scmp.le.s32.totalorder 1, %s11
    %p187 = scmp.lt.s32.totalorder %s11, 3
    %p188 = pnand %p186, %p187
    %p189 = pneg %p188
    // Predicated region
    $region37: #{_lenet_forward_impl.1} parent=5 // pred_check
      _
    $region38: #{_lenet_forward_impl.1} parent=5 // pred_check_branch
      %191 = sbr.rel (%p188) target = $region40
    $region39: #{_lenet_forward_impl.1} parent=5 // pred_region
      %s192 = ssub.s32 %s11, 1
      %p193 = scmp.lt.s32.totalorder %s16, 1
      %s194 = scalar_select %p193, %s16, 1
      %s195 = smul.addr %s194, 8
      %s196 = smul.addr %s195, 4
      %s197 = scalar_lea.vmem %s0, %s196
      %p198 = pneg %p37
      %p199 = pneg %p34
      %p200 = pneg %p58
      %p201 = pneg %p55
      %p202 = pneg %p79
      %p203 = pneg %p76
      %p204 = pneg %p100
      %p205 = pneg %p97
      %p206 = pneg %p121
      %p207 = pneg %p118
      %p208 = pneg %p147
      %p209 = pneg %p144
      %p210 = scmp.lt.s32.totalorder %s16, 1
      %s211 = scalar_select %p210, %s16, 1
      %s212 = smul.addr %s211, 2
      %s213 = smul.addr %s212, 8
      %s214 = scalar_lea.vmem %s5, %s213
      %p215 = scmp.lt.s32.totalorder %s16, 1
      %s216 = scalar_select %p215, %s16, 1
      %s217 = smul.addr %s216, 8
      %s218 = smul.addr %s217, 4
      %s219 = scalar_lea.vmem %s0, %s218
      %p220 = scmp.lt.s32.totalorder %s16, 1
      %s221 = scalar_select %p220, %s16, 1
      %s222 = smul.addr %s221, 2
      %s223 = smul.addr %s222, 8
      %s224 = scalar_lea.vmem %s5, %s223
      %v225 = vld [vmem:[%s219] sm:$0x77]
      %v226 = vld [vmem:[%s219 + $0x8] sm:$0x77]
      %v227 = vld [vmem:[%s219 + $0x10] sm:$0x77]
      %v228 = vld [vmem:[%s219 + $0x18] sm:$0x77]
      %v229 = vld [vmem:[%s1] sm:$0x3f]
      %s230 = scalar_lea.vmem %s1, 8
      %v231 = vld [vmem:[%s230] sm:$0x3f]
      %236 = vst [vmem:[#allocation1] ss:$2 sm:$0xff] %v225
      %s237 = scalar_lea.vmem [#allocation1], 16
      %238 = vst [vmem:[%s237] ss:$2 sm:$0xff] %v226
      %s239 = scalar_lea.vmem [#allocation1], 32
      %240 = vst [vmem:[%s239] ss:$2 sm:$0xff] %v227
      %s241 = scalar_lea.vmem [#allocation1], 48
      %242 = vst [vmem:[%s241] ss:$2 sm:$0xff] %v228
      %v243 = vld.sshfl [vmem:[#allocation1] sm:$0xff pattern:$0x75316420]
      %v244 = vld.sshfl [vmem:[#allocation1 + $0x8] sm:$0xff pattern:$0x75316420]
      %v245 = vld.sshfl [vmem:[#allocation1 + $0x10] sm:$0xff pattern:$0x75316420]
      %v246 = vld.sshfl [vmem:[#allocation1 + $0x18] sm:$0xff pattern:$0x75316420]
      %v247 = vld.sshfl [vmem:[#allocation1 + $0x20] sm:$0xff pattern:$0x75316420]
      %v248 = vld.sshfl [vmem:[#allocation1 + $0x28] sm:$0xff pattern:$0x75316420]
      %v249 = vld.sshfl [vmem:[#allocation1 + $0x30] sm:$0xff pattern:$0x75316420]
      %250 = vrot.lane.b32.xlu0 %v243, 127
      %v251 = vpop.permute.xlu0 %250
      %252 = vrot.lane.b32.xlu0 %v244, 127
      %v253 = vpop.permute.xlu0 %252
      %254 = vrot.lane.b32.xlu0 %v245, 127
      %v255 = vpop.permute.xlu0 %254
      %256 = vrot.lane.b32.xlu0 %v246, 127
      %v257 = vpop.permute.xlu0 %256
      %258 = vrot.lane.b32.xlu0 %v247, 127
      %v259 = vpop.permute.xlu0 %258
      %260 = vrot.lane.b32.xlu0 %v248, 127
      %v261 = vpop.permute.xlu0 %260
      %262 = vrot.lane.b32.xlu0 %v249, 127
      %v263 = vpop.permute.xlu0 %262
      %vm264 = vcmask 1039360
      %v265 = vsel %vm264, %v251, %v253
      %v266 = vsel %vm264, %v253, %v255
      %v267 = vsel %vm264, %v255, %v257
      %v268 = vsel %vm264, %v257, %v259
      %v269 = vsel %vm264, %v259, %v261
      %v270 = vsel %vm264, %v261, %v263
      %vm271 = vcmask 23552
      %v273 = vsel %vm271, %v231, 0
      %vm275 = vcmask 1042432
      %v276 = vsel %vm275, %v265, 0
      %v278 = vsel %vm275, %v266, 0
      %v280 = vsel %vm275, %v267, 0
      %v282 = vsel %vm275, %v268, 0
      %v284 = vsel %vm275, %v269, 0
      %v286 = vsel %vm275, %v270, 0
      %v288 = vsel %vm275, %v263, 0
      %290 = vmatpush.msra.mxu0 0.0
      %291 = vmatpush.msra.mxu0 0.0
      %292 = vmatpush.msra.mxu0 0.0
      %293 = vmatpush.msra.mxu0 0.0
      %294 = vmatpush.msra.mxu0 0.0
      %295 = vmatpush.msra.mxu0 0.0
      %296 = vmatpush.msra.mxu0 0.0
      %297 = vmatpush.msra.mxu0 0.0
      %298 = vmatpush.msra.mxu0 0.0
      %299 = vmatpush.msra.mxu0 0.0
      %300 = vmatpush.msra.mxu0 0.0
      %301 = vmatpush.msra.mxu0 0.0
      %302 = vmatpush.msra.mxu0 0.0
      %303 = vmatpush.msra.mxu0 0.0
      %304 = vmatpush.msra.mxu0 0.0
      %305 = vmatpush.msra.mxu0 %v276
      %306 = vmatmul.f32.gmra.mxu0 %v273
      %v307 = vpop.f32.mrf.mxu0
      %v308 = vadd.f32 0.0, %v307
      %309 = vdwg.mxu0
      %310 = vmatpush.msra.mxu0 0.0
      %311 = vmatpush.msra.mxu0 0.0
      %312 = vmatpush.msra.mxu0 0.0
      %313 = vmatpush.msra.mxu0 0.0
      %314 = vmatpush.msra.mxu0 0.0
      %315 = vmatpush.msra.mxu0 0.0
      %316 = vmatpush.msra.mxu0 0.0
      %317 = vmatpush.msra.mxu0 0.0
      %318 = vmatpush.msra.mxu0 0.0
      %319 = vmatpush.msra.mxu0 0.0
      %320 = vmatpush.msra.mxu0 0.0
      %321 = vmatpush.msra.mxu0 0.0
      %322 = vmatpush.msra.mxu0 0.0
      %323 = vmatpush.msra.mxu0 0.0
      %324 = vmatpush.msra.mxu0 0.0
      %325 = vmatpush.msra.mxu0 %v278
      %326 = vmatmul.f32.gmra.mxu0 %v273
      %v327 = vpop.f32.mrf.mxu0
      %v328 = vadd.f32 0.0, %v327
      %329 = vdwg.mxu0
      %330 = vmatpush.msra.mxu0 0.0
      %331 = vmatpush.msra.mxu0 0.0
      %332 = vmatpush.msra.mxu0 0.0
      %333 = vmatpush.msra.mxu0 0.0
      %334 = vmatpush.msra.mxu0 0.0
      %335 = vmatpush.msra.mxu0 0.0
      %336 = vmatpush.msra.mxu0 0.0
      %337 = vmatpush.msra.mxu0 0.0
      %338 = vmatpush.msra.mxu0 0.0
      %339 = vmatpush.msra.mxu0 0.0
      %340 = vmatpush.msra.mxu0 0.0
      %341 = vmatpush.msra.mxu0 0.0
      %342 = vmatpush.msra.mxu0 0.0
      %343 = vmatpush.msra.mxu0 0.0
      %344 = vmatpush.msra.mxu0 0.0
      %345 = vmatpush.msra.mxu0 %v280
      %346 = vmatmul.f32.gmra.mxu0 %v273
      %v347 = vpop.f32.mrf.mxu0
      %v348 = vadd.f32 0.0, %v347
      %349 = vdwg.mxu0
      %350 = vmatpush.msra.mxu0 0.0
      %351 = vmatpush.msra.mxu0 0.0
      %352 = vmatpush.msra.mxu0 0.0
      %353 = vmatpush.msra.mxu0 0.0
      %354 = vmatpush.msra.mxu0 0.0
      %355 = vmatpush.msra.mxu0 0.0
      %356 = vmatpush.msra.mxu0 0.0
      %357 = vmatpush.msra.mxu0 0.0
      %358 = vmatpush.msra.mxu0 0.0
      %359 = vmatpush.msra.mxu0 0.0
      %360 = vmatpush.msra.mxu0 0.0
      %361 = vmatpush.msra.mxu0 0.0
      %362 = vmatpush.msra.mxu0 0.0
      %363 = vmatpush.msra.mxu0 0.0
      %364 = vmatpush.msra.mxu0 0.0
      %365 = vmatpush.msra.mxu0 %v282
      %366 = vmatmul.f32.gmra.mxu0 %v273
      %v367 = vpop.f32.mrf.mxu0
      %v368 = vadd.f32 0.0, %v367
      %369 = vdwg.mxu0
      %370 = vmatpush.msra.mxu0 0.0
      %371 = vmatpush.msra.mxu0 0.0
      %372 = vmatpush.msra.mxu0 0.0
      %373 = vmatpush.msra.mxu0 0.0
      %374 = vmatpush.msra.mxu0 0.0
      %375 = vmatpush.msra.mxu0 0.0
      %376 = vmatpush.msra.mxu0 0.0
      %377 = vmatpush.msra.mxu0 0.0
      %378 = vmatpush.msra.mxu0 0.0
      %379 = vmatpush.msra.mxu0 0.0
      %380 = vmatpush.msra.mxu0 0.0
      %381 = vmatpush.msra.mxu0 0.0
      %382 = vmatpush.msra.mxu0 0.0
      %383 = vmatpush.msra.mxu0 0.0
      %384 = vmatpush.msra.mxu0 0.0
      %385 = vmatpush.msra.mxu0 %v284
      %386 = vmatmul.f32.gmra.mxu0 %v273
      %v387 = vpop.f32.mrf.mxu0
      %v388 = vadd.f32 0.0, %v387
      %389 = vdwg.mxu0
      %390 = vmatpush.msra.mxu0 0.0
      %391 = vmatpush.msra.mxu0 0.0
      %392 = vmatpush.msra.mxu0 0.0
      %393 = vmatpush.msra.mxu0 0.0
      %394 = vmatpush.msra.mxu0 0.0
      %395 = vmatpush.msra.mxu0 0.0
      %396 = vmatpush.msra.mxu0 0.0
      %397 = vmatpush.msra.mxu0 0.0
      %398 = vmatpush.msra.mxu0 0.0
      %399 = vmatpush.msra.mxu0 0.0
      %400 = vmatpush.msra.mxu0 0.0
      %401 = vmatpush.msra.mxu0 0.0
      %402 = vmatpush.msra.mxu0 0.0
      %403 = vmatpush.msra.mxu0 0.0
      %404 = vmatpush.msra.mxu0 0.0
      %405 = vmatpush.msra.mxu0 %v286
      %406 = vmatmul.f32.gmra.mxu0 %v273
      %v407 = vpop.f32.mrf.mxu0
      %v408 = vadd.f32 0.0, %v407
      %409 = vdwg.mxu0
      %410 = vmatpush.msra.mxu0 0.0
      %411 = vmatpush.msra.mxu0 0.0
      %412 = vmatpush.msra.mxu0 0.0
      %413 = vmatpush.msra.mxu0 0.0
      %414 = vmatpush.msra.mxu0 0.0
      %415 = vmatpush.msra.mxu0 0.0
      %416 = vmatpush.msra.mxu0 0.0
      %417 = vmatpush.msra.mxu0 0.0
      %418 = vmatpush.msra.mxu0 0.0
      %419 = vmatpush.msra.mxu0 0.0
      %420 = vmatpush.msra.mxu0 0.0
      %421 = vmatpush.msra.mxu0 0.0
      %422 = vmatpush.msra.mxu0 0.0
      %423 = vmatpush.msra.mxu0 0.0
      %424 = vmatpush.msra.mxu0 0.0
      %425 = vmatpush.msra.mxu0 %v288
      %426 = vmatmul.f32.gmra.mxu0 %v273
      %v427 = vpop.f32.mrf.mxu0
      %v428 = vadd.f32 0.0, %v427
      %429 = vdwg.mxu0
      %430 = vst [vmem:[#allocation1] ss:$2 sm:$0xff] %v225
      %s431 = scalar_lea.vmem [#allocation1], 16
      %432 = vst [vmem:[%s431] ss:$2 sm:$0xff] %v226
      %s433 = scalar_lea.vmem [#allocation1], 32
      %434 = vst [vmem:[%s433] ss:$2 sm:$0xff] %v227
      %s435 = scalar_lea.vmem [#allocation1], 48
      %436 = vst [vmem:[%s435] ss:$2 sm:$0xff] %v228
      %v437 = vld.sshfl [vmem:[#allocation1] sm:$0xff pattern:$0x75316420]
      %v438 = vld.sshfl [vmem:[#allocation1 + $0x8] sm:$0xff pattern:$0x75316420]
      %v439 = vld.sshfl [vmem:[#allocation1 + $0x10] sm:$0xff pattern:$0x75316420]
      %v440 = vld.sshfl [vmem:[#allocation1 + $0x18] sm:$0xff pattern:$0x75316420]
      %v441 = vld.sshfl [vmem:[#allocation1 + $0x20] sm:$0xff pattern:$0x75316420]
      %v442 = vld.sshfl [vmem:[#allocation1 + $0x28] sm:$0xff pattern:$0x75316420]
      %v443 = vld.sshfl [vmem:[#allocation1 + $0x30] sm:$0xff pattern:$0x75316420]
      %v445 = vsel %vm271, %v229, 0
      %v447 = vsel %vm275, %v437, 0
      %v449 = vsel %vm275, %v438, 0
      %v451 = vsel %vm275, %v439, 0
      %v453 = vsel %vm275, %v440, 0
      %v455 = vsel %vm275, %v441, 0
      %v457 = vsel %vm275, %v442, 0
      %v459 = vsel %vm275, %v443, 0
      %461 = vmatpush.msra.mxu0 0.0
      %462 = vmatpush.msra.mxu0 0.0
      %463 = vmatpush.msra.mxu0 0.0
      %464 = vmatpush.msra.mxu0 0.0
      %465 = vmatpush.msra.mxu0 0.0
      %466 = vmatpush.msra.mxu0 0.0
      %467 = vmatpush.msra.mxu0 0.0
      %468 = vmatpush.msra.mxu0 0.0
      %469 = vmatpush.msra.mxu0 0.0
      %470 = vmatpush.msra.mxu0 0.0
      %471 = vmatpush.msra.mxu0 0.0
      %472 = vmatpush.msra.mxu0 0.0
      %473 = vmatpush.msra.mxu0 0.0
      %474 = vmatpush.msra.mxu0 0.0
      %475 = vmatpush.msra.mxu0 0.0
      %476 = vmatpush.msra.mxu0 %v447
      %477 = vmatmul.f32.gmra.mxu0 %v445
      %v478 = vpop.f32.mrf.mxu0
      %v479 = vadd.f32 %v308, %v478
      %480 = vdwg.mxu0
      %481 = vmatpush.msra.mxu0 0.0
      %482 = vmatpush.msra.mxu0 0.0
      %483 = vmatpush.msra.mxu0 0.0
      %484 = vmatpush.msra.mxu0 0.0
      %485 = vmatpush.msra.mxu0 0.0
      %486 = vmatpush.msra.mxu0 0.0
      %487 = vmatpush.msra.mxu0 0.0
      %488 = vmatpush.msra.mxu0 0.0
      %489 = vmatpush.msra.mxu0 0.0
      %490 = vmatpush.msra.mxu0 0.0
      %491 = vmatpush.msra.mxu0 0.0
      %492 = vmatpush.msra.mxu0 0.0
      %493 = vmatpush.msra.mxu0 0.0
      %494 = vmatpush.msra.mxu0 0.0
      %495 = vmatpush.msra.mxu0 0.0
      %496 = vmatpush.msra.mxu0 %v449
      %497 = vmatmul.f32.gmra.mxu0 %v445
      %v498 = vpop.f32.mrf.mxu0
      %v499 = vadd.f32 %v328, %v498
      %500 = vdwg.mxu0
      %501 = vmatpush.msra.mxu0 0.0
      %502 = vmatpush.msra.mxu0 0.0
      %503 = vmatpush.msra.mxu0 0.0
      %504 = vmatpush.msra.mxu0 0.0
      %505 = vmatpush.msra.mxu0 0.0
      %506 = vmatpush.msra.mxu0 0.0
      %507 = vmatpush.msra.mxu0 0.0
      %508 = vmatpush.msra.mxu0 0.0
      %509 = vmatpush.msra.mxu0 0.0
      %510 = vmatpush.msra.mxu0 0.0
      %511 = vmatpush.msra.mxu0 0.0
      %512 = vmatpush.msra.mxu0 0.0
      %513 = vmatpush.msra.mxu0 0.0
      %514 = vmatpush.msra.mxu0 0.0
      %515 = vmatpush.msra.mxu0 0.0
      %516 = vmatpush.msra.mxu0 %v451
      %517 = vmatmul.f32.gmra.mxu0 %v445
      %v518 = vpop.f32.mrf.mxu0
      %v519 = vadd.f32 %v348, %v518
      %520 = vdwg.mxu0
      %521 = vmatpush.msra.mxu0 0.0
      %522 = vmatpush.msra.mxu0 0.0
      %523 = vmatpush.msra.mxu0 0.0
      %524 = vmatpush.msra.mxu0 0.0
      %525 = vmatpush.msra.mxu0 0.0
      %526 = vmatpush.msra.mxu0 0.0
      %527 = vmatpush.msra.mxu0 0.0
      %528 = vmatpush.msra.mxu0 0.0
      %529 = vmatpush.msra.mxu0 0.0
      %530 = vmatpush.msra.mxu0 0.0
      %531 = vmatpush.msra.mxu0 0.0
      %532 = vmatpush.msra.mxu0 0.0
      %533 = vmatpush.msra.mxu0 0.0
      %534 = vmatpush.msra.mxu0 0.0
      %535 = vmatpush.msra.mxu0 0.0
      %536 = vmatpush.msra.mxu0 %v453
      %537 = vmatmul.f32.gmra.mxu0 %v445
      %v538 = vpop.f32.mrf.mxu0
      %v539 = vadd.f32 %v368, %v538
      %540 = vdwg.mxu0
      %541 = vmatpush.msra.mxu0 0.0
      %542 = vmatpush.msra.mxu0 0.0
      %543 = vmatpush.msra.mxu0 0.0
      %544 = vmatpush.msra.mxu0 0.0
      %545 = vmatpush.msra.mxu0 0.0
      %546 = vmatpush.msra.mxu0 0.0
      %547 = vmatpush.msra.mxu0 0.0
      %548 = vmatpush.msra.mxu0 0.0
      %549 = vmatpush.msra.mxu0 0.0
      %550 = vmatpush.msra.mxu0 0.0
      %551 = vmatpush.msra.mxu0 0.0
      %552 = vmatpush.msra.mxu0 0.0
      %553 = vmatpush.msra.mxu0 0.0
      %554 = vmatpush.msra.mxu0 0.0
      %555 = vmatpush.msra.mxu0 0.0
      %556 = vmatpush.msra.mxu0 %v455
      %557 = vmatmul.f32.gmra.mxu0 %v445
      %v558 = vpop.f32.mrf.mxu0
      %v559 = vadd.f32 %v388, %v558
      %560 = vdwg.mxu0
      %561 = vmatpush.msra.mxu0 0.0
      %562 = vmatpush.msra.mxu0 0.0
      %563 = vmatpush.msra.mxu0 0.0
      %564 = vmatpush.msra.mxu0 0.0
      %565 = vmatpush.msra.mxu0 0.0
      %566 = vmatpush.msra.mxu0 0.0
      %567 = vmatpush.msra.mxu0 0.0
      %568 = vmatpush.msra.mxu0 0.0
      %569 = vmatpush.msra.mxu0 0.0
      %570 = vmatpush.msra.mxu0 0.0
      %571 = vmatpush.msra.mxu0 0.0
      %572 = vmatpush.msra.mxu0 0.0
      %573 = vmatpush.msra.mxu0 0.0
      %574 = vmatpush.msra.mxu0 0.0
      %575 = vmatpush.msra.mxu0 0.0
      %576 = vmatpush.msra.mxu0 %v457
      %577 = vmatmul.f32.gmra.mxu0 %v445
      %v578 = vpop.f32.mrf.mxu0
      %v579 = vadd.f32 %v408, %v578
      %580 = vdwg.mxu0
      %581 = vmatpush.msra.mxu0 0.0
      %582 = vmatpush.msra.mxu0 0.0
      %583 = vmatpush.msra.mxu0 0.0
      %584 = vmatpush.msra.mxu0 0.0
      %585 = vmatpush.msra.mxu0 0.0
      %586 = vmatpush.msra.mxu0 0.0
      %587 = vmatpush.msra.mxu0 0.0
      %588 = vmatpush.msra.mxu0 0.0
      %589 = vmatpush.msra.mxu0 0.0
      %590 = vmatpush.msra.mxu0 0.0
      %591 = vmatpush.msra.mxu0 0.0
      %592 = vmatpush.msra.mxu0 0.0
      %593 = vmatpush.msra.mxu0 0.0
      %594 = vmatpush.msra.mxu0 0.0
      %595 = vmatpush.msra.mxu0 0.0
      %596 = vmatpush.msra.mxu0 %v459
      %597 = vmatmul.f32.gmra.mxu0 %v445
      %v598 = vpop.f32.mrf.mxu0
      %v599 = vadd.f32 %v428, %v598
      %600 = vdwg.mxu0
      %s601 = scalar_lea.vmem %s1, 16
      %v602 = vld [vmem:[%s601] sm:$0x3f]
      %603 = vst [vmem:[#allocation1] ss:$2 sm:$0xff] %v225
      %s604 = scalar_lea.vmem [#allocation1], 16
      %605 = vst [vmem:[%s604] ss:$2 sm:$0xff] %v226
      %s606 = scalar_lea.vmem [#allocation1], 32
      %607 = vst [vmem:[%s606] ss:$2 sm:$0xff] %v227
      %s608 = scalar_lea.vmem [#allocation1], 48
      %609 = vst [vmem:[%s608] ss:$2 sm:$0xff] %v228
      %v610 = vld.sshfl [vmem:[#allocation1] sm:$0xff pattern:$0x75316420]
      %v611 = vld.sshfl [vmem:[#allocation1 + $0x8] sm:$0xff pattern:$0x75316420]
      %v612 = vld.sshfl [vmem:[#allocation1 + $0x10] sm:$0xff pattern:$0x75316420]
      %v613 = vld.sshfl [vmem:[#allocation1 + $0x18] sm:$0xff pattern:$0x75316420]
      %v614 = vld.sshfl [vmem:[#allocation1 + $0x20] sm:$0xff pattern:$0x75316420]
      %v615 = vld.sshfl [vmem:[#allocation1 + $0x28] sm:$0xff pattern:$0x75316420]
      %v616 = vld.sshfl [vmem:[#allocation1 + $0x30] sm:$0xff pattern:$0x75316420]
      %617 = vrot.lane.b32.xlu0 %v610, 126
      %v618 = vpop.permute.xlu0 %617
      %619 = vrot.lane.b32.xlu0 %v611, 126
      %v620 = vpop.permute.xlu0 %619
      %621 = vrot.lane.b32.xlu0 %v612, 126
      %v622 = vpop.permute.xlu0 %621
      %623 = vrot.lane.b32.xlu0 %v613, 126
      %v624 = vpop.permute.xlu0 %623
      %625 = vrot.lane.b32.xlu0 %v614, 126
      %v626 = vpop.permute.xlu0 %625
      %627 = vrot.lane.b32.xlu0 %v615, 126
      %v628 = vpop.permute.xlu0 %627
      %629 = vrot.lane.b32.xlu0 %v616, 126
      %v630 = vpop.permute.xlu0 %629
      %vm631 = vcmask 1031168
      %v632 = vsel %vm631, %v618, %v620
      %v633 = vsel %vm631, %v620, %v622
      %v634 = vsel %vm631, %v622, %v624
      %v635 = vsel %vm631, %v624, %v626
      %v636 = vsel %vm631, %v626, %v628
      %v637 = vsel %vm631, %v628, %v630
      %v639 = vsel %vm271, %v602, 0
      %v641 = vsel %vm275, %v632, 0
      %v643 = vsel %vm275, %v633, 0
      %v645 = vsel %vm275, %v634, 0
      %v647 = vsel %vm275, %v635, 0
      %v649 = vsel %vm275, %v636, 0
      %v651 = vsel %vm275, %v637, 0
      %v653 = vsel %vm275, %v630, 0
      %655 = vmatpush.msra.mxu0 0.0
      %656 = vmatpush.msra.mxu0 0.0
      %657 = vmatpush.msra.mxu0 0.0
      %658 = vmatpush.msra.mxu0 0.0
      %659 = vmatpush.msra.mxu0 0.0
      %660 = vmatpush.msra.mxu0 0.0
      %661 = vmatpush.msra.mxu0 0.0
      %662 = vmatpush.msra.mxu0 0.0
      %663 = vmatpush.msra.mxu0 0.0
      %664 = vmatpush.msra.mxu0 0.0
      %665 = vmatpush.msra.mxu0 0.0
      %666 = vmatpush.msra.mxu0 0.0
      %667 = vmatpush.msra.mxu0 0.0
      %668 = vmatpush.msra.mxu0 0.0
      %669 = vmatpush.msra.mxu0 0.0
      %670 = vmatpush.msra.mxu0 %v641
      %671 = vmatmul.f32.gmra.mxu0 %v639
      %v672 = vpop.f32.mrf.mxu0
      %v673 = vadd.f32 0.0, %v672
      %674 = vdwg.mxu0
      %675 = vmatpush.msra.mxu0 0.0
      %676 = vmatpush.msra.mxu0 0.0
      %677 = vmatpush.msra.mxu0 0.0
      %678 = vmatpush.msra.mxu0 0.0
      %679 = vmatpush.msra.mxu0 0.0
      %680 = vmatpush.msra.mxu0 0.0
      %681 = vmatpush.msra.mxu0 0.0
      %682 = vmatpush.msra.mxu0 0.0
      %683 = vmatpush.msra.mxu0 0.0
      %684 = vmatpush.msra.mxu0 0.0
      %685 = vmatpush.msra.mxu0 0.0
      %686 = vmatpush.msra.mxu0 0.0
      %687 = vmatpush.msra.mxu0 0.0
      %688 = vmatpush.msra.mxu0 0.0
      %689 = vmatpush.msra.mxu0 0.0
      %690 = vmatpush.msra.mxu0 %v643
      %691 = vmatmul.f32.gmra.mxu0 %v639
      %v692 = vpop.f32.mrf.mxu0
      %v693 = vadd.f32 0.0, %v692
      %694 = vdwg.mxu0
      %695 = vmatpush.msra.mxu0 0.0
      %696 = vmatpush.msra.mxu0 0.0
      %697 = vmatpush.msra.mxu0 0.0
      %698 = vmatpush.msra.mxu0 0.0
      %699 = vmatpush.msra.mxu0 0.0
      %700 = vmatpush.msra.mxu0 0.0
      %701 = vmatpush.msra.mxu0 0.0
      %702 = vmatpush.msra.mxu0 0.0
      %703 = vmatpush.msra.mxu0 0.0
      %704 = vmatpush.msra.mxu0 0.0
      %705 = vmatpush.msra.mxu0 0.0
      %706 = vmatpush.msra.mxu0 0.0
      %707 = vmatpush.msra.mxu0 0.0
      %708 = vmatpush.msra.mxu0 0.0
      %709 = vmatpush.msra.mxu0 0.0
      %710 = vmatpush.msra.mxu0 %v645
      %711 = vmatmul.f32.gmra.mxu0 %v639
      %v712 = vpop.f32.mrf.mxu0
      %v713 = vadd.f32 0.0, %v712
      %714 = vdwg.mxu0
      %715 = vmatpush.msra.mxu0 0.0
      %716 = vmatpush.msra.mxu0 0.0
      %717 = vmatpush.msra.mxu0 0.0
      %718 = vmatpush.msra.mxu0 0.0
      %719 = vmatpush.msra.mxu0 0.0
      %720 = vmatpush.msra.mxu0 0.0
      %721 = vmatpush.msra.mxu0 0.0
      %722 = vmatpush.msra.mxu0 0.0
      %723 = vmatpush.msra.mxu0 0.0
      %724 = vmatpush.msra.mxu0 0.0
      %725 = vmatpush.msra.mxu0 0.0
      %726 = vmatpush.msra.mxu0 0.0
      %727 = vmatpush.msra.mxu0 0.0
      %728 = vmatpush.msra.mxu0 0.0
      %729 = vmatpush.msra.mxu0 0.0
      %730 = vmatpush.msra.mxu0 %v647
      %731 = vmatmul.f32.gmra.mxu0 %v639
      %v732 = vpop.f32.mrf.mxu0
      %v733 = vadd.f32 0.0, %v732
      %734 = vdwg.mxu0
      %735 = vmatpush.msra.mxu0 0.0
      %736 = vmatpush.msra.mxu0 0.0
      %737 = vmatpush.msra.mxu0 0.0
      %738 = vmatpush.msra.mxu0 0.0
      %739 = vmatpush.msra.mxu0 0.0
      %740 = vmatpush.msra.mxu0 0.0
      %741 = vmatpush.msra.mxu0 0.0
      %742 = vmatpush.msra.mxu0 0.0
      %743 = vmatpush.msra.mxu0 0.0
      %744 = vmatpush.msra.mxu0 0.0
      %745 = vmatpush.msra.mxu0 0.0
      %746 = vmatpush.msra.mxu0 0.0
      %747 = vmatpush.msra.mxu0 0.0
      %748 = vmatpush.msra.mxu0 0.0
      %749 = vmatpush.msra.mxu0 0.0
      %750 = vmatpush.msra.mxu0 %v649
      %751 = vmatmul.f32.gmra.mxu0 %v639
      %v752 = vpop.f32.mrf.mxu0
      %v753 = vadd.f32 0.0, %v752
      %754 = vdwg.mxu0
      %755 = vmatpush.msra.mxu0 0.0
      %756 = vmatpush.msra.mxu0 0.0
      %757 = vmatpush.msra.mxu0 0.0
      %758 = vmatpush.msra.mxu0 0.0
      %759 = vmatpush.msra.mxu0 0.0
      %760 = vmatpush.msra.mxu0 0.0
      %761 = vmatpush.msra.mxu0 0.0
      %762 = vmatpush.msra.mxu0 0.0
      %763 = vmatpush.msra.mxu0 0.0
      %764 = vmatpush.msra.mxu0 0.0
      %765 = vmatpush.msra.mxu0 0.0
      %766 = vmatpush.msra.mxu0 0.0
      %767 = vmatpush.msra.mxu0 0.0
      %768 = vmatpush.msra.mxu0 0.0
      %769 = vmatpush.msra.mxu0 0.0
      %770 = vmatpush.msra.mxu0 %v651
      %771 = vmatmul.f32.gmra.mxu0 %v639
      %v772 = vpop.f32.mrf.mxu0
      %v773 = vadd.f32 0.0, %v772
      %774 = vdwg.mxu0
      %775 = vmatpush.msra.mxu0 0.0
      %776 = vmatpush.msra.mxu0 0.0
      %777 = vmatpush.msra.mxu0 0.0
      %778 = vmatpush.msra.mxu0 0.0
      %779 = vmatpush.msra.mxu0 0.0
      %780 = vmatpush.msra.mxu0 0.0
      %781 = vmatpush.msra.mxu0 0.0
      %782 = vmatpush.msra.mxu0 0.0
      %783 = vmatpush.msra.mxu0 0.0
      %784 = vmatpush.msra.mxu0 0.0
      %785 = vmatpush.msra.mxu0 0.0
      %786 = vmatpush.msra.mxu0 0.0
      %787 = vmatpush.msra.mxu0 0.0
      %788 = vmatpush.msra.mxu0 0.0
      %789 = vmatpush.msra.mxu0 0.0
      %790 = vmatpush.msra.mxu0 %v653
      %791 = vmatmul.f32.gmra.mxu0 %v639
      %v792 = vpop.f32.mrf.mxu0
      %v793 = vadd.f32 0.0, %v792
      %794 = vdwg.mxu0
      %v795 = vadd.f32 %v479, %v673
      %v796 = vadd.f32 %v499, %v693
      %v797 = vadd.f32 %v519, %v713
      %v798 = vadd.f32 %v539, %v733
      %v799 = vadd.f32 %v559, %v753
      %v800 = vadd.f32 %v579, %v773
      %v801 = vadd.f32 %v599, %v793
      %s802 = scalar_lea.vmem %s1, 24
      %v803 = vld [vmem:[%s802] sm:$0x3f]
      %804 = vst [vmem:[#allocation1] ss:$2 sm:$0xff] %v225
      %s805 = scalar_lea.vmem [#allocation1], 16
      %806 = vst [vmem:[%s805] ss:$2 sm:$0xff] %v226
      %s807 = scalar_lea.vmem [#allocation1], 32
      %808 = vst [vmem:[%s807] ss:$2 sm:$0xff] %v227
      %s809 = scalar_lea.vmem [#allocation1], 48
      %810 = vst [vmem:[%s809] ss:$2 sm:$0xff] %v228
      %v811 = vld.sshfl [vmem:[#allocation1] sm:$0xff pattern:$0x75316420]
      %v812 = vld.sshfl [vmem:[#allocation1 + $0x8] sm:$0xff pattern:$0x75316420]
      %v813 = vld.sshfl [vmem:[#allocation1 + $0x10] sm:$0xff pattern:$0x75316420]
      %v814 = vld.sshfl [vmem:[#allocation1 + $0x18] sm:$0xff pattern:$0x75316420]
      %v815 = vld.sshfl [vmem:[#allocation1 + $0x20] sm:$0xff pattern:$0x75316420]
      %v816 = vld.sshfl [vmem:[#allocation1 + $0x28] sm:$0xff pattern:$0x75316420]
      %v817 = vld.sshfl [vmem:[#allocation1 + $0x30] sm:$0xff pattern:$0x75316420]
      %818 = vrot.lane.b32.xlu0 %v811, 125
      %v819 = vpop.permute.xlu0 %818
      %820 = vrot.lane.b32.xlu0 %v812, 125
      %v821 = vpop.permute.xlu0 %820
      %822 = vrot.lane.b32.xlu0 %v813, 125
      %v823 = vpop.permute.xlu0 %822
      %824 = vrot.lane.b32.xlu0 %v814, 125
      %v825 = vpop.permute.xlu0 %824
      %826 = vrot.lane.b32.xlu0 %v815, 125
      %v827 = vpop.permute.xlu0 %826
      %828 = vrot.lane.b32.xlu0 %v816, 125
      %v829 = vpop.permute.xlu0 %828
      %830 = vrot.lane.b32.xlu0 %v817, 125
      %v831 = vpop.permute.xlu0 %830
      %vm832 = vcmask 1022976
      %v833 = vsel %vm832, %v819, %v821
      %v834 = vsel %vm832, %v821, %v823
      %v835 = vsel %vm832, %v823, %v825
      %v836 = vsel %vm832, %v825, %v827
      %v837 = vsel %vm832, %v827, %v829
      %v838 = vsel %vm832, %v829, %v831
      %v840 = vsel %vm271, %v803, 0
      %v842 = vsel %vm275, %v833, 0
      %v844 = vsel %vm275, %v834, 0
      %v846 = vsel %vm275, %v835, 0
      %v848 = vsel %vm275, %v836, 0
      %v850 = vsel %vm275, %v837, 0
      %v852 = vsel %vm275, %v838, 0
      %v854 = vsel %vm275, %v831, 0
      %856 = vmatpush.msra.mxu0 0.0
      %857 = vmatpush.msra.mxu0 0.0
      %858 = vmatpush.msra.mxu0 0.0
      %859 = vmatpush.msra.mxu0 0.0
      %860 = vmatpush.msra.mxu0 0.0
      %861 = vmatpush.msra.mxu0 0.0
      %862 = vmatpush.msra.mxu0 0.0
      %863 = vmatpush.msra.mxu0 0.0
      %864 = vmatpush.msra.mxu0 0.0
      %865 = vmatpush.msra.mxu0 0.0
      %866 = vmatpush.msra.mxu0 0.0
      %867 = vmatpush.msra.mxu0 0.0
      %868 = vmatpush.msra.mxu0 0.0
      %869 = vmatpush.msra.mxu0 0.0
      %870 = vmatpush.msra.mxu0 0.0
      %871 = vmatpush.msra.mxu0 %v842
      %872 = vmatmul.f32.gmra.mxu0 %v840
      %v873 = vpop.f32.mrf.mxu0
      %v874 = vadd.f32 0.0, %v873
      %875 = vdwg.mxu0
      %876 = vmatpush.msra.mxu0 0.0
      %877 = vmatpush.msra.mxu0 0.0
      %878 = vmatpush.msra.mxu0 0.0
      %879 = vmatpush.msra.mxu0 0.0
      %880 = vmatpush.msra.mxu0 0.0
      %881 = vmatpush.msra.mxu0 0.0
      %882 = vmatpush.msra.mxu0 0.0
      %883 = vmatpush.msra.mxu0 0.0
      %884 = vmatpush.msra.mxu0 0.0
      %885 = vmatpush.msra.mxu0 0.0
      %886 = vmatpush.msra.mxu0 0.0
      %887 = vmatpush.msra.mxu0 0.0
      %888 = vmatpush.msra.mxu0 0.0
      %889 = vmatpush.msra.mxu0 0.0
      %890 = vmatpush.msra.mxu0 0.0
      %891 = vmatpush.msra.mxu0 %v844
      %892 = vmatmul.f32.gmra.mxu0 %v840
      %v893 = vpop.f32.mrf.mxu0
      %v894 = vadd.f32 0.0, %v893
      %895 = vdwg.mxu0
      %896 = vmatpush.msra.mxu0 0.0
      %897 = vmatpush.msra.mxu0 0.0
      %898 = vmatpush.msra.mxu0 0.0
      %899 = vmatpush.msra.mxu0 0.0
      %900 = vmatpush.msra.mxu0 0.0
      %901 = vmatpush.msra.mxu0 0.0
      %902 = vmatpush.msra.mxu0 0.0
      %903 = vmatpush.msra.mxu0 0.0
      %904 = vmatpush.msra.mxu0 0.0
      %905 = vmatpush.msra.mxu0 0.0
      %906 = vmatpush.msra.mxu0 0.0
      %907 = vmatpush.msra.mxu0 0.0
      %908 = vmatpush.msra.mxu0 0.0
      %909 = vmatpush.msra.mxu0 0.0
      %910 = vmatpush.msra.mxu0 0.0
      %911 = vmatpush.msra.mxu0 %v846
      %912 = vmatmul.f32.gmra.mxu0 %v840
      %v913 = vpop.f32.mrf.mxu0
      %v914 = vadd.f32 0.0, %v913
      %915 = vdwg.mxu0
      %916 = vmatpush.msra.mxu0 0.0
      %917 = vmatpush.msra.mxu0 0.0
      %918 = vmatpush.msra.mxu0 0.0
      %919 = vmatpush.msra.mxu0 0.0
      %920 = vmatpush.msra.mxu0 0.0
      %921 = vmatpush.msra.mxu0 0.0
      %922 = vmatpush.msra.mxu0 0.0
      %923 = vmatpush.msra.mxu0 0.0
      %924 = vmatpush.msra.mxu0 0.0
      %925 = vmatpush.msra.mxu0 0.0
      %926 = vmatpush.msra.mxu0 0.0
      %927 = vmatpush.msra.mxu0 0.0
      %928 = vmatpush.msra.mxu0 0.0
      %929 = vmatpush.msra.mxu0 0.0
      %930 = vmatpush.msra.mxu0 0.0
      %931 = vmatpush.msra.mxu0 %v848
      %932 = vmatmul.f32.gmra.mxu0 %v840
      %v933 = vpop.f32.mrf.mxu0
      %v934 = vadd.f32 0.0, %v933
      %935 = vdwg.mxu0
      %936 = vmatpush.msra.mxu0 0.0
      %937 = vmatpush.msra.mxu0 0.0
      %938 = vmatpush.msra.mxu0 0.0
      %939 = vmatpush.msra.mxu0 0.0
      %940 = vmatpush.msra.mxu0 0.0
      %941 = vmatpush.msra.mxu0 0.0
      %942 = vmatpush.msra.mxu0 0.0
      %943 = vmatpush.msra.mxu0 0.0
      %944 = vmatpush.msra.mxu0 0.0
      %945 = vmatpush.msra.mxu0 0.0
      %946 = vmatpush.msra.mxu0 0.0
      %947 = vmatpush.msra.mxu0 0.0
      %948 = vmatpush.msra.mxu0 0.0
      %949 = vmatpush.msra.mxu0 0.0
      %950 = vmatpush.msra.mxu0 0.0
      %951 = vmatpush.msra.mxu0 %v850
      %952 = vmatmul.f32.gmra.mxu0 %v840
      %v953 = vpop.f32.mrf.mxu0
      %v954 = vadd.f32 0.0, %v953
      %955 = vdwg.mxu0
      %956 = vmatpush.msra.mxu0 0.0
      %957 = vmatpush.msra.mxu0 0.0
      %958 = vmatpush.msra.mxu0 0.0
      %959 = vmatpush.msra.mxu0 0.0
      %960 = vmatpush.msra.mxu0 0.0
      %961 = vmatpush.msra.mxu0 0.0
      %962 = vmatpush.msra.mxu0 0.0
      %963 = vmatpush.msra.mxu0 0.0
      %964 = vmatpush.msra.mxu0 0.0
      %965 = vmatpush.msra.mxu0 0.0
      %966 = vmatpush.msra.mxu0 0.0
      %967 = vmatpush.msra.mxu0 0.0
      %968 = vmatpush.msra.mxu0 0.0
      %969 = vmatpush.msra.mxu0 0.0
      %970 = vmatpush.msra.mxu0 0.0
      %971 = vmatpush.msra.mxu0 %v852
      %972 = vmatmul.f32.gmra.mxu0 %v840
      %v973 = vpop.f32.mrf.mxu0
      %v974 = vadd.f32 0.0, %v973
      %975 = vdwg.mxu0
      %976 = vmatpush.msra.mxu0 0.0
      %977 = vmatpush.msra.mxu0 0.0
      %978 = vmatpush.msra.mxu0 0.0
      %979 = vmatpush.msra.mxu0 0.0
      %980 = vmatpush.msra.mxu0 0.0
      %981 = vmatpush.msra.mxu0 0.0
      %982 = vmatpush.msra.mxu0 0.0
      %983 = vmatpush.msra.mxu0 0.0
      %984 = vmatpush.msra.mxu0 0.0
      %985 = vmatpush.msra.mxu0 0.0
      %986 = vmatpush.msra.mxu0 0.0
      %987 = vmatpush.msra.mxu0 0.0
      %988 = vmatpush.msra.mxu0 0.0
      %989 = vmatpush.msra.mxu0 0.0
      %990 = vmatpush.msra.mxu0 0.0
      %991 = vmatpush.msra.mxu0 %v854
      %992 = vmatmul.f32.gmra.mxu0 %v840
      %v993 = vpop.f32.mrf.mxu0
      %v994 = vadd.f32 0.0, %v993
      %995 = vdwg.mxu0
      %v996 = vadd.f32 %v795, %v874
      %v997 = vadd.f32 %v796, %v894
      %v998 = vadd.f32 %v797, %v914
      %v999 = vadd.f32 %v798, %v934
      %v1000 = vadd.f32 %v799, %v954
      %v1001 = vadd.f32 %v800, %v974
      %v1002 = vadd.f32 %v801, %v994
      %s1003 = scalar_lea.vmem %s1, 32
      %v1004 = vld [vmem:[%s1003] sm:$0x3f]
      %1005 = vst [vmem:[#allocation1] ss:$2 sm:$0xff] %v225
      %s1006 = scalar_lea.vmem [#allocation1], 16
      %1007 = vst [vmem:[%s1006] ss:$2 sm:$0xff] %v226
      %s1008 = scalar_lea.vmem [#allocation1], 32
      %1009 = vst [vmem:[%s1008] ss:$2 sm:$0xff] %v227
      %s1010 = scalar_lea.vmem [#allocation1], 48
      %1011 = vst [vmem:[%s1010] ss:$2 sm:$0xff] %v228
      %v1012 = vld.sshfl [vmem:[#allocation1] sm:$0xff pattern:$0x75316420]
      %v1013 = vld.sshfl [vmem:[#allocation1 + $0x8] sm:$0xff pattern:$0x75316420]
      %v1014 = vld.sshfl [vmem:[#allocation1 + $0x10] sm:$0xff pattern:$0x75316420]
      %v1015 = vld.sshfl [vmem:[#allocation1 + $0x18] sm:$0xff pattern:$0x75316420]
      %v1016 = vld.sshfl [vmem:[#allocation1 + $0x20] sm:$0xff pattern:$0x75316420]
      %v1017 = vld.sshfl [vmem:[#allocation1 + $0x28] sm:$0xff pattern:$0x75316420]
      %v1018 = vld.sshfl [vmem:[#allocation1 + $0x30] sm:$0xff pattern:$0x75316420]
      %1019 = vrot.lane.b32.xlu0 %v1012, 124
      %v1020 = vpop.permute.xlu0 %1019
      %1021 = vrot.lane.b32.xlu0 %v1013, 124
      %v1022 = vpop.permute.xlu0 %1021
      %1023 = vrot.lane.b32.xlu0 %v1014, 124
      %v1024 = vpop.permute.xlu0 %1023
      %1025 = vrot.lane.b32.xlu0 %v1015, 124
      %v1026 = vpop.permute.xlu0 %1025
      %1027 = vrot.lane.b32.xlu0 %v1016, 124
      %v1028 = vpop.permute.xlu0 %1027
      %1029 = vrot.lane.b32.xlu0 %v1017, 124
      %v1030 = vpop.permute.xlu0 %1029
      %1031 = vrot.lane.b32.xlu0 %v1018, 124
      %v1032 = vpop.permute.xlu0 %1031
      %vm1033 = vcmask 1014784
      %v1034 = vsel %vm1033, %v1020, %v1022
      %v1035 = vsel %vm1033, %v1022, %v1024
      %v1036 = vsel %vm1033, %v1024, %v1026
      %v1037 = vsel %vm1033, %v1026, %v1028
      %v1038 = vsel %vm1033, %v1028, %v1030
      %v1039 = vsel %vm1033, %v1030, %v1032
      %v1041 = vsel %vm271, %v1004, 0
      %v1043 = vsel %vm275, %v1034, 0
      %v1045 = vsel %vm275, %v1035, 0
      %v1047 = vsel %vm275, %v1036, 0
      %v1049 = vsel %vm275, %v1037, 0
      %v1051 = vsel %vm275, %v1038, 0
      %v1053 = vsel %vm275, %v1039, 0
      %v1055 = vsel %vm275, %v1032, 0
      %1057 = vmatpush.msra.mxu0 0.0
      %1058 = vmatpush.msra.mxu0 0.0
      %1059 = vmatpush.msra.mxu0 0.0
      %1060 = vmatpush.msra.mxu0 0.0
      %1061 = vmatpush.msra.mxu0 0.0
      %1062 = vmatpush.msra.mxu0 0.0
      %1063 = vmatpush.msra.mxu0 0.0
      %1064 = vmatpush.msra.mxu0 0.0
      %1065 = vmatpush.msra.mxu0 0.0
      %1066 = vmatpush.msra.mxu0 0.0
      %1067 = vmatpush.msra.mxu0 0.0
      %1068 = vmatpush.msra.mxu0 0.0
      %1069 = vmatpush.msra.mxu0 0.0
      %1070 = vmatpush.msra.mxu0 0.0
      %1071 = vmatpush.msra.mxu0 0.0
      %1072 = vmatpush.msra.mxu0 %v1043
      %1073 = vmatmul.f32.gmra.mxu0 %v1041
      %v1074 = vpop.f32.mrf.mxu0
      %v1075 = vadd.f32 0.0, %v1074
      %1076 = vdwg.mxu0
      %1077 = vmatpush.msra.mxu0 0.0
      %1078 = vmatpush.msra.mxu0 0.0
      %1079 = vmatpush.msra.mxu0 0.0
      %1080 = vmatpush.msra.mxu0 0.0
      %1081 = vmatpush.msra.mxu0 0.0
      %1082 = vmatpush.msra.mxu0 0.0
      %1083 = vmatpush.msra.mxu0 0.0
      %1084 = vmatpush.msra.mxu0 0.0
      %1085 = vmatpush.msra.mxu0 0.0
      %1086 = vmatpush.msra.mxu0 0.0
      %1087 = vmatpush.msra.mxu0 0.0
      %1088 = vmatpush.msra.mxu0 0.0
      %1089 = vmatpush.msra.mxu0 0.0
      %1090 = vmatpush.msra.mxu0 0.0
      %1091 = vmatpush.msra.mxu0 0.0
      %1092 = vmatpush.msra.mxu0 %v1045
      %1093 = vmatmul.f32.gmra.mxu0 %v1041
      %v1094 = vpop.f32.mrf.mxu0
      %v1095 = vadd.f32 0.0, %v1094
      %1096 = vdwg.mxu0
      %1097 = vmatpush.msra.mxu0 0.0
      %1098 = vmatpush.msra.mxu0 0.0
      %1099 = vmatpush.msra.mxu0 0.0
      %1100 = vmatpush.msra.mxu0 0.0
      %1101 = vmatpush.msra.mxu0 0.0
      %1102 = vmatpush.msra.mxu0 0.0
      %1103 = vmatpush.msra.mxu0 0.0
      %1104 = vmatpush.msra.mxu0 0.0
      %1105 = vmatpush.msra.mxu0 0.0
      %1106 = vmatpush.msra.mxu0 0.0
      %1107 = vmatpush.msra.mxu0 0.0
      %1108 = vmatpush.msra.mxu0 0.0
      %1109 = vmatpush.msra.mxu0 0.0
      %1110 = vmatpush.msra.mxu0 0.0
      %1111 = vmatpush.msra.mxu0 0.0
      %1112 = vmatpush.msra.mxu0 %v1047
      %1113 = vmatmul.f32.gmra.mxu0 %v1041
      %v1114 = vpop.f32.mrf.mxu0
      %v1115 = vadd.f32 0.0, %v1114
      %1116 = vdwg.mxu0
      %1117 = vmatpush.msra.mxu0 0.0
      %1118 = vmatpush.msra.mxu0 0.0
      %1119 = vmatpush.msra.mxu0 0.0
      %1120 = vmatpush.msra.mxu0 0.0
      %1121 = vmatpush.msra.mxu0 0.0
      %1122 = vmatpush.msra.mxu0 0.0
      %1123 = vmatpush.msra.mxu0 0.0
      %1124 = vmatpush.msra.mxu0 0.0
      %1125 = vmatpush.msra.mxu0 0.0
      %1126 = vmatpush.msra.mxu0 0.0
      %1127 = vmatpush.msra.mxu0 0.0
      %1128 = vmatpush.msra.mxu0 0.0
      %1129 = vmatpush.msra.mxu0 0.0
      %1130 = vmatpush.msra.mxu0 0.0
      %1131 = vmatpush.msra.mxu0 0.0
      %1132 = vmatpush.msra.mxu0 %v1049
      %1133 = vmatmul.f32.gmra.mxu0 %v1041
      %v1134 = vpop.f32.mrf.mxu0
      %v1135 = vadd.f32 0.0, %v1134
      %1136 = vdwg.mxu0
      %1137 = vmatpush.msra.mxu0 0.0
      %1138 = vmatpush.msra.mxu0 0.0
      %1139 = vmatpush.msra.mxu0 0.0
      %1140 = vmatpush.msra.mxu0 0.0
      %1141 = vmatpush.msra.mxu0 0.0
      %1142 = vmatpush.msra.mxu0 0.0
      %1143 = vmatpush.msra.mxu0 0.0
      %1144 = vmatpush.msra.mxu0 0.0
      %1145 = vmatpush.msra.mxu0 0.0
      %1146 = vmatpush.msra.mxu0 0.0
      %1147 = vmatpush.msra.mxu0 0.0
      %1148 = vmatpush.msra.mxu0 0.0
      %1149 = vmatpush.msra.mxu0 0.0
      %1150 = vmatpush.msra.mxu0 0.0
      %1151 = vmatpush.msra.mxu0 0.0
      %1152 = vmatpush.msra.mxu0 %v1051
      %1153 = vmatmul.f32.gmra.mxu0 %v1041
      %v1154 = vpop.f32.mrf.mxu0
      %v1155 = vadd.f32 0.0, %v1154
      %1156 = vdwg.mxu0
      %1157 = vmatpush.msra.mxu0 0.0
      %1158 = vmatpush.msra.mxu0 0.0
      %1159 = vmatpush.msra.mxu0 0.0
      %1160 = vmatpush.msra.mxu0 0.0
      %1161 = vmatpush.msra.mxu0 0.0
      %1162 = vmatpush.msra.mxu0 0.0
      %1163 = vmatpush.msra.mxu0 0.0
      %1164 = vmatpush.msra.mxu0 0.0
      %1165 = vmatpush.msra.mxu0 0.0
      %1166 = vmatpush.msra.mxu0 0.0
      %1167 = vmatpush.msra.mxu0 0.0
      %1168 = vmatpush.msra.mxu0 0.0
      %1169 = vmatpush.msra.mxu0 0.0
      %1170 = vmatpush.msra.mxu0 0.0
      %1171 = vmatpush.msra.mxu0 0.0
      %1172 = vmatpush.msra.mxu0 %v1053
      %1173 = vmatmul.f32.gmra.mxu0 %v1041
      %v1174 = vpop.f32.mrf.mxu0
      %v1175 = vadd.f32 0.0, %v1174
      %1176 = vdwg.mxu0
      %1177 = vmatpush.msra.mxu0 0.0
      %1178 = vmatpush.msra.mxu0 0.0
      %1179 = vmatpush.msra.mxu0 0.0
      %1180 = vmatpush.msra.mxu0 0.0
      %1181 = vmatpush.msra.mxu0 0.0
      %1182 = vmatpush.msra.mxu0 0.0
      %1183 = vmatpush.msra.mxu0 0.0
      %1184 = vmatpush.msra.mxu0 0.0
      %1185 = vmatpush.msra.mxu0 0.0
      %1186 = vmatpush.msra.mxu0 0.0
      %1187 = vmatpush.msra.mxu0 0.0
      %1188 = vmatpush.msra.mxu0 0.0
      %1189 = vmatpush.msra.mxu0 0.0
      %1190 = vmatpush.msra.mxu0 0.0
      %1191 = vmatpush.msra.mxu0 0.0
      %1192 = vmatpush.msra.mxu0 %v1055
      %1193 = vmatmul.f32.gmra.mxu0 %v1041
      %v1194 = vpop.f32.mrf.mxu0
      %v1195 = vadd.f32 0.0, %v1194
      %1196 = vdwg.mxu0
      %v1197 = vadd.f32 %v996, %v1075
      %v1198 = vadd.f32 %v997, %v1095
      %v1199 = vadd.f32 %v998, %v1115
      %v1200 = vadd.f32 %v999, %v1135
      %v1201 = vadd.f32 %v1000, %v1155
      %v1202 = vadd.f32 %v1001, %v1175
      %v1203 = vadd.f32 %v1002, %v1195
      %s1204 = scalar_lea.vmem %s1, 40
      %v1205 = vld [vmem:[%s1204] sm:$0x3f]
      %1206 = vst [vmem:[#allocation1] ss:$2 sm:$0xff] %v225
      %s1207 = scalar_lea.vmem [#allocation1], 16
      %1208 = vst [vmem:[%s1207] ss:$2 sm:$0xff] %v226
      %s1209 = scalar_lea.vmem [#allocation1], 32
      %1210 = vst [vmem:[%s1209] ss:$2 sm:$0xff] %v227
      %s1211 = scalar_lea.vmem [#allocation1], 48
      %1212 = vst [vmem:[%s1211] ss:$2 sm:$0xff] %v228
      %v1213 = vld.sshfl [vmem:[#allocation1] sm:$0xff pattern:$0x75316420]
      %v1214 = vld.sshfl [vmem:[#allocation1 + $0x8] sm:$0xff pattern:$0x75316420]
      %v1215 = vld.sshfl [vmem:[#allocation1 + $0x10] sm:$0xff pattern:$0x75316420]
      %v1216 = vld.sshfl [vmem:[#allocation1 + $0x18] sm:$0xff pattern:$0x75316420]
      %v1217 = vld.sshfl [vmem:[#allocation1 + $0x20] sm:$0xff pattern:$0x75316420]
      %v1218 = vld.sshfl [vmem:[#allocation1 + $0x28] sm:$0xff pattern:$0x75316420]
      %v1219 = vld.sshfl [vmem:[#allocation1 + $0x30] sm:$0xff pattern:$0x75316420]
      %v1220 = vld.sshfl [vmem:[#allocation1 + $0x38] sm:$0xff pattern:$0x75316420]
      %1221 = vrot.lane.b32.xlu0 %v1213, 96
      %v1222 = vpop.permute.xlu0 %1221
      %1223 = vrot.lane.b32.xlu0 %v1214, 96
      %v1224 = vpop.permute.xlu0 %1223
      %1225 = vrot.lane.b32.xlu0 %v1215, 96
      %v1226 = vpop.permute.xlu0 %1225
      %1227 = vrot.lane.b32.xlu0 %v1216, 96
      %v1228 = vpop.permute.xlu0 %1227
      %1229 = vrot.lane.b32.xlu0 %v1217, 96
      %v1230 = vpop.permute.xlu0 %1229
      %1231 = vrot.lane.b32.xlu0 %v1218, 96
      %v1232 = vpop.permute.xlu0 %1231
      %1233 = vrot.lane.b32.xlu0 %v1219, 96
      %v1234 = vpop.permute.xlu0 %1233
      %1235 = vrot.lane.b32.xlu0 %v1220, 96
      %v1236 = vpop.permute.xlu0 %1235
      %vm1237 = vcmask 785408
      %v1238 = vsel %vm1237, %v1222, %v1224
      %v1239 = vsel %vm1237, %v1224, %v1226
      %v1240 = vsel %vm1237, %v1226, %v1228
      %v1241 = vsel %vm1237, %v1228, %v1230
      %v1242 = vsel %vm1237, %v1230, %v1232
      %v1243 = vsel %vm1237, %v1232, %v1234
      %v1244 = vsel %vm1237, %v1234, %v1236
      %v1246 = vsel %vm271, %v1205, 0
      %v1248 = vsel %vm275, %v1238, 0
      %v1250 = vsel %vm275, %v1239, 0
      %v1252 = vsel %vm275, %v1240, 0
      %v1254 = vsel %vm275, %v1241, 0
      %v1256 = vsel %vm275, %v1242, 0
      %v1258 = vsel %vm275, %v1243, 0
      %v1260 = vsel %vm275, %v1244, 0
      %1262 = vmatpush.msra.mxu0 0.0
      %1263 = vmatpush.msra.mxu0 0.0
      %1264 = vmatpush.msra.mxu0 0.0
      %1265 = vmatpush.msra.mxu0 0.0
      %1266 = vmatpush.msra.mxu0 0.0
      %1267 = vmatpush.msra.mxu0 0.0
      %1268 = vmatpush.msra.mxu0 0.0
      %1269 = vmatpush.msra.mxu0 0.0
      %1270 = vmatpush.msra.mxu0 0.0
      %1271 = vmatpush.msra.mxu0 0.0
      %1272 = vmatpush.msra.mxu0 0.0
      %1273 = vmatpush.msra.mxu0 0.0
      %1274 = vmatpush.msra.mxu0 0.0
      %1275 = vmatpush.msra.mxu0 0.0
      %1276 = vmatpush.msra.mxu0 0.0
      %1277 = vmatpush.msra.mxu0 %v1248
      %1278 = vmatmul.f32.gmra.mxu0 %v1246
      %v1279 = vpop.f32.mrf.mxu0
      %v1280 = vadd.f32 0.0, %v1279
      %1281 = vdwg.mxu0
      %1282 = vmatpush.msra.mxu0 0.0
      %1283 = vmatpush.msra.mxu0 0.0
      %1284 = vmatpush.msra.mxu0 0.0
      %1285 = vmatpush.msra.mxu0 0.0
      %1286 = vmatpush.msra.mxu0 0.0
      %1287 = vmatpush.msra.mxu0 0.0
      %1288 = vmatpush.msra.mxu0 0.0
      %1289 = vmatpush.msra.mxu0 0.0
      %1290 = vmatpush.msra.mxu0 0.0
      %1291 = vmatpush.msra.mxu0 0.0
      %1292 = vmatpush.msra.mxu0 0.0
      %1293 = vmatpush.msra.mxu0 0.0
      %1294 = vmatpush.msra.mxu0 0.0
      %1295 = vmatpush.msra.mxu0 0.0
      %1296 = vmatpush.msra.mxu0 0.0
      %1297 = vmatpush.msra.mxu0 %v1250
      %1298 = vmatmul.f32.gmra.mxu0 %v1246
      %v1299 = vpop.f32.mrf.mxu0
      %v1300 = vadd.f32 0.0, %v1299
      %1301 = vdwg.mxu0
      %1302 = vmatpush.msra.mxu0 0.0
      %1303 = vmatpush.msra.mxu0 0.0
      %1304 = vmatpush.msra.mxu0 0.0
      %1305 = vmatpush.msra.mxu0 0.0
      %1306 = vmatpush.msra.mxu0 0.0
      %1307 = vmatpush.msra.mxu0 0.0
      %1308 = vmatpush.msra.mxu0 0.0
      %1309 = vmatpush.msra.mxu0 0.0
      %1310 = vmatpush.msra.mxu0 0.0
      %1311 = vmatpush.msra.mxu0 0.0
      %1312 = vmatpush.msra.mxu0 0.0
      %1313 = vmatpush.msra.mxu0 0.0
      %1314 = vmatpush.msra.mxu0 0.0
      %1315 = vmatpush.msra.mxu0 0.0
      %1316 = vmatpush.msra.mxu0 0.0
      %1317 = vmatpush.msra.mxu0 %v1252
      %1318 = vmatmul.f32.gmra.mxu0 %v1246
      %v1319 = vpop.f32.mrf.mxu0
      %v1320 = vadd.f32 0.0, %v1319
      %1321 = vdwg.mxu0
      %1322 = vmatpush.msra.mxu0 0.0
      %1323 = vmatpush.msra.mxu0 0.0
      %1324 = vmatpush.msra.mxu0 0.0
      %1325 = vmatpush.msra.mxu0 0.0
      %1326 = vmatpush.msra.mxu0 0.0
      %1327 = vmatpush.msra.mxu0 0.0
      %1328 = vmatpush.msra.mxu0 0.0
      %1329 = vmatpush.msra.mxu0 0.0
      %1330 = vmatpush.msra.mxu0 0.0
      %1331 = vmatpush.msra.mxu0 0.0
      %1332 = vmatpush.msra.mxu0 0.0
      %1333 = vmatpush.msra.mxu0 0.0
      %1334 = vmatpush.msra.mxu0 0.0
      %1335 = vmatpush.msra.mxu0 0.0
      %1336 = vmatpush.msra.mxu0 0.0
      %1337 = vmatpush.msra.mxu0 %v1254
      %1338 = vmatmul.f32.gmra.mxu0 %v1246
      %v1339 = vpop.f32.mrf.mxu0
      %v1340 = vadd.f32 0.0, %v1339
      %1341 = vdwg.mxu0
      %1342 = vmatpush.msra.mxu0 0.0
      %1343 = vmatpush.msra.mxu0 0.0
      %1344 = vmatpush.msra.mxu0 0.0
      %1345 = vmatpush.msra.mxu0 0.0
      %1346 = vmatpush.msra.mxu0 0.0
      %1347 = vmatpush.msra.mxu0 0.0
      %1348 = vmatpush.msra.mxu0 0.0
      %1349 = vmatpush.msra.mxu0 0.0
      %1350 = vmatpush.msra.mxu0 0.0
      %1351 = vmatpush.msra.mxu0 0.0
      %1352 = vmatpush.msra.mxu0 0.0
      %1353 = vmatpush.msra.mxu0 0.0
      %1354 = vmatpush.msra.mxu0 0.0
      %1355 = vmatpush.msra.mxu0 0.0
      %1356 = vmatpush.msra.mxu0 0.0
      %1357 = vmatpush.msra.mxu0 %v1256
      %1358 = vmatmul.f32.gmra.mxu0 %v1246
      %v1359 = vpop.f32.mrf.mxu0
      %v1360 = vadd.f32 0.0, %v1359
      %1361 = vdwg.mxu0
      %1362 = vmatpush.msra.mxu0 0.0
      %1363 = vmatpush.msra.mxu0 0.0
      %1364 = vmatpush.msra.mxu0 0.0
      %1365 = vmatpush.msra.mxu0 0.0
      %1366 = vmatpush.msra.mxu0 0.0
      %1367 = vmatpush.msra.mxu0 0.0
      %1368 = vmatpush.msra.mxu0 0.0
      %1369 = vmatpush.msra.mxu0 0.0
      %1370 = vmatpush.msra.mxu0 0.0
      %1371 = vmatpush.msra.mxu0 0.0
      %1372 = vmatpush.msra.mxu0 0.0
      %1373 = vmatpush.msra.mxu0 0.0
      %1374 = vmatpush.msra.mxu0 0.0
      %1375 = vmatpush.msra.mxu0 0.0
      %1376 = vmatpush.msra.mxu0 0.0
      %1377 = vmatpush.msra.mxu0 %v1258
      %1378 = vmatmul.f32.gmra.mxu0 %v1246
      %v1379 = vpop.f32.mrf.mxu0
      %v1380 = vadd.f32 0.0, %v1379
      %1381 = vdwg.mxu0
      %1382 = vmatpush.msra.mxu0 0.0
      %1383 = vmatpush.msra.mxu0 0.0
      %1384 = vmatpush.msra.mxu0 0.0
      %1385 = vmatpush.msra.mxu0 0.0
      %1386 = vmatpush.msra.mxu0 0.0
      %1387 = vmatpush.msra.mxu0 0.0
      %1388 = vmatpush.msra.mxu0 0.0
      %1389 = vmatpush.msra.mxu0 0.0
      %1390 = vmatpush.msra.mxu0 0.0
      %1391 = vmatpush.msra.mxu0 0.0
      %1392 = vmatpush.msra.mxu0 0.0
      %1393 = vmatpush.msra.mxu0 0.0
      %1394 = vmatpush.msra.mxu0 0.0
      %1395 = vmatpush.msra.mxu0 0.0
      %1396 = vmatpush.msra.mxu0 0.0
      %1397 = vmatpush.msra.mxu0 %v1260
      %1398 = vmatmul.f32.gmra.mxu0 %v1246
      %v1399 = vpop.f32.mrf.mxu0
      %v1400 = vadd.f32 0.0, %v1399
      %1401 = vdwg.mxu0
      %v1402 = vadd.f32 %v1197, %v1280
      %v1403 = vadd.f32 %v1198, %v1300
      %v1404 = vadd.f32 %v1199, %v1320
      %v1405 = vadd.f32 %v1200, %v1340
      %v1406 = vadd.f32 %v1201, %v1360
      %v1407 = vadd.f32 %v1202, %v1380
      %v1408 = vadd.f32 %v1203, %v1400
      %s1409 = scalar_lea.vmem %s1, 48
      %v1410 = vld [vmem:[%s1409] sm:$0x3f]
      %1411 = vst [vmem:[#allocation1] ss:$2 sm:$0xff] %v225
      %s1412 = scalar_lea.vmem [#allocation1], 16
      %1413 = vst [vmem:[%s1412] ss:$2 sm:$0xff] %v226
      %s1414 = scalar_lea.vmem [#allocation1], 32
      %1415 = vst [vmem:[%s1414] ss:$2 sm:$0xff] %v227
      %s1416 = scalar_lea.vmem [#allocation1], 48
      %1417 = vst [vmem:[%s1416] ss:$2 sm:$0xff] %v228
      %v1418 = vld.sshfl [vmem:[#allocation1] sm:$0xff pattern:$0x75316420]
      %v1419 = vld.sshfl [vmem:[#allocation1 + $0x8] sm:$0xff pattern:$0x75316420]
      %v1420 = vld.sshfl [vmem:[#allocation1 + $0x10] sm:$0xff pattern:$0x75316420]
      %v1421 = vld.sshfl [vmem:[#allocation1 + $0x18] sm:$0xff pattern:$0x75316420]
      %v1422 = vld.sshfl [vmem:[#allocation1 + $0x20] sm:$0xff pattern:$0x75316420]
      %v1423 = vld.sshfl [vmem:[#allocation1 + $0x28] sm:$0xff pattern:$0x75316420]
      %v1424 = vld.sshfl [vmem:[#allocation1 + $0x30] sm:$0xff pattern:$0x75316420]
      %v1425 = vld.sshfl [vmem:[#allocation1 + $0x38] sm:$0xff pattern:$0x75316420]
      %1426 = vrot.lane.b32.xlu0 %v1418, 95
      %v1427 = vpop.permute.xlu0 %1426
      %1428 = vrot.lane.b32.xlu0 %v1419, 95
      %v1429 = vpop.permute.xlu0 %1428
      %1430 = vrot.lane.b32.xlu0 %v1420, 95
      %v1431 = vpop.permute.xlu0 %1430
      %1432 = vrot.lane.b32.xlu0 %v1421, 95
      %v1433 = vpop.permute.xlu0 %1432
      %1434 = vrot.lane.b32.xlu0 %v1422, 95
      %v1435 = vpop.permute.xlu0 %1434
      %1436 = vrot.lane.b32.xlu0 %v1423, 95
      %v1437 = vpop.permute.xlu0 %1436
      %1438 = vrot.lane.b32.xlu0 %v1424, 95
      %v1439 = vpop.permute.xlu0 %1438
      %1440 = vrot.lane.b32.xlu0 %v1425, 95
      %v1441 = vpop.permute.xlu0 %1440
      %vm1442 = vcmask 777216
      %v1443 = vsel %vm1442, %v1427, %v1429
      %v1444 = vsel %vm1442, %v1429, %v1431
      %v1445 = vsel %vm1442, %v1431, %v1433
      %v1446 = vsel %vm1442, %v1433, %v1435
      %v1447 = vsel %vm1442, %v1435, %v1437
      %v1448 = vsel %vm1442, %v1437, %v1439
      %v1449 = vsel %vm1442, %v1439, %v1441
      %v1451 = vsel %vm271, %v1410, 0
      %v1453 = vsel %vm275, %v1443, 0
      %v1455 = vsel %vm275, %v1444, 0
      %v1457 = vsel %vm275, %v1445, 0
      %v1459 = vsel %vm275, %v1446, 0
      %v1461 = vsel %vm275, %v1447, 0
      %v1463 = vsel %vm275, %v1448, 0
      %v1465 = vsel %vm275, %v1449, 0
      %1467 = vmatpush.msra.mxu0 0.0
      %1468 = vmatpush.msra.mxu0 0.0
      %1469 = vmatpush.msra.mxu0 0.0
      %1470 = vmatpush.msra.mxu0 0.0
      %1471 = vmatpush.msra.mxu0 0.0
      %1472 = vmatpush.msra.mxu0 0.0
      %1473 = vmatpush.msra.mxu0 0.0
      %1474 = vmatpush.msra.mxu0 0.0
      %1475 = vmatpush.msra.mxu0 0.0
      %1476 = vmatpush.msra.mxu0 0.0
      %1477 = vmatpush.msra.mxu0 0.0
      %1478 = vmatpush.msra.mxu0 0.0
      %1479 = vmatpush.msra.mxu0 0.0
      %1480 = vmatpush.msra.mxu0 0.0
      %1481 = vmatpush.msra.mxu0 0.0
      %1482 = vmatpush.msra.mxu0 %v1453
      %1483 = vmatmul.f32.gmra.mxu0 %v1451
      %v1484 = vpop.f32.mrf.mxu0
      %v1485 = vadd.f32 0.0, %v1484
      %1486 = vdwg.mxu0
      %1487 = vmatpush.msra.mxu0 0.0
      %1488 = vmatpush.msra.mxu0 0.0
      %1489 = vmatpush.msra.mxu0 0.0
      %1490 = vmatpush.msra.mxu0 0.0
      %1491 = vmatpush.msra.mxu0 0.0
      %1492 = vmatpush.msra.mxu0 0.0
      %1493 = vmatpush.msra.mxu0 0.0
      %1494 = vmatpush.msra.mxu0 0.0
      %1495 = vmatpush.msra.mxu0 0.0
      %1496 = vmatpush.msra.mxu0 0.0
      %1497 = vmatpush.msra.mxu0 0.0
      %1498 = vmatpush.msra.mxu0 0.0
      %1499 = vmatpush.msra.mxu0 0.0
      %1500 = vmatpush.msra.mxu0 0.0
      %1501 = vmatpush.msra.mxu0 0.0
      %1502 = vmatpush.msra.mxu0 %v1455
      %1503 = vmatmul.f32.gmra.mxu0 %v1451
      %v1504 = vpop.f32.mrf.mxu0
      %v1505 = vadd.f32 0.0, %v1504
      %1506 = vdwg.mxu0
      %1507 = vmatpush.msra.mxu0 0.0
      %1508 = vmatpush.msra.mxu0 0.0
      %1509 = vmatpush.msra.mxu0 0.0
      %1510 = vmatpush.msra.mxu0 0.0
      %1511 = vmatpush.msra.mxu0 0.0
      %1512 = vmatpush.msra.mxu0 0.0
      %1513 = vmatpush.msra.mxu0 0.0
      %1514 = vmatpush.msra.mxu0 0.0
      %1515 = vmatpush.msra.mxu0 0.0
      %1516 = vmatpush.msra.mxu0 0.0
      %1517 = vmatpush.msra.mxu0 0.0
      %1518 = vmatpush.msra.mxu0 0.0
      %1519 = vmatpush.msra.mxu0 0.0
      %1520 = vmatpush.msra.mxu0 0.0
      %1521 = vmatpush.msra.mxu0 0.0
      %1522 = vmatpush.msra.mxu0 %v1457
      %1523 = vmatmul.f32.gmra.mxu0 %v1451
      %v1524 = vpop.f32.mrf.mxu0
      %v1525 = vadd.f32 0.0, %v1524
      %1526 = vdwg.mxu0
      %1527 = vmatpush.msra.mxu0 0.0
      %1528 = vmatpush.msra.mxu0 0.0
      %1529 = vmatpush.msra.mxu0 0.0
      %1530 = vmatpush.msra.mxu0 0.0
      %1531 = vmatpush.msra.mxu0 0.0
      %1532 = vmatpush.msra.mxu0 0.0
      %1533 = vmatpush.msra.mxu0 0.0
      %1534 = vmatpush.msra.mxu0 0.0
      %1535 = vmatpush.msra.mxu0 0.0
      %1536 = vmatpush.msra.mxu0 0.0
      %1537 = vmatpush.msra.mxu0 0.0
      %1538 = vmatpush.msra.mxu0 0.0
      %1539 = vmatpush.msra.mxu0 0.0
      %1540 = vmatpush.msra.mxu0 0.0
      %1541 = vmatpush.msra.mxu0 0.0
      %1542 = vmatpush.msra.mxu0 %v1459
      %1543 = vmatmul.f32.gmra.mxu0 %v1451
      %v1544 = vpop.f32.mrf.mxu0
      %v1545 = vadd.f32 0.0, %v1544
      %1546 = vdwg.mxu0
      %1547 = vmatpush.msra.mxu0 0.0
      %1548 = vmatpush.msra.mxu0 0.0
      %1549 = vmatpush.msra.mxu0 0.0
      %1550 = vmatpush.msra.mxu0 0.0
      %1551 = vmatpush.msra.mxu0 0.0
      %1552 = vmatpush.msra.mxu0 0.0
      %1553 = vmatpush.msra.mxu0 0.0
      %1554 = vmatpush.msra.mxu0 0.0
      %1555 = vmatpush.msra.mxu0 0.0
      %1556 = vmatpush.msra.mxu0 0.0
      %1557 = vmatpush.msra.mxu0 0.0
      %1558 = vmatpush.msra.mxu0 0.0
      %1559 = vmatpush.msra.mxu0 0.0
      %1560 = vmatpush.msra.mxu0 0.0
      %1561 = vmatpush.msra.mxu0 0.0
      %1562 = vmatpush.msra.mxu0 %v1461
      %1563 = vmatmul.f32.gmra.mxu0 %v1451
      %v1564 = vpop.f32.mrf.mxu0
      %v1565 = vadd.f32 0.0, %v1564
      %1566 = vdwg.mxu0
      %1567 = vmatpush.msra.mxu0 0.0
      %1568 = vmatpush.msra.mxu0 0.0
      %1569 = vmatpush.msra.mxu0 0.0
      %1570 = vmatpush.msra.mxu0 0.0
      %1571 = vmatpush.msra.mxu0 0.0
      %1572 = vmatpush.msra.mxu0 0.0
      %1573 = vmatpush.msra.mxu0 0.0
      %1574 = vmatpush.msra.mxu0 0.0
      %1575 = vmatpush.msra.mxu0 0.0
      %1576 = vmatpush.msra.mxu0 0.0
      %1577 = vmatpush.msra.mxu0 0.0
      %1578 = vmatpush.msra.mxu0 0.0
      %1579 = vmatpush.msra.mxu0 0.0
      %1580 = vmatpush.msra.mxu0 0.0
      %1581 = vmatpush.msra.mxu0 0.0
      %1582 = vmatpush.msra.mxu0 %v1463
      %1583 = vmatmul.f32.gmra.mxu0 %v1451
      %v1584 = vpop.f32.mrf.mxu0
      %v1585 = vadd.f32 0.0, %v1584
      %1586 = vdwg.mxu0
      %1587 = vmatpush.msra.mxu0 0.0
      %1588 = vmatpush.msra.mxu0 0.0
      %1589 = vmatpush.msra.mxu0 0.0
      %1590 = vmatpush.msra.mxu0 0.0
      %1591 = vmatpush.msra.mxu0 0.0
      %1592 = vmatpush.msra.mxu0 0.0
      %1593 = vmatpush.msra.mxu0 0.0
      %1594 = vmatpush.msra.mxu0 0.0
      %1595 = vmatpush.msra.mxu0 0.0
      %1596 = vmatpush.msra.mxu0 0.0
      %1597 = vmatpush.msra.mxu0 0.0
      %1598 = vmatpush.msra.mxu0 0.0
      %1599 = vmatpush.msra.mxu0 0.0
      %1600 = vmatpush.msra.mxu0 0.0
      %1601 = vmatpush.msra.mxu0 0.0
      %1602 = vmatpush.msra.mxu0 %v1465
      %1603 = vmatmul.f32.gmra.mxu0 %v1451
      %v1604 = vpop.f32.mrf.mxu0
      %v1605 = vadd.f32 0.0, %v1604
      %1606 = vdwg.mxu0
      %v1607 = vadd.f32 %v1402, %v1485
      %v1608 = vadd.f32 %v1403, %v1505
      %v1609 = vadd.f32 %v1404, %v1525
      %v1610 = vadd.f32 %v1405, %v1545
      %v1611 = vadd.f32 %v1406, %v1565
      %v1612 = vadd.f32 %v1407, %v1585
      %v1613 = vadd.f32 %v1408, %v1605
      %s1614 = scalar_lea.vmem %s1, 56
      %v1615 = vld [vmem:[%s1614] sm:$0x3f]
      %1616 = vst [vmem:[#allocation1] ss:$2 sm:$0xff] %v225
      %s1617 = scalar_lea.vmem [#allocation1], 16
      %1618 = vst [vmem:[%s1617] ss:$2 sm:$0xff] %v226
      %s1619 = scalar_lea.vmem [#allocation1], 32
      %1620 = vst [vmem:[%s1619] ss:$2 sm:$0xff] %v227
      %s1621 = scalar_lea.vmem [#allocation1], 48
      %1622 = vst [vmem:[%s1621] ss:$2 sm:$0xff] %v228
      %v1623 = vld.sshfl [vmem:[#allocation1] sm:$0xff pattern:$0x75316420]
      %v1624 = vld.sshfl [vmem:[#allocation1 + $0x8] sm:$0xff pattern:$0x75316420]
      %v1625 = vld.sshfl [vmem:[#allocation1 + $0x10] sm:$0xff pattern:$0x75316420]
      %v1626 = vld.sshfl [vmem:[#allocation1 + $0x18] sm:$0xff pattern:$0x75316420]
      %v1627 = vld.sshfl [vmem:[#allocation1 + $0x20] sm:$0xff pattern:$0x75316420]
      %v1628 = vld.sshfl [vmem:[#allocation1 + $0x28] sm:$0xff pattern:$0x75316420]
      %v1629 = vld.sshfl [vmem:[#allocation1 + $0x30] sm:$0xff pattern:$0x75316420]
      %v1630 = vld.sshfl [vmem:[#allocation1 + $0x38] sm:$0xff pattern:$0x75316420]
      %1631 = vrot.lane.b32.xlu0 %v1623, 94
      %v1632 = vpop.permute.xlu0 %1631
      %1633 = vrot.lane.b32.xlu0 %v1624, 94
      %v1634 = vpop.permute.xlu0 %1633
      %1635 = vrot.lane.b32.xlu0 %v1625, 94
      %v1636 = vpop.permute.xlu0 %1635
      %1637 = vrot.lane.b32.xlu0 %v1626, 94
      %v1638 = vpop.permute.xlu0 %1637
      %1639 = vrot.lane.b32.xlu0 %v1627, 94
      %v1640 = vpop.permute.xlu0 %1639
      %1641 = vrot.lane.b32.xlu0 %v1628, 94
      %v1642 = vpop.permute.xlu0 %1641
      %1643 = vrot.lane.b32.xlu0 %v1629, 94
      %v1644 = vpop.permute.xlu0 %1643
      %1645 = vrot.lane.b32.xlu0 %v1630, 94
      %v1646 = vpop.permute.xlu0 %1645
      %vm1647 = vcmask 769024
      %v1648 = vsel %vm1647, %v1632, %v1634
      %v1649 = vsel %vm1647, %v1634, %v1636
      %v1650 = vsel %vm1647, %v1636, %v1638
      %v1651 = vsel %vm1647, %v1638, %v1640
      %v1652 = vsel %vm1647, %v1640, %v1642
      %v1653 = vsel %vm1647, %v1642, %v1644
      %v1654 = vsel %vm1647, %v1644, %v1646
      %v1656 = vsel %vm271, %v1615, 0
      %v1658 = vsel %vm275, %v1648, 0
      %v1660 = vsel %vm275, %v1649, 0
      %v1662 = vsel %vm275, %v1650, 0
      %v1664 = vsel %vm275, %v1651, 0
      %v1666 = vsel %vm275, %v1652, 0
      %v1668 = vsel %vm275, %v1653, 0
      %v1670 = vsel %vm275, %v1654, 0
      %1672 = vmatpush.msra.mxu0 0.0
      %1673 = vmatpush.msra.mxu0 0.0
      %1674 = vmatpush.msra.mxu0 0.0
      %1675 = vmatpush.msra.mxu0 0.0
      %1676 = vmatpush.msra.mxu0 0.0
      %1677 = vmatpush.msra.mxu0 0.0
      %1678 = vmatpush.msra.mxu0 0.0
      %1679 = vmatpush.msra.mxu0 0.0
      %1680 = vmatpush.msra.mxu0 0.0
      %1681 = vmatpush.msra.mxu0 0.0
      %1682 = vmatpush.msra.mxu0 0.0
      %1683 = vmatpush.msra.mxu0 0.0
      %1684 = vmatpush.msra.mxu0 0.0
      %1685 = vmatpush.msra.mxu0 0.0
      %1686 = vmatpush.msra.mxu0 0.0
      %1687 = vmatpush.msra.mxu0 %v1658
      %1688 = vmatmul.f32.gmra.mxu0 %v1656
      %v1689 = vpop.f32.mrf.mxu0
      %v1690 = vadd.f32 0.0, %v1689
      %1691 = vdwg.mxu0
      %1692 = vmatpush.msra.mxu0 0.0
      %1693 = vmatpush.msra.mxu0 0.0
      %1694 = vmatpush.msra.mxu0 0.0
      %1695 = vmatpush.msra.mxu0 0.0
      %1696 = vmatpush.msra.mxu0 0.0
      %1697 = vmatpush.msra.mxu0 0.0
      %1698 = vmatpush.msra.mxu0 0.0
      %1699 = vmatpush.msra.mxu0 0.0
      %1700 = vmatpush.msra.mxu0 0.0
      %1701 = vmatpush.msra.mxu0 0.0
      %1702 = vmatpush.msra.mxu0 0.0
      %1703 = vmatpush.msra.mxu0 0.0
      %1704 = vmatpush.msra.mxu0 0.0
      %1705 = vmatpush.msra.mxu0 0.0
      %1706 = vmatpush.msra.mxu0 0.0
      %1707 = vmatpush.msra.mxu0 %v1660
      %1708 = vmatmul.f32.gmra.mxu0 %v1656
      %v1709 = vpop.f32.mrf.mxu0
      %v1710 = vadd.f32 0.0, %v1709
      %1711 = vdwg.mxu0
      %1712 = vmatpush.msra.mxu0 0.0
      %1713 = vmatpush.msra.mxu0 0.0
      %1714 = vmatpush.msra.mxu0 0.0
      %1715 = vmatpush.msra.mxu0 0.0
      %1716 = vmatpush.msra.mxu0 0.0
      %1717 = vmatpush.msra.mxu0 0.0
      %1718 = vmatpush.msra.mxu0 0.0
      %1719 = vmatpush.msra.mxu0 0.0
      %1720 = vmatpush.msra.mxu0 0.0
      %1721 = vmatpush.msra.mxu0 0.0
      %1722 = vmatpush.msra.mxu0 0.0
      %1723 = vmatpush.msra.mxu0 0.0
      %1724 = vmatpush.msra.mxu0 0.0
      %1725 = vmatpush.msra.mxu0 0.0
      %1726 = vmatpush.msra.mxu0 0.0
      %1727 = vmatpush.msra.mxu0 %v1662
      %1728 = vmatmul.f32.gmra.mxu0 %v1656
      %v1729 = vpop.f32.mrf.mxu0
      %v1730 = vadd.f32 0.0, %v1729
      %1731 = vdwg.mxu0
      %1732 = vmatpush.msra.mxu0 0.0
      %1733 = vmatpush.msra.mxu0 0.0
      %1734 = vmatpush.msra.mxu0 0.0
      %1735 = vmatpush.msra.mxu0 0.0
      %1736 = vmatpush.msra.mxu0 0.0
      %1737 = vmatpush.msra.mxu0 0.0
      %1738 = vmatpush.msra.mxu0 0.0
      %1739 = vmatpush.msra.mxu0 0.0
      %1740 = vmatpush.msra.mxu0 0.0
      %1741 = vmatpush.msra.mxu0 0.0
      %1742 = vmatpush.msra.mxu0 0.0
      %1743 = vmatpush.msra.mxu0 0.0
      %1744 = vmatpush.msra.mxu0 0.0
      %1745 = vmatpush.msra.mxu0 0.0
      %1746 = vmatpush.msra.mxu0 0.0
      %1747 = vmatpush.msra.mxu0 %v1664
      %1748 = vmatmul.f32.gmra.mxu0 %v1656
      %v1749 = vpop.f32.mrf.mxu0
      %v1750 = vadd.f32 0.0, %v1749
      %1751 = vdwg.mxu0
      %1752 = vmatpush.msra.mxu0 0.0
      %1753 = vmatpush.msra.mxu0 0.0
      %1754 = vmatpush.msra.mxu0 0.0
      %1755 = vmatpush.msra.mxu0 0.0
      %1756 = vmatpush.msra.mxu0 0.0
      %1757 = vmatpush.msra.mxu0 0.0
      %1758 = vmatpush.msra.mxu0 0.0
      %1759 = vmatpush.msra.mxu0 0.0
      %1760 = vmatpush.msra.mxu0 0.0
      %1761 = vmatpush.msra.mxu0 0.0
      %1762 = vmatpush.msra.mxu0 0.0
      %1763 = vmatpush.msra.mxu0 0.0
      %1764 = vmatpush.msra.mxu0 0.0
      %1765 = vmatpush.msra.mxu0 0.0
      %1766 = vmatpush.msra.mxu0 0.0
      %1767 = vmatpush.msra.mxu0 %v1666
      %1768 = vmatmul.f32.gmra.mxu0 %v1656
      %v1769 = vpop.f32.mrf.mxu0
      %v1770 = vadd.f32 0.0, %v1769
      %1771 = vdwg.mxu0
      %1772 = vmatpush.msra.mxu0 0.0
      %1773 = vmatpush.msra.mxu0 0.0
      %1774 = vmatpush.msra.mxu0 0.0
      %1775 = vmatpush.msra.mxu0 0.0
      %1776 = vmatpush.msra.mxu0 0.0
      %1777 = vmatpush.msra.mxu0 0.0
      %1778 = vmatpush.msra.mxu0 0.0
      %1779 = vmatpush.msra.mxu0 0.0
      %1780 = vmatpush.msra.mxu0 0.0
      %1781 = vmatpush.msra.mxu0 0.0
      %1782 = vmatpush.msra.mxu0 0.0
      %1783 = vmatpush.msra.mxu0 0.0
      %1784 = vmatpush.msra.mxu0 0.0
      %1785 = vmatpush.msra.mxu0 0.0
      %1786 = vmatpush.msra.mxu0 0.0
      %1787 = vmatpush.msra.mxu0 %v1668
      %1788 = vmatmul.f32.gmra.mxu0 %v1656
      %v1789 = vpop.f32.mrf.mxu0
      %v1790 = vadd.f32 0.0, %v1789
      %1791 = vdwg.mxu0
      %1792 = vmatpush.msra.mxu0 0.0
      %1793 = vmatpush.msra.mxu0 0.0
      %1794 = vmatpush.msra.mxu0 0.0
      %1795 = vmatpush.msra.mxu0 0.0
      %1796 = vmatpush.msra.mxu0 0.0
      %1797 = vmatpush.msra.mxu0 0.0
      %1798 = vmatpush.msra.mxu0 0.0
      %1799 = vmatpush.msra.mxu0 0.0
      %1800 = vmatpush.msra.mxu0 0.0
      %1801 = vmatpush.msra.mxu0 0.0
      %1802 = vmatpush.msra.mxu0 0.0
      %1803 = vmatpush.msra.mxu0 0.0
      %1804 = vmatpush.msra.mxu0 0.0
      %1805 = vmatpush.msra.mxu0 0.0
      %1806 = vmatpush.msra.mxu0 0.0
      %1807 = vmatpush.msra.mxu0 %v1670
      %1808 = vmatmul.f32.gmra.mxu0 %v1656
      %v1809 = vpop.f32.mrf.mxu0
      %v1810 = vadd.f32 0.0, %v1809
      %1811 = vdwg.mxu0
      %v1812 = vadd.f32 %v1607, %v1690
      %v1813 = vadd.f32 %v1608, %v1710
      %v1814 = vadd.f32 %v1609, %v1730
      %v1815 = vadd.f32 %v1610, %v1750
      %v1816 = vadd.f32 %v1611, %v1770
      %v1817 = vadd.f32 %v1612, %v1790
      %v1818 = vadd.f32 %v1613, %v1810
      %s1819 = scalar_lea.vmem %s1, 64
      %v1820 = vld [vmem:[%s1819] sm:$0x3f]
      %1821 = vst [vmem:[#allocation1] ss:$2 sm:$0xff] %v225
      %s1822 = scalar_lea.vmem [#allocation1], 16
      %1823 = vst [vmem:[%s1822] ss:$2 sm:$0xff] %v226
      %s1824 = scalar_lea.vmem [#allocation1], 32
      %1825 = vst [vmem:[%s1824] ss:$2 sm:$0xff] %v227
      %s1826 = scalar_lea.vmem [#allocation1], 48
      %1827 = vst [vmem:[%s1826] ss:$2 sm:$0xff] %v228
      %v1828 = vld.sshfl [vmem:[#allocation1] sm:$0xff pattern:$0x75316420]
      %v1829 = vld.sshfl [vmem:[#allocation1 + $0x8] sm:$0xff pattern:$0x75316420]
      %v1830 = vld.sshfl [vmem:[#allocation1 + $0x10] sm:$0xff pattern:$0x75316420]
      %v1831 = vld.sshfl [vmem:[#allocation1 + $0x18] sm:$0xff pattern:$0x75316420]
      %v1832 = vld.sshfl [vmem:[#allocation1 + $0x20] sm:$0xff pattern:$0x75316420]
      %v1833 = vld.sshfl [vmem:[#allocation1 + $0x28] sm:$0xff pattern:$0x75316420]
      %v1834 = vld.sshfl [vmem:[#allocation1 + $0x30] sm:$0xff pattern:$0x75316420]
      %v1835 = vld.sshfl [vmem:[#allocation1 + $0x38] sm:$0xff pattern:$0x75316420]
      %1836 = vrot.lane.b32.xlu0 %v1828, 93
      %v1837 = vpop.permute.xlu0 %1836
      %1838 = vrot.lane.b32.xlu0 %v1829, 93
      %v1839 = vpop.permute.xlu0 %1838
      %1840 = vrot.lane.b32.xlu0 %v1830, 93
      %v1841 = vpop.permute.xlu0 %1840
      %1842 = vrot.lane.b32.xlu0 %v1831, 93
      %v1843 = vpop.permute.xlu0 %1842
      %1844 = vrot.lane.b32.xlu0 %v1832, 93
      %v1845 = vpop.permute.xlu0 %1844
      %1846 = vrot.lane.b32.xlu0 %v1833, 93
      %v1847 = vpop.permute.xlu0 %1846
      %1848 = vrot.lane.b32.xlu0 %v1834, 93
      %v1849 = vpop.permute.xlu0 %1848
      %1850 = vrot.lane.b32.xlu0 %v1835, 93
      %v1851 = vpop.permute.xlu0 %1850
      %vm1852 = vcmask 760832
      %v1853 = vsel %vm1852, %v1837, %v1839
      %v1854 = vsel %vm1852, %v1839, %v1841
      %v1855 = vsel %vm1852, %v1841, %v1843
      %v1856 = vsel %vm1852, %v1843, %v1845
      %v1857 = vsel %vm1852, %v1845, %v1847
      %v1858 = vsel %vm1852, %v1847, %v1849
      %v1859 = vsel %vm1852, %v1849, %v1851
      %v1861 = vsel %vm271, %v1820, 0
      %v1863 = vsel %vm275, %v1853, 0
      %v1865 = vsel %vm275, %v1854, 0
      %v1867 = vsel %vm275, %v1855, 0
      %v1869 = vsel %vm275, %v1856, 0
      %v1871 = vsel %vm275, %v1857, 0
      %v1873 = vsel %vm275, %v1858, 0
      %v1875 = vsel %vm275, %v1859, 0
      %1877 = vmatpush.msra.mxu0 0.0
      %1878 = vmatpush.msra.mxu0 0.0
      %1879 = vmatpush.msra.mxu0 0.0
      %1880 = vmatpush.msra.mxu0 0.0
      %1881 = vmatpush.msra.mxu0 0.0
      %1882 = vmatpush.msra.mxu0 0.0
      %1883 = vmatpush.msra.mxu0 0.0
      %1884 = vmatpush.msra.mxu0 0.0
      %1885 = vmatpush.msra.mxu0 0.0
      %1886 = vmatpush.msra.mxu0 0.0
      %1887 = vmatpush.msra.mxu0 0.0
      %1888 = vmatpush.msra.mxu0 0.0
      %1889 = vmatpush.msra.mxu0 0.0
      %1890 = vmatpush.msra.mxu0 0.0
      %1891 = vmatpush.msra.mxu0 0.0
      %1892 = vmatpush.msra.mxu0 %v1863
      %1893 = vmatmul.f32.gmra.mxu0 %v1861
      %v1894 = vpop.f32.mrf.mxu0
      %v1895 = vadd.f32 0.0, %v1894
      %1896 = vdwg.mxu0
      %1897 = vmatpush.msra.mxu0 0.0
      %1898 = vmatpush.msra.mxu0 0.0
      %1899 = vmatpush.msra.mxu0 0.0
      %1900 = vmatpush.msra.mxu0 0.0
      %1901 = vmatpush.msra.mxu0 0.0
      %1902 = vmatpush.msra.mxu0 0.0
      %1903 = vmatpush.msra.mxu0 0.0
      %1904 = vmatpush.msra.mxu0 0.0
      %1905 = vmatpush.msra.mxu0 0.0
      %1906 = vmatpush.msra.mxu0 0.0
      %1907 = vmatpush.msra.mxu0 0.0
      %1908 = vmatpush.msra.mxu0 0.0
      %1909 = vmatpush.msra.mxu0 0.0
      %1910 = vmatpush.msra.mxu0 0.0
      %1911 = vmatpush.msra.mxu0 0.0
      %1912 = vmatpush.msra.mxu0 %v1865
      %1913 = vmatmul.f32.gmra.mxu0 %v1861
      %v1914 = vpop.f32.mrf.mxu0
      %v1915 = vadd.f32 0.0, %v1914
      %1916 = vdwg.mxu0
      %1917 = vmatpush.msra.mxu0 0.0
      %1918 = vmatpush.msra.mxu0 0.0
      %1919 = vmatpush.msra.mxu0 0.0
      %1920 = vmatpush.msra.mxu0 0.0
      %1921 = vmatpush.msra.mxu0 0.0
      %1922 = vmatpush.msra.mxu0 0.0
      %1923 = vmatpush.msra.mxu0 0.0
      %1924 = vmatpush.msra.mxu0 0.0
      %1925 = vmatpush.msra.mxu0 0.0
      %1926 = vmatpush.msra.mxu0 0.0
      %1927 = vmatpush.msra.mxu0 0.0
      %1928 = vmatpush.msra.mxu0 0.0
      %1929 = vmatpush.msra.mxu0 0.0
      %1930 = vmatpush.msra.mxu0 0.0
      %1931 = vmatpush.msra.mxu0 0.0
      %1932 = vmatpush.msra.mxu0 %v1867
      %1933 = vmatmul.f32.gmra.mxu0 %v1861
      %v1934 = vpop.f32.mrf.mxu0
      %v1935 = vadd.f32 0.0, %v1934
      %1936 = vdwg.mxu0
      %1937 = vmatpush.msra.mxu0 0.0
      %1938 = vmatpush.msra.mxu0 0.0
      %1939 = vmatpush.msra.mxu0 0.0
      %1940 = vmatpush.msra.mxu0 0.0
      %1941 = vmatpush.msra.mxu0 0.0
      %1942 = vmatpush.msra.mxu0 0.0
      %1943 = vmatpush.msra.mxu0 0.0
      %1944 = vmatpush.msra.mxu0 0.0
      %1945 = vmatpush.msra.mxu0 0.0
      %1946 = vmatpush.msra.mxu0 0.0
      %1947 = vmatpush.msra.mxu0 0.0
      %1948 = vmatpush.msra.mxu0 0.0
      %1949 = vmatpush.msra.mxu0 0.0
      %1950 = vmatpush.msra.mxu0 0.0
      %1951 = vmatpush.msra.mxu0 0.0
      %1952 = vmatpush.msra.mxu0 %v1869
      %1953 = vmatmul.f32.gmra.mxu0 %v1861
      %v1954 = vpop.f32.mrf.mxu0
      %v1955 = vadd.f32 0.0, %v1954
      %1956 = vdwg.mxu0
      %1957 = vmatpush.msra.mxu0 0.0
      %1958 = vmatpush.msra.mxu0 0.0
      %1959 = vmatpush.msra.mxu0 0.0
      %1960 = vmatpush.msra.mxu0 0.0
      %1961 = vmatpush.msra.mxu0 0.0
      %1962 = vmatpush.msra.mxu0 0.0
      %1963 = vmatpush.msra.mxu0 0.0
      %1964 = vmatpush.msra.mxu0 0.0
      %1965 = vmatpush.msra.mxu0 0.0
      %1966 = vmatpush.msra.mxu0 0.0
      %1967 = vmatpush.msra.mxu0 0.0
      %1968 = vmatpush.msra.mxu0 0.0
      %1969 = vmatpush.msra.mxu0 0.0
      %1970 = vmatpush.msra.mxu0 0.0
      %1971 = vmatpush.msra.mxu0 0.0
      %1972 = vmatpush.msra.mxu0 %v1871
      %1973 = vmatmul.f32.gmra.mxu0 %v1861
      %v1974 = vpop.f32.mrf.mxu0
      %v1975 = vadd.f32 0.0, %v1974
      %1976 = vdwg.mxu0
      %1977 = vmatpush.msra.mxu0 0.0
      %1978 = vmatpush.msra.mxu0 0.0
      %1979 = vmatpush.msra.mxu0 0.0
      %1980 = vmatpush.msra.mxu0 0.0
      %1981 = vmatpush.msra.mxu0 0.0
      %1982 = vmatpush.msra.mxu0 0.0
      %1983 = vmatpush.msra.mxu0 0.0
      %1984 = vmatpush.msra.mxu0 0.0
      %1985 = vmatpush.msra.mxu0 0.0
      %1986 = vmatpush.msra.mxu0 0.0
      %1987 = vmatpush.msra.mxu0 0.0
      %1988 = vmatpush.msra.mxu0 0.0
      %1989 = vmatpush.msra.mxu0 0.0
      %1990 = vmatpush.msra.mxu0 0.0
      %1991 = vmatpush.msra.mxu0 0.0
      %1992 = vmatpush.msra.mxu0 %v1873
      %1993 = vmatmul.f32.gmra.mxu0 %v1861
      %v1994 = vpop.f32.mrf.mxu0
      %v1995 = vadd.f32 0.0, %v1994
      %1996 = vdwg.mxu0
      %1997 = vmatpush.msra.mxu0 0.0
      %1998 = vmatpush.msra.mxu0 0.0
      %1999 = vmatpush.msra.mxu0 0.0
      %2000 = vmatpush.msra.mxu0 0.0
      %2001 = vmatpush.msra.mxu0 0.0
      %2002 = vmatpush.msra.mxu0 0.0
      %2003 = vmatpush.msra.mxu0 0.0
      %2004 = vmatpush.msra.mxu0 0.0
      %2005 = vmatpush.msra.mxu0 0.0
      %2006 = vmatpush.msra.mxu0 0.0
      %2007 = vmatpush.msra.mxu0 0.0
      %2008 = vmatpush.msra.mxu0 0.0
      %2009 = vmatpush.msra.mxu0 0.0
      %2010 = vmatpush.msra.mxu0 0.0
      %2011 = vmatpush.msra.mxu0 0.0
      %2012 = vmatpush.msra.mxu0 %v1875
      %2013 = vmatmul.f32.gmra.mxu0 %v1861
      %v2014 = vpop.f32.mrf.mxu0
      %v2015 = vadd.f32 0.0, %v2014
      %2016 = vdwg.mxu0
      %v2017 = vadd.f32 %v1812, %v1895
      %v2018 = vadd.f32 %v1813, %v1915
      %v2019 = vadd.f32 %v1814, %v1935
      %v2020 = vadd.f32 %v1815, %v1955
      %v2021 = vadd.f32 %v1816, %v1975
      %v2022 = vadd.f32 %v1817, %v1995
      %v2023 = vadd.f32 %v1818, %v2015
      %s2024 = scalar_lea.vmem %s1, 72
      %v2025 = vld [vmem:[%s2024] sm:$0x3f]
      %2026 = vst [vmem:[#allocation1] ss:$2 sm:$0xff] %v225
      %s2027 = scalar_lea.vmem [#allocation1], 16
      %2028 = vst [vmem:[%s2027] ss:$2 sm:$0xff] %v226
      %s2029 = scalar_lea.vmem [#allocation1], 32
      %2030 = vst [vmem:[%s2029] ss:$2 sm:$0xff] %v227
      %s2031 = scalar_lea.vmem [#allocation1], 48
      %2032 = vst [vmem:[%s2031] ss:$2 sm:$0xff] %v228
      %v2033 = vld.sshfl [vmem:[#allocation1] sm:$0xff pattern:$0x75316420]
      %v2034 = vld.sshfl [vmem:[#allocation1 + $0x8] sm:$0xff pattern:$0x75316420]
      %v2035 = vld.sshfl [vmem:[#allocation1 + $0x10] sm:$0xff pattern:$0x75316420]
      %v2036 = vld.sshfl [vmem:[#allocation1 + $0x18] sm:$0xff pattern:$0x75316420]
      %v2037 = vld.sshfl [vmem:[#allocation1 + $0x20] sm:$0xff pattern:$0x75316420]
      %v2038 = vld.sshfl [vmem:[#allocation1 + $0x28] sm:$0xff pattern:$0x75316420]
      %v2039 = vld.sshfl [vmem:[#allocation1 + $0x30] sm:$0xff pattern:$0x75316420]
      %v2040 = vld.sshfl [vmem:[#allocation1 + $0x38] sm:$0xff pattern:$0x75316420]
      %2041 = vrot.lane.b32.xlu0 %v2033, 92
      %v2042 = vpop.permute.xlu0 %2041
      %2043 = vrot.lane.b32.xlu0 %v2034, 92
      %v2044 = vpop.permute.xlu0 %2043
      %2045 = vrot.lane.b32.xlu0 %v2035, 92
      %v2046 = vpop.permute.xlu0 %2045
      %2047 = vrot.lane.b32.xlu0 %v2036, 92
      %v2048 = vpop.permute.xlu0 %2047
      %2049 = vrot.lane.b32.xlu0 %v2037, 92
      %v2050 = vpop.permute.xlu0 %2049
      %2051 = vrot.lane.b32.xlu0 %v2038, 92
      %v2052 = vpop.permute.xlu0 %2051
      %2053 = vrot.lane.b32.xlu0 %v2039, 92
      %v2054 = vpop.permute.xlu0 %2053
      %2055 = vrot.lane.b32.xlu0 %v2040, 92
      %v2056 = vpop.permute.xlu0 %2055
      %vm2057 = vcmask 752640
      %v2058 = vsel %vm2057, %v2042, %v2044
      %v2059 = vsel %vm2057, %v2044, %v2046
      %v2060 = vsel %vm2057, %v2046, %v2048
      %v2061 = vsel %vm2057, %v2048, %v2050
      %v2062 = vsel %vm2057, %v2050, %v2052
      %v2063 = vsel %vm2057, %v2052, %v2054
      %v2064 = vsel %vm2057, %v2054, %v2056
      %v2066 = vsel %vm271, %v2025, 0
      %v2068 = vsel %vm275, %v2058, 0
      %v2070 = vsel %vm275, %v2059, 0
      %v2072 = vsel %vm275, %v2060, 0
      %v2074 = vsel %vm275, %v2061, 0
      %v2076 = vsel %vm275, %v2062, 0
      %v2078 = vsel %vm275, %v2063, 0
      %v2080 = vsel %vm275, %v2064, 0
      %2082 = vmatpush.msra.mxu0 0.0
      %2083 = vmatpush.msra.mxu0 0.0
      %2084 = vmatpush.msra.mxu0 0.0
      %2085 = vmatpush.msra.mxu0 0.0
      %2086 = vmatpush.msra.mxu0 0.0
      %2087 = vmatpush.msra.mxu0 0.0
      %2088 = vmatpush.msra.mxu0 0.0
      %2089 = vmatpush.msra.mxu0 0.0
      %2090 = vmatpush.msra.mxu0 0.0
      %2091 = vmatpush.msra.mxu0 0.0
      %2092 = vmatpush.msra.mxu0 0.0
      %2093 = vmatpush.msra.mxu0 0.0
      %2094 = vmatpush.msra.mxu0 0.0
      %2095 = vmatpush.msra.mxu0 0.0
      %2096 = vmatpush.msra.mxu0 0.0
      %2097 = vmatpush.msra.mxu0 %v2068
      %2098 = vmatmul.f32.gmra.mxu0 %v2066
      %v2099 = vpop.f32.mrf.mxu0
      %v2100 = vadd.f32 0.0, %v2099
      %2101 = vdwg.mxu0
      %2102 = vmatpush.msra.mxu0 0.0
      %2103 = vmatpush.msra.mxu0 0.0
      %2104 = vmatpush.msra.mxu0 0.0
      %2105 = vmatpush.msra.mxu0 0.0
      %2106 = vmatpush.msra.mxu0 0.0
      %2107 = vmatpush.msra.mxu0 0.0
      %2108 = vmatpush.msra.mxu0 0.0
      %2109 = vmatpush.msra.mxu0 0.0
      %2110 = vmatpush.msra.mxu0 0.0
      %2111 = vmatpush.msra.mxu0 0.0
      %2112 = vmatpush.msra.mxu0 0.0
      %2113 = vmatpush.msra.mxu0 0.0
      %2114 = vmatpush.msra.mxu0 0.0
      %2115 = vmatpush.msra.mxu0 0.0
      %2116 = vmatpush.msra.mxu0 0.0
      %2117 = vmatpush.msra.mxu0 %v2070
      %2118 = vmatmul.f32.gmra.mxu0 %v2066
      %v2119 = vpop.f32.mrf.mxu0
      %v2120 = vadd.f32 0.0, %v2119
      %2121 = vdwg.mxu0
      %2122 = vmatpush.msra.mxu0 0.0
      %2123 = vmatpush.msra.mxu0 0.0
      %2124 = vmatpush.msra.mxu0 0.0
      %2125 = vmatpush.msra.mxu0 0.0
      %2126 = vmatpush.msra.mxu0 0.0
      %2127 = vmatpush.msra.mxu0 0.0
      %2128 = vmatpush.msra.mxu0 0.0
      %2129 = vmatpush.msra.mxu0 0.0
      %2130 = vmatpush.msra.mxu0 0.0
      %2131 = vmatpush.msra.mxu0 0.0
      %2132 = vmatpush.msra.mxu0 0.0
      %2133 = vmatpush.msra.mxu0 0.0
      %2134 = vmatpush.msra.mxu0 0.0
      %2135 = vmatpush.msra.mxu0 0.0
      %2136 = vmatpush.msra.mxu0 0.0
      %2137 = vmatpush.msra.mxu0 %v2072
      %2138 = vmatmul.f32.gmra.mxu0 %v2066
      %v2139 = vpop.f32.mrf.mxu0
      %v2140 = vadd.f32 0.0, %v2139
      %2141 = vdwg.mxu0
      %2142 = vmatpush.msra.mxu0 0.0
      %2143 = vmatpush.msra.mxu0 0.0
      %2144 = vmatpush.msra.mxu0 0.0
      %2145 = vmatpush.msra.mxu0 0.0
      %2146 = vmatpush.msra.mxu0 0.0
      %2147 = vmatpush.msra.mxu0 0.0
      %2148 = vmatpush.msra.mxu0 0.0
      %2149 = vmatpush.msra.mxu0 0.0
      %2150 = vmatpush.msra.mxu0 0.0
      %2151 = vmatpush.msra.mxu0 0.0
      %2152 = vmatpush.msra.mxu0 0.0
      %2153 = vmatpush.msra.mxu0 0.0
      %2154 = vmatpush.msra.mxu0 0.0
      %2155 = vmatpush.msra.mxu0 0.0
      %2156 = vmatpush.msra.mxu0 0.0
      %2157 = vmatpush.msra.mxu0 %v2074
      %2158 = vmatmul.f32.gmra.mxu0 %v2066
      %v2159 = vpop.f32.mrf.mxu0
      %v2160 = vadd.f32 0.0, %v2159
      %2161 = vdwg.mxu0
      %2162 = vmatpush.msra.mxu0 0.0
      %2163 = vmatpush.msra.mxu0 0.0
      %2164 = vmatpush.msra.mxu0 0.0
      %2165 = vmatpush.msra.mxu0 0.0
      %2166 = vmatpush.msra.mxu0 0.0
      %2167 = vmatpush.msra.mxu0 0.0
      %2168 = vmatpush.msra.mxu0 0.0
      %2169 = vmatpush.msra.mxu0 0.0
      %2170 = vmatpush.msra.mxu0 0.0
      %2171 = vmatpush.msra.mxu0 0.0
      %2172 = vmatpush.msra.mxu0 0.0
      %2173 = vmatpush.msra.mxu0 0.0
      %2174 = vmatpush.msra.mxu0 0.0
      %2175 = vmatpush.msra.mxu0 0.0
      %2176 = vmatpush.msra.mxu0 0.0
      %2177 = vmatpush.msra.mxu0 %v2076
      %2178 = vmatmul.f32.gmra.mxu0 %v2066
      %v2179 = vpop.f32.mrf.mxu0
      %v2180 = vadd.f32 0.0, %v2179
      %2181 = vdwg.mxu0
      %2182 = vmatpush.msra.mxu0 0.0
      %2183 = vmatpush.msra.mxu0 0.0
      %2184 = vmatpush.msra.mxu0 0.0
      %2185 = vmatpush.msra.mxu0 0.0
      %2186 = vmatpush.msra.mxu0 0.0
      %2187 = vmatpush.msra.mxu0 0.0
      %2188 = vmatpush.msra.mxu0 0.0
      %2189 = vmatpush.msra.mxu0 0.0
      %2190 = vmatpush.msra.mxu0 0.0
      %2191 = vmatpush.msra.mxu0 0.0
      %2192 = vmatpush.msra.mxu0 0.0
      %2193 = vmatpush.msra.mxu0 0.0
      %2194 = vmatpush.msra.mxu0 0.0
      %2195 = vmatpush.msra.mxu0 0.0
      %2196 = vmatpush.msra.mxu0 0.0
      %2197 = vmatpush.msra.mxu0 %v2078
      %2198 = vmatmul.f32.gmra.mxu0 %v2066
      %v2199 = vpop.f32.mrf.mxu0
      %v2200 = vadd.f32 0.0, %v2199
      %2201 = vdwg.mxu0
      %2202 = vmatpush.msra.mxu0 0.0
      %2203 = vmatpush.msra.mxu0 0.0
      %2204 = vmatpush.msra.mxu0 0.0
      %2205 = vmatpush.msra.mxu0 0.0
      %2206 = vmatpush.msra.mxu0 0.0
      %2207 = vmatpush.msra.mxu0 0.0
      %2208 = vmatpush.msra.mxu0 0.0
      %2209 = vmatpush.msra.mxu0 0.0
      %2210 = vmatpush.msra.mxu0 0.0
      %2211 = vmatpush.msra.mxu0 0.0
      %2212 = vmatpush.msra.mxu0 0.0
      %2213 = vmatpush.msra.mxu0 0.0
      %2214 = vmatpush.msra.mxu0 0.0
      %2215 = vmatpush.msra.mxu0 0.0
      %2216 = vmatpush.msra.mxu0 0.0
      %2217 = vmatpush.msra.mxu0 %v2080
      %2218 = vmatmul.f32.gmra.mxu0 %v2066
      %v2219 = vpop.f32.mrf.mxu0
      %v2220 = vadd.f32 0.0, %v2219
      %2221 = vdwg.mxu0
      %v2222 = vadd.f32 %v2017, %v2100
      %v2223 = vadd.f32 %v2018, %v2120
      %v2224 = vadd.f32 %v2019, %v2140
      %v2225 = vadd.f32 %v2020, %v2160
      %v2226 = vadd.f32 %v2021, %v2180
      %v2227 = vadd.f32 %v2022, %v2200
      %v2228 = vadd.f32 %v2023, %v2220
      %s2229 = scalar_lea.vmem %s1, 80
      %v2230 = vld [vmem:[%s2229] sm:$0x3f]
      %2231 = vst [vmem:[#allocation1] ss:$2 sm:$0xff] %v225
      %s2232 = scalar_lea.vmem [#allocation1], 16
      %2233 = vst [vmem:[%s2232] ss:$2 sm:$0xff] %v226
      %s2234 = scalar_lea.vmem [#allocation1], 32
      %2235 = vst [vmem:[%s2234] ss:$2 sm:$0xff] %v227
      %s2236 = scalar_lea.vmem [#allocation1], 48
      %2237 = vst [vmem:[%s2236] ss:$2 sm:$0xff] %v228
      %v2238 = vld.sshfl [vmem:[#allocation1] sm:$0xff pattern:$0x75316420]
      %v2239 = vld.sshfl [vmem:[#allocation1 + $0x8] sm:$0xff pattern:$0x75316420]
      %v2240 = vld.sshfl [vmem:[#allocation1 + $0x10] sm:$0xff pattern:$0x75316420]
      %v2241 = vld.sshfl [vmem:[#allocation1 + $0x18] sm:$0xff pattern:$0x75316420]
      %v2242 = vld.sshfl [vmem:[#allocation1 + $0x20] sm:$0xff pattern:$0x75316420]
      %v2243 = vld.sshfl [vmem:[#allocation1 + $0x28] sm:$0xff pattern:$0x75316420]
      %v2244 = vld.sshfl [vmem:[#allocation1 + $0x30] sm:$0xff pattern:$0x75316420]
      %v2245 = vld.sshfl [vmem:[#allocation1 + $0x38] sm:$0xff pattern:$0x75316420]
      %2246 = vrot.lane.b32.xlu0 %v2238, 64
      %v2247 = vpop.permute.xlu0 %2246
      %2248 = vrot.lane.b32.xlu0 %v2239, 64
      %v2249 = vpop.permute.xlu0 %2248
      %2250 = vrot.lane.b32.xlu0 %v2240, 64
      %v2251 = vpop.permute.xlu0 %2250
      %2252 = vrot.lane.b32.xlu0 %v2241, 64
      %v2253 = vpop.permute.xlu0 %2252
      %2254 = vrot.lane.b32.xlu0 %v2242, 64
      %v2255 = vpop.permute.xlu0 %2254
      %2256 = vrot.lane.b32.xlu0 %v2243, 64
      %v2257 = vpop.permute.xlu0 %2256
      %2258 = vrot.lane.b32.xlu0 %v2244, 64
      %v2259 = vpop.permute.xlu0 %2258
      %2260 = vrot.lane.b32.xlu0 %v2245, 64
      %v2261 = vpop.permute.xlu0 %2260
      %vm2262 = vcmask 523264
      %v2263 = vsel %vm2262, %v2247, %v2249
      %v2264 = vsel %vm2262, %v2249, %v2251
      %v2265 = vsel %vm2262, %v2251, %v2253
      %v2266 = vsel %vm2262, %v2253, %v2255
      %v2267 = vsel %vm2262, %v2255, %v2257
      %v2268 = vsel %vm2262, %v2257, %v2259
      %v2269 = vsel %vm2262, %v2259, %v2261
      %v2271 = vsel %vm271, %v2230, 0
      %v2273 = vsel %vm275, %v2263, 0
      %v2275 = vsel %vm275, %v2264, 0
      %v2277 = vsel %vm275, %v2265, 0
      %v2279 = vsel %vm275, %v2266, 0
      %v2281 = vsel %vm275, %v2267, 0
      %v2283 = vsel %vm275, %v2268, 0
      %v2285 = vsel %vm275, %v2269, 0
      %2287 = vmatpush.msra.mxu0 0.0
      %2288 = vmatpush.msra.mxu0 0.0
      %2289 = vmatpush.msra.mxu0 0.0
      %2290 = vmatpush.msra.mxu0 0.0
      %2291 = vmatpush.msra.mxu0 0.0
      %2292 = vmatpush.msra.mxu0 0.0
      %2293 = vmatpush.msra.mxu0 0.0
      %2294 = vmatpush.msra.mxu0 0.0
      %2295 = vmatpush.msra.mxu0 0.0
      %2296 = vmatpush.msra.mxu0 0.0
      %2297 = vmatpush.msra.mxu0 0.0
      %2298 = vmatpush.msra.mxu0 0.0
      %2299 = vmatpush.msra.mxu0 0.0
      %2300 = vmatpush.msra.mxu0 0.0
      %2301 = vmatpush.msra.mxu0 0.0
      %2302 = vmatpush.msra.mxu0 %v2273
      %2303 = vmatmul.f32.gmra.mxu0 %v2271
      %v2304 = vpop.f32.mrf.mxu0
      %v2305 = vadd.f32 0.0, %v2304
      %2306 = vdwg.mxu0
      %2307 = vmatpush.msra.mxu0 0.0
      %2308 = vmatpush.msra.mxu0 0.0
      %2309 = vmatpush.msra.mxu0 0.0
      %2310 = vmatpush.msra.mxu0 0.0
      %2311 = vmatpush.msra.mxu0 0.0
      %2312 = vmatpush.msra.mxu0 0.0
      %2313 = vmatpush.msra.mxu0 0.0
      %2314 = vmatpush.msra.mxu0 0.0
      %2315 = vmatpush.msra.mxu0 0.0
      %2316 = vmatpush.msra.mxu0 0.0
      %2317 = vmatpush.msra.mxu0 0.0
      %2318 = vmatpush.msra.mxu0 0.0
      %2319 = vmatpush.msra.mxu0 0.0
      %2320 = vmatpush.msra.mxu0 0.0
      %2321 = vmatpush.msra.mxu0 0.0
      %2322 = vmatpush.msra.mxu0 %v2275
      %2323 = vmatmul.f32.gmra.mxu0 %v2271
      %v2324 = vpop.f32.mrf.mxu0
      %v2325 = vadd.f32 0.0, %v2324
      %2326 = vdwg.mxu0
      %2327 = vmatpush.msra.mxu0 0.0
      %2328 = vmatpush.msra.mxu0 0.0
      %2329 = vmatpush.msra.mxu0 0.0
      %2330 = vmatpush.msra.mxu0 0.0
      %2331 = vmatpush.msra.mxu0 0.0
      %2332 = vmatpush.msra.mxu0 0.0
      %2333 = vmatpush.msra.mxu0 0.0
      %2334 = vmatpush.msra.mxu0 0.0
      %2335 = vmatpush.msra.mxu0 0.0
      %2336 = vmatpush.msra.mxu0 0.0
      %2337 = vmatpush.msra.mxu0 0.0
      %2338 = vmatpush.msra.mxu0 0.0
      %2339 = vmatpush.msra.mxu0 0.0
      %2340 = vmatpush.msra.mxu0 0.0
      %2341 = vmatpush.msra.mxu0 0.0
      %2342 = vmatpush.msra.mxu0 %v2277
      %2343 = vmatmul.f32.gmra.mxu0 %v2271
      %v2344 = vpop.f32.mrf.mxu0
      %v2345 = vadd.f32 0.0, %v2344
      %2346 = vdwg.mxu0
      %2347 = vmatpush.msra.mxu0 0.0
      %2348 = vmatpush.msra.mxu0 0.0
      %2349 = vmatpush.msra.mxu0 0.0
      %2350 = vmatpush.msra.mxu0 0.0
      %2351 = vmatpush.msra.mxu0 0.0
      %2352 = vmatpush.msra.mxu0 0.0
      %2353 = vmatpush.msra.mxu0 0.0
      %2354 = vmatpush.msra.mxu0 0.0
      %2355 = vmatpush.msra.mxu0 0.0
      %2356 = vmatpush.msra.mxu0 0.0
      %2357 = vmatpush.msra.mxu0 0.0
      %2358 = vmatpush.msra.mxu0 0.0
      %2359 = vmatpush.msra.mxu0 0.0
      %2360 = vmatpush.msra.mxu0 0.0
      %2361 = vmatpush.msra.mxu0 0.0
      %2362 = vmatpush.msra.mxu0 %v2279
      %2363 = vmatmul.f32.gmra.mxu0 %v2271
      %v2364 = vpop.f32.mrf.mxu0
      %v2365 = vadd.f32 0.0, %v2364
      %2366 = vdwg.mxu0
      %2367 = vmatpush.msra.mxu0 0.0
      %2368 = vmatpush.msra.mxu0 0.0
      %2369 = vmatpush.msra.mxu0 0.0
      %2370 = vmatpush.msra.mxu0 0.0
      %2371 = vmatpush.msra.mxu0 0.0
      %2372 = vmatpush.msra.mxu0 0.0
      %2373 = vmatpush.msra.mxu0 0.0
      %2374 = vmatpush.msra.mxu0 0.0
      %2375 = vmatpush.msra.mxu0 0.0
      %2376 = vmatpush.msra.mxu0 0.0
      %2377 = vmatpush.msra.mxu0 0.0
      %2378 = vmatpush.msra.mxu0 0.0
      %2379 = vmatpush.msra.mxu0 0.0
      %2380 = vmatpush.msra.mxu0 0.0
      %2381 = vmatpush.msra.mxu0 0.0
      %2382 = vmatpush.msra.mxu0 %v2281
      %2383 = vmatmul.f32.gmra.mxu0 %v2271
      %v2384 = vpop.f32.mrf.mxu0
      %v2385 = vadd.f32 0.0, %v2384
      %2386 = vdwg.mxu0
      %2387 = vmatpush.msra.mxu0 0.0
      %2388 = vmatpush.msra.mxu0 0.0
      %2389 = vmatpush.msra.mxu0 0.0
      %2390 = vmatpush.msra.mxu0 0.0
      %2391 = vmatpush.msra.mxu0 0.0
      %2392 = vmatpush.msra.mxu0 0.0
      %2393 = vmatpush.msra.mxu0 0.0
      %2394 = vmatpush.msra.mxu0 0.0
      %2395 = vmatpush.msra.mxu0 0.0
      %2396 = vmatpush.msra.mxu0 0.0
      %2397 = vmatpush.msra.mxu0 0.0
      %2398 = vmatpush.msra.mxu0 0.0
      %2399 = vmatpush.msra.mxu0 0.0
      %2400 = vmatpush.msra.mxu0 0.0
      %2401 = vmatpush.msra.mxu0 0.0
      %2402 = vmatpush.msra.mxu0 %v2283
      %2403 = vmatmul.f32.gmra.mxu0 %v2271
      %v2404 = vpop.f32.mrf.mxu0
      %v2405 = vadd.f32 0.0, %v2404
      %2406 = vdwg.mxu0
      %2407 = vmatpush.msra.mxu0 0.0
      %2408 = vmatpush.msra.mxu0 0.0
      %2409 = vmatpush.msra.mxu0 0.0
      %2410 = vmatpush.msra.mxu0 0.0
      %2411 = vmatpush.msra.mxu0 0.0
      %2412 = vmatpush.msra.mxu0 0.0
      %2413 = vmatpush.msra.mxu0 0.0
      %2414 = vmatpush.msra.mxu0 0.0
      %2415 = vmatpush.msra.mxu0 0.0
      %2416 = vmatpush.msra.mxu0 0.0
      %2417 = vmatpush.msra.mxu0 0.0
      %2418 = vmatpush.msra.mxu0 0.0
      %2419 = vmatpush.msra.mxu0 0.0
      %2420 = vmatpush.msra.mxu0 0.0
      %2421 = vmatpush.msra.mxu0 0.0
      %2422 = vmatpush.msra.mxu0 %v2285
      %2423 = vmatmul.f32.gmra.mxu0 %v2271
      %v2424 = vpop.f32.mrf.mxu0
      %v2425 = vadd.f32 0.0, %v2424
      %2426 = vdwg.mxu0
      %v2427 = vadd.f32 %v2222, %v2305
      %v2428 = vadd.f32 %v2223, %v2325
      %v2429 = vadd.f32 %v2224, %v2345
      %v2430 = vadd.f32 %v2225, %v2365
      %v2431 = vadd.f32 %v2226, %v2385
      %v2432 = vadd.f32 %v2227, %v2405
      %v2433 = vadd.f32 %v2228, %v2425
      %s2434 = scalar_lea.vmem %s1, 88
      %v2435 = vld [vmem:[%s2434] sm:$0x3f]
      %2436 = vst [vmem:[#allocation1] ss:$2 sm:$0xff] %v225
      %s2437 = scalar_lea.vmem [#allocation1], 16
      %2438 = vst [vmem:[%s2437] ss:$2 sm:$0xff] %v226
      %s2439 = scalar_lea.vmem [#allocation1], 32
      %2440 = vst [vmem:[%s2439] ss:$2 sm:$0xff] %v227
      %s2441 = scalar_lea.vmem [#allocation1], 48
      %2442 = vst [vmem:[%s2441] ss:$2 sm:$0xff] %v228
      %v2443 = vld.sshfl [vmem:[#allocation1] sm:$0xff pattern:$0x75316420]
      %v2444 = vld.sshfl [vmem:[#allocation1 + $0x8] sm:$0xff pattern:$0x75316420]
      %v2445 = vld.sshfl [vmem:[#allocation1 + $0x10] sm:$0xff pattern:$0x75316420]
      %v2446 = vld.sshfl [vmem:[#allocation1 + $0x18] sm:$0xff pattern:$0x75316420]
      %v2447 = vld.sshfl [vmem:[#allocation1 + $0x20] sm:$0xff pattern:$0x75316420]
      %v2448 = vld.sshfl [vmem:[#allocation1 + $0x28] sm:$0xff pattern:$0x75316420]
      %v2449 = vld.sshfl [vmem:[#allocation1 + $0x30] sm:$0xff pattern:$0x75316420]
      %v2450 = vld.sshfl [vmem:[#allocation1 + $0x38] sm:$0xff pattern:$0x75316420]
      %2451 = vrot.lane.b32.xlu0 %v2443, 63
      %v2452 = vpop.permute.xlu0 %2451
      %2453 = vrot.lane.b32.xlu0 %v2444, 63
      %v2454 = vpop.permute.xlu0 %2453
      %2455 = vrot.lane.b32.xlu0 %v2445, 63
      %v2456 = vpop.permute.xlu0 %2455
      %2457 = vrot.lane.b32.xlu0 %v2446, 63
      %v2458 = vpop.permute.xlu0 %2457
      %2459 = vrot.lane.b32.xlu0 %v2447, 63
      %v2460 = vpop.permute.xlu0 %2459
      %2461 = vrot.lane.b32.xlu0 %v2448, 63
      %v2462 = vpop.permute.xlu0 %2461
      %2463 = vrot.lane.b32.xlu0 %v2449, 63
      %v2464 = vpop.permute.xlu0 %2463
      %2465 = vrot.lane.b32.xlu0 %v2450, 63
      %v2466 = vpop.permute.xlu0 %2465
      %vm2467 = vcmask 515072
      %v2468 = vsel %vm2467, %v2452, %v2454
      %v2469 = vsel %vm2467, %v2454, %v2456
      %v2470 = vsel %vm2467, %v2456, %v2458
      %v2471 = vsel %vm2467, %v2458, %v2460
      %v2472 = vsel %vm2467, %v2460, %v2462
      %v2473 = vsel %vm2467, %v2462, %v2464
      %v2474 = vsel %vm2467, %v2464, %v2466
      %v2476 = vsel %vm271, %v2435, 0
      %v2478 = vsel %vm275, %v2468, 0
      %v2480 = vsel %vm275, %v2469, 0
      %v2482 = vsel %vm275, %v2470, 0
      %v2484 = vsel %vm275, %v2471, 0
      %v2486 = vsel %vm275, %v2472, 0
      %v2488 = vsel %vm275, %v2473, 0
      %v2490 = vsel %vm275, %v2474, 0
      %2492 = vmatpush.msra.mxu0 0.0
      %2493 = vmatpush.msra.mxu0 0.0
      %2494 = vmatpush.msra.mxu0 0.0
      %2495 = vmatpush.msra.mxu0 0.0
      %2496 = vmatpush.msra.mxu0 0.0
      %2497 = vmatpush.msra.mxu0 0.0
      %2498 = vmatpush.msra.mxu0 0.0
      %2499 = vmatpush.msra.mxu0 0.0
      %2500 = vmatpush.msra.mxu0 0.0
      %2501 = vmatpush.msra.mxu0 0.0
      %2502 = vmatpush.msra.mxu0 0.0
      %2503 = vmatpush.msra.mxu0 0.0
      %2504 = vmatpush.msra.mxu0 0.0
      %2505 = vmatpush.msra.mxu0 0.0
      %2506 = vmatpush.msra.mxu0 0.0
      %2507 = vmatpush.msra.mxu0 %v2478
      %2508 = vmatmul.f32.gmra.mxu0 %v2476
      %v2509 = vpop.f32.mrf.mxu0
      %v2510 = vadd.f32 0.0, %v2509
      %2511 = vdwg.mxu0
      %2512 = vmatpush.msra.mxu0 0.0
      %2513 = vmatpush.msra.mxu0 0.0
      %2514 = vmatpush.msra.mxu0 0.0
      %2515 = vmatpush.msra.mxu0 0.0
      %2516 = vmatpush.msra.mxu0 0.0
      %2517 = vmatpush.msra.mxu0 0.0
      %2518 = vmatpush.msra.mxu0 0.0
      %2519 = vmatpush.msra.mxu0 0.0
      %2520 = vmatpush.msra.mxu0 0.0
      %2521 = vmatpush.msra.mxu0 0.0
      %2522 = vmatpush.msra.mxu0 0.0
      %2523 = vmatpush.msra.mxu0 0.0
      %2524 = vmatpush.msra.mxu0 0.0
      %2525 = vmatpush.msra.mxu0 0.0
      %2526 = vmatpush.msra.mxu0 0.0
      %2527 = vmatpush.msra.mxu0 %v2480
      %2528 = vmatmul.f32.gmra.mxu0 %v2476
      %v2529 = vpop.f32.mrf.mxu0
      %v2530 = vadd.f32 0.0, %v2529
      %2531 = vdwg.mxu0
      %2532 = vmatpush.msra.mxu0 0.0
      %2533 = vmatpush.msra.mxu0 0.0
      %2534 = vmatpush.msra.mxu0 0.0
      %2535 = vmatpush.msra.mxu0 0.0
      %2536 = vmatpush.msra.mxu0 0.0
      %2537 = vmatpush.msra.mxu0 0.0
      %2538 = vmatpush.msra.mxu0 0.0
      %2539 = vmatpush.msra.mxu0 0.0
      %2540 = vmatpush.msra.mxu0 0.0
      %2541 = vmatpush.msra.mxu0 0.0
      %2542 = vmatpush.msra.mxu0 0.0
      %2543 = vmatpush.msra.mxu0 0.0
      %2544 = vmatpush.msra.mxu0 0.0
      %2545 = vmatpush.msra.mxu0 0.0
      %2546 = vmatpush.msra.mxu0 0.0
      %2547 = vmatpush.msra.mxu0 %v2482
      %2548 = vmatmul.f32.gmra.mxu0 %v2476
      %v2549 = vpop.f32.mrf.mxu0
      %v2550 = vadd.f32 0.0, %v2549
      %2551 = vdwg.mxu0
      %2552 = vmatpush.msra.mxu0 0.0
      %2553 = vmatpush.msra.mxu0 0.0
      %2554 = vmatpush.msra.mxu0 0.0
      %2555 = vmatpush.msra.mxu0 0.0
      %2556 = vmatpush.msra.mxu0 0.0
      %2557 = vmatpush.msra.mxu0 0.0
      %2558 = vmatpush.msra.mxu0 0.0
      %2559 = vmatpush.msra.mxu0 0.0
      %2560 = vmatpush.msra.mxu0 0.0
      %2561 = vmatpush.msra.mxu0 0.0
      %2562 = vmatpush.msra.mxu0 0.0
      %2563 = vmatpush.msra.mxu0 0.0
      %2564 = vmatpush.msra.mxu0 0.0
      %2565 = vmatpush.msra.mxu0 0.0
      %2566 = vmatpush.msra.mxu0 0.0
      %2567 = vmatpush.msra.mxu0 %v2484
      %2568 = vmatmul.f32.gmra.mxu0 %v2476
      %v2569 = vpop.f32.mrf.mxu0
      %v2570 = vadd.f32 0.0, %v2569
      %2571 = vdwg.mxu0
      %2572 = vmatpush.msra.mxu0 0.0
      %2573 = vmatpush.msra.mxu0 0.0
      %2574 = vmatpush.msra.mxu0 0.0
      %2575 = vmatpush.msra.mxu0 0.0
      %2576 = vmatpush.msra.mxu0 0.0
      %2577 = vmatpush.msra.mxu0 0.0
      %2578 = vmatpush.msra.mxu0 0.0
      %2579 = vmatpush.msra.mxu0 0.0
      %2580 = vmatpush.msra.mxu0 0.0
      %2581 = vmatpush.msra.mxu0 0.0
      %2582 = vmatpush.msra.mxu0 0.0
      %2583 = vmatpush.msra.mxu0 0.0
      %2584 = vmatpush.msra.mxu0 0.0
      %2585 = vmatpush.msra.mxu0 0.0
      %2586 = vmatpush.msra.mxu0 0.0
      %2587 = vmatpush.msra.mxu0 %v2486
      %2588 = vmatmul.f32.gmra.mxu0 %v2476
      %v2589 = vpop.f32.mrf.mxu0
      %v2590 = vadd.f32 0.0, %v2589
      %2591 = vdwg.mxu0
      %2592 = vmatpush.msra.mxu0 0.0
      %2593 = vmatpush.msra.mxu0 0.0
      %2594 = vmatpush.msra.mxu0 0.0
      %2595 = vmatpush.msra.mxu0 0.0
      %2596 = vmatpush.msra.mxu0 0.0
      %2597 = vmatpush.msra.mxu0 0.0
      %2598 = vmatpush.msra.mxu0 0.0
      %2599 = vmatpush.msra.mxu0 0.0
      %2600 = vmatpush.msra.mxu0 0.0
      %2601 = vmatpush.msra.mxu0 0.0
      %2602 = vmatpush.msra.mxu0 0.0
      %2603 = vmatpush.msra.mxu0 0.0
      %2604 = vmatpush.msra.mxu0 0.0
      %2605 = vmatpush.msra.mxu0 0.0
      %2606 = vmatpush.msra.mxu0 0.0
      %2607 = vmatpush.msra.mxu0 %v2488
      %2608 = vmatmul.f32.gmra.mxu0 %v2476
      %v2609 = vpop.f32.mrf.mxu0
      %v2610 = vadd.f32 0.0, %v2609
      %2611 = vdwg.mxu0
      %2612 = vmatpush.msra.mxu0 0.0
      %2613 = vmatpush.msra.mxu0 0.0
      %2614 = vmatpush.msra.mxu0 0.0
      %2615 = vmatpush.msra.mxu0 0.0
      %2616 = vmatpush.msra.mxu0 0.0
      %2617 = vmatpush.msra.mxu0 0.0
      %2618 = vmatpush.msra.mxu0 0.0
      %2619 = vmatpush.msra.mxu0 0.0
      %2620 = vmatpush.msra.mxu0 0.0
      %2621 = vmatpush.msra.mxu0 0.0
      %2622 = vmatpush.msra.mxu0 0.0
      %2623 = vmatpush.msra.mxu0 0.0
      %2624 = vmatpush.msra.mxu0 0.0
      %2625 = vmatpush.msra.mxu0 0.0
      %2626 = vmatpush.msra.mxu0 0.0
      %2627 = vmatpush.msra.mxu0 %v2490
      %2628 = vmatmul.f32.gmra.mxu0 %v2476
      %v2629 = vpop.f32.mrf.mxu0
      %v2630 = vadd.f32 0.0, %v2629
      %2631 = vdwg.mxu0
      %v2632 = vadd.f32 %v2427, %v2510
      %v2633 = vadd.f32 %v2428, %v2530
      %v2634 = vadd.f32 %v2429, %v2550
      %v2635 = vadd.f32 %v2430, %v2570
      %v2636 = vadd.f32 %v2431, %v2590
      %v2637 = vadd.f32 %v2432, %v2610
      %v2638 = vadd.f32 %v2433, %v2630
      %s2639 = scalar_lea.vmem %s1, 96
      %v2640 = vld [vmem:[%s2639] sm:$0x3f]
      %2641 = vst [vmem:[#allocation1] ss:$2 sm:$0xff] %v225
      %s2642 = scalar_lea.vmem [#allocation1], 16
      %2643 = vst [vmem:[%s2642] ss:$2 sm:$0xff] %v226
      %s2644 = scalar_lea.vmem [#allocation1], 32
      %2645 = vst [vmem:[%s2644] ss:$2 sm:$0xff] %v227
      %s2646 = scalar_lea.vmem [#allocation1], 48
      %2647 = vst [vmem:[%s2646] ss:$2 sm:$0xff] %v228
      %v2648 = vld.sshfl [vmem:[#allocation1] sm:$0xff pattern:$0x75316420]
      %v2649 = vld.sshfl [vmem:[#allocation1 + $0x8] sm:$0xff pattern:$0x75316420]
      %v2650 = vld.sshfl [vmem:[#allocation1 + $0x10] sm:$0xff pattern:$0x75316420]
      %v2651 = vld.sshfl [vmem:[#allocation1 + $0x18] sm:$0xff pattern:$0x75316420]
      %v2652 = vld.sshfl [vmem:[#allocation1 + $0x20] sm:$0xff pattern:$0x75316420]
      %v2653 = vld.sshfl [vmem:[#allocation1 + $0x28] sm:$0xff pattern:$0x75316420]
      %v2654 = vld.sshfl [vmem:[#allocation1 + $0x30] sm:$0xff pattern:$0x75316420]
      %v2655 = vld.sshfl [vmem:[#allocation1 + $0x38] sm:$0xff pattern:$0x75316420]
      %2656 = vrot.lane.b32.xlu0 %v2648, 62
      %v2657 = vpop.permute.xlu0 %2656
      %2658 = vrot.lane.b32.xlu0 %v2649, 62
      %v2659 = vpop.permute.xlu0 %2658
      %2660 = vrot.lane.b32.xlu0 %v2650, 62
      %v2661 = vpop.permute.xlu0 %2660
      %2662 = vrot.lane.b32.xlu0 %v2651, 62
      %v2663 = vpop.permute.xlu0 %2662
      %2664 = vrot.lane.b32.xlu0 %v2652, 62
      %v2665 = vpop.permute.xlu0 %2664
      %2666 = vrot.lane.b32.xlu0 %v2653, 62
      %v2667 = vpop.permute.xlu0 %2666
      %2668 = vrot.lane.b32.xlu0 %v2654, 62
      %v2669 = vpop.permute.xlu0 %2668
      %2670 = vrot.lane.b32.xlu0 %v2655, 62
      %v2671 = vpop.permute.xlu0 %2670
      %vm2672 = vcmask 506880
      %v2673 = vsel %vm2672, %v2657, %v2659
      %v2674 = vsel %vm2672, %v2659, %v2661
      %v2675 = vsel %vm2672, %v2661, %v2663
      %v2676 = vsel %vm2672, %v2663, %v2665
      %v2677 = vsel %vm2672, %v2665, %v2667
      %v2678 = vsel %vm2672, %v2667, %v2669
      %v2679 = vsel %vm2672, %v2669, %v2671
      %v2681 = vsel %vm271, %v2640, 0
      %v2683 = vsel %vm275, %v2673, 0
      %v2685 = vsel %vm275, %v2674, 0
      %v2687 = vsel %vm275, %v2675, 0
      %v2689 = vsel %vm275, %v2676, 0
      %v2691 = vsel %vm275, %v2677, 0
      %v2693 = vsel %vm275, %v2678, 0
      %v2695 = vsel %vm275, %v2679, 0
      %2697 = vmatpush.msra.mxu0 0.0
      %2698 = vmatpush.msra.mxu0 0.0
      %2699 = vmatpush.msra.mxu0 0.0
      %2700 = vmatpush.msra.mxu0 0.0
      %2701 = vmatpush.msra.mxu0 0.0
      %2702 = vmatpush.msra.mxu0 0.0
      %2703 = vmatpush.msra.mxu0 0.0
      %2704 = vmatpush.msra.mxu0 0.0
      %2705 = vmatpush.msra.mxu0 0.0
      %2706 = vmatpush.msra.mxu0 0.0
      %2707 = vmatpush.msra.mxu0 0.0
      %2708 = vmatpush.msra.mxu0 0.0
      %2709 = vmatpush.msra.mxu0 0.0
      %2710 = vmatpush.msra.mxu0 0.0
      %2711 = vmatpush.msra.mxu0 0.0
      %2712 = vmatpush.msra.mxu0 %v2683
      %2713 = vmatmul.f32.gmra.mxu0 %v2681
      %v2714 = vpop.f32.mrf.mxu0
      %v2715 = vadd.f32 0.0, %v2714
      %2716 = vdwg.mxu0
      %2717 = vmatpush.msra.mxu0 0.0
      %2718 = vmatpush.msra.mxu0 0.0
      %2719 = vmatpush.msra.mxu0 0.0
      %2720 = vmatpush.msra.mxu0 0.0
      %2721 = vmatpush.msra.mxu0 0.0
      %2722 = vmatpush.msra.mxu0 0.0
      %2723 = vmatpush.msra.mxu0 0.0
      %2724 = vmatpush.msra.mxu0 0.0
      %2725 = vmatpush.msra.mxu0 0.0
      %2726 = vmatpush.msra.mxu0 0.0
      %2727 = vmatpush.msra.mxu0 0.0
      %2728 = vmatpush.msra.mxu0 0.0
      %2729 = vmatpush.msra.mxu0 0.0
      %2730 = vmatpush.msra.mxu0 0.0
      %2731 = vmatpush.msra.mxu0 0.0
      %2732 = vmatpush.msra.mxu0 %v2685
      %2733 = vmatmul.f32.gmra.mxu0 %v2681
      %v2734 = vpop.f32.mrf.mxu0
      %v2735 = vadd.f32 0.0, %v2734
      %2736 = vdwg.mxu0
      %2737 = vmatpush.msra.mxu0 0.0
      %2738 = vmatpush.msra.mxu0 0.0
      %2739 = vmatpush.msra.mxu0 0.0
      %2740 = vmatpush.msra.mxu0 0.0
      %2741 = vmatpush.msra.mxu0 0.0
      %2742 = vmatpush.msra.mxu0 0.0
      %2743 = vmatpush.msra.mxu0 0.0
      %2744 = vmatpush.msra.mxu0 0.0
      %2745 = vmatpush.msra.mxu0 0.0
      %2746 = vmatpush.msra.mxu0 0.0
      %2747 = vmatpush.msra.mxu0 0.0
      %2748 = vmatpush.msra.mxu0 0.0
      %2749 = vmatpush.msra.mxu0 0.0
      %2750 = vmatpush.msra.mxu0 0.0
      %2751 = vmatpush.msra.mxu0 0.0
      %2752 = vmatpush.msra.mxu0 %v2687
      %2753 = vmatmul.f32.gmra.mxu0 %v2681
      %v2754 = vpop.f32.mrf.mxu0
      %v2755 = vadd.f32 0.0, %v2754
      %2756 = vdwg.mxu0
      %2757 = vmatpush.msra.mxu0 0.0
      %2758 = vmatpush.msra.mxu0 0.0
      %2759 = vmatpush.msra.mxu0 0.0
      %2760 = vmatpush.msra.mxu0 0.0
      %2761 = vmatpush.msra.mxu0 0.0
      %2762 = vmatpush.msra.mxu0 0.0
      %2763 = vmatpush.msra.mxu0 0.0
      %2764 = vmatpush.msra.mxu0 0.0
      %2765 = vmatpush.msra.mxu0 0.0
      %2766 = vmatpush.msra.mxu0 0.0
      %2767 = vmatpush.msra.mxu0 0.0
      %2768 = vmatpush.msra.mxu0 0.0
      %2769 = vmatpush.msra.mxu0 0.0
      %2770 = vmatpush.msra.mxu0 0.0
      %2771 = vmatpush.msra.mxu0 0.0
      %2772 = vmatpush.msra.mxu0 %v2689
      %2773 = vmatmul.f32.gmra.mxu0 %v2681
      %v2774 = vpop.f32.mrf.mxu0
      %v2775 = vadd.f32 0.0, %v2774
      %2776 = vdwg.mxu0
      %2777 = vmatpush.msra.mxu0 0.0
      %2778 = vmatpush.msra.mxu0 0.0
      %2779 = vmatpush.msra.mxu0 0.0
      %2780 = vmatpush.msra.mxu0 0.0
      %2781 = vmatpush.msra.mxu0 0.0
      %2782 = vmatpush.msra.mxu0 0.0
      %2783 = vmatpush.msra.mxu0 0.0
      %2784 = vmatpush.msra.mxu0 0.0
      %2785 = vmatpush.msra.mxu0 0.0
      %2786 = vmatpush.msra.mxu0 0.0
      %2787 = vmatpush.msra.mxu0 0.0
      %2788 = vmatpush.msra.mxu0 0.0
      %2789 = vmatpush.msra.mxu0 0.0
      %2790 = vmatpush.msra.mxu0 0.0
      %2791 = vmatpush.msra.mxu0 0.0
      %2792 = vmatpush.msra.mxu0 %v2691
      %2793 = vmatmul.f32.gmra.mxu0 %v2681
      %v2794 = vpop.f32.mrf.mxu0
      %v2795 = vadd.f32 0.0, %v2794
      %2796 = vdwg.mxu0
      %2797 = vmatpush.msra.mxu0 0.0
      %2798 = vmatpush.msra.mxu0 0.0
      %2799 = vmatpush.msra.mxu0 0.0
      %2800 = vmatpush.msra.mxu0 0.0
      %2801 = vmatpush.msra.mxu0 0.0
      %2802 = vmatpush.msra.mxu0 0.0
      %2803 = vmatpush.msra.mxu0 0.0
      %2804 = vmatpush.msra.mxu0 0.0
      %2805 = vmatpush.msra.mxu0 0.0
      %2806 = vmatpush.msra.mxu0 0.0
      %2807 = vmatpush.msra.mxu0 0.0
      %2808 = vmatpush.msra.mxu0 0.0
      %2809 = vmatpush.msra.mxu0 0.0
      %2810 = vmatpush.msra.mxu0 0.0
      %2811 = vmatpush.msra.mxu0 0.0
      %2812 = vmatpush.msra.mxu0 %v2693
      %2813 = vmatmul.f32.gmra.mxu0 %v2681
      %v2814 = vpop.f32.mrf.mxu0
      %v2815 = vadd.f32 0.0, %v2814
      %2816 = vdwg.mxu0
      %2817 = vmatpush.msra.mxu0 0.0
      %2818 = vmatpush.msra.mxu0 0.0
      %2819 = vmatpush.msra.mxu0 0.0
      %2820 = vmatpush.msra.mxu0 0.0
      %2821 = vmatpush.msra.mxu0 0.0
      %2822 = vmatpush.msra.mxu0 0.0
      %2823 = vmatpush.msra.mxu0 0.0
      %2824 = vmatpush.msra.mxu0 0.0
      %2825 = vmatpush.msra.mxu0 0.0
      %2826 = vmatpush.msra.mxu0 0.0
      %2827 = vmatpush.msra.mxu0 0.0
      %2828 = vmatpush.msra.mxu0 0.0
      %2829 = vmatpush.msra.mxu0 0.0
      %2830 = vmatpush.msra.mxu0 0.0
      %2831 = vmatpush.msra.mxu0 0.0
      %2832 = vmatpush.msra.mxu0 %v2695
      %2833 = vmatmul.f32.gmra.mxu0 %v2681
      %v2834 = vpop.f32.mrf.mxu0
      %v2835 = vadd.f32 0.0, %v2834
      %2836 = vdwg.mxu0
      %v2837 = vadd.f32 %v2632, %v2715
      %v2838 = vadd.f32 %v2633, %v2735
      %v2839 = vadd.f32 %v2634, %v2755
      %v2840 = vadd.f32 %v2635, %v2775
      %v2841 = vadd.f32 %v2636, %v2795
      %v2842 = vadd.f32 %v2637, %v2815
      %v2843 = vadd.f32 %v2638, %v2835
      %s2844 = scalar_lea.vmem %s1, 104
      %v2845 = vld [vmem:[%s2844] sm:$0x3f]
      %2846 = vst [vmem:[#allocation1] ss:$2 sm:$0xff] %v225
      %s2847 = scalar_lea.vmem [#allocation1], 16
      %2848 = vst [vmem:[%s2847] ss:$2 sm:$0xff] %v226
      %s2849 = scalar_lea.vmem [#allocation1], 32
      %2850 = vst [vmem:[%s2849] ss:$2 sm:$0xff] %v227
      %s2851 = scalar_lea.vmem [#allocation1], 48
      %2852 = vst [vmem:[%s2851] ss:$2 sm:$0xff] %v228
      %v2853 = vld.sshfl [vmem:[#allocation1] sm:$0xff pattern:$0x75316420]
      %v2854 = vld.sshfl [vmem:[#allocation1 + $0x8] sm:$0xff pattern:$0x75316420]
      %v2855 = vld.sshfl [vmem:[#allocation1 + $0x10] sm:$0xff pattern:$0x75316420]
      %v2856 = vld.sshfl [vmem:[#allocation1 + $0x18] sm:$0xff pattern:$0x75316420]
      %v2857 = vld.sshfl [vmem:[#allocation1 + $0x20] sm:$0xff pattern:$0x75316420]
      %v2858 = vld.sshfl [vmem:[#allocation1 + $0x28] sm:$0xff pattern:$0x75316420]
      %v2859 = vld.sshfl [vmem:[#allocation1 + $0x30] sm:$0xff pattern:$0x75316420]
      %v2860 = vld.sshfl [vmem:[#allocation1 + $0x38] sm:$0xff pattern:$0x75316420]
      %2861 = vrot.lane.b32.xlu0 %v2853, 61
      %v2862 = vpop.permute.xlu0 %2861
      %2863 = vrot.lane.b32.xlu0 %v2854, 61
      %v2864 = vpop.permute.xlu0 %2863
      %2865 = vrot.lane.b32.xlu0 %v2855, 61
      %v2866 = vpop.permute.xlu0 %2865
      %2867 = vrot.lane.b32.xlu0 %v2856, 61
      %v2868 = vpop.permute.xlu0 %2867
      %2869 = vrot.lane.b32.xlu0 %v2857, 61
      %v2870 = vpop.permute.xlu0 %2869
      %2871 = vrot.lane.b32.xlu0 %v2858, 61
      %v2872 = vpop.permute.xlu0 %2871
      %2873 = vrot.lane.b32.xlu0 %v2859, 61
      %v2874 = vpop.permute.xlu0 %2873
      %2875 = vrot.lane.b32.xlu0 %v2860, 61
      %v2876 = vpop.permute.xlu0 %2875
      %vm2877 = vcmask 498688
      %v2878 = vsel %vm2877, %v2862, %v2864
      %v2879 = vsel %vm2877, %v2864, %v2866
      %v2880 = vsel %vm2877, %v2866, %v2868
      %v2881 = vsel %vm2877, %v2868, %v2870
      %v2882 = vsel %vm2877, %v2870, %v2872
      %v2883 = vsel %vm2877, %v2872, %v2874
      %v2884 = vsel %vm2877, %v2874, %v2876
      %v2886 = vsel %vm271, %v2845, 0
      %v2888 = vsel %vm275, %v2878, 0
      %v2890 = vsel %vm275, %v2879, 0
      %v2892 = vsel %vm275, %v2880, 0
      %v2894 = vsel %vm275, %v2881, 0
      %v2896 = vsel %vm275, %v2882, 0
      %v2898 = vsel %vm275, %v2883, 0
      %v2900 = vsel %vm275, %v2884, 0
      %2902 = vmatpush.msra.mxu0 0.0
      %2903 = vmatpush.msra.mxu0 0.0
      %2904 = vmatpush.msra.mxu0 0.0
      %2905 = vmatpush.msra.mxu0 0.0
      %2906 = vmatpush.msra.mxu0 0.0
      %2907 = vmatpush.msra.mxu0 0.0
      %2908 = vmatpush.msra.mxu0 0.0
      %2909 = vmatpush.msra.mxu0 0.0
      %2910 = vmatpush.msra.mxu0 0.0
      %2911 = vmatpush.msra.mxu0 0.0
      %2912 = vmatpush.msra.mxu0 0.0
      %2913 = vmatpush.msra.mxu0 0.0
      %2914 = vmatpush.msra.mxu0 0.0
      %2915 = vmatpush.msra.mxu0 0.0
      %2916 = vmatpush.msra.mxu0 0.0
      %2917 = vmatpush.msra.mxu0 %v2888
      %2918 = vmatmul.f32.gmra.mxu0 %v2886
      %v2919 = vpop.f32.mrf.mxu0
      %v2920 = vadd.f32 0.0, %v2919
      %2921 = vdwg.mxu0
      %2922 = vmatpush.msra.mxu0 0.0
      %2923 = vmatpush.msra.mxu0 0.0
      %2924 = vmatpush.msra.mxu0 0.0
      %2925 = vmatpush.msra.mxu0 0.0
      %2926 = vmatpush.msra.mxu0 0.0
      %2927 = vmatpush.msra.mxu0 0.0
      %2928 = vmatpush.msra.mxu0 0.0
      %2929 = vmatpush.msra.mxu0 0.0
      %2930 = vmatpush.msra.mxu0 0.0
      %2931 = vmatpush.msra.mxu0 0.0
      %2932 = vmatpush.msra.mxu0 0.0
      %2933 = vmatpush.msra.mxu0 0.0
      %2934 = vmatpush.msra.mxu0 0.0
      %2935 = vmatpush.msra.mxu0 0.0
      %2936 = vmatpush.msra.mxu0 0.0
      %2937 = vmatpush.msra.mxu0 %v2890
      %2938 = vmatmul.f32.gmra.mxu0 %v2886
      %v2939 = vpop.f32.mrf.mxu0
      %v2940 = vadd.f32 0.0, %v2939
      %2941 = vdwg.mxu0
      %2942 = vmatpush.msra.mxu0 0.0
      %2943 = vmatpush.msra.mxu0 0.0
      %2944 = vmatpush.msra.mxu0 0.0
      %2945 = vmatpush.msra.mxu0 0.0
      %2946 = vmatpush.msra.mxu0 0.0
      %2947 = vmatpush.msra.mxu0 0.0
      %2948 = vmatpush.msra.mxu0 0.0
      %2949 = vmatpush.msra.mxu0 0.0
      %2950 = vmatpush.msra.mxu0 0.0
      %2951 = vmatpush.msra.mxu0 0.0
      %2952 = vmatpush.msra.mxu0 0.0
      %2953 = vmatpush.msra.mxu0 0.0
      %2954 = vmatpush.msra.mxu0 0.0
      %2955 = vmatpush.msra.mxu0 0.0
      %2956 = vmatpush.msra.mxu0 0.0
      %2957 = vmatpush.msra.mxu0 %v2892
      %2958 = vmatmul.f32.gmra.mxu0 %v2886
      %v2959 = vpop.f32.mrf.mxu0
      %v2960 = vadd.f32 0.0, %v2959
      %2961 = vdwg.mxu0
      %2962 = vmatpush.msra.mxu0 0.0
      %2963 = vmatpush.msra.mxu0 0.0
      %2964 = vmatpush.msra.mxu0 0.0
      %2965 = vmatpush.msra.mxu0 0.0
      %2966 = vmatpush.msra.mxu0 0.0
      %2967 = vmatpush.msra.mxu0 0.0
      %2968 = vmatpush.msra.mxu0 0.0
      %2969 = vmatpush.msra.mxu0 0.0
      %2970 = vmatpush.msra.mxu0 0.0
      %2971 = vmatpush.msra.mxu0 0.0
      %2972 = vmatpush.msra.mxu0 0.0
      %2973 = vmatpush.msra.mxu0 0.0
      %2974 = vmatpush.msra.mxu0 0.0
      %2975 = vmatpush.msra.mxu0 0.0
      %2976 = vmatpush.msra.mxu0 0.0
      %2977 = vmatpush.msra.mxu0 %v2894
      %2978 = vmatmul.f32.gmra.mxu0 %v2886
      %v2979 = vpop.f32.mrf.mxu0
      %v2980 = vadd.f32 0.0, %v2979
      %2981 = vdwg.mxu0
      %2982 = vmatpush.msra.mxu0 0.0
      %2983 = vmatpush.msra.mxu0 0.0
      %2984 = vmatpush.msra.mxu0 0.0
      %2985 = vmatpush.msra.mxu0 0.0
      %2986 = vmatpush.msra.mxu0 0.0
      %2987 = vmatpush.msra.mxu0 0.0
      %2988 = vmatpush.msra.mxu0 0.0
      %2989 = vmatpush.msra.mxu0 0.0
      %2990 = vmatpush.msra.mxu0 0.0
      %2991 = vmatpush.msra.mxu0 0.0
      %2992 = vmatpush.msra.mxu0 0.0
      %2993 = vmatpush.msra.mxu0 0.0
      %2994 = vmatpush.msra.mxu0 0.0
      %2995 = vmatpush.msra.mxu0 0.0
      %2996 = vmatpush.msra.mxu0 0.0
      %2997 = vmatpush.msra.mxu0 %v2896
      %2998 = vmatmul.f32.gmra.mxu0 %v2886
      %v2999 = vpop.f32.mrf.mxu0
      %v3000 = vadd.f32 0.0, %v2999
      %3001 = vdwg.mxu0
      %3002 = vmatpush.msra.mxu0 0.0
      %3003 = vmatpush.msra.mxu0 0.0
      %3004 = vmatpush.msra.mxu0 0.0
      %3005 = vmatpush.msra.mxu0 0.0
      %3006 = vmatpush.msra.mxu0 0.0
      %3007 = vmatpush.msra.mxu0 0.0
      %3008 = vmatpush.msra.mxu0 0.0
      %3009 = vmatpush.msra.mxu0 0.0
      %3010 = vmatpush.msra.mxu0 0.0
      %3011 = vmatpush.msra.mxu0 0.0
      %3012 = vmatpush.msra.mxu0 0.0
      %3013 = vmatpush.msra.mxu0 0.0
      %3014 = vmatpush.msra.mxu0 0.0
      %3015 = vmatpush.msra.mxu0 0.0
      %3016 = vmatpush.msra.mxu0 0.0
      %3017 = vmatpush.msra.mxu0 %v2898
      %3018 = vmatmul.f32.gmra.mxu0 %v2886
      %v3019 = vpop.f32.mrf.mxu0
      %v3020 = vadd.f32 0.0, %v3019
      %3021 = vdwg.mxu0
      %3022 = vmatpush.msra.mxu0 0.0
      %3023 = vmatpush.msra.mxu0 0.0
      %3024 = vmatpush.msra.mxu0 0.0
      %3025 = vmatpush.msra.mxu0 0.0
      %3026 = vmatpush.msra.mxu0 0.0
      %3027 = vmatpush.msra.mxu0 0.0
      %3028 = vmatpush.msra.mxu0 0.0
      %3029 = vmatpush.msra.mxu0 0.0
      %3030 = vmatpush.msra.mxu0 0.0
      %3031 = vmatpush.msra.mxu0 0.0
      %3032 = vmatpush.msra.mxu0 0.0
      %3033 = vmatpush.msra.mxu0 0.0
      %3034 = vmatpush.msra.mxu0 0.0
      %3035 = vmatpush.msra.mxu0 0.0
      %3036 = vmatpush.msra.mxu0 0.0
      %3037 = vmatpush.msra.mxu0 %v2900
      %3038 = vmatmul.f32.gmra.mxu0 %v2886
      %v3039 = vpop.f32.mrf.mxu0
      %v3040 = vadd.f32 0.0, %v3039
      %3041 = vdwg.mxu0
      %v3042 = vadd.f32 %v2837, %v2920
      %v3043 = vadd.f32 %v2838, %v2940
      %v3044 = vadd.f32 %v2839, %v2960
      %v3045 = vadd.f32 %v2840, %v2980
      %v3046 = vadd.f32 %v2841, %v3000
      %v3047 = vadd.f32 %v2842, %v3020
      %v3048 = vadd.f32 %v2843, %v3040
      %s3049 = scalar_lea.vmem %s1, 112
      %v3050 = vld [vmem:[%s3049] sm:$0x3f]
      %3051 = vst [vmem:[#allocation1] ss:$2 sm:$0xff] %v225
      %s3052 = scalar_lea.vmem [#allocation1], 16
      %3053 = vst [vmem:[%s3052] ss:$2 sm:$0xff] %v226
      %s3054 = scalar_lea.vmem [#allocation1], 32
      %3055 = vst [vmem:[%s3054] ss:$2 sm:$0xff] %v227
      %s3056 = scalar_lea.vmem [#allocation1], 48
      %3057 = vst [vmem:[%s3056] ss:$2 sm:$0xff] %v228
      %v3058 = vld.sshfl [vmem:[#allocation1] sm:$0xff pattern:$0x75316420]
      %v3059 = vld.sshfl [vmem:[#allocation1 + $0x8] sm:$0xff pattern:$0x75316420]
      %v3060 = vld.sshfl [vmem:[#allocation1 + $0x10] sm:$0xff pattern:$0x75316420]
      %v3061 = vld.sshfl [vmem:[#allocation1 + $0x18] sm:$0xff pattern:$0x75316420]
      %v3062 = vld.sshfl [vmem:[#allocation1 + $0x20] sm:$0xff pattern:$0x75316420]
      %v3063 = vld.sshfl [vmem:[#allocation1 + $0x28] sm:$0xff pattern:$0x75316420]
      %v3064 = vld.sshfl [vmem:[#allocation1 + $0x30] sm:$0xff pattern:$0x75316420]
      %v3065 = vld.sshfl [vmem:[#allocation1 + $0x38] sm:$0xff pattern:$0x75316420]
      %3066 = vrot.lane.b32.xlu0 %v3058, 60
      %v3067 = vpop.permute.xlu0 %3066
      %3068 = vrot.lane.b32.xlu0 %v3059, 60
      %v3069 = vpop.permute.xlu0 %3068
      %3070 = vrot.lane.b32.xlu0 %v3060, 60
      %v3071 = vpop.permute.xlu0 %3070
      %3072 = vrot.lane.b32.xlu0 %v3061, 60
      %v3073 = vpop.permute.xlu0 %3072
      %3074 = vrot.lane.b32.xlu0 %v3062, 60
      %v3075 = vpop.permute.xlu0 %3074
      %3076 = vrot.lane.b32.xlu0 %v3063, 60
      %v3077 = vpop.permute.xlu0 %3076
      %3078 = vrot.lane.b32.xlu0 %v3064, 60
      %v3079 = vpop.permute.xlu0 %3078
      %3080 = vrot.lane.b32.xlu0 %v3065, 60
      %v3081 = vpop.permute.xlu0 %3080
      %vm3082 = vcmask 490496
      %v3083 = vsel %vm3082, %v3067, %v3069
      %v3084 = vsel %vm3082, %v3069, %v3071
      %v3085 = vsel %vm3082, %v3071, %v3073
      %v3086 = vsel %vm3082, %v3073, %v3075
      %v3087 = vsel %vm3082, %v3075, %v3077
      %v3088 = vsel %vm3082, %v3077, %v3079
      %v3089 = vsel %vm3082, %v3079, %v3081
      %v3091 = vsel %vm271, %v3050, 0
      %v3093 = vsel %vm275, %v3083, 0
      %v3095 = vsel %vm275, %v3084, 0
      %v3097 = vsel %vm275, %v3085, 0
      %v3099 = vsel %vm275, %v3086, 0
      %v3101 = vsel %vm275, %v3087, 0
      %v3103 = vsel %vm275, %v3088, 0
      %v3105 = vsel %vm275, %v3089, 0
      %3107 = vmatpush.msra.mxu0 0.0
      %3108 = vmatpush.msra.mxu0 0.0
      %3109 = vmatpush.msra.mxu0 0.0
      %3110 = vmatpush.msra.mxu0 0.0
      %3111 = vmatpush.msra.mxu0 0.0
      %3112 = vmatpush.msra.mxu0 0.0
      %3113 = vmatpush.msra.mxu0 0.0
      %3114 = vmatpush.msra.mxu0 0.0
      %3115 = vmatpush.msra.mxu0 0.0
      %3116 = vmatpush.msra.mxu0 0.0
      %3117 = vmatpush.msra.mxu0 0.0
      %3118 = vmatpush.msra.mxu0 0.0
      %3119 = vmatpush.msra.mxu0 0.0
      %3120 = vmatpush.msra.mxu0 0.0
      %3121 = vmatpush.msra.mxu0 0.0
      %3122 = vmatpush.msra.mxu0 %v3093
      %3123 = vmatmul.f32.gmra.mxu0 %v3091
      %v3124 = vpop.f32.mrf.mxu0
      %v3125 = vadd.f32 0.0, %v3124
      %3126 = vdwg.mxu0
      %3127 = vmatpush.msra.mxu0 0.0
      %3128 = vmatpush.msra.mxu0 0.0
      %3129 = vmatpush.msra.mxu0 0.0
      %3130 = vmatpush.msra.mxu0 0.0
      %3131 = vmatpush.msra.mxu0 0.0
      %3132 = vmatpush.msra.mxu0 0.0
      %3133 = vmatpush.msra.mxu0 0.0
      %3134 = vmatpush.msra.mxu0 0.0
      %3135 = vmatpush.msra.mxu0 0.0
      %3136 = vmatpush.msra.mxu0 0.0
      %3137 = vmatpush.msra.mxu0 0.0
      %3138 = vmatpush.msra.mxu0 0.0
      %3139 = vmatpush.msra.mxu0 0.0
      %3140 = vmatpush.msra.mxu0 0.0
      %3141 = vmatpush.msra.mxu0 0.0
      %3142 = vmatpush.msra.mxu0 %v3095
      %3143 = vmatmul.f32.gmra.mxu0 %v3091
      %v3144 = vpop.f32.mrf.mxu0
      %v3145 = vadd.f32 0.0, %v3144
      %3146 = vdwg.mxu0
      %3147 = vmatpush.msra.mxu0 0.0
      %3148 = vmatpush.msra.mxu0 0.0
      %3149 = vmatpush.msra.mxu0 0.0
      %3150 = vmatpush.msra.mxu0 0.0
      %3151 = vmatpush.msra.mxu0 0.0
      %3152 = vmatpush.msra.mxu0 0.0
      %3153 = vmatpush.msra.mxu0 0.0
      %3154 = vmatpush.msra.mxu0 0.0
      %3155 = vmatpush.msra.mxu0 0.0
      %3156 = vmatpush.msra.mxu0 0.0
      %3157 = vmatpush.msra.mxu0 0.0
      %3158 = vmatpush.msra.mxu0 0.0
      %3159 = vmatpush.msra.mxu0 0.0
      %3160 = vmatpush.msra.mxu0 0.0
      %3161 = vmatpush.msra.mxu0 0.0
      %3162 = vmatpush.msra.mxu0 %v3097
      %3163 = vmatmul.f32.gmra.mxu0 %v3091
      %v3164 = vpop.f32.mrf.mxu0
      %v3165 = vadd.f32 0.0, %v3164
      %3166 = vdwg.mxu0
      %3167 = vmatpush.msra.mxu0 0.0
      %3168 = vmatpush.msra.mxu0 0.0
      %3169 = vmatpush.msra.mxu0 0.0
      %3170 = vmatpush.msra.mxu0 0.0
      %3171 = vmatpush.msra.mxu0 0.0
      %3172 = vmatpush.msra.mxu0 0.0
      %3173 = vmatpush.msra.mxu0 0.0
      %3174 = vmatpush.msra.mxu0 0.0
      %3175 = vmatpush.msra.mxu0 0.0
      %3176 = vmatpush.msra.mxu0 0.0
      %3177 = vmatpush.msra.mxu0 0.0
      %3178 = vmatpush.msra.mxu0 0.0
      %3179 = vmatpush.msra.mxu0 0.0
      %3180 = vmatpush.msra.mxu0 0.0
      %3181 = vmatpush.msra.mxu0 0.0
      %3182 = vmatpush.msra.mxu0 %v3099
      %3183 = vmatmul.f32.gmra.mxu0 %v3091
      %v3184 = vpop.f32.mrf.mxu0
      %v3185 = vadd.f32 0.0, %v3184
      %3186 = vdwg.mxu0
      %3187 = vmatpush.msra.mxu0 0.0
      %3188 = vmatpush.msra.mxu0 0.0
      %3189 = vmatpush.msra.mxu0 0.0
      %3190 = vmatpush.msra.mxu0 0.0
      %3191 = vmatpush.msra.mxu0 0.0
      %3192 = vmatpush.msra.mxu0 0.0
      %3193 = vmatpush.msra.mxu0 0.0
      %3194 = vmatpush.msra.mxu0 0.0
      %3195 = vmatpush.msra.mxu0 0.0
      %3196 = vmatpush.msra.mxu0 0.0
      %3197 = vmatpush.msra.mxu0 0.0
      %3198 = vmatpush.msra.mxu0 0.0
      %3199 = vmatpush.msra.mxu0 0.0
      %3200 = vmatpush.msra.mxu0 0.0
      %3201 = vmatpush.msra.mxu0 0.0
      %3202 = vmatpush.msra.mxu0 %v3101
      %3203 = vmatmul.f32.gmra.mxu0 %v3091
      %v3204 = vpop.f32.mrf.mxu0
      %v3205 = vadd.f32 0.0, %v3204
      %3206 = vdwg.mxu0
      %3207 = vmatpush.msra.mxu0 0.0
      %3208 = vmatpush.msra.mxu0 0.0
      %3209 = vmatpush.msra.mxu0 0.0
      %3210 = vmatpush.msra.mxu0 0.0
      %3211 = vmatpush.msra.mxu0 0.0
      %3212 = vmatpush.msra.mxu0 0.0
      %3213 = vmatpush.msra.mxu0 0.0
      %3214 = vmatpush.msra.mxu0 0.0
      %3215 = vmatpush.msra.mxu0 0.0
      %3216 = vmatpush.msra.mxu0 0.0
      %3217 = vmatpush.msra.mxu0 0.0
      %3218 = vmatpush.msra.mxu0 0.0
      %3219 = vmatpush.msra.mxu0 0.0
      %3220 = vmatpush.msra.mxu0 0.0
      %3221 = vmatpush.msra.mxu0 0.0
      %3222 = vmatpush.msra.mxu0 %v3103
      %3223 = vmatmul.f32.gmra.mxu0 %v3091
      %v3224 = vpop.f32.mrf.mxu0
      %v3225 = vadd.f32 0.0, %v3224
      %3226 = vdwg.mxu0
      %3227 = vmatpush.msra.mxu0 0.0
      %3228 = vmatpush.msra.mxu0 0.0
      %3229 = vmatpush.msra.mxu0 0.0
      %3230 = vmatpush.msra.mxu0 0.0
      %3231 = vmatpush.msra.mxu0 0.0
      %3232 = vmatpush.msra.mxu0 0.0
      %3233 = vmatpush.msra.mxu0 0.0
      %3234 = vmatpush.msra.mxu0 0.0
      %3235 = vmatpush.msra.mxu0 0.0
      %3236 = vmatpush.msra.mxu0 0.0
      %3237 = vmatpush.msra.mxu0 0.0
      %3238 = vmatpush.msra.mxu0 0.0
      %3239 = vmatpush.msra.mxu0 0.0
      %3240 = vmatpush.msra.mxu0 0.0
      %3241 = vmatpush.msra.mxu0 0.0
      %3242 = vmatpush.msra.mxu0 %v3105
      %3243 = vmatmul.f32.gmra.mxu0 %v3091
      %v3244 = vpop.f32.mrf.mxu0
      %v3245 = vadd.f32 0.0, %v3244
      %3246 = vdwg.mxu0
      %v3247 = vadd.f32 %v3042, %v3125
      %v3248 = vadd.f32 %v3043, %v3145
      %v3249 = vadd.f32 %v3044, %v3165
      %v3250 = vadd.f32 %v3045, %v3185
      %v3251 = vadd.f32 %v3046, %v3205
      %v3252 = vadd.f32 %v3047, %v3225
      %v3253 = vadd.f32 %v3048, %v3245
      %s3254 = scalar_lea.vmem %s1, 120
      %v3255 = vld [vmem:[%s3254] sm:$0x3f]
      %3256 = vst [vmem:[#allocation1] ss:$2 sm:$0xff] %v225
      %s3257 = scalar_lea.vmem [#allocation1], 16
      %3258 = vst [vmem:[%s3257] ss:$2 sm:$0xff] %v226
      %s3259 = scalar_lea.vmem [#allocation1], 32
      %3260 = vst [vmem:[%s3259] ss:$2 sm:$0xff] %v227
      %s3261 = scalar_lea.vmem [#allocation1], 48
      %3262 = vst [vmem:[%s3261] ss:$2 sm:$0xff] %v228
      %v3263 = vld.sshfl [vmem:[#allocation1] sm:$0xff pattern:$0x75316420]
      %v3264 = vld.sshfl [vmem:[#allocation1 + $0x8] sm:$0xff pattern:$0x75316420]
      %v3265 = vld.sshfl [vmem:[#allocation1 + $0x10] sm:$0xff pattern:$0x75316420]
      %v3266 = vld.sshfl [vmem:[#allocation1 + $0x18] sm:$0xff pattern:$0x75316420]
      %v3267 = vld.sshfl [vmem:[#allocation1 + $0x20] sm:$0xff pattern:$0x75316420]
      %v3268 = vld.sshfl [vmem:[#allocation1 + $0x28] sm:$0xff pattern:$0x75316420]
      %v3269 = vld.sshfl [vmem:[#allocation1 + $0x30] sm:$0xff pattern:$0x75316420]
      %v3270 = vld.sshfl [vmem:[#allocation1 + $0x38] sm:$0xff pattern:$0x75316420]
      %3271 = vrot.lane.b32.xlu0 %v3263, 32
      %v3272 = vpop.permute.xlu0 %3271
      %3273 = vrot.lane.b32.xlu0 %v3264, 32
      %v3274 = vpop.permute.xlu0 %3273
      %3275 = vrot.lane.b32.xlu0 %v3265, 32
      %v3276 = vpop.permute.xlu0 %3275
      %3277 = vrot.lane.b32.xlu0 %v3266, 32
      %v3278 = vpop.permute.xlu0 %3277
      %3279 = vrot.lane.b32.xlu0 %v3267, 32
      %v3280 = vpop.permute.xlu0 %3279
      %3281 = vrot.lane.b32.xlu0 %v3268, 32
      %v3282 = vpop.permute.xlu0 %3281
      %3283 = vrot.lane.b32.xlu0 %v3269, 32
      %v3284 = vpop.permute.xlu0 %3283
      %3285 = vrot.lane.b32.xlu0 %v3270, 32
      %v3286 = vpop.permute.xlu0 %3285
      %vm3287 = vcmask 261120
      %v3288 = vsel %vm3287, %v3272, %v3274
      %v3289 = vsel %vm3287, %v3274, %v3276
      %v3290 = vsel %vm3287, %v3276, %v3278
      %v3291 = vsel %vm3287, %v3278, %v3280
      %v3292 = vsel %vm3287, %v3280, %v3282
      %v3293 = vsel %vm3287, %v3282, %v3284
      %v3294 = vsel %vm3287, %v3284, %v3286
      %v3296 = vsel %vm271, %v3255, 0
      %v3298 = vsel %vm275, %v3288, 0
      %v3300 = vsel %vm275, %v3289, 0
      %v3302 = vsel %vm275, %v3290, 0
      %v3304 = vsel %vm275, %v3291, 0
      %v3306 = vsel %vm275, %v3292, 0
      %v3308 = vsel %vm275, %v3293, 0
      %v3310 = vsel %vm275, %v3294, 0
      %3312 = vmatpush.msra.mxu0 0.0
      %3313 = vmatpush.msra.mxu0 0.0
      %3314 = vmatpush.msra.mxu0 0.0
      %3315 = vmatpush.msra.mxu0 0.0
      %3316 = vmatpush.msra.mxu0 0.0
      %3317 = vmatpush.msra.mxu0 0.0
      %3318 = vmatpush.msra.mxu0 0.0
      %3319 = vmatpush.msra.mxu0 0.0
      %3320 = vmatpush.msra.mxu0 0.0
      %3321 = vmatpush.msra.mxu0 0.0
      %3322 = vmatpush.msra.mxu0 0.0
      %3323 = vmatpush.msra.mxu0 0.0
      %3324 = vmatpush.msra.mxu0 0.0
      %3325 = vmatpush.msra.mxu0 0.0
      %3326 = vmatpush.msra.mxu0 0.0
      %3327 = vmatpush.msra.mxu0 %v3298
      %3328 = vmatmul.f32.gmra.mxu0 %v3296
      %v3329 = vpop.f32.mrf.mxu0
      %v3330 = vadd.f32 0.0, %v3329
      %3331 = vdwg.mxu0
      %3332 = vmatpush.msra.mxu0 0.0
      %3333 = vmatpush.msra.mxu0 0.0
      %3334 = vmatpush.msra.mxu0 0.0
      %3335 = vmatpush.msra.mxu0 0.0
      %3336 = vmatpush.msra.mxu0 0.0
      %3337 = vmatpush.msra.mxu0 0.0
      %3338 = vmatpush.msra.mxu0 0.0
      %3339 = vmatpush.msra.mxu0 0.0
      %3340 = vmatpush.msra.mxu0 0.0
      %3341 = vmatpush.msra.mxu0 0.0
      %3342 = vmatpush.msra.mxu0 0.0
      %3343 = vmatpush.msra.mxu0 0.0
      %3344 = vmatpush.msra.mxu0 0.0
      %3345 = vmatpush.msra.mxu0 0.0
      %3346 = vmatpush.msra.mxu0 0.0
      %3347 = vmatpush.msra.mxu0 %v3300
      %3348 = vmatmul.f32.gmra.mxu0 %v3296
      %v3349 = vpop.f32.mrf.mxu0
      %v3350 = vadd.f32 0.0, %v3349
      %3351 = vdwg.mxu0
      %3352 = vmatpush.msra.mxu0 0.0
      %3353 = vmatpush.msra.mxu0 0.0
      %3354 = vmatpush.msra.mxu0 0.0
      %3355 = vmatpush.msra.mxu0 0.0
      %3356 = vmatpush.msra.mxu0 0.0
      %3357 = vmatpush.msra.mxu0 0.0
      %3358 = vmatpush.msra.mxu0 0.0
      %3359 = vmatpush.msra.mxu0 0.0
      %3360 = vmatpush.msra.mxu0 0.0
      %3361 = vmatpush.msra.mxu0 0.0
      %3362 = vmatpush.msra.mxu0 0.0
      %3363 = vmatpush.msra.mxu0 0.0
      %3364 = vmatpush.msra.mxu0 0.0
      %3365 = vmatpush.msra.mxu0 0.0
      %3366 = vmatpush.msra.mxu0 0.0
      %3367 = vmatpush.msra.mxu0 %v3302
      %3368 = vmatmul.f32.gmra.mxu0 %v3296
      %v3369 = vpop.f32.mrf.mxu0
      %v3370 = vadd.f32 0.0, %v3369
      %3371 = vdwg.mxu0
      %3372 = vmatpush.msra.mxu0 0.0
      %3373 = vmatpush.msra.mxu0 0.0
      %3374 = vmatpush.msra.mxu0 0.0
      %3375 = vmatpush.msra.mxu0 0.0
      %3376 = vmatpush.msra.mxu0 0.0
      %3377 = vmatpush.msra.mxu0 0.0
      %3378 = vmatpush.msra.mxu0 0.0
      %3379 = vmatpush.msra.mxu0 0.0
      %3380 = vmatpush.msra.mxu0 0.0
      %3381 = vmatpush.msra.mxu0 0.0
      %3382 = vmatpush.msra.mxu0 0.0
      %3383 = vmatpush.msra.mxu0 0.0
      %3384 = vmatpush.msra.mxu0 0.0
      %3385 = vmatpush.msra.mxu0 0.0
      %3386 = vmatpush.msra.mxu0 0.0
      %3387 = vmatpush.msra.mxu0 %v3304
      %3388 = vmatmul.f32.gmra.mxu0 %v3296
      %v3389 = vpop.f32.mrf.mxu0
      %v3390 = vadd.f32 0.0, %v3389
      %3391 = vdwg.mxu0
      %3392 = vmatpush.msra.mxu0 0.0
      %3393 = vmatpush.msra.mxu0 0.0
      %3394 = vmatpush.msra.mxu0 0.0
      %3395 = vmatpush.msra.mxu0 0.0
      %3396 = vmatpush.msra.mxu0 0.0
      %3397 = vmatpush.msra.mxu0 0.0
      %3398 = vmatpush.msra.mxu0 0.0
      %3399 = vmatpush.msra.mxu0 0.0
      %3400 = vmatpush.msra.mxu0 0.0
      %3401 = vmatpush.msra.mxu0 0.0
      %3402 = vmatpush.msra.mxu0 0.0
      %3403 = vmatpush.msra.mxu0 0.0
      %3404 = vmatpush.msra.mxu0 0.0
      %3405 = vmatpush.msra.mxu0 0.0
      %3406 = vmatpush.msra.mxu0 0.0
      %3407 = vmatpush.msra.mxu0 %v3306
      %3408 = vmatmul.f32.gmra.mxu0 %v3296
      %v3409 = vpop.f32.mrf.mxu0
      %v3410 = vadd.f32 0.0, %v3409
      %3411 = vdwg.mxu0
      %3412 = vmatpush.msra.mxu0 0.0
      %3413 = vmatpush.msra.mxu0 0.0
      %3414 = vmatpush.msra.mxu0 0.0
      %3415 = vmatpush.msra.mxu0 0.0
      %3416 = vmatpush.msra.mxu0 0.0
      %3417 = vmatpush.msra.mxu0 0.0
      %3418 = vmatpush.msra.mxu0 0.0
      %3419 = vmatpush.msra.mxu0 0.0
      %3420 = vmatpush.msra.mxu0 0.0
      %3421 = vmatpush.msra.mxu0 0.0
      %3422 = vmatpush.msra.mxu0 0.0
      %3423 = vmatpush.msra.mxu0 0.0
      %3424 = vmatpush.msra.mxu0 0.0
      %3425 = vmatpush.msra.mxu0 0.0
      %3426 = vmatpush.msra.mxu0 0.0
      %3427 = vmatpush.msra.mxu0 %v3308
      %3428 = vmatmul.f32.gmra.mxu0 %v3296
      %v3429 = vpop.f32.mrf.mxu0
      %v3430 = vadd.f32 0.0, %v3429
      %3431 = vdwg.mxu0
      %3432 = vmatpush.msra.mxu0 0.0
      %3433 = vmatpush.msra.mxu0 0.0
      %3434 = vmatpush.msra.mxu0 0.0
      %3435 = vmatpush.msra.mxu0 0.0
      %3436 = vmatpush.msra.mxu0 0.0
      %3437 = vmatpush.msra.mxu0 0.0
      %3438 = vmatpush.msra.mxu0 0.0
      %3439 = vmatpush.msra.mxu0 0.0
      %3440 = vmatpush.msra.mxu0 0.0
      %3441 = vmatpush.msra.mxu0 0.0
      %3442 = vmatpush.msra.mxu0 0.0
      %3443 = vmatpush.msra.mxu0 0.0
      %3444 = vmatpush.msra.mxu0 0.0
      %3445 = vmatpush.msra.mxu0 0.0
      %3446 = vmatpush.msra.mxu0 0.0
      %3447 = vmatpush.msra.mxu0 %v3310
      %3448 = vmatmul.f32.gmra.mxu0 %v3296
      %v3449 = vpop.f32.mrf.mxu0
      %v3450 = vadd.f32 0.0, %v3449
      %3451 = vdwg.mxu0
      %v3452 = vadd.f32 %v3247, %v3330
      %v3453 = vadd.f32 %v3248, %v3350
      %v3454 = vadd.f32 %v3249, %v3370
      %v3455 = vadd.f32 %v3250, %v3390
      %v3456 = vadd.f32 %v3251, %v3410
      %v3457 = vadd.f32 %v3252, %v3430
      %v3458 = vadd.f32 %v3253, %v3450
      %s3459 = scalar_lea.vmem %s1, 128
      %v3460 = vld [vmem:[%s3459] sm:$0x3f]
      %3461 = vst [vmem:[#allocation1] ss:$2 sm:$0xff] %v225
      %s3462 = scalar_lea.vmem [#allocation1], 16
      %3463 = vst [vmem:[%s3462] ss:$2 sm:$0xff] %v226
      %s3464 = scalar_lea.vmem [#allocation1], 32
      %3465 = vst [vmem:[%s3464] ss:$2 sm:$0xff] %v227
      %s3466 = scalar_lea.vmem [#allocation1], 48
      %3467 = vst [vmem:[%s3466] ss:$2 sm:$0xff] %v228
      %v3468 = vld.sshfl [vmem:[#allocation1] sm:$0xff pattern:$0x75316420]
      %v3469 = vld.sshfl [vmem:[#allocation1 + $0x8] sm:$0xff pattern:$0x75316420]
      %v3470 = vld.sshfl [vmem:[#allocation1 + $0x10] sm:$0xff pattern:$0x75316420]
      %v3471 = vld.sshfl [vmem:[#allocation1 + $0x18] sm:$0xff pattern:$0x75316420]
      %v3472 = vld.sshfl [vmem:[#allocation1 + $0x20] sm:$0xff pattern:$0x75316420]
      %v3473 = vld.sshfl [vmem:[#allocation1 + $0x28] sm:$0xff pattern:$0x75316420]
      %v3474 = vld.sshfl [vmem:[#allocation1 + $0x30] sm:$0xff pattern:$0x75316420]
      %v3475 = vld.sshfl [vmem:[#allocation1 + $0x38] sm:$0xff pattern:$0x75316420]
      %3476 = vrot.lane.b32.xlu0 %v3468, 31
      %v3477 = vpop.permute.xlu0 %3476
      %3478 = vrot.lane.b32.xlu0 %v3469, 31
      %v3479 = vpop.permute.xlu0 %3478
      %3480 = vrot.lane.b32.xlu0 %v3470, 31
      %v3481 = vpop.permute.xlu0 %3480
      %3482 = vrot.lane.b32.xlu0 %v3471, 31
      %v3483 = vpop.permute.xlu0 %3482
      %3484 = vrot.lane.b32.xlu0 %v3472, 31
      %v3485 = vpop.permute.xlu0 %3484
      %3486 = vrot.lane.b32.xlu0 %v3473, 31
      %v3487 = vpop.permute.xlu0 %3486
      %3488 = vrot.lane.b32.xlu0 %v3474, 31
      %v3489 = vpop.permute.xlu0 %3488
      %3490 = vrot.lane.b32.xlu0 %v3475, 31
      %v3491 = vpop.permute.xlu0 %3490
      %vm3492 = vcmask 252928
      %v3493 = vsel %vm3492, %v3477, %v3479
      %v3494 = vsel %vm3492, %v3479, %v3481
      %v3495 = vsel %vm3492, %v3481, %v3483
      %v3496 = vsel %vm3492, %v3483, %v3485
      %v3497 = vsel %vm3492, %v3485, %v3487
      %v3498 = vsel %vm3492, %v3487, %v3489
      %v3499 = vsel %vm3492, %v3489, %v3491
      %v3501 = vsel %vm271, %v3460, 0
      %v3503 = vsel %vm275, %v3493, 0
      %v3505 = vsel %vm275, %v3494, 0
      %v3507 = vsel %vm275, %v3495, 0
      %v3509 = vsel %vm275, %v3496, 0
      %v3511 = vsel %vm275, %v3497, 0
      %v3513 = vsel %vm275, %v3498, 0
      %v3515 = vsel %vm275, %v3499, 0
      %3517 = vmatpush.msra.mxu0 0.0
      %3518 = vmatpush.msra.mxu0 0.0
      %3519 = vmatpush.msra.mxu0 0.0
      %3520 = vmatpush.msra.mxu0 0.0
      %3521 = vmatpush.msra.mxu0 0.0
      %3522 = vmatpush.msra.mxu0 0.0
      %3523 = vmatpush.msra.mxu0 0.0
      %3524 = vmatpush.msra.mxu0 0.0
      %3525 = vmatpush.msra.mxu0 0.0
      %3526 = vmatpush.msra.mxu0 0.0
      %3527 = vmatpush.msra.mxu0 0.0
      %3528 = vmatpush.msra.mxu0 0.0
      %3529 = vmatpush.msra.mxu0 0.0
      %3530 = vmatpush.msra.mxu0 0.0
      %3531 = vmatpush.msra.mxu0 0.0
      %3532 = vmatpush.msra.mxu0 %v3503
      %3533 = vmatmul.f32.gmra.mxu0 %v3501
      %v3534 = vpop.f32.mrf.mxu0
      %v3535 = vadd.f32 0.0, %v3534
      %3536 = vdwg.mxu0
      %3537 = vmatpush.msra.mxu0 0.0
      %3538 = vmatpush.msra.mxu0 0.0
      %3539 = vmatpush.msra.mxu0 0.0
      %3540 = vmatpush.msra.mxu0 0.0
      %3541 = vmatpush.msra.mxu0 0.0
      %3542 = vmatpush.msra.mxu0 0.0
      %3543 = vmatpush.msra.mxu0 0.0
      %3544 = vmatpush.msra.mxu0 0.0
      %3545 = vmatpush.msra.mxu0 0.0
      %3546 = vmatpush.msra.mxu0 0.0
      %3547 = vmatpush.msra.mxu0 0.0
      %3548 = vmatpush.msra.mxu0 0.0
      %3549 = vmatpush.msra.mxu0 0.0
      %3550 = vmatpush.msra.mxu0 0.0
      %3551 = vmatpush.msra.mxu0 0.0
      %3552 = vmatpush.msra.mxu0 %v3505
      %3553 = vmatmul.f32.gmra.mxu0 %v3501
      %v3554 = vpop.f32.mrf.mxu0
      %v3555 = vadd.f32 0.0, %v3554
      %3556 = vdwg.mxu0
      %3557 = vmatpush.msra.mxu0 0.0
      %3558 = vmatpush.msra.mxu0 0.0
      %3559 = vmatpush.msra.mxu0 0.0
      %3560 = vmatpush.msra.mxu0 0.0
      %3561 = vmatpush.msra.mxu0 0.0
      %3562 = vmatpush.msra.mxu0 0.0
      %3563 = vmatpush.msra.mxu0 0.0
      %3564 = vmatpush.msra.mxu0 0.0
      %3565 = vmatpush.msra.mxu0 0.0
      %3566 = vmatpush.msra.mxu0 0.0
      %3567 = vmatpush.msra.mxu0 0.0
      %3568 = vmatpush.msra.mxu0 0.0
      %3569 = vmatpush.msra.mxu0 0.0
      %3570 = vmatpush.msra.mxu0 0.0
      %3571 = vmatpush.msra.mxu0 0.0
      %3572 = vmatpush.msra.mxu0 %v3507
      %3573 = vmatmul.f32.gmra.mxu0 %v3501
      %v3574 = vpop.f32.mrf.mxu0
      %v3575 = vadd.f32 0.0, %v3574
      %3576 = vdwg.mxu0
      %3577 = vmatpush.msra.mxu0 0.0
      %3578 = vmatpush.msra.mxu0 0.0
      %3579 = vmatpush.msra.mxu0 0.0
      %3580 = vmatpush.msra.mxu0 0.0
      %3581 = vmatpush.msra.mxu0 0.0
      %3582 = vmatpush.msra.mxu0 0.0
      %3583 = vmatpush.msra.mxu0 0.0
      %3584 = vmatpush.msra.mxu0 0.0
      %3585 = vmatpush.msra.mxu0 0.0
      %3586 = vmatpush.msra.mxu0 0.0
      %3587 = vmatpush.msra.mxu0 0.0
      %3588 = vmatpush.msra.mxu0 0.0
      %3589 = vmatpush.msra.mxu0 0.0
      %3590 = vmatpush.msra.mxu0 0.0
      %3591 = vmatpush.msra.mxu0 0.0
      %3592 = vmatpush.msra.mxu0 %v3509
      %3593 = vmatmul.f32.gmra.mxu0 %v3501
      %v3594 = vpop.f32.mrf.mxu0
      %v3595 = vadd.f32 0.0, %v3594
      %3596 = vdwg.mxu0
      %3597 = vmatpush.msra.mxu0 0.0
      %3598 = vmatpush.msra.mxu0 0.0
      %3599 = vmatpush.msra.mxu0 0.0
      %3600 = vmatpush.msra.mxu0 0.0
      %3601 = vmatpush.msra.mxu0 0.0
      %3602 = vmatpush.msra.mxu0 0.0
      %3603 = vmatpush.msra.mxu0 0.0
      %3604 = vmatpush.msra.mxu0 0.0
      %3605 = vmatpush.msra.mxu0 0.0
      %3606 = vmatpush.msra.mxu0 0.0
      %3607 = vmatpush.msra.mxu0 0.0
      %3608 = vmatpush.msra.mxu0 0.0
      %3609 = vmatpush.msra.mxu0 0.0
      %3610 = vmatpush.msra.mxu0 0.0
      %3611 = vmatpush.msra.mxu0 0.0
      %3612 = vmatpush.msra.mxu0 %v3511
      %3613 = vmatmul.f32.gmra.mxu0 %v3501
      %v3614 = vpop.f32.mrf.mxu0
      %v3615 = vadd.f32 0.0, %v3614
      %3616 = vdwg.mxu0
      %3617 = vmatpush.msra.mxu0 0.0
      %3618 = vmatpush.msra.mxu0 0.0
      %3619 = vmatpush.msra.mxu0 0.0
      %3620 = vmatpush.msra.mxu0 0.0
      %3621 = vmatpush.msra.mxu0 0.0
      %3622 = vmatpush.msra.mxu0 0.0
      %3623 = vmatpush.msra.mxu0 0.0
      %3624 = vmatpush.msra.mxu0 0.0
      %3625 = vmatpush.msra.mxu0 0.0
      %3626 = vmatpush.msra.mxu0 0.0
      %3627 = vmatpush.msra.mxu0 0.0
      %3628 = vmatpush.msra.mxu0 0.0
      %3629 = vmatpush.msra.mxu0 0.0
      %3630 = vmatpush.msra.mxu0 0.0
      %3631 = vmatpush.msra.mxu0 0.0
      %3632 = vmatpush.msra.mxu0 %v3513
      %3633 = vmatmul.f32.gmra.mxu0 %v3501
      %v3634 = vpop.f32.mrf.mxu0
      %v3635 = vadd.f32 0.0, %v3634
      %3636 = vdwg.mxu0
      %3637 = vmatpush.msra.mxu0 0.0
      %3638 = vmatpush.msra.mxu0 0.0
      %3639 = vmatpush.msra.mxu0 0.0
      %3640 = vmatpush.msra.mxu0 0.0
      %3641 = vmatpush.msra.mxu0 0.0
      %3642 = vmatpush.msra.mxu0 0.0
      %3643 = vmatpush.msra.mxu0 0.0
      %3644 = vmatpush.msra.mxu0 0.0
      %3645 = vmatpush.msra.mxu0 0.0
      %3646 = vmatpush.msra.mxu0 0.0
      %3647 = vmatpush.msra.mxu0 0.0
      %3648 = vmatpush.msra.mxu0 0.0
      %3649 = vmatpush.msra.mxu0 0.0
      %3650 = vmatpush.msra.mxu0 0.0
      %3651 = vmatpush.msra.mxu0 0.0
      %3652 = vmatpush.msra.mxu0 %v3515
      %3653 = vmatmul.f32.gmra.mxu0 %v3501
      %v3654 = vpop.f32.mrf.mxu0
      %v3655 = vadd.f32 0.0, %v3654
      %3656 = vdwg.mxu0
      %v3657 = vadd.f32 %v3452, %v3535
      %v3658 = vadd.f32 %v3453, %v3555
      %v3659 = vadd.f32 %v3454, %v3575
      %v3660 = vadd.f32 %v3455, %v3595
      %v3661 = vadd.f32 %v3456, %v3615
      %v3662 = vadd.f32 %v3457, %v3635
      %v3663 = vadd.f32 %v3458, %v3655
      %s3664 = scalar_lea.vmem %s1, 136
      %v3665 = vld [vmem:[%s3664] sm:$0x3f]
      %3666 = vst [vmem:[#allocation1] ss:$2 sm:$0xff] %v225
      %s3667 = scalar_lea.vmem [#allocation1], 16
      %3668 = vst [vmem:[%s3667] ss:$2 sm:$0xff] %v226
      %s3669 = scalar_lea.vmem [#allocation1], 32
      %3670 = vst [vmem:[%s3669] ss:$2 sm:$0xff] %v227
      %s3671 = scalar_lea.vmem [#allocation1], 48
      %3672 = vst [vmem:[%s3671] ss:$2 sm:$0xff] %v228
      %v3673 = vld.sshfl [vmem:[#allocation1] sm:$0xff pattern:$0x75316420]
      %v3674 = vld.sshfl [vmem:[#allocation1 + $0x8] sm:$0xff pattern:$0x75316420]
      %v3675 = vld.sshfl [vmem:[#allocation1 + $0x10] sm:$0xff pattern:$0x75316420]
      %v3676 = vld.sshfl [vmem:[#allocation1 + $0x18] sm:$0xff pattern:$0x75316420]
      %v3677 = vld.sshfl [vmem:[#allocation1 + $0x20] sm:$0xff pattern:$0x75316420]
      %v3678 = vld.sshfl [vmem:[#allocation1 + $0x28] sm:$0xff pattern:$0x75316420]
      %v3679 = vld.sshfl [vmem:[#allocation1 + $0x30] sm:$0xff pattern:$0x75316420]
      %v3680 = vld.sshfl [vmem:[#allocation1 + $0x38] sm:$0xff pattern:$0x75316420]
      %3681 = vrot.lane.b32.xlu0 %v3673, 30
      %v3682 = vpop.permute.xlu0 %3681
      %3683 = vrot.lane.b32.xlu0 %v3674, 30
      %v3684 = vpop.permute.xlu0 %3683
      %3685 = vrot.lane.b32.xlu0 %v3675, 30
      %v3686 = vpop.permute.xlu0 %3685
      %3687 = vrot.lane.b32.xlu0 %v3676, 30
      %v3688 = vpop.permute.xlu0 %3687
      %3689 = vrot.lane.b32.xlu0 %v3677, 30
      %v3690 = vpop.permute.xlu0 %3689
      %3691 = vrot.lane.b32.xlu0 %v3678, 30
      %v3692 = vpop.permute.xlu0 %3691
      %3693 = vrot.lane.b32.xlu0 %v3679, 30
      %v3694 = vpop.permute.xlu0 %3693
      %3695 = vrot.lane.b32.xlu0 %v3680, 30
      %v3696 = vpop.permute.xlu0 %3695
      %vm3697 = vcmask 244736
      %v3698 = vsel %vm3697, %v3682, %v3684
      %v3699 = vsel %vm3697, %v3684, %v3686
      %v3700 = vsel %vm3697, %v3686, %v3688
      %v3701 = vsel %vm3697, %v3688, %v3690
      %v3702 = vsel %vm3697, %v3690, %v3692
      %v3703 = vsel %vm3697, %v3692, %v3694
      %v3704 = vsel %vm3697, %v3694, %v3696
      %v3706 = vsel %vm271, %v3665, 0
      %v3708 = vsel %vm275, %v3698, 0
      %v3710 = vsel %vm275, %v3699, 0
      %v3712 = vsel %vm275, %v3700, 0
      %v3714 = vsel %vm275, %v3701, 0
      %v3716 = vsel %vm275, %v3702, 0
      %v3718 = vsel %vm275, %v3703, 0
      %v3720 = vsel %vm275, %v3704, 0
      %3722 = vmatpush.msra.mxu0 0.0
      %3723 = vmatpush.msra.mxu0 0.0
      %3724 = vmatpush.msra.mxu0 0.0
      %3725 = vmatpush.msra.mxu0 0.0
      %3726 = vmatpush.msra.mxu0 0.0
      %3727 = vmatpush.msra.mxu0 0.0
      %3728 = vmatpush.msra.mxu0 0.0
      %3729 = vmatpush.msra.mxu0 0.0
      %3730 = vmatpush.msra.mxu0 0.0
      %3731 = vmatpush.msra.mxu0 0.0
      %3732 = vmatpush.msra.mxu0 0.0
      %3733 = vmatpush.msra.mxu0 0.0
      %3734 = vmatpush.msra.mxu0 0.0
      %3735 = vmatpush.msra.mxu0 0.0
      %3736 = vmatpush.msra.mxu0 0.0
      %3737 = vmatpush.msra.mxu0 %v3708
      %3738 = vmatmul.f32.gmra.mxu0 %v3706
      %v3739 = vpop.f32.mrf.mxu0
      %v3740 = vadd.f32 0.0, %v3739
      %3741 = vdwg.mxu0
      %3742 = vmatpush.msra.mxu0 0.0
      %3743 = vmatpush.msra.mxu0 0.0
      %3744 = vmatpush.msra.mxu0 0.0
      %3745 = vmatpush.msra.mxu0 0.0
      %3746 = vmatpush.msra.mxu0 0.0
      %3747 = vmatpush.msra.mxu0 0.0
      %3748 = vmatpush.msra.mxu0 0.0
      %3749 = vmatpush.msra.mxu0 0.0
      %3750 = vmatpush.msra.mxu0 0.0
      %3751 = vmatpush.msra.mxu0 0.0
      %3752 = vmatpush.msra.mxu0 0.0
      %3753 = vmatpush.msra.mxu0 0.0
      %3754 = vmatpush.msra.mxu0 0.0
      %3755 = vmatpush.msra.mxu0 0.0
      %3756 = vmatpush.msra.mxu0 0.0
      %3757 = vmatpush.msra.mxu0 %v3710
      %3758 = vmatmul.f32.gmra.mxu0 %v3706
      %v3759 = vpop.f32.mrf.mxu0
      %v3760 = vadd.f32 0.0, %v3759
      %3761 = vdwg.mxu0
      %3762 = vmatpush.msra.mxu0 0.0
      %3763 = vmatpush.msra.mxu0 0.0
      %3764 = vmatpush.msra.mxu0 0.0
      %3765 = vmatpush.msra.mxu0 0.0
      %3766 = vmatpush.msra.mxu0 0.0
      %3767 = vmatpush.msra.mxu0 0.0
      %3768 = vmatpush.msra.mxu0 0.0
      %3769 = vmatpush.msra.mxu0 0.0
      %3770 = vmatpush.msra.mxu0 0.0
      %3771 = vmatpush.msra.mxu0 0.0
      %3772 = vmatpush.msra.mxu0 0.0
      %3773 = vmatpush.msra.mxu0 0.0
      %3774 = vmatpush.msra.mxu0 0.0
      %3775 = vmatpush.msra.mxu0 0.0
      %3776 = vmatpush.msra.mxu0 0.0
      %3777 = vmatpush.msra.mxu0 %v3712
      %3778 = vmatmul.f32.gmra.mxu0 %v3706
      %v3779 = vpop.f32.mrf.mxu0
      %v3780 = vadd.f32 0.0, %v3779
      %3781 = vdwg.mxu0
      %3782 = vmatpush.msra.mxu0 0.0
      %3783 = vmatpush.msra.mxu0 0.0
      %3784 = vmatpush.msra.mxu0 0.0
      %3785 = vmatpush.msra.mxu0 0.0
      %3786 = vmatpush.msra.mxu0 0.0
      %3787 = vmatpush.msra.mxu0 0.0
      %3788 = vmatpush.msra.mxu0 0.0
      %3789 = vmatpush.msra.mxu0 0.0
      %3790 = vmatpush.msra.mxu0 0.0
      %3791 = vmatpush.msra.mxu0 0.0
      %3792 = vmatpush.msra.mxu0 0.0
      %3793 = vmatpush.msra.mxu0 0.0
      %3794 = vmatpush.msra.mxu0 0.0
      %3795 = vmatpush.msra.mxu0 0.0
      %3796 = vmatpush.msra.mxu0 0.0
      %3797 = vmatpush.msra.mxu0 %v3714
      %3798 = vmatmul.f32.gmra.mxu0 %v3706
      %v3799 = vpop.f32.mrf.mxu0
      %v3800 = vadd.f32 0.0, %v3799
      %3801 = vdwg.mxu0
      %3802 = vmatpush.msra.mxu0 0.0
      %3803 = vmatpush.msra.mxu0 0.0
      %3804 = vmatpush.msra.mxu0 0.0
      %3805 = vmatpush.msra.mxu0 0.0
      %3806 = vmatpush.msra.mxu0 0.0
      %3807 = vmatpush.msra.mxu0 0.0
      %3808 = vmatpush.msra.mxu0 0.0
      %3809 = vmatpush.msra.mxu0 0.0
      %3810 = vmatpush.msra.mxu0 0.0
      %3811 = vmatpush.msra.mxu0 0.0
      %3812 = vmatpush.msra.mxu0 0.0
      %3813 = vmatpush.msra.mxu0 0.0
      %3814 = vmatpush.msra.mxu0 0.0
      %3815 = vmatpush.msra.mxu0 0.0
      %3816 = vmatpush.msra.mxu0 0.0
      %3817 = vmatpush.msra.mxu0 %v3716
      %3818 = vmatmul.f32.gmra.mxu0 %v3706
      %v3819 = vpop.f32.mrf.mxu0
      %v3820 = vadd.f32 0.0, %v3819
      %3821 = vdwg.mxu0
      %3822 = vmatpush.msra.mxu0 0.0
      %3823 = vmatpush.msra.mxu0 0.0
      %3824 = vmatpush.msra.mxu0 0.0
      %3825 = vmatpush.msra.mxu0 0.0
      %3826 = vmatpush.msra.mxu0 0.0
      %3827 = vmatpush.msra.mxu0 0.0
      %3828 = vmatpush.msra.mxu0 0.0
      %3829 = vmatpush.msra.mxu0 0.0
      %3830 = vmatpush.msra.mxu0 0.0
      %3831 = vmatpush.msra.mxu0 0.0
      %3832 = vmatpush.msra.mxu0 0.0
      %3833 = vmatpush.msra.mxu0 0.0
      %3834 = vmatpush.msra.mxu0 0.0
      %3835 = vmatpush.msra.mxu0 0.0
      %3836 = vmatpush.msra.mxu0 0.0
      %3837 = vmatpush.msra.mxu0 %v3718
      %3838 = vmatmul.f32.gmra.mxu0 %v3706
      %v3839 = vpop.f32.mrf.mxu0
      %v3840 = vadd.f32 0.0, %v3839
      %3841 = vdwg.mxu0
      %3842 = vmatpush.msra.mxu0 0.0
      %3843 = vmatpush.msra.mxu0 0.0
      %3844 = vmatpush.msra.mxu0 0.0
      %3845 = vmatpush.msra.mxu0 0.0
      %3846 = vmatpush.msra.mxu0 0.0
      %3847 = vmatpush.msra.mxu0 0.0
      %3848 = vmatpush.msra.mxu0 0.0
      %3849 = vmatpush.msra.mxu0 0.0
      %3850 = vmatpush.msra.mxu0 0.0
      %3851 = vmatpush.msra.mxu0 0.0
      %3852 = vmatpush.msra.mxu0 0.0
      %3853 = vmatpush.msra.mxu0 0.0
      %3854 = vmatpush.msra.mxu0 0.0
      %3855 = vmatpush.msra.mxu0 0.0
      %3856 = vmatpush.msra.mxu0 0.0
      %3857 = vmatpush.msra.mxu0 %v3720
      %3858 = vmatmul.f32.gmra.mxu0 %v3706
      %v3859 = vpop.f32.mrf.mxu0
      %v3860 = vadd.f32 0.0, %v3859
      %3861 = vdwg.mxu0
      %v3862 = vadd.f32 %v3657, %v3740
      %v3863 = vadd.f32 %v3658, %v3760
      %v3864 = vadd.f32 %v3659, %v3780
      %v3865 = vadd.f32 %v3660, %v3800
      %v3866 = vadd.f32 %v3661, %v3820
      %v3867 = vadd.f32 %v3662, %v3840
      %v3868 = vadd.f32 %v3663, %v3860
      %s3869 = scalar_lea.vmem %s1, 144
      %v3870 = vld [vmem:[%s3869] sm:$0x3f]
      %3871 = vst [vmem:[#allocation1] ss:$2 sm:$0xff] %v225
      %s3872 = scalar_lea.vmem [#allocation1], 16
      %3873 = vst [vmem:[%s3872] ss:$2 sm:$0xff] %v226
      %s3874 = scalar_lea.vmem [#allocation1], 32
      %3875 = vst [vmem:[%s3874] ss:$2 sm:$0xff] %v227
      %s3876 = scalar_lea.vmem [#allocation1], 48
      %3877 = vst [vmem:[%s3876] ss:$2 sm:$0xff] %v228
      %v3878 = vld.sshfl [vmem:[#allocation1] sm:$0xff pattern:$0x75316420]
      %v3879 = vld.sshfl [vmem:[#allocation1 + $0x8] sm:$0xff pattern:$0x75316420]
      %v3880 = vld.sshfl [vmem:[#allocation1 + $0x10] sm:$0xff pattern:$0x75316420]
      %v3881 = vld.sshfl [vmem:[#allocation1 + $0x18] sm:$0xff pattern:$0x75316420]
      %v3882 = vld.sshfl [vmem:[#allocation1 + $0x20] sm:$0xff pattern:$0x75316420]
      %v3883 = vld.sshfl [vmem:[#allocation1 + $0x28] sm:$0xff pattern:$0x75316420]
      %v3884 = vld.sshfl [vmem:[#allocation1 + $0x30] sm:$0xff pattern:$0x75316420]
      %v3885 = vld.sshfl [vmem:[#allocation1 + $0x38] sm:$0xff pattern:$0x75316420]
      %3886 = vrot.lane.b32.xlu0 %v3878, 29
      %v3887 = vpop.permute.xlu0 %3886
      %3888 = vrot.lane.b32.xlu0 %v3879, 29
      %v3889 = vpop.permute.xlu0 %3888
      %3890 = vrot.lane.b32.xlu0 %v3880, 29
      %v3891 = vpop.permute.xlu0 %3890
      %3892 = vrot.lane.b32.xlu0 %v3881, 29
      %v3893 = vpop.permute.xlu0 %3892
      %3894 = vrot.lane.b32.xlu0 %v3882, 29
      %v3895 = vpop.permute.xlu0 %3894
      %3896 = vrot.lane.b32.xlu0 %v3883, 29
      %v3897 = vpop.permute.xlu0 %3896
      %3898 = vrot.lane.b32.xlu0 %v3884, 29
      %v3899 = vpop.permute.xlu0 %3898
      %3900 = vrot.lane.b32.xlu0 %v3885, 29
      %v3901 = vpop.permute.xlu0 %3900
      %vm3902 = vcmask 236544
      %v3903 = vsel %vm3902, %v3887, %v3889
      %v3904 = vsel %vm3902, %v3889, %v3891
      %v3905 = vsel %vm3902, %v3891, %v3893
      %v3906 = vsel %vm3902, %v3893, %v3895
      %v3907 = vsel %vm3902, %v3895, %v3897
      %v3908 = vsel %vm3902, %v3897, %v3899
      %v3909 = vsel %vm3902, %v3899, %v3901
      %v3911 = vsel %vm271, %v3870, 0
      %v3913 = vsel %vm275, %v3903, 0
      %v3915 = vsel %vm275, %v3904, 0
      %v3917 = vsel %vm275, %v3905, 0
      %v3919 = vsel %vm275, %v3906, 0
      %v3921 = vsel %vm275, %v3907, 0
      %v3923 = vsel %vm275, %v3908, 0
      %v3925 = vsel %vm275, %v3909, 0
      %3927 = vmatpush.msra.mxu0 0.0
      %3928 = vmatpush.msra.mxu0 0.0
      %3929 = vmatpush.msra.mxu0 0.0
      %3930 = vmatpush.msra.mxu0 0.0
      %3931 = vmatpush.msra.mxu0 0.0
      %3932 = vmatpush.msra.mxu0 0.0
      %3933 = vmatpush.msra.mxu0 0.0
      %3934 = vmatpush.msra.mxu0 0.0
      %3935 = vmatpush.msra.mxu0 0.0
      %3936 = vmatpush.msra.mxu0 0.0
      %3937 = vmatpush.msra.mxu0 0.0
      %3938 = vmatpush.msra.mxu0 0.0
      %3939 = vmatpush.msra.mxu0 0.0
      %3940 = vmatpush.msra.mxu0 0.0
      %3941 = vmatpush.msra.mxu0 0.0
      %3942 = vmatpush.msra.mxu0 %v3913
      %3943 = vmatmul.f32.gmra.mxu0 %v3911
      %v3944 = vpop.f32.mrf.mxu0
      %v3945 = vadd.f32 0.0, %v3944
      %3946 = vdwg.mxu0
      %3947 = vmatpush.msra.mxu0 0.0
      %3948 = vmatpush.msra.mxu0 0.0
      %3949 = vmatpush.msra.mxu0 0.0
      %3950 = vmatpush.msra.mxu0 0.0
      %3951 = vmatpush.msra.mxu0 0.0
      %3952 = vmatpush.msra.mxu0 0.0
      %3953 = vmatpush.msra.mxu0 0.0
      %3954 = vmatpush.msra.mxu0 0.0
      %3955 = vmatpush.msra.mxu0 0.0
      %3956 = vmatpush.msra.mxu0 0.0
      %3957 = vmatpush.msra.mxu0 0.0
      %3958 = vmatpush.msra.mxu0 0.0
      %3959 = vmatpush.msra.mxu0 0.0
      %3960 = vmatpush.msra.mxu0 0.0
      %3961 = vmatpush.msra.mxu0 0.0
      %3962 = vmatpush.msra.mxu0 %v3915
      %3963 = vmatmul.f32.gmra.mxu0 %v3911
      %v3964 = vpop.f32.mrf.mxu0
      %v3965 = vadd.f32 0.0, %v3964
      %3966 = vdwg.mxu0
      %3967 = vmatpush.msra.mxu0 0.0
      %3968 = vmatpush.msra.mxu0 0.0
      %3969 = vmatpush.msra.mxu0 0.0
      %3970 = vmatpush.msra.mxu0 0.0
      %3971 = vmatpush.msra.mxu0 0.0
      %3972 = vmatpush.msra.mxu0 0.0
      %3973 = vmatpush.msra.mxu0 0.0
      %3974 = vmatpush.msra.mxu0 0.0
      %3975 = vmatpush.msra.mxu0 0.0
      %3976 = vmatpush.msra.mxu0 0.0
      %3977 = vmatpush.msra.mxu0 0.0
      %3978 = vmatpush.msra.mxu0 0.0
      %3979 = vmatpush.msra.mxu0 0.0
      %3980 = vmatpush.msra.mxu0 0.0
      %3981 = vmatpush.msra.mxu0 0.0
      %3982 = vmatpush.msra.mxu0 %v3917
      %3983 = vmatmul.f32.gmra.mxu0 %v3911
      %v3984 = vpop.f32.mrf.mxu0
      %v3985 = vadd.f32 0.0, %v3984
      %3986 = vdwg.mxu0
      %3987 = vmatpush.msra.mxu0 0.0
      %3988 = vmatpush.msra.mxu0 0.0
      %3989 = vmatpush.msra.mxu0 0.0
      %3990 = vmatpush.msra.mxu0 0.0
      %3991 = vmatpush.msra.mxu0 0.0
      %3992 = vmatpush.msra.mxu0 0.0
      %3993 = vmatpush.msra.mxu0 0.0
      %3994 = vmatpush.msra.mxu0 0.0
      %3995 = vmatpush.msra.mxu0 0.0
      %3996 = vmatpush.msra.mxu0 0.0
      %3997 = vmatpush.msra.mxu0 0.0
      %3998 = vmatpush.msra.mxu0 0.0
      %3999 = vmatpush.msra.mxu0 0.0
      %4000 = vmatpush.msra.mxu0 0.0
      %4001 = vmatpush.msra.mxu0 0.0
      %4002 = vmatpush.msra.mxu0 %v3919
      %4003 = vmatmul.f32.gmra.mxu0 %v3911
      %v4004 = vpop.f32.mrf.mxu0
      %v4005 = vadd.f32 0.0, %v4004
      %4006 = vdwg.mxu0
      %4007 = vmatpush.msra.mxu0 0.0
      %4008 = vmatpush.msra.mxu0 0.0
      %4009 = vmatpush.msra.mxu0 0.0
      %4010 = vmatpush.msra.mxu0 0.0
      %4011 = vmatpush.msra.mxu0 0.0
      %4012 = vmatpush.msra.mxu0 0.0
      %4013 = vmatpush.msra.mxu0 0.0
      %4014 = vmatpush.msra.mxu0 0.0
      %4015 = vmatpush.msra.mxu0 0.0
      %4016 = vmatpush.msra.mxu0 0.0
      %4017 = vmatpush.msra.mxu0 0.0
      %4018 = vmatpush.msra.mxu0 0.0
      %4019 = vmatpush.msra.mxu0 0.0
      %4020 = vmatpush.msra.mxu0 0.0
      %4021 = vmatpush.msra.mxu0 0.0
      %4022 = vmatpush.msra.mxu0 %v3921
      %4023 = vmatmul.f32.gmra.mxu0 %v3911
      %v4024 = vpop.f32.mrf.mxu0
      %v4025 = vadd.f32 0.0, %v4024
      %4026 = vdwg.mxu0
      %4027 = vmatpush.msra.mxu0 0.0
      %4028 = vmatpush.msra.mxu0 0.0
      %4029 = vmatpush.msra.mxu0 0.0
      %4030 = vmatpush.msra.mxu0 0.0
      %4031 = vmatpush.msra.mxu0 0.0
      %4032 = vmatpush.msra.mxu0 0.0
      %4033 = vmatpush.msra.mxu0 0.0
      %4034 = vmatpush.msra.mxu0 0.0
      %4035 = vmatpush.msra.mxu0 0.0
      %4036 = vmatpush.msra.mxu0 0.0
      %4037 = vmatpush.msra.mxu0 0.0
      %4038 = vmatpush.msra.mxu0 0.0
      %4039 = vmatpush.msra.mxu0 0.0
      %4040 = vmatpush.msra.mxu0 0.0
      %4041 = vmatpush.msra.mxu0 0.0
      %4042 = vmatpush.msra.mxu0 %v3923
      %4043 = vmatmul.f32.gmra.mxu0 %v3911
      %v4044 = vpop.f32.mrf.mxu0
      %v4045 = vadd.f32 0.0, %v4044
      %4046 = vdwg.mxu0
      %4047 = vmatpush.msra.mxu0 0.0
      %4048 = vmatpush.msra.mxu0 0.0
      %4049 = vmatpush.msra.mxu0 0.0
      %4050 = vmatpush.msra.mxu0 0.0
      %4051 = vmatpush.msra.mxu0 0.0
      %4052 = vmatpush.msra.mxu0 0.0
      %4053 = vmatpush.msra.mxu0 0.0
      %4054 = vmatpush.msra.mxu0 0.0
      %4055 = vmatpush.msra.mxu0 0.0
      %4056 = vmatpush.msra.mxu0 0.0
      %4057 = vmatpush.msra.mxu0 0.0
      %4058 = vmatpush.msra.mxu0 0.0
      %4059 = vmatpush.msra.mxu0 0.0
      %4060 = vmatpush.msra.mxu0 0.0
      %4061 = vmatpush.msra.mxu0 0.0
      %4062 = vmatpush.msra.mxu0 %v3925
      %4063 = vmatmul.f32.gmra.mxu0 %v3911
      %v4064 = vpop.f32.mrf.mxu0
      %v4065 = vadd.f32 0.0, %v4064
      %4066 = vdwg.mxu0
      %v4067 = vadd.f32 %v3862, %v3945
      %v4068 = vadd.f32 %v3863, %v3965
      %v4069 = vadd.f32 %v3864, %v3985
      %v4070 = vadd.f32 %v3865, %v4005
      %v4071 = vadd.f32 %v3866, %v4025
      %v4072 = vadd.f32 %v3867, %v4045
      %v4073 = vadd.f32 %v3868, %v4065
      %s4074 = scalar_lea.vmem %s1, 152
      %v4075 = vld [vmem:[%s4074] sm:$0x3f]
      %4076 = vst [vmem:[#allocation1] ss:$2 sm:$0xff] %v225
      %s4077 = scalar_lea.vmem [#allocation1], 16
      %4078 = vst [vmem:[%s4077] ss:$2 sm:$0xff] %v226
      %s4079 = scalar_lea.vmem [#allocation1], 32
      %4080 = vst [vmem:[%s4079] ss:$2 sm:$0xff] %v227
      %s4081 = scalar_lea.vmem [#allocation1], 48
      %4082 = vst [vmem:[%s4081] ss:$2 sm:$0xff] %v228
      %v4083 = vld.sshfl [vmem:[#allocation1] sm:$0xff pattern:$0x75316420]
      %v4084 = vld.sshfl [vmem:[#allocation1 + $0x8] sm:$0xff pattern:$0x75316420]
      %v4085 = vld.sshfl [vmem:[#allocation1 + $0x10] sm:$0xff pattern:$0x75316420]
      %v4086 = vld.sshfl [vmem:[#allocation1 + $0x18] sm:$0xff pattern:$0x75316420]
      %v4087 = vld.sshfl [vmem:[#allocation1 + $0x20] sm:$0xff pattern:$0x75316420]
      %v4088 = vld.sshfl [vmem:[#allocation1 + $0x28] sm:$0xff pattern:$0x75316420]
      %v4089 = vld.sshfl [vmem:[#allocation1 + $0x30] sm:$0xff pattern:$0x75316420]
      %v4090 = vld.sshfl [vmem:[#allocation1 + $0x38] sm:$0xff pattern:$0x75316420]
      %4091 = vrot.lane.b32.xlu0 %v4083, 28
      %v4092 = vpop.permute.xlu0 %4091
      %4093 = vrot.lane.b32.xlu0 %v4084, 28
      %v4094 = vpop.permute.xlu0 %4093
      %4095 = vrot.lane.b32.xlu0 %v4085, 28
      %v4096 = vpop.permute.xlu0 %4095
      %4097 = vrot.lane.b32.xlu0 %v4086, 28
      %v4098 = vpop.permute.xlu0 %4097
      %4099 = vrot.lane.b32.xlu0 %v4087, 28
      %v4100 = vpop.permute.xlu0 %4099
      %4101 = vrot.lane.b32.xlu0 %v4088, 28
      %v4102 = vpop.permute.xlu0 %4101
      %4103 = vrot.lane.b32.xlu0 %v4089, 28
      %v4104 = vpop.permute.xlu0 %4103
      %4105 = vrot.lane.b32.xlu0 %v4090, 28
      %v4106 = vpop.permute.xlu0 %4105
      %vm4107 = vcmask 228352
      %v4108 = vsel %vm4107, %v4092, %v4094
      %v4109 = vsel %vm4107, %v4094, %v4096
      %v4110 = vsel %vm4107, %v4096, %v4098
      %v4111 = vsel %vm4107, %v4098, %v4100
      %v4112 = vsel %vm4107, %v4100, %v4102
      %v4113 = vsel %vm4107, %v4102, %v4104
      %v4114 = vsel %vm4107, %v4104, %v4106
      %v4116 = vsel %vm271, %v4075, 0
      %v4118 = vsel %vm275, %v4108, 0
      %v4120 = vsel %vm275, %v4109, 0
      %v4122 = vsel %vm275, %v4110, 0
      %v4124 = vsel %vm275, %v4111, 0
      %v4126 = vsel %vm275, %v4112, 0
      %v4128 = vsel %vm275, %v4113, 0
      %v4130 = vsel %vm275, %v4114, 0
      %4132 = vmatpush.msra.mxu0 0.0
      %4133 = vmatpush.msra.mxu0 0.0
      %4134 = vmatpush.msra.mxu0 0.0
      %4135 = vmatpush.msra.mxu0 0.0
      %4136 = vmatpush.msra.mxu0 0.0
      %4137 = vmatpush.msra.mxu0 0.0
      %4138 = vmatpush.msra.mxu0 0.0
      %4139 = vmatpush.msra.mxu0 0.0
      %4140 = vmatpush.msra.mxu0 0.0
      %4141 = vmatpush.msra.mxu0 0.0
      %4142 = vmatpush.msra.mxu0 0.0
      %4143 = vmatpush.msra.mxu0 0.0
      %4144 = vmatpush.msra.mxu0 0.0
      %4145 = vmatpush.msra.mxu0 0.0
      %4146 = vmatpush.msra.mxu0 0.0
      %4147 = vmatpush.msra.mxu0 %v4118
      %4148 = vmatmul.f32.gmra.mxu0 %v4116
      %v4149 = vpop.f32.mrf.mxu0
      %v4150 = vadd.f32 0.0, %v4149
      %4151 = vdwg.mxu0
      %4152 = vmatpush.msra.mxu0 0.0
      %4153 = vmatpush.msra.mxu0 0.0
      %4154 = vmatpush.msra.mxu0 0.0
      %4155 = vmatpush.msra.mxu0 0.0
      %4156 = vmatpush.msra.mxu0 0.0
      %4157 = vmatpush.msra.mxu0 0.0
      %4158 = vmatpush.msra.mxu0 0.0
      %4159 = vmatpush.msra.mxu0 0.0
      %4160 = vmatpush.msra.mxu0 0.0
      %4161 = vmatpush.msra.mxu0 0.0
      %4162 = vmatpush.msra.mxu0 0.0
      %4163 = vmatpush.msra.mxu0 0.0
      %4164 = vmatpush.msra.mxu0 0.0
      %4165 = vmatpush.msra.mxu0 0.0
      %4166 = vmatpush.msra.mxu0 0.0
      %4167 = vmatpush.msra.mxu0 %v4120
      %4168 = vmatmul.f32.gmra.mxu0 %v4116
      %v4169 = vpop.f32.mrf.mxu0
      %v4170 = vadd.f32 0.0, %v4169
      %4171 = vdwg.mxu0
      %4172 = vmatpush.msra.mxu0 0.0
      %4173 = vmatpush.msra.mxu0 0.0
      %4174 = vmatpush.msra.mxu0 0.0
      %4175 = vmatpush.msra.mxu0 0.0
      %4176 = vmatpush.msra.mxu0 0.0
      %4177 = vmatpush.msra.mxu0 0.0
      %4178 = vmatpush.msra.mxu0 0.0
      %4179 = vmatpush.msra.mxu0 0.0
      %4180 = vmatpush.msra.mxu0 0.0
      %4181 = vmatpush.msra.mxu0 0.0
      %4182 = vmatpush.msra.mxu0 0.0
      %4183 = vmatpush.msra.mxu0 0.0
      %4184 = vmatpush.msra.mxu0 0.0
      %4185 = vmatpush.msra.mxu0 0.0
      %4186 = vmatpush.msra.mxu0 0.0
      %4187 = vmatpush.msra.mxu0 %v4122
      %4188 = vmatmul.f32.gmra.mxu0 %v4116
      %v4189 = vpop.f32.mrf.mxu0
      %v4190 = vadd.f32 0.0, %v4189
      %4191 = vdwg.mxu0
      %4192 = vmatpush.msra.mxu0 0.0
      %4193 = vmatpush.msra.mxu0 0.0
      %4194 = vmatpush.msra.mxu0 0.0
      %4195 = vmatpush.msra.mxu0 0.0
      %4196 = vmatpush.msra.mxu0 0.0
      %4197 = vmatpush.msra.mxu0 0.0
      %4198 = vmatpush.msra.mxu0 0.0
      %4199 = vmatpush.msra.mxu0 0.0
      %4200 = vmatpush.msra.mxu0 0.0
      %4201 = vmatpush.msra.mxu0 0.0
      %4202 = vmatpush.msra.mxu0 0.0
      %4203 = vmatpush.msra.mxu0 0.0
      %4204 = vmatpush.msra.mxu0 0.0
      %4205 = vmatpush.msra.mxu0 0.0
      %4206 = vmatpush.msra.mxu0 0.0
      %4207 = vmatpush.msra.mxu0 %v4124
      %4208 = vmatmul.f32.gmra.mxu0 %v4116
      %v4209 = vpop.f32.mrf.mxu0
      %v4210 = vadd.f32 0.0, %v4209
      %4211 = vdwg.mxu0
      %4212 = vmatpush.msra.mxu0 0.0
      %4213 = vmatpush.msra.mxu0 0.0
      %4214 = vmatpush.msra.mxu0 0.0
      %4215 = vmatpush.msra.mxu0 0.0
      %4216 = vmatpush.msra.mxu0 0.0
      %4217 = vmatpush.msra.mxu0 0.0
      %4218 = vmatpush.msra.mxu0 0.0
      %4219 = vmatpush.msra.mxu0 0.0
      %4220 = vmatpush.msra.mxu0 0.0
      %4221 = vmatpush.msra.mxu0 0.0
      %4222 = vmatpush.msra.mxu0 0.0
      %4223 = vmatpush.msra.mxu0 0.0
      %4224 = vmatpush.msra.mxu0 0.0
      %4225 = vmatpush.msra.mxu0 0.0
      %4226 = vmatpush.msra.mxu0 0.0
      %4227 = vmatpush.msra.mxu0 %v4126
      %4228 = vmatmul.f32.gmra.mxu0 %v4116
      %v4229 = vpop.f32.mrf.mxu0
      %v4230 = vadd.f32 0.0, %v4229
      %4231 = vdwg.mxu0
      %4232 = vmatpush.msra.mxu0 0.0
      %4233 = vmatpush.msra.mxu0 0.0
      %4234 = vmatpush.msra.mxu0 0.0
      %4235 = vmatpush.msra.mxu0 0.0
      %4236 = vmatpush.msra.mxu0 0.0
      %4237 = vmatpush.msra.mxu0 0.0
      %4238 = vmatpush.msra.mxu0 0.0
      %4239 = vmatpush.msra.mxu0 0.0
      %4240 = vmatpush.msra.mxu0 0.0
      %4241 = vmatpush.msra.mxu0 0.0
      %4242 = vmatpush.msra.mxu0 0.0
      %4243 = vmatpush.msra.mxu0 0.0
      %4244 = vmatpush.msra.mxu0 0.0
      %4245 = vmatpush.msra.mxu0 0.0
      %4246 = vmatpush.msra.mxu0 0.0
      %4247 = vmatpush.msra.mxu0 %v4128
      %4248 = vmatmul.f32.gmra.mxu0 %v4116
      %v4249 = vpop.f32.mrf.mxu0
      %v4250 = vadd.f32 0.0, %v4249
      %4251 = vdwg.mxu0
      %4252 = vmatpush.msra.mxu0 0.0
      %4253 = vmatpush.msra.mxu0 0.0
      %4254 = vmatpush.msra.mxu0 0.0
      %4255 = vmatpush.msra.mxu0 0.0
      %4256 = vmatpush.msra.mxu0 0.0
      %4257 = vmatpush.msra.mxu0 0.0
      %4258 = vmatpush.msra.mxu0 0.0
      %4259 = vmatpush.msra.mxu0 0.0
      %4260 = vmatpush.msra.mxu0 0.0
      %4261 = vmatpush.msra.mxu0 0.0
      %4262 = vmatpush.msra.mxu0 0.0
      %4263 = vmatpush.msra.mxu0 0.0
      %4264 = vmatpush.msra.mxu0 0.0
      %4265 = vmatpush.msra.mxu0 0.0
      %4266 = vmatpush.msra.mxu0 0.0
      %4267 = vmatpush.msra.mxu0 %v4130
      %4268 = vmatmul.f32.gmra.mxu0 %v4116
      %v4269 = vpop.f32.mrf.mxu0
      %v4270 = vadd.f32 0.0, %v4269
      %4271 = vdwg.mxu0
      %v4272 = vadd.f32 %v4067, %v4150
      %v4273 = vadd.f32 %v4068, %v4170
      %v4274 = vadd.f32 %v4069, %v4190
      %v4275 = vadd.f32 %v4070, %v4210
      %v4276 = vadd.f32 %v4071, %v4230
      %v4277 = vadd.f32 %v4072, %v4250
      %v4278 = vadd.f32 %v4073, %v4270
      %s4279 = scalar_lea.vmem %s1, 160
      %v4280 = vld [vmem:[%s4279] sm:$0x3f]
      %4281 = vst [vmem:[#allocation1] ss:$2 sm:$0xff] %v225
      %s4282 = scalar_lea.vmem [#allocation1], 16
      %4283 = vst [vmem:[%s4282] ss:$2 sm:$0xff] %v226
      %s4284 = scalar_lea.vmem [#allocation1], 32
      %4285 = vst [vmem:[%s4284] ss:$2 sm:$0xff] %v227
      %s4286 = scalar_lea.vmem [#allocation1], 48
      %4287 = vst [vmem:[%s4286] ss:$2 sm:$0xff] %v228
      %v4288 = vld.sshfl [vmem:[#allocation1 + $0x8] sm:$0xff pattern:$0x75316420]
      %v4289 = vld.sshfl [vmem:[#allocation1 + $0x10] sm:$0xff pattern:$0x75316420]
      %v4290 = vld.sshfl [vmem:[#allocation1 + $0x18] sm:$0xff pattern:$0x75316420]
      %v4291 = vld.sshfl [vmem:[#allocation1 + $0x20] sm:$0xff pattern:$0x75316420]
      %v4292 = vld.sshfl [vmem:[#allocation1 + $0x28] sm:$0xff pattern:$0x75316420]
      %v4293 = vld.sshfl [vmem:[#allocation1 + $0x30] sm:$0xff pattern:$0x75316420]
      %v4294 = vld.sshfl [vmem:[#allocation1 + $0x38] sm:$0xff pattern:$0x75316420]
      %v4296 = vsel %vm271, %v4280, 0
      %v4298 = vsel %vm275, %v4288, 0
      %v4300 = vsel %vm275, %v4289, 0
      %v4302 = vsel %vm275, %v4290, 0
      %v4304 = vsel %vm275, %v4291, 0
      %v4306 = vsel %vm275, %v4292, 0
      %v4308 = vsel %vm275, %v4293, 0
      %v4310 = vsel %vm275, %v4294, 0
      %4312 = vmatpush.msra.mxu0 0.0
      %4313 = vmatpush.msra.mxu0 0.0
      %4314 = vmatpush.msra.mxu0 0.0
      %4315 = vmatpush.msra.mxu0 0.0
      %4316 = vmatpush.msra.mxu0 0.0
      %4317 = vmatpush.msra.mxu0 0.0
      %4318 = vmatpush.msra.mxu0 0.0
      %4319 = vmatpush.msra.mxu0 0.0
      %4320 = vmatpush.msra.mxu0 0.0
      %4321 = vmatpush.msra.mxu0 0.0
      %4322 = vmatpush.msra.mxu0 0.0
      %4323 = vmatpush.msra.mxu0 0.0
      %4324 = vmatpush.msra.mxu0 0.0
      %4325 = vmatpush.msra.mxu0 0.0
      %4326 = vmatpush.msra.mxu0 0.0
      %4327 = vmatpush.msra.mxu0 %v4298
      %4328 = vmatmul.f32.gmra.mxu0 %v4296
      %v4329 = vpop.f32.mrf.mxu0
      %v4330 = vadd.f32 0.0, %v4329
      %4331 = vdwg.mxu0
      %4332 = vmatpush.msra.mxu0 0.0
      %4333 = vmatpush.msra.mxu0 0.0
      %4334 = vmatpush.msra.mxu0 0.0
      %4335 = vmatpush.msra.mxu0 0.0
      %4336 = vmatpush.msra.mxu0 0.0
      %4337 = vmatpush.msra.mxu0 0.0
      %4338 = vmatpush.msra.mxu0 0.0
      %4339 = vmatpush.msra.mxu0 0.0
      %4340 = vmatpush.msra.mxu0 0.0
      %4341 = vmatpush.msra.mxu0 0.0
      %4342 = vmatpush.msra.mxu0 0.0
      %4343 = vmatpush.msra.mxu0 0.0
      %4344 = vmatpush.msra.mxu0 0.0
      %4345 = vmatpush.msra.mxu0 0.0
      %4346 = vmatpush.msra.mxu0 0.0
      %4347 = vmatpush.msra.mxu0 %v4300
      %4348 = vmatmul.f32.gmra.mxu0 %v4296
      %v4349 = vpop.f32.mrf.mxu0
      %v4350 = vadd.f32 0.0, %v4349
      %4351 = vdwg.mxu0
      %4352 = vmatpush.msra.mxu0 0.0
      %4353 = vmatpush.msra.mxu0 0.0
      %4354 = vmatpush.msra.mxu0 0.0
      %4355 = vmatpush.msra.mxu0 0.0
      %4356 = vmatpush.msra.mxu0 0.0
      %4357 = vmatpush.msra.mxu0 0.0
      %4358 = vmatpush.msra.mxu0 0.0
      %4359 = vmatpush.msra.mxu0 0.0
      %4360 = vmatpush.msra.mxu0 0.0
      %4361 = vmatpush.msra.mxu0 0.0
      %4362 = vmatpush.msra.mxu0 0.0
      %4363 = vmatpush.msra.mxu0 0.0
      %4364 = vmatpush.msra.mxu0 0.0
      %4365 = vmatpush.msra.mxu0 0.0
      %4366 = vmatpush.msra.mxu0 0.0
      %4367 = vmatpush.msra.mxu0 %v4302
      %4368 = vmatmul.f32.gmra.mxu0 %v4296
      %v4369 = vpop.f32.mrf.mxu0
      %v4370 = vadd.f32 0.0, %v4369
      %4371 = vdwg.mxu0
      %4372 = vmatpush.msra.mxu0 0.0
      %4373 = vmatpush.msra.mxu0 0.0
      %4374 = vmatpush.msra.mxu0 0.0
      %4375 = vmatpush.msra.mxu0 0.0
      %4376 = vmatpush.msra.mxu0 0.0
      %4377 = vmatpush.msra.mxu0 0.0
      %4378 = vmatpush.msra.mxu0 0.0
      %4379 = vmatpush.msra.mxu0 0.0
      %4380 = vmatpush.msra.mxu0 0.0
      %4381 = vmatpush.msra.mxu0 0.0
      %4382 = vmatpush.msra.mxu0 0.0
      %4383 = vmatpush.msra.mxu0 0.0
      %4384 = vmatpush.msra.mxu0 0.0
      %4385 = vmatpush.msra.mxu0 0.0
      %4386 = vmatpush.msra.mxu0 0.0
      %4387 = vmatpush.msra.mxu0 %v4304
      %4388 = vmatmul.f32.gmra.mxu0 %v4296
      %v4389 = vpop.f32.mrf.mxu0
      %v4390 = vadd.f32 0.0, %v4389
      %4391 = vdwg.mxu0
      %4392 = vmatpush.msra.mxu0 0.0
      %4393 = vmatpush.msra.mxu0 0.0
      %4394 = vmatpush.msra.mxu0 0.0
      %4395 = vmatpush.msra.mxu0 0.0
      %4396 = vmatpush.msra.mxu0 0.0
      %4397 = vmatpush.msra.mxu0 0.0
      %4398 = vmatpush.msra.mxu0 0.0
      %4399 = vmatpush.msra.mxu0 0.0
      %4400 = vmatpush.msra.mxu0 0.0
      %4401 = vmatpush.msra.mxu0 0.0
      %4402 = vmatpush.msra.mxu0 0.0
      %4403 = vmatpush.msra.mxu0 0.0
      %4404 = vmatpush.msra.mxu0 0.0
      %4405 = vmatpush.msra.mxu0 0.0
      %4406 = vmatpush.msra.mxu0 0.0
      %4407 = vmatpush.msra.mxu0 %v4306
      %4408 = vmatmul.f32.gmra.mxu0 %v4296
      %v4409 = vpop.f32.mrf.mxu0
      %v4410 = vadd.f32 0.0, %v4409
      %4411 = vdwg.mxu0
      %4412 = vmatpush.msra.mxu0 0.0
      %4413 = vmatpush.msra.mxu0 0.0
      %4414 = vmatpush.msra.mxu0 0.0
      %4415 = vmatpush.msra.mxu0 0.0
      %4416 = vmatpush.msra.mxu0 0.0
      %4417 = vmatpush.msra.mxu0 0.0
      %4418 = vmatpush.msra.mxu0 0.0
      %4419 = vmatpush.msra.mxu0 0.0
      %4420 = vmatpush.msra.mxu0 0.0
      %4421 = vmatpush.msra.mxu0 0.0
      %4422 = vmatpush.msra.mxu0 0.0
      %4423 = vmatpush.msra.mxu0 0.0
      %4424 = vmatpush.msra.mxu0 0.0
      %4425 = vmatpush.msra.mxu0 0.0
      %4426 = vmatpush.msra.mxu0 0.0
      %4427 = vmatpush.msra.mxu0 %v4308
      %4428 = vmatmul.f32.gmra.mxu0 %v4296
      %v4429 = vpop.f32.mrf.mxu0
      %v4430 = vadd.f32 0.0, %v4429
      %4431 = vdwg.mxu0
      %4432 = vmatpush.msra.mxu0 0.0
      %4433 = vmatpush.msra.mxu0 0.0
      %4434 = vmatpush.msra.mxu0 0.0
      %4435 = vmatpush.msra.mxu0 0.0
      %4436 = vmatpush.msra.mxu0 0.0
      %4437 = vmatpush.msra.mxu0 0.0
      %4438 = vmatpush.msra.mxu0 0.0
      %4439 = vmatpush.msra.mxu0 0.0
      %4440 = vmatpush.msra.mxu0 0.0
      %4441 = vmatpush.msra.mxu0 0.0
      %4442 = vmatpush.msra.mxu0 0.0
      %4443 = vmatpush.msra.mxu0 0.0
      %4444 = vmatpush.msra.mxu0 0.0
      %4445 = vmatpush.msra.mxu0 0.0
      %4446 = vmatpush.msra.mxu0 0.0
      %4447 = vmatpush.msra.mxu0 %v4310
      %4448 = vmatmul.f32.gmra.mxu0 %v4296
      %v4449 = vpop.f32.mrf.mxu0
      %v4450 = vadd.f32 0.0, %v4449
      %4451 = vdwg.mxu0
      %v4452 = vadd.f32 %v4272, %v4330
      %v4453 = vadd.f32 %v4273, %v4350
      %v4454 = vadd.f32 %v4274, %v4370
      %v4455 = vadd.f32 %v4275, %v4390
      %v4456 = vadd.f32 %v4276, %v4410
      %v4457 = vadd.f32 %v4277, %v4430
      %v4458 = vadd.f32 %v4278, %v4450
      %s4459 = scalar_lea.vmem %s1, 168
      %v4460 = vld [vmem:[%s4459] sm:$0x3f]
      %4461 = vst [vmem:[#allocation1] ss:$2 sm:$0xff] %v225
      %s4462 = scalar_lea.vmem [#allocation1], 16
      %4463 = vst [vmem:[%s4462] ss:$2 sm:$0xff] %v226
      %s4464 = scalar_lea.vmem [#allocation1], 32
      %4465 = vst [vmem:[%s4464] ss:$2 sm:$0xff] %v227
      %s4466 = scalar_lea.vmem [#allocation1], 48
      %4467 = vst [vmem:[%s4466] ss:$2 sm:$0xff] %v228
      %v4468 = vld.sshfl [vmem:[#allocation1 + $0x8] sm:$0xff pattern:$0x75316420]
      %v4469 = vld.sshfl [vmem:[#allocation1 + $0x10] sm:$0xff pattern:$0x75316420]
      %v4470 = vld.sshfl [vmem:[#allocation1 + $0x18] sm:$0xff pattern:$0x75316420]
      %v4471 = vld.sshfl [vmem:[#allocation1 + $0x20] sm:$0xff pattern:$0x75316420]
      %v4472 = vld.sshfl [vmem:[#allocation1 + $0x28] sm:$0xff pattern:$0x75316420]
      %v4473 = vld.sshfl [vmem:[#allocation1 + $0x30] sm:$0xff pattern:$0x75316420]
      %v4474 = vld.sshfl [vmem:[#allocation1 + $0x38] sm:$0xff pattern:$0x75316420]
      %4475 = vrot.lane.b32.xlu0 %v4468, 127
      %v4476 = vpop.permute.xlu0 %4475
      %4477 = vrot.lane.b32.xlu0 %v4469, 127
      %v4478 = vpop.permute.xlu0 %4477
      %4479 = vrot.lane.b32.xlu0 %v4470, 127
      %v4480 = vpop.permute.xlu0 %4479
      %4481 = vrot.lane.b32.xlu0 %v4471, 127
      %v4482 = vpop.permute.xlu0 %4481
      %4483 = vrot.lane.b32.xlu0 %v4472, 127
      %v4484 = vpop.permute.xlu0 %4483
      %4485 = vrot.lane.b32.xlu0 %v4473, 127
      %v4486 = vpop.permute.xlu0 %4485
      %4487 = vrot.lane.b32.xlu0 %v4474, 127
      %v4488 = vpop.permute.xlu0 %4487
      %v4489 = vsel %vm264, %v4476, %v4478
      %v4490 = vsel %vm264, %v4478, %v4480
      %v4491 = vsel %vm264, %v4480, %v4482
      %v4492 = vsel %vm264, %v4482, %v4484
      %v4493 = vsel %vm264, %v4484, %v4486
      %v4494 = vsel %vm264, %v4486, %v4488
      %v4496 = vsel %vm271, %v4460, 0
      %v4498 = vsel %vm275, %v4489, 0
      %v4500 = vsel %vm275, %v4490, 0
      %v4502 = vsel %vm275, %v4491, 0
      %v4504 = vsel %vm275, %v4492, 0
      %v4506 = vsel %vm275, %v4493, 0
      %v4508 = vsel %vm275, %v4494, 0
      %v4510 = vsel %vm275, %v4488, 0
      %4512 = vmatpush.msra.mxu0 0.0
      %4513 = vmatpush.msra.mxu0 0.0
      %4514 = vmatpush.msra.mxu0 0.0
      %4515 = vmatpush.msra.mxu0 0.0
      %4516 = vmatpush.msra.mxu0 0.0
      %4517 = vmatpush.msra.mxu0 0.0
      %4518 = vmatpush.msra.mxu0 0.0
      %4519 = vmatpush.msra.mxu0 0.0
      %4520 = vmatpush.msra.mxu0 0.0
      %4521 = vmatpush.msra.mxu0 0.0
      %4522 = vmatpush.msra.mxu0 0.0
      %4523 = vmatpush.msra.mxu0 0.0
      %4524 = vmatpush.msra.mxu0 0.0
      %4525 = vmatpush.msra.mxu0 0.0
      %4526 = vmatpush.msra.mxu0 0.0
      %4527 = vmatpush.msra.mxu0 %v4498
      %4528 = vmatmul.f32.gmra.mxu0 %v4496
      %v4529 = vpop.f32.mrf.mxu0
      %v4530 = vadd.f32 0.0, %v4529
      %4531 = vdwg.mxu0
      %4532 = vmatpush.msra.mxu0 0.0
      %4533 = vmatpush.msra.mxu0 0.0
      %4534 = vmatpush.msra.mxu0 0.0
      %4535 = vmatpush.msra.mxu0 0.0
      %4536 = vmatpush.msra.mxu0 0.0
      %4537 = vmatpush.msra.mxu0 0.0
      %4538 = vmatpush.msra.mxu0 0.0
      %4539 = vmatpush.msra.mxu0 0.0
      %4540 = vmatpush.msra.mxu0 0.0
      %4541 = vmatpush.msra.mxu0 0.0
      %4542 = vmatpush.msra.mxu0 0.0
      %4543 = vmatpush.msra.mxu0 0.0
      %4544 = vmatpush.msra.mxu0 0.0
      %4545 = vmatpush.msra.mxu0 0.0
      %4546 = vmatpush.msra.mxu0 0.0
      %4547 = vmatpush.msra.mxu0 %v4500
      %4548 = vmatmul.f32.gmra.mxu0 %v4496
      %v4549 = vpop.f32.mrf.mxu0
      %v4550 = vadd.f32 0.0, %v4549
      %4551 = vdwg.mxu0
      %4552 = vmatpush.msra.mxu0 0.0
      %4553 = vmatpush.msra.mxu0 0.0
      %4554 = vmatpush.msra.mxu0 0.0
      %4555 = vmatpush.msra.mxu0 0.0
      %4556 = vmatpush.msra.mxu0 0.0
      %4557 = vmatpush.msra.mxu0 0.0
      %4558 = vmatpush.msra.mxu0 0.0
      %4559 = vmatpush.msra.mxu0 0.0
      %4560 = vmatpush.msra.mxu0 0.0
      %4561 = vmatpush.msra.mxu0 0.0
      %4562 = vmatpush.msra.mxu0 0.0
      %4563 = vmatpush.msra.mxu0 0.0
      %4564 = vmatpush.msra.mxu0 0.0
      %4565 = vmatpush.msra.mxu0 0.0
      %4566 = vmatpush.msra.mxu0 0.0
      %4567 = vmatpush.msra.mxu0 %v4502
      %4568 = vmatmul.f32.gmra.mxu0 %v4496
      %v4569 = vpop.f32.mrf.mxu0
      %v4570 = vadd.f32 0.0, %v4569
      %4571 = vdwg.mxu0
      %4572 = vmatpush.msra.mxu0 0.0
      %4573 = vmatpush.msra.mxu0 0.0
      %4574 = vmatpush.msra.mxu0 0.0
      %4575 = vmatpush.msra.mxu0 0.0
      %4576 = vmatpush.msra.mxu0 0.0
      %4577 = vmatpush.msra.mxu0 0.0
      %4578 = vmatpush.msra.mxu0 0.0
      %4579 = vmatpush.msra.mxu0 0.0
      %4580 = vmatpush.msra.mxu0 0.0
      %4581 = vmatpush.msra.mxu0 0.0
      %4582 = vmatpush.msra.mxu0 0.0
      %4583 = vmatpush.msra.mxu0 0.0
      %4584 = vmatpush.msra.mxu0 0.0
      %4585 = vmatpush.msra.mxu0 0.0
      %4586 = vmatpush.msra.mxu0 0.0
      %4587 = vmatpush.msra.mxu0 %v4504
      %4588 = vmatmul.f32.gmra.mxu0 %v4496
      %v4589 = vpop.f32.mrf.mxu0
      %v4590 = vadd.f32 0.0, %v4589
      %4591 = vdwg.mxu0
      %4592 = vmatpush.msra.mxu0 0.0
      %4593 = vmatpush.msra.mxu0 0.0
      %4594 = vmatpush.msra.mxu0 0.0
      %4595 = vmatpush.msra.mxu0 0.0
      %4596 = vmatpush.msra.mxu0 0.0
      %4597 = vmatpush.msra.mxu0 0.0
      %4598 = vmatpush.msra.mxu0 0.0
      %4599 = vmatpush.msra.mxu0 0.0
      %4600 = vmatpush.msra.mxu0 0.0
      %4601 = vmatpush.msra.mxu0 0.0
      %4602 = vmatpush.msra.mxu0 0.0
      %4603 = vmatpush.msra.mxu0 0.0
      %4604 = vmatpush.msra.mxu0 0.0
      %4605 = vmatpush.msra.mxu0 0.0
      %4606 = vmatpush.msra.mxu0 0.0
      %4607 = vmatpush.msra.mxu0 %v4506
      %4608 = vmatmul.f32.gmra.mxu0 %v4496
      %v4609 = vpop.f32.mrf.mxu0
      %v4610 = vadd.f32 0.0, %v4609
      %4611 = vdwg.mxu0
      %4612 = vmatpush.msra.mxu0 0.0
      %4613 = vmatpush.msra.mxu0 0.0
      %4614 = vmatpush.msra.mxu0 0.0
      %4615 = vmatpush.msra.mxu0 0.0
      %4616 = vmatpush.msra.mxu0 0.0
      %4617 = vmatpush.msra.mxu0 0.0
      %4618 = vmatpush.msra.mxu0 0.0
      %4619 = vmatpush.msra.mxu0 0.0
      %4620 = vmatpush.msra.mxu0 0.0
      %4621 = vmatpush.msra.mxu0 0.0
      %4622 = vmatpush.msra.mxu0 0.0
      %4623 = vmatpush.msra.mxu0 0.0
      %4624 = vmatpush.msra.mxu0 0.0
      %4625 = vmatpush.msra.mxu0 0.0
      %4626 = vmatpush.msra.mxu0 0.0
      %4627 = vmatpush.msra.mxu0 %v4508
      %4628 = vmatmul.f32.gmra.mxu0 %v4496
      %v4629 = vpop.f32.mrf.mxu0
      %v4630 = vadd.f32 0.0, %v4629
      %4631 = vdwg.mxu0
      %4632 = vmatpush.msra.mxu0 0.0
      %4633 = vmatpush.msra.mxu0 0.0
      %4634 = vmatpush.msra.mxu0 0.0
      %4635 = vmatpush.msra.mxu0 0.0
      %4636 = vmatpush.msra.mxu0 0.0
      %4637 = vmatpush.msra.mxu0 0.0
      %4638 = vmatpush.msra.mxu0 0.0
      %4639 = vmatpush.msra.mxu0 0.0
      %4640 = vmatpush.msra.mxu0 0.0
      %4641 = vmatpush.msra.mxu0 0.0
      %4642 = vmatpush.msra.mxu0 0.0
      %4643 = vmatpush.msra.mxu0 0.0
      %4644 = vmatpush.msra.mxu0 0.0
      %4645 = vmatpush.msra.mxu0 0.0
      %4646 = vmatpush.msra.mxu0 0.0
      %4647 = vmatpush.msra.mxu0 %v4510
      %4648 = vmatmul.f32.gmra.mxu0 %v4496
      %v4649 = vpop.f32.mrf.mxu0
      %v4650 = vadd.f32 0.0, %v4649
      %4651 = vdwg.mxu0
      %v4652 = vadd.f32 %v4452, %v4530
      %v4653 = vadd.f32 %v4453, %v4550
      %v4654 = vadd.f32 %v4454, %v4570
      %v4655 = vadd.f32 %v4455, %v4590
      %v4656 = vadd.f32 %v4456, %v4610
      %v4657 = vadd.f32 %v4457, %v4630
      %v4658 = vadd.f32 %v4458, %v4650
      %s4659 = scalar_lea.vmem %s1, 176
      %v4660 = vld [vmem:[%s4659] sm:$0x3f]
      %4661 = vst [vmem:[#allocation1] ss:$2 sm:$0xff] %v225
      %s4662 = scalar_lea.vmem [#allocation1], 16
      %4663 = vst [vmem:[%s4662] ss:$2 sm:$0xff] %v226
      %s4664 = scalar_lea.vmem [#allocation1], 32
      %4665 = vst [vmem:[%s4664] ss:$2 sm:$0xff] %v227
      %s4666 = scalar_lea.vmem [#allocation1], 48
      %4667 = vst [vmem:[%s4666] ss:$2 sm:$0xff] %v228
      %v4668 = vld.sshfl [vmem:[#allocation1 + $0x8] sm:$0xff pattern:$0x75316420]
      %v4669 = vld.sshfl [vmem:[#allocation1 + $0x10] sm:$0xff pattern:$0x75316420]
      %v4670 = vld.sshfl [vmem:[#allocation1 + $0x18] sm:$0xff pattern:$0x75316420]
      %v4671 = vld.sshfl [vmem:[#allocation1 + $0x20] sm:$0xff pattern:$0x75316420]
      %v4672 = vld.sshfl [vmem:[#allocation1 + $0x28] sm:$0xff pattern:$0x75316420]
      %v4673 = vld.sshfl [vmem:[#allocation1 + $0x30] sm:$0xff pattern:$0x75316420]
      %v4674 = vld.sshfl [vmem:[#allocation1 + $0x38] sm:$0xff pattern:$0x75316420]
      %4675 = vrot.lane.b32.xlu0 %v4668, 126
      %v4676 = vpop.permute.xlu0 %4675
      %4677 = vrot.lane.b32.xlu0 %v4669, 126
      %v4678 = vpop.permute.xlu0 %4677
      %4679 = vrot.lane.b32.xlu0 %v4670, 126
      %v4680 = vpop.permute.xlu0 %4679
      %4681 = vrot.lane.b32.xlu0 %v4671, 126
      %v4682 = vpop.permute.xlu0 %4681
      %4683 = vrot.lane.b32.xlu0 %v4672, 126
      %v4684 = vpop.permute.xlu0 %4683
      %4685 = vrot.lane.b32.xlu0 %v4673, 126
      %v4686 = vpop.permute.xlu0 %4685
      %4687 = vrot.lane.b32.xlu0 %v4674, 126
      %v4688 = vpop.permute.xlu0 %4687
      %v4689 = vsel %vm631, %v4676, %v4678
      %v4690 = vsel %vm631, %v4678, %v4680
      %v4691 = vsel %vm631, %v4680, %v4682
      %v4692 = vsel %vm631, %v4682, %v4684
      %v4693 = vsel %vm631, %v4684, %v4686
      %v4694 = vsel %vm631, %v4686, %v4688
      %v4696 = vsel %vm271, %v4660, 0
      %v4698 = vsel %vm275, %v4689, 0
      %v4700 = vsel %vm275, %v4690, 0
      %v4702 = vsel %vm275, %v4691, 0
      %v4704 = vsel %vm275, %v4692, 0
      %v4706 = vsel %vm275, %v4693, 0
      %v4708 = vsel %vm275, %v4694, 0
      %v4710 = vsel %vm275, %v4688, 0
      %4712 = vmatpush.msra.mxu0 0.0
      %4713 = vmatpush.msra.mxu0 0.0
      %4714 = vmatpush.msra.mxu0 0.0
      %4715 = vmatpush.msra.mxu0 0.0
      %4716 = vmatpush.msra.mxu0 0.0
      %4717 = vmatpush.msra.mxu0 0.0
      %4718 = vmatpush.msra.mxu0 0.0
      %4719 = vmatpush.msra.mxu0 0.0
      %4720 = vmatpush.msra.mxu0 0.0
      %4721 = vmatpush.msra.mxu0 0.0
      %4722 = vmatpush.msra.mxu0 0.0
      %4723 = vmatpush.msra.mxu0 0.0
      %4724 = vmatpush.msra.mxu0 0.0
      %4725 = vmatpush.msra.mxu0 0.0
      %4726 = vmatpush.msra.mxu0 0.0
      %4727 = vmatpush.msra.mxu0 %v4698
      %4728 = vmatmul.f32.gmra.mxu0 %v4696
      %v4729 = vpop.f32.mrf.mxu0
      %v4730 = vadd.f32 0.0, %v4729
      %4731 = vdwg.mxu0
      %4732 = vmatpush.msra.mxu0 0.0
      %4733 = vmatpush.msra.mxu0 0.0
      %4734 = vmatpush.msra.mxu0 0.0
      %4735 = vmatpush.msra.mxu0 0.0
      %4736 = vmatpush.msra.mxu0 0.0
      %4737 = vmatpush.msra.mxu0 0.0
      %4738 = vmatpush.msra.mxu0 0.0
      %4739 = vmatpush.msra.mxu0 0.0
      %4740 = vmatpush.msra.mxu0 0.0
      %4741 = vmatpush.msra.mxu0 0.0
      %4742 = vmatpush.msra.mxu0 0.0
      %4743 = vmatpush.msra.mxu0 0.0
      %4744 = vmatpush.msra.mxu0 0.0
      %4745 = vmatpush.msra.mxu0 0.0
      %4746 = vmatpush.msra.mxu0 0.0
      %4747 = vmatpush.msra.mxu0 %v4700
      %4748 = vmatmul.f32.gmra.mxu0 %v4696
      %v4749 = vpop.f32.mrf.mxu0
      %v4750 = vadd.f32 0.0, %v4749
      %4751 = vdwg.mxu0
      %4752 = vmatpush.msra.mxu0 0.0
      %4753 = vmatpush.msra.mxu0 0.0
      %4754 = vmatpush.msra.mxu0 0.0
      %4755 = vmatpush.msra.mxu0 0.0
      %4756 = vmatpush.msra.mxu0 0.0
      %4757 = vmatpush.msra.mxu0 0.0
      %4758 = vmatpush.msra.mxu0 0.0
      %4759 = vmatpush.msra.mxu0 0.0
      %4760 = vmatpush.msra.mxu0 0.0
      %4761 = vmatpush.msra.mxu0 0.0
      %4762 = vmatpush.msra.mxu0 0.0
      %4763 = vmatpush.msra.mxu0 0.0
      %4764 = vmatpush.msra.mxu0 0.0
      %4765 = vmatpush.msra.mxu0 0.0
      %4766 = vmatpush.msra.mxu0 0.0
      %4767 = vmatpush.msra.mxu0 %v4702
      %4768 = vmatmul.f32.gmra.mxu0 %v4696
      %v4769 = vpop.f32.mrf.mxu0
      %v4770 = vadd.f32 0.0, %v4769
      %4771 = vdwg.mxu0
      %4772 = vmatpush.msra.mxu0 0.0
      %4773 = vmatpush.msra.mxu0 0.0
      %4774 = vmatpush.msra.mxu0 0.0
      %4775 = vmatpush.msra.mxu0 0.0
      %4776 = vmatpush.msra.mxu0 0.0
      %4777 = vmatpush.msra.mxu0 0.0
      %4778 = vmatpush.msra.mxu0 0.0
      %4779 = vmatpush.msra.mxu0 0.0
      %4780 = vmatpush.msra.mxu0 0.0
      %4781 = vmatpush.msra.mxu0 0.0
      %4782 = vmatpush.msra.mxu0 0.0
      %4783 = vmatpush.msra.mxu0 0.0
      %4784 = vmatpush.msra.mxu0 0.0
      %4785 = vmatpush.msra.mxu0 0.0
      %4786 = vmatpush.msra.mxu0 0.0
      %4787 = vmatpush.msra.mxu0 %v4704
      %4788 = vmatmul.f32.gmra.mxu0 %v4696
      %v4789 = vpop.f32.mrf.mxu0
      %v4790 = vadd.f32 0.0, %v4789
      %4791 = vdwg.mxu0
      %4792 = vmatpush.msra.mxu0 0.0
      %4793 = vmatpush.msra.mxu0 0.0
      %4794 = vmatpush.msra.mxu0 0.0
      %4795 = vmatpush.msra.mxu0 0.0
      %4796 = vmatpush.msra.mxu0 0.0
      %4797 = vmatpush.msra.mxu0 0.0
      %4798 = vmatpush.msra.mxu0 0.0
      %4799 = vmatpush.msra.mxu0 0.0
      %4800 = vmatpush.msra.mxu0 0.0
      %4801 = vmatpush.msra.mxu0 0.0
      %4802 = vmatpush.msra.mxu0 0.0
      %4803 = vmatpush.msra.mxu0 0.0
      %4804 = vmatpush.msra.mxu0 0.0
      %4805 = vmatpush.msra.mxu0 0.0
      %4806 = vmatpush.msra.mxu0 0.0
      %4807 = vmatpush.msra.mxu0 %v4706
      %4808 = vmatmul.f32.gmra.mxu0 %v4696
      %v4809 = vpop.f32.mrf.mxu0
      %v4810 = vadd.f32 0.0, %v4809
      %4811 = vdwg.mxu0
      %4812 = vmatpush.msra.mxu0 0.0
      %4813 = vmatpush.msra.mxu0 0.0
      %4814 = vmatpush.msra.mxu0 0.0
      %4815 = vmatpush.msra.mxu0 0.0
      %4816 = vmatpush.msra.mxu0 0.0
      %4817 = vmatpush.msra.mxu0 0.0
      %4818 = vmatpush.msra.mxu0 0.0
      %4819 = vmatpush.msra.mxu0 0.0
      %4820 = vmatpush.msra.mxu0 0.0
      %4821 = vmatpush.msra.mxu0 0.0
      %4822 = vmatpush.msra.mxu0 0.0
      %4823 = vmatpush.msra.mxu0 0.0
      %4824 = vmatpush.msra.mxu0 0.0
      %4825 = vmatpush.msra.mxu0 0.0
      %4826 = vmatpush.msra.mxu0 0.0
      %4827 = vmatpush.msra.mxu0 %v4708
      %4828 = vmatmul.f32.gmra.mxu0 %v4696
      %v4829 = vpop.f32.mrf.mxu0
      %v4830 = vadd.f32 0.0, %v4829
      %4831 = vdwg.mxu0
      %4832 = vmatpush.msra.mxu0 0.0
      %4833 = vmatpush.msra.mxu0 0.0
      %4834 = vmatpush.msra.mxu0 0.0
      %4835 = vmatpush.msra.mxu0 0.0
      %4836 = vmatpush.msra.mxu0 0.0
      %4837 = vmatpush.msra.mxu0 0.0
      %4838 = vmatpush.msra.mxu0 0.0
      %4839 = vmatpush.msra.mxu0 0.0
      %4840 = vmatpush.msra.mxu0 0.0
      %4841 = vmatpush.msra.mxu0 0.0
      %4842 = vmatpush.msra.mxu0 0.0
      %4843 = vmatpush.msra.mxu0 0.0
      %4844 = vmatpush.msra.mxu0 0.0
      %4845 = vmatpush.msra.mxu0 0.0
      %4846 = vmatpush.msra.mxu0 0.0
      %4847 = vmatpush.msra.mxu0 %v4710
      %4848 = vmatmul.f32.gmra.mxu0 %v4696
      %v4849 = vpop.f32.mrf.mxu0
      %v4850 = vadd.f32 0.0, %v4849
      %4851 = vdwg.mxu0
      %v4852 = vadd.f32 %v4652, %v4730
      %v4853 = vadd.f32 %v4653, %v4750
      %v4854 = vadd.f32 %v4654, %v4770
      %v4855 = vadd.f32 %v4655, %v4790
      %v4856 = vadd.f32 %v4656, %v4810
      %v4857 = vadd.f32 %v4657, %v4830
      %v4858 = vadd.f32 %v4658, %v4850
      %s4859 = scalar_lea.vmem %s1, 184
      %v4860 = vld [vmem:[%s4859] sm:$0x3f]
      %4861 = vst [vmem:[#allocation1] ss:$2 sm:$0xff] %v225
      %s4862 = scalar_lea.vmem [#allocation1], 16
      %4863 = vst [vmem:[%s4862] ss:$2 sm:$0xff] %v226
      %s4864 = scalar_lea.vmem [#allocation1], 32
      %4865 = vst [vmem:[%s4864] ss:$2 sm:$0xff] %v227
      %s4866 = scalar_lea.vmem [#allocation1], 48
      %4867 = vst [vmem:[%s4866] ss:$2 sm:$0xff] %v228
      %v4868 = vld.sshfl [vmem:[#allocation1 + $0x8] sm:$0xff pattern:$0x75316420]
      %v4869 = vld.sshfl [vmem:[#allocation1 + $0x10] sm:$0xff pattern:$0x75316420]
      %v4870 = vld.sshfl [vmem:[#allocation1 + $0x18] sm:$0xff pattern:$0x75316420]
      %v4871 = vld.sshfl [vmem:[#allocation1 + $0x20] sm:$0xff pattern:$0x75316420]
      %v4872 = vld.sshfl [vmem:[#allocation1 + $0x28] sm:$0xff pattern:$0x75316420]
      %v4873 = vld.sshfl [vmem:[#allocation1 + $0x30] sm:$0xff pattern:$0x75316420]
      %v4874 = vld.sshfl [vmem:[#allocation1 + $0x38] sm:$0xff pattern:$0x75316420]
      %4875 = vrot.lane.b32.xlu0 %v4868, 125
      %v4876 = vpop.permute.xlu0 %4875
      %4877 = vrot.lane.b32.xlu0 %v4869, 125
      %v4878 = vpop.permute.xlu0 %4877
      %4879 = vrot.lane.b32.xlu0 %v4870, 125
      %v4880 = vpop.permute.xlu0 %4879
      %4881 = vrot.lane.b32.xlu0 %v4871, 125
      %v4882 = vpop.permute.xlu0 %4881
      %4883 = vrot.lane.b32.xlu0 %v4872, 125
      %v4884 = vpop.permute.xlu0 %4883
      %4885 = vrot.lane.b32.xlu0 %v4873, 125
      %v4886 = vpop.permute.xlu0 %4885
      %4887 = vrot.lane.b32.xlu0 %v4874, 125
      %v4888 = vpop.permute.xlu0 %4887
      %v4889 = vsel %vm832, %v4876, %v4878
      %v4890 = vsel %vm832, %v4878, %v4880
      %v4891 = vsel %vm832, %v4880, %v4882
      %v4892 = vsel %vm832, %v4882, %v4884
      %v4893 = vsel %vm832, %v4884, %v4886
      %v4894 = vsel %vm832, %v4886, %v4888
      %v4896 = vsel %vm271, %v4860, 0
      %v4898 = vsel %vm275, %v4889, 0
      %v4900 = vsel %vm275, %v4890, 0
      %v4902 = vsel %vm275, %v4891, 0
      %v4904 = vsel %vm275, %v4892, 0
      %v4906 = vsel %vm275, %v4893, 0
      %v4908 = vsel %vm275, %v4894, 0
      %v4910 = vsel %vm275, %v4888, 0
      %4912 = vmatpush.msra.mxu0 0.0
      %4913 = vmatpush.msra.mxu0 0.0
      %4914 = vmatpush.msra.mxu0 0.0
      %4915 = vmatpush.msra.mxu0 0.0
      %4916 = vmatpush.msra.mxu0 0.0
      %4917 = vmatpush.msra.mxu0 0.0
      %4918 = vmatpush.msra.mxu0 0.0
      %4919 = vmatpush.msra.mxu0 0.0
      %4920 = vmatpush.msra.mxu0 0.0
      %4921 = vmatpush.msra.mxu0 0.0
      %4922 = vmatpush.msra.mxu0 0.0
      %4923 = vmatpush.msra.mxu0 0.0
      %4924 = vmatpush.msra.mxu0 0.0
      %4925 = vmatpush.msra.mxu0 0.0
      %4926 = vmatpush.msra.mxu0 0.0
      %4927 = vmatpush.msra.mxu0 %v4898
      %4928 = vmatmul.f32.gmra.mxu0 %v4896
      %v4929 = vpop.f32.mrf.mxu0
      %v4930 = vadd.f32 0.0, %v4929
      %4931 = vdwg.mxu0
      %4932 = vmatpush.msra.mxu0 0.0
      %4933 = vmatpush.msra.mxu0 0.0
      %4934 = vmatpush.msra.mxu0 0.0
      %4935 = vmatpush.msra.mxu0 0.0
      %4936 = vmatpush.msra.mxu0 0.0
      %4937 = vmatpush.msra.mxu0 0.0
      %4938 = vmatpush.msra.mxu0 0.0
      %4939 = vmatpush.msra.mxu0 0.0
      %4940 = vmatpush.msra.mxu0 0.0
      %4941 = vmatpush.msra.mxu0 0.0
      %4942 = vmatpush.msra.mxu0 0.0
      %4943 = vmatpush.msra.mxu0 0.0
      %4944 = vmatpush.msra.mxu0 0.0
      %4945 = vmatpush.msra.mxu0 0.0
      %4946 = vmatpush.msra.mxu0 0.0
      %4947 = vmatpush.msra.mxu0 %v4900
      %4948 = vmatmul.f32.gmra.mxu0 %v4896
      %v4949 = vpop.f32.mrf.mxu0
      %v4950 = vadd.f32 0.0, %v4949
      %4951 = vdwg.mxu0
      %4952 = vmatpush.msra.mxu0 0.0
      %4953 = vmatpush.msra.mxu0 0.0
      %4954 = vmatpush.msra.mxu0 0.0
      %4955 = vmatpush.msra.mxu0 0.0
      %4956 = vmatpush.msra.mxu0 0.0
      %4957 = vmatpush.msra.mxu0 0.0
      %4958 = vmatpush.msra.mxu0 0.0
      %4959 = vmatpush.msra.mxu0 0.0
      %4960 = vmatpush.msra.mxu0 0.0
      %4961 = vmatpush.msra.mxu0 0.0
      %4962 = vmatpush.msra.mxu0 0.0
      %4963 = vmatpush.msra.mxu0 0.0
      %4964 = vmatpush.msra.mxu0 0.0
      %4965 = vmatpush.msra.mxu0 0.0
      %4966 = vmatpush.msra.mxu0 0.0
      %4967 = vmatpush.msra.mxu0 %v4902
      %4968 = vmatmul.f32.gmra.mxu0 %v4896
      %v4969 = vpop.f32.mrf.mxu0
      %v4970 = vadd.f32 0.0, %v4969
      %4971 = vdwg.mxu0
      %4972 = vmatpush.msra.mxu0 0.0
      %4973 = vmatpush.msra.mxu0 0.0
      %4974 = vmatpush.msra.mxu0 0.0
      %4975 = vmatpush.msra.mxu0 0.0
      %4976 = vmatpush.msra.mxu0 0.0
      %4977 = vmatpush.msra.mxu0 0.0
      %4978 = vmatpush.msra.mxu0 0.0
      %4979 = vmatpush.msra.mxu0 0.0
      %4980 = vmatpush.msra.mxu0 0.0
      %4981 = vmatpush.msra.mxu0 0.0
      %4982 = vmatpush.msra.mxu0 0.0
      %4983 = vmatpush.msra.mxu0 0.0
      %4984 = vmatpush.msra.mxu0 0.0
      %4985 = vmatpush.msra.mxu0 0.0
      %4986 = vmatpush.msra.mxu0 0.0
      %4987 = vmatpush.msra.mxu0 %v4904
      %4988 = vmatmul.f32.gmra.mxu0 %v4896
      %v4989 = vpop.f32.mrf.mxu0
      %v4990 = vadd.f32 0.0, %v4989
      %4991 = vdwg.mxu0
      %4992 = vmatpush.msra.mxu0 0.0
      %4993 = vmatpush.msra.mxu0 0.0
      %4994 = vmatpush.msra.mxu0 0.0
      %4995 = vmatpush.msra.mxu0 0.0
      %4996 = vmatpush.msra.mxu0 0.0
      %4997 = vmatpush.msra.mxu0 0.0
      %4998 = vmatpush.msra.mxu0 0.0
      %4999 = vmatpush.msra.mxu0 0.0
      %5000 = vmatpush.msra.mxu0 0.0
      %5001 = vmatpush.msra.mxu0 0.0
      %5002 = vmatpush.msra.mxu0 0.0
      %5003 = vmatpush.msra.mxu0 0.0
      %5004 = vmatpush.msra.mxu0 0.0
      %5005 = vmatpush.msra.mxu0 0.0
      %5006 = vmatpush.msra.mxu0 0.0
      %5007 = vmatpush.msra.mxu0 %v4906
      %5008 = vmatmul.f32.gmra.mxu0 %v4896
      %v5009 = vpop.f32.mrf.mxu0
      %v5010 = vadd.f32 0.0, %v5009
      %5011 = vdwg.mxu0
      %5012 = vmatpush.msra.mxu0 0.0
      %5013 = vmatpush.msra.mxu0 0.0
      %5014 = vmatpush.msra.mxu0 0.0
      %5015 = vmatpush.msra.mxu0 0.0
      %5016 = vmatpush.msra.mxu0 0.0
      %5017 = vmatpush.msra.mxu0 0.0
      %5018 = vmatpush.msra.mxu0 0.0
      %5019 = vmatpush.msra.mxu0 0.0
      %5020 = vmatpush.msra.mxu0 0.0
      %5021 = vmatpush.msra.mxu0 0.0
      %5022 = vmatpush.msra.mxu0 0.0
      %5023 = vmatpush.msra.mxu0 0.0
      %5024 = vmatpush.msra.mxu0 0.0
      %5025 = vmatpush.msra.mxu0 0.0
      %5026 = vmatpush.msra.mxu0 0.0
      %5027 = vmatpush.msra.mxu0 %v4908
      %5028 = vmatmul.f32.gmra.mxu0 %v4896
      %v5029 = vpop.f32.mrf.mxu0
      %v5030 = vadd.f32 0.0, %v5029
      %5031 = vdwg.mxu0
      %5032 = vmatpush.msra.mxu0 0.0
      %5033 = vmatpush.msra.mxu0 0.0
      %5034 = vmatpush.msra.mxu0 0.0
      %5035 = vmatpush.msra.mxu0 0.0
      %5036 = vmatpush.msra.mxu0 0.0
      %5037 = vmatpush.msra.mxu0 0.0
      %5038 = vmatpush.msra.mxu0 0.0
      %5039 = vmatpush.msra.mxu0 0.0
      %5040 = vmatpush.msra.mxu0 0.0
      %5041 = vmatpush.msra.mxu0 0.0
      %5042 = vmatpush.msra.mxu0 0.0
      %5043 = vmatpush.msra.mxu0 0.0
      %5044 = vmatpush.msra.mxu0 0.0
      %5045 = vmatpush.msra.mxu0 0.0
      %5046 = vmatpush.msra.mxu0 0.0
      %5047 = vmatpush.msra.mxu0 %v4910
      %5048 = vmatmul.f32.gmra.mxu0 %v4896
      %v5049 = vpop.f32.mrf.mxu0
      %v5050 = vadd.f32 0.0, %v5049
      %5051 = vdwg.mxu0
      %v5052 = vadd.f32 %v4852, %v4930
      %v5053 = vadd.f32 %v4853, %v4950
      %v5054 = vadd.f32 %v4854, %v4970
      %v5055 = vadd.f32 %v4855, %v4990
      %v5056 = vadd.f32 %v4856, %v5010
      %v5057 = vadd.f32 %v4857, %v5030
      %v5058 = vadd.f32 %v4858, %v5050
      %s5059 = scalar_lea.vmem %s1, 192
      %v5060 = vld [vmem:[%s5059] sm:$0x3f]
      %5061 = vst [vmem:[#allocation1] ss:$2 sm:$0xff] %v225
      %s5062 = scalar_lea.vmem [#allocation1], 16
      %5063 = vst [vmem:[%s5062] ss:$2 sm:$0xff] %v226
      %s5064 = scalar_lea.vmem [#allocation1], 32
      %5065 = vst [vmem:[%s5064] ss:$2 sm:$0xff] %v227
      %s5066 = scalar_lea.vmem [#allocation1], 48
      %5067 = vst [vmem:[%s5066] ss:$2 sm:$0xff] %v228
      %v5068 = vld.sshfl [vmem:[#allocation1 + $0x8] sm:$0xff pattern:$0x75316420]
      %v5069 = vld.sshfl [vmem:[#allocation1 + $0x10] sm:$0xff pattern:$0x75316420]
      %v5070 = vld.sshfl [vmem:[#allocation1 + $0x18] sm:$0xff pattern:$0x75316420]
      %v5071 = vld.sshfl [vmem:[#allocation1 + $0x20] sm:$0xff pattern:$0x75316420]
      %v5072 = vld.sshfl [vmem:[#allocation1 + $0x28] sm:$0xff pattern:$0x75316420]
      %v5073 = vld.sshfl [vmem:[#allocation1 + $0x30] sm:$0xff pattern:$0x75316420]
      %v5074 = vld.sshfl [vmem:[#allocation1 + $0x38] sm:$0xff pattern:$0x75316420]
      %5075 = vrot.lane.b32.xlu0 %v5068, 124
      %v5076 = vpop.permute.xlu0 %5075
      %5077 = vrot.lane.b32.xlu0 %v5069, 124
      %v5078 = vpop.permute.xlu0 %5077
      %5079 = vrot.lane.b32.xlu0 %v5070, 124
      %v5080 = vpop.permute.xlu0 %5079
      %5081 = vrot.lane.b32.xlu0 %v5071, 124
      %v5082 = vpop.permute.xlu0 %5081
      %5083 = vrot.lane.b32.xlu0 %v5072, 124
      %v5084 = vpop.permute.xlu0 %5083
      %5085 = vrot.lane.b32.xlu0 %v5073, 124
      %v5086 = vpop.permute.xlu0 %5085
      %5087 = vrot.lane.b32.xlu0 %v5074, 124
      %v5088 = vpop.permute.xlu0 %5087
      %v5089 = vsel %vm1033, %v5076, %v5078
      %v5090 = vsel %vm1033, %v5078, %v5080
      %v5091 = vsel %vm1033, %v5080, %v5082
      %v5092 = vsel %vm1033, %v5082, %v5084
      %v5093 = vsel %vm1033, %v5084, %v5086
      %v5094 = vsel %vm1033, %v5086, %v5088
      %v5096 = vsel %vm271, %v5060, 0
      %v5098 = vsel %vm275, %v5089, 0
      %v5100 = vsel %vm275, %v5090, 0
      %v5102 = vsel %vm275, %v5091, 0
      %v5104 = vsel %vm275, %v5092, 0
      %v5106 = vsel %vm275, %v5093, 0
      %v5108 = vsel %vm275, %v5094, 0
      %v5110 = vsel %vm275, %v5088, 0
      %5112 = vmatpush.msra.mxu0 0.0
      %5113 = vmatpush.msra.mxu0 0.0
      %5114 = vmatpush.msra.mxu0 0.0
      %5115 = vmatpush.msra.mxu0 0.0
      %5116 = vmatpush.msra.mxu0 0.0
      %5117 = vmatpush.msra.mxu0 0.0
      %5118 = vmatpush.msra.mxu0 0.0
      %5119 = vmatpush.msra.mxu0 0.0
      %5120 = vmatpush.msra.mxu0 0.0
      %5121 = vmatpush.msra.mxu0 0.0
      %5122 = vmatpush.msra.mxu0 0.0
      %5123 = vmatpush.msra.mxu0 0.0
      %5124 = vmatpush.msra.mxu0 0.0
      %5125 = vmatpush.msra.mxu0 0.0
      %5126 = vmatpush.msra.mxu0 0.0
      %5127 = vmatpush.msra.mxu0 %v5098
      %5128 = vmatmul.f32.gmra.mxu0 %v5096
      %v5129 = vpop.f32.mrf.mxu0
      %v5130 = vadd.f32 0.0, %v5129
      %5131 = vdwg.mxu0
      %5132 = vmatpush.msra.mxu0 0.0
      %5133 = vmatpush.msra.mxu0 0.0
      %5134 = vmatpush.msra.mxu0 0.0
      %5135 = vmatpush.msra.mxu0 0.0
      %5136 = vmatpush.msra.mxu0 0.0
      %5137 = vmatpush.msra.mxu0 0.0
      %5138 = vmatpush.msra.mxu0 0.0
      %5139 = vmatpush.msra.mxu0 0.0
      %5140 = vmatpush.msra.mxu0 0.0
      %5141 = vmatpush.msra.mxu0 0.0
      %5142 = vmatpush.msra.mxu0 0.0
      %5143 = vmatpush.msra.mxu0 0.0
      %5144 = vmatpush.msra.mxu0 0.0
      %5145 = vmatpush.msra.mxu0 0.0
      %5146 = vmatpush.msra.mxu0 0.0
      %5147 = vmatpush.msra.mxu0 %v5100
      %5148 = vmatmul.f32.gmra.mxu0 %v5096
      %v5149 = vpop.f32.mrf.mxu0
      %v5150 = vadd.f32 0.0, %v5149
      %5151 = vdwg.mxu0
      %5152 = vmatpush.msra.mxu0 0.0
      %5153 = vmatpush.msra.mxu0 0.0
      %5154 = vmatpush.msra.mxu0 0.0
      %5155 = vmatpush.msra.mxu0 0.0
      %5156 = vmatpush.msra.mxu0 0.0
      %5157 = vmatpush.msra.mxu0 0.0
      %5158 = vmatpush.msra.mxu0 0.0
      %5159 = vmatpush.msra.mxu0 0.0
      %5160 = vmatpush.msra.mxu0 0.0
      %5161 = vmatpush.msra.mxu0 0.0
      %5162 = vmatpush.msra.mxu0 0.0
      %5163 = vmatpush.msra.mxu0 0.0
      %5164 = vmatpush.msra.mxu0 0.0
      %5165 = vmatpush.msra.mxu0 0.0
      %5166 = vmatpush.msra.mxu0 0.0
      %5167 = vmatpush.msra.mxu0 %v5102
      %5168 = vmatmul.f32.gmra.mxu0 %v5096
      %v5169 = vpop.f32.mrf.mxu0
      %v5170 = vadd.f32 0.0, %v5169
      %5171 = vdwg.mxu0
      %5172 = vmatpush.msra.mxu0 0.0
      %5173 = vmatpush.msra.mxu0 0.0
      %5174 = vmatpush.msra.mxu0 0.0
      %5175 = vmatpush.msra.mxu0 0.0
      %5176 = vmatpush.msra.mxu0 0.0
      %5177 = vmatpush.msra.mxu0 0.0
      %5178 = vmatpush.msra.mxu0 0.0
      %5179 = vmatpush.msra.mxu0 0.0
      %5180 = vmatpush.msra.mxu0 0.0
      %5181 = vmatpush.msra.mxu0 0.0
      %5182 = vmatpush.msra.mxu0 0.0
      %5183 = vmatpush.msra.mxu0 0.0
      %5184 = vmatpush.msra.mxu0 0.0
      %5185 = vmatpush.msra.mxu0 0.0
      %5186 = vmatpush.msra.mxu0 0.0
      %5187 = vmatpush.msra.mxu0 %v5104
      %5188 = vmatmul.f32.gmra.mxu0 %v5096
      %v5189 = vpop.f32.mrf.mxu0
      %v5190 = vadd.f32 0.0, %v5189
      %5191 = vdwg.mxu0
      %5192 = vmatpush.msra.mxu0 0.0
      %5193 = vmatpush.msra.mxu0 0.0
      %5194 = vmatpush.msra.mxu0 0.0
      %5195 = vmatpush.msra.mxu0 0.0
      %5196 = vmatpush.msra.mxu0 0.0
      %5197 = vmatpush.msra.mxu0 0.0
      %5198 = vmatpush.msra.mxu0 0.0
      %5199 = vmatpush.msra.mxu0 0.0
      %5200 = vmatpush.msra.mxu0 0.0
      %5201 = vmatpush.msra.mxu0 0.0
      %5202 = vmatpush.msra.mxu0 0.0
      %5203 = vmatpush.msra.mxu0 0.0
      %5204 = vmatpush.msra.mxu0 0.0
      %5205 = vmatpush.msra.mxu0 0.0
      %5206 = vmatpush.msra.mxu0 0.0
      %5207 = vmatpush.msra.mxu0 %v5106
      %5208 = vmatmul.f32.gmra.mxu0 %v5096
      %v5209 = vpop.f32.mrf.mxu0
      %v5210 = vadd.f32 0.0, %v5209
      %5211 = vdwg.mxu0
      %5212 = vmatpush.msra.mxu0 0.0
      %5213 = vmatpush.msra.mxu0 0.0
      %5214 = vmatpush.msra.mxu0 0.0
      %5215 = vmatpush.msra.mxu0 0.0
      %5216 = vmatpush.msra.mxu0 0.0
      %5217 = vmatpush.msra.mxu0 0.0
      %5218 = vmatpush.msra.mxu0 0.0
      %5219 = vmatpush.msra.mxu0 0.0
      %5220 = vmatpush.msra.mxu0 0.0
      %5221 = vmatpush.msra.mxu0 0.0
      %5222 = vmatpush.msra.mxu0 0.0
      %5223 = vmatpush.msra.mxu0 0.0
      %5224 = vmatpush.msra.mxu0 0.0
      %5225 = vmatpush.msra.mxu0 0.0
      %5226 = vmatpush.msra.mxu0 0.0
      %5227 = vmatpush.msra.mxu0 %v5108
      %5228 = vmatmul.f32.gmra.mxu0 %v5096
      %v5229 = vpop.f32.mrf.mxu0
      %v5230 = vadd.f32 0.0, %v5229
      %5231 = vdwg.mxu0
      %5232 = vmatpush.msra.mxu0 0.0
      %5233 = vmatpush.msra.mxu0 0.0
      %5234 = vmatpush.msra.mxu0 0.0
      %5235 = vmatpush.msra.mxu0 0.0
      %5236 = vmatpush.msra.mxu0 0.0
      %5237 = vmatpush.msra.mxu0 0.0
      %5238 = vmatpush.msra.mxu0 0.0
      %5239 = vmatpush.msra.mxu0 0.0
      %5240 = vmatpush.msra.mxu0 0.0
      %5241 = vmatpush.msra.mxu0 0.0
      %5242 = vmatpush.msra.mxu0 0.0
      %5243 = vmatpush.msra.mxu0 0.0
      %5244 = vmatpush.msra.mxu0 0.0
      %5245 = vmatpush.msra.mxu0 0.0
      %5246 = vmatpush.msra.mxu0 0.0
      %5247 = vmatpush.msra.mxu0 %v5110
      %5248 = vmatmul.f32.gmra.mxu0 %v5096
      %v5249 = vpop.f32.mrf.mxu0
      %v5250 = vadd.f32 0.0, %v5249
      %5251 = vdwg.mxu0
      %v5252 = vadd.f32 %v5052, %v5130
      %v5253 = vadd.f32 %v5053, %v5150
      %v5254 = vadd.f32 %v5054, %v5170
      %v5255 = vadd.f32 %v5055, %v5190
      %v5256 = vadd.f32 %v5056, %v5210
      %v5257 = vadd.f32 %v5057, %v5230
      %v5258 = vadd.f32 %v5058, %v5250
      %v5259 = vld [vmem:[%s2] sm:$0x3f]
      %5261 = vset.pattern.permute.xlu0 0
      %5262 = vperm.xlu0 %5261, %v5259
      %v5263 = vpop.permute.xlu0 %5262
      %v5265 = vadd.f32 %v5252, %v5263
      %v5266 = vadd.f32 %v5253, %v5263
      %v5267 = vadd.f32 %v5254, %v5263
      %v5268 = vadd.f32 %v5255, %v5263
      %v5269 = vadd.f32 %v5256, %v5263
      %v5270 = vadd.f32 %v5257, %v5263
      %v5271 = vadd.f32 %v5258, %v5263
      %v5272 = vmax.f32 %v5265, 0.0
      %v5273 = vmax.f32 %v5266, 0.0
      %v5274 = vmax.f32 %v5267, 0.0
      %v5275 = vmax.f32 %v5268, 0.0
      %v5276 = vmax.f32 %v5269, 0.0
      %v5277 = vmax.f32 %v5270, 0.0
      %v5278 = vmax.f32 %v5271, 0.0
      %5286 = vrot.lane.b32.xlu0 %v5272, 127
      %v5287 = vpop.permute.xlu0 %5286
      %5288 = vrot.lane.b32.xlu0 %v5273, 127
      %v5289 = vpop.permute.xlu0 %5288
      %5290 = vrot.lane.b32.xlu0 %v5274, 127
      %v5291 = vpop.permute.xlu0 %5290
      %5292 = vrot.lane.b32.xlu0 %v5275, 127
      %v5293 = vpop.permute.xlu0 %5292
      %5294 = vrot.lane.b32.xlu0 %v5276, 127
      %v5295 = vpop.permute.xlu0 %5294
      %5296 = vrot.lane.b32.xlu0 %v5277, 127
      %v5297 = vpop.permute.xlu0 %5296
      %5298 = vrot.lane.b32.xlu0 %v5278, 127
      %v5299 = vpop.permute.xlu0 %5298
      %v5300 = vsel %vm264, %v5287, %v5289
      %v5301 = vsel %vm264, %v5289, %v5291
      %v5302 = vsel %vm264, %v5291, %v5293
      %v5303 = vsel %vm264, %v5293, %v5295
      %v5304 = vsel %vm264, %v5295, %v5297
      %v5305 = vsel %vm264, %v5297, %v5299
      %v5313 = vmax.f32 %v5272, %v5300
      %v5314 = vmax.f32 %v5273, %v5301
      %v5315 = vmax.f32 %v5274, %v5302
      %v5316 = vmax.f32 %v5275, %v5303
      %v5317 = vmax.f32 %v5276, %v5304
      %v5318 = vmax.f32 %v5277, %v5305
      %v5319 = vmax.f32 %v5278, %v5299
      %5327 = vrot.lane.b32.xlu0 %v5313, 96
      %v5328 = vpop.permute.xlu0 %5327
      %5329 = vrot.lane.b32.xlu0 %v5314, 96
      %v5330 = vpop.permute.xlu0 %5329
      %5331 = vrot.lane.b32.xlu0 %v5315, 96
      %v5332 = vpop.permute.xlu0 %5331
      %5333 = vrot.lane.b32.xlu0 %v5316, 96
      %v5334 = vpop.permute.xlu0 %5333
      %5335 = vrot.lane.b32.xlu0 %v5317, 96
      %v5336 = vpop.permute.xlu0 %5335
      %5337 = vrot.lane.b32.xlu0 %v5318, 96
      %v5338 = vpop.permute.xlu0 %5337
      %5339 = vrot.lane.b32.xlu0 %v5319, 96
      %v5340 = vpop.permute.xlu0 %5339
      %v5341 = vsel %vm1237, %v5328, %v5330
      %v5342 = vsel %vm1237, %v5330, %v5332
      %v5343 = vsel %vm1237, %v5332, %v5334
      %v5344 = vsel %vm1237, %v5334, %v5336
      %v5345 = vsel %vm1237, %v5336, %v5338
      %v5346 = vsel %vm1237, %v5338, %v5340
      %v5354 = vmax.f32 %v5313, %v5341
      %v5355 = vmax.f32 %v5314, %v5342
      %v5356 = vmax.f32 %v5315, %v5343
      %v5357 = vmax.f32 %v5316, %v5344
      %v5358 = vmax.f32 %v5317, %v5345
      %v5359 = vmax.f32 %v5318, %v5346
      %v5360 = vmax.f32 %v5319, %v5340
      %v5361 = vld [vmem:[%s3] sm:$0xff]
      %v5362 = vld [vmem:[%s3 + $0x8] sm:$0xff]
      %s5363 = scalar_lea.vmem %s3, 16
      %v5364 = vld [vmem:[%s5363] sm:$0xff]
      %v5365 = vld [vmem:[%s5363 + $0x8] sm:$0xff]
      %5371 = vrot.lane.b32.xlu0 %v5354, 126
      %v5372 = vpop.permute.xlu0 %5371
      %5373 = vrot.lane.b32.xlu0 %v5355, 126
      %v5374 = vpop.permute.xlu0 %5373
      %5375 = vrot.lane.b32.xlu0 %v5356, 126
      %v5376 = vpop.permute.xlu0 %5375
      %5377 = vrot.lane.b32.xlu0 %v5357, 126
      %v5378 = vpop.permute.xlu0 %5377
      %5379 = vrot.lane.b32.xlu0 %v5358, 126
      %v5380 = vpop.permute.xlu0 %5379
      %v5381 = vsel %vm631, %v5372, %v5374
      %v5382 = vsel %vm631, %v5374, %v5376
      %v5383 = vsel %vm631, %v5376, %v5378
      %v5384 = vsel %vm631, %v5378, %v5380
      %vm5385 = vcmask 48128
      %v5387 = vsel %vm5385, %v5364, 0
      %v5390 = vsel %vm5385, %v5365, 0
      %vm5392 = vcmask 1045504
      %v5393 = vsel %vm5392, %v5381, 0
      %v5395 = vsel %vm5392, %v5382, 0
      %v5397 = vsel %vm5392, %v5383, 0
      %v5399 = vsel %vm5392, %v5384, 0
      %v5401 = vsel %vm5392, %v5380, 0
      %5403 = vmatpush.msra.mxu0 0.0
      %5404 = vmatpush.msra.mxu0 0.0
      %5405 = vmatpush.msra.mxu0 0.0
      %5406 = vmatpush.msra.mxu0 0.0
      %5407 = vmatpush.msra.mxu0 0.0
      %5408 = vmatpush.msra.mxu0 0.0
      %5409 = vmatpush.msra.mxu0 0.0
      %5410 = vmatpush.msra.mxu0 0.0
      %5411 = vmatpush.msra.mxu0 0.0
      %5412 = vmatpush.msra.mxu0 0.0
      %5413 = vmatpush.msra.mxu0 0.0
      %5414 = vmatpush.msra.mxu0 0.0
      %5415 = vmatpush.msra.mxu0 0.0
      %5416 = vmatpush.msra.mxu0 0.0
      %5417 = vmatpush.msra.mxu0 0.0
      %5418 = vmatpush.msra.mxu0 %v5393
      %5419 = vmatmul.f32.gmra.mxu0 %v5387
      %v5420 = vpop.f32.mrf.mxu0
      %v5421 = vadd.f32 0.0, %v5420
      %5422 = vmatmul.f32.gmra.mxu0 %v5390
      %v5423 = vpop.f32.mrf.mxu0
      %v5424 = vadd.f32 0.0, %v5423
      %5425 = vdwg.mxu0
      %5426 = vmatpush.msra.mxu0 0.0
      %5427 = vmatpush.msra.mxu0 0.0
      %5428 = vmatpush.msra.mxu0 0.0
      %5429 = vmatpush.msra.mxu0 0.0
      %5430 = vmatpush.msra.mxu0 0.0
      %5431 = vmatpush.msra.mxu0 0.0
      %5432 = vmatpush.msra.mxu0 0.0
      %5433 = vmatpush.msra.mxu0 0.0
      %5434 = vmatpush.msra.mxu0 0.0
      %5435 = vmatpush.msra.mxu0 0.0
      %5436 = vmatpush.msra.mxu0 0.0
      %5437 = vmatpush.msra.mxu0 0.0
      %5438 = vmatpush.msra.mxu0 0.0
      %5439 = vmatpush.msra.mxu0 0.0
      %5440 = vmatpush.msra.mxu0 0.0
      %5441 = vmatpush.msra.mxu0 %v5395
      %5442 = vmatmul.f32.gmra.mxu0 %v5387
      %v5443 = vpop.f32.mrf.mxu0
      %v5444 = vadd.f32 0.0, %v5443
      %5445 = vmatmul.f32.gmra.mxu0 %v5390
      %v5446 = vpop.f32.mrf.mxu0
      %v5447 = vadd.f32 0.0, %v5446
      %5448 = vdwg.mxu0
      %5449 = vmatpush.msra.mxu0 0.0
      %5450 = vmatpush.msra.mxu0 0.0
      %5451 = vmatpush.msra.mxu0 0.0
      %5452 = vmatpush.msra.mxu0 0.0
      %5453 = vmatpush.msra.mxu0 0.0
      %5454 = vmatpush.msra.mxu0 0.0
      %5455 = vmatpush.msra.mxu0 0.0
      %5456 = vmatpush.msra.mxu0 0.0
      %5457 = vmatpush.msra.mxu0 0.0
      %5458 = vmatpush.msra.mxu0 0.0
      %5459 = vmatpush.msra.mxu0 0.0
      %5460 = vmatpush.msra.mxu0 0.0
      %5461 = vmatpush.msra.mxu0 0.0
      %5462 = vmatpush.msra.mxu0 0.0
      %5463 = vmatpush.msra.mxu0 0.0
      %5464 = vmatpush.msra.mxu0 %v5397
      %5465 = vmatmul.f32.gmra.mxu0 %v5387
      %v5466 = vpop.f32.mrf.mxu0
      %v5467 = vadd.f32 0.0, %v5466
      %5468 = vmatmul.f32.gmra.mxu0 %v5390
      %v5469 = vpop.f32.mrf.mxu0
      %v5470 = vadd.f32 0.0, %v5469
      %5471 = vdwg.mxu0
      %5472 = vmatpush.msra.mxu0 0.0
      %5473 = vmatpush.msra.mxu0 0.0
      %5474 = vmatpush.msra.mxu0 0.0
      %5475 = vmatpush.msra.mxu0 0.0
      %5476 = vmatpush.msra.mxu0 0.0
      %5477 = vmatpush.msra.mxu0 0.0
      %5478 = vmatpush.msra.mxu0 0.0
      %5479 = vmatpush.msra.mxu0 0.0
      %5480 = vmatpush.msra.mxu0 0.0
      %5481 = vmatpush.msra.mxu0 0.0
      %5482 = vmatpush.msra.mxu0 0.0
      %5483 = vmatpush.msra.mxu0 0.0
      %5484 = vmatpush.msra.mxu0 0.0
      %5485 = vmatpush.msra.mxu0 0.0
      %5486 = vmatpush.msra.mxu0 0.0
      %5487 = vmatpush.msra.mxu0 %v5399
      %5488 = vmatmul.f32.gmra.mxu0 %v5387
      %v5489 = vpop.f32.mrf.mxu0
      %v5490 = vadd.f32 0.0, %v5489
      %5491 = vmatmul.f32.gmra.mxu0 %v5390
      %v5492 = vpop.f32.mrf.mxu0
      %v5493 = vadd.f32 0.0, %v5492
      %5494 = vdwg.mxu0
      %5495 = vmatpush.msra.mxu0 0.0
      %5496 = vmatpush.msra.mxu0 0.0
      %5497 = vmatpush.msra.mxu0 0.0
      %5498 = vmatpush.msra.mxu0 0.0
      %5499 = vmatpush.msra.mxu0 0.0
      %5500 = vmatpush.msra.mxu0 0.0
      %5501 = vmatpush.msra.mxu0 0.0
      %5502 = vmatpush.msra.mxu0 0.0
      %5503 = vmatpush.msra.mxu0 0.0
      %5504 = vmatpush.msra.mxu0 0.0
      %5505 = vmatpush.msra.mxu0 0.0
      %5506 = vmatpush.msra.mxu0 0.0
      %5507 = vmatpush.msra.mxu0 0.0
      %5508 = vmatpush.msra.mxu0 0.0
      %5509 = vmatpush.msra.mxu0 0.0
      %5510 = vmatpush.msra.mxu0 %v5401
      %5511 = vmatmul.f32.gmra.mxu0 %v5387
      %v5512 = vpop.f32.mrf.mxu0
      %v5513 = vadd.f32 0.0, %v5512
      %5514 = vmatmul.f32.gmra.mxu0 %v5390
      %v5515 = vpop.f32.mrf.mxu0
      %v5516 = vadd.f32 0.0, %v5515
      %5517 = vdwg.mxu0
      %v5519 = vsel %vm5385, %v5361, 0
      %v5522 = vsel %vm5385, %v5362, 0
      %v5524 = vsel %vm5392, %v5354, 0
      %v5526 = vsel %vm5392, %v5355, 0
      %v5528 = vsel %vm5392, %v5356, 0
      %v5530 = vsel %vm5392, %v5357, 0
      %v5532 = vsel %vm5392, %v5358, 0
      %5534 = vmatpush.msra.mxu0 0.0
      %5535 = vmatpush.msra.mxu0 0.0
      %5536 = vmatpush.msra.mxu0 0.0
      %5537 = vmatpush.msra.mxu0 0.0
      %5538 = vmatpush.msra.mxu0 0.0
      %5539 = vmatpush.msra.mxu0 0.0
      %5540 = vmatpush.msra.mxu0 0.0
      %5541 = vmatpush.msra.mxu0 0.0
      %5542 = vmatpush.msra.mxu0 0.0
      %5543 = vmatpush.msra.mxu0 0.0
      %5544 = vmatpush.msra.mxu0 0.0
      %5545 = vmatpush.msra.mxu0 0.0
      %5546 = vmatpush.msra.mxu0 0.0
      %5547 = vmatpush.msra.mxu0 0.0
      %5548 = vmatpush.msra.mxu0 0.0
      %5549 = vmatpush.msra.mxu0 %v5524
      %5550 = vmatmul.f32.gmra.mxu0 %v5519
      %v5551 = vpop.f32.mrf.mxu0
      %v5552 = vadd.f32 %v5421, %v5551
      %5553 = vmatmul.f32.gmra.mxu0 %v5522
      %v5554 = vpop.f32.mrf.mxu0
      %v5555 = vadd.f32 %v5424, %v5554
      %5556 = vdwg.mxu0
      %5557 = vmatpush.msra.mxu0 0.0
      %5558 = vmatpush.msra.mxu0 0.0
      %5559 = vmatpush.msra.mxu0 0.0
      %5560 = vmatpush.msra.mxu0 0.0
      %5561 = vmatpush.msra.mxu0 0.0
      %5562 = vmatpush.msra.mxu0 0.0
      %5563 = vmatpush.msra.mxu0 0.0
      %5564 = vmatpush.msra.mxu0 0.0
      %5565 = vmatpush.msra.mxu0 0.0
      %5566 = vmatpush.msra.mxu0 0.0
      %5567 = vmatpush.msra.mxu0 0.0
      %5568 = vmatpush.msra.mxu0 0.0
      %5569 = vmatpush.msra.mxu0 0.0
      %5570 = vmatpush.msra.mxu0 0.0
      %5571 = vmatpush.msra.mxu0 0.0
      %5572 = vmatpush.msra.mxu0 %v5526
      %5573 = vmatmul.f32.gmra.mxu0 %v5519
      %v5574 = vpop.f32.mrf.mxu0
      %v5575 = vadd.f32 %v5444, %v5574
      %5576 = vmatmul.f32.gmra.mxu0 %v5522
      %v5577 = vpop.f32.mrf.mxu0
      %v5578 = vadd.f32 %v5447, %v5577
      %5579 = vdwg.mxu0
      %5580 = vmatpush.msra.mxu0 0.0
      %5581 = vmatpush.msra.mxu0 0.0
      %5582 = vmatpush.msra.mxu0 0.0
      %5583 = vmatpush.msra.mxu0 0.0
      %5584 = vmatpush.msra.mxu0 0.0
      %5585 = vmatpush.msra.mxu0 0.0
      %5586 = vmatpush.msra.mxu0 0.0
      %5587 = vmatpush.msra.mxu0 0.0
      %5588 = vmatpush.msra.mxu0 0.0
      %5589 = vmatpush.msra.mxu0 0.0
      %5590 = vmatpush.msra.mxu0 0.0
      %5591 = vmatpush.msra.mxu0 0.0
      %5592 = vmatpush.msra.mxu0 0.0
      %5593 = vmatpush.msra.mxu0 0.0
      %5594 = vmatpush.msra.mxu0 0.0
      %5595 = vmatpush.msra.mxu0 %v5528
      %5596 = vmatmul.f32.gmra.mxu0 %v5519
      %v5597 = vpop.f32.mrf.mxu0
      %v5598 = vadd.f32 %v5467, %v5597
      %5599 = vmatmul.f32.gmra.mxu0 %v5522
      %v5600 = vpop.f32.mrf.mxu0
      %v5601 = vadd.f32 %v5470, %v5600
      %5602 = vdwg.mxu0
      %5603 = vmatpush.msra.mxu0 0.0
      %5604 = vmatpush.msra.mxu0 0.0
      %5605 = vmatpush.msra.mxu0 0.0
      %5606 = vmatpush.msra.mxu0 0.0
      %5607 = vmatpush.msra.mxu0 0.0
      %5608 = vmatpush.msra.mxu0 0.0
      %5609 = vmatpush.msra.mxu0 0.0
      %5610 = vmatpush.msra.mxu0 0.0
      %5611 = vmatpush.msra.mxu0 0.0
      %5612 = vmatpush.msra.mxu0 0.0
      %5613 = vmatpush.msra.mxu0 0.0
      %5614 = vmatpush.msra.mxu0 0.0
      %5615 = vmatpush.msra.mxu0 0.0
      %5616 = vmatpush.msra.mxu0 0.0
      %5617 = vmatpush.msra.mxu0 0.0
      %5618 = vmatpush.msra.mxu0 %v5530
      %5619 = vmatmul.f32.gmra.mxu0 %v5519
      %v5620 = vpop.f32.mrf.mxu0
      %v5621 = vadd.f32 %v5490, %v5620
      %5622 = vmatmul.f32.gmra.mxu0 %v5522
      %v5623 = vpop.f32.mrf.mxu0
      %v5624 = vadd.f32 %v5493, %v5623
      %5625 = vdwg.mxu0
      %5626 = vmatpush.msra.mxu0 0.0
      %5627 = vmatpush.msra.mxu0 0.0
      %5628 = vmatpush.msra.mxu0 0.0
      %5629 = vmatpush.msra.mxu0 0.0
      %5630 = vmatpush.msra.mxu0 0.0
      %5631 = vmatpush.msra.mxu0 0.0
      %5632 = vmatpush.msra.mxu0 0.0
      %5633 = vmatpush.msra.mxu0 0.0
      %5634 = vmatpush.msra.mxu0 0.0
      %5635 = vmatpush.msra.mxu0 0.0
      %5636 = vmatpush.msra.mxu0 0.0
      %5637 = vmatpush.msra.mxu0 0.0
      %5638 = vmatpush.msra.mxu0 0.0
      %5639 = vmatpush.msra.mxu0 0.0
      %5640 = vmatpush.msra.mxu0 0.0
      %5641 = vmatpush.msra.mxu0 %v5532
      %5642 = vmatmul.f32.gmra.mxu0 %v5519
      %v5643 = vpop.f32.mrf.mxu0
      %v5644 = vadd.f32 %v5513, %v5643
      %5645 = vmatmul.f32.gmra.mxu0 %v5522
      %v5646 = vpop.f32.mrf.mxu0
      %v5647 = vadd.f32 %v5516, %v5646
      %5648 = vdwg.mxu0
      %s5649 = scalar_lea.vmem %s3, 32
      %v5650 = vld [vmem:[%s5649] sm:$0xff]
      %v5651 = vld [vmem:[%s5649 + $0x8] sm:$0xff]
      %5652 = vrot.lane.b32.xlu0 %v5354, 124
      %v5653 = vpop.permute.xlu0 %5652
      %5654 = vrot.lane.b32.xlu0 %v5355, 124
      %v5655 = vpop.permute.xlu0 %5654
      %5656 = vrot.lane.b32.xlu0 %v5356, 124
      %v5657 = vpop.permute.xlu0 %5656
      %5658 = vrot.lane.b32.xlu0 %v5357, 124
      %v5659 = vpop.permute.xlu0 %5658
      %5660 = vrot.lane.b32.xlu0 %v5358, 124
      %v5661 = vpop.permute.xlu0 %5660
      %v5662 = vsel %vm1033, %v5653, %v5655
      %v5663 = vsel %vm1033, %v5655, %v5657
      %v5664 = vsel %vm1033, %v5657, %v5659
      %v5665 = vsel %vm1033, %v5659, %v5661
      %v5667 = vsel %vm5385, %v5650, 0
      %v5670 = vsel %vm5385, %v5651, 0
      %v5672 = vsel %vm5392, %v5662, 0
      %v5674 = vsel %vm5392, %v5663, 0
      %v5676 = vsel %vm5392, %v5664, 0
      %v5678 = vsel %vm5392, %v5665, 0
      %v5680 = vsel %vm5392, %v5661, 0
      %5682 = vmatpush.msra.mxu0 0.0
      %5683 = vmatpush.msra.mxu0 0.0
      %5684 = vmatpush.msra.mxu0 0.0
      %5685 = vmatpush.msra.mxu0 0.0
      %5686 = vmatpush.msra.mxu0 0.0
      %5687 = vmatpush.msra.mxu0 0.0
      %5688 = vmatpush.msra.mxu0 0.0
      %5689 = vmatpush.msra.mxu0 0.0
      %5690 = vmatpush.msra.mxu0 0.0
      %5691 = vmatpush.msra.mxu0 0.0
      %5692 = vmatpush.msra.mxu0 0.0
      %5693 = vmatpush.msra.mxu0 0.0
      %5694 = vmatpush.msra.mxu0 0.0
      %5695 = vmatpush.msra.mxu0 0.0
      %5696 = vmatpush.msra.mxu0 0.0
      %5697 = vmatpush.msra.mxu0 %v5672
      %5698 = vmatmul.f32.gmra.mxu0 %v5667
      %v5699 = vpop.f32.mrf.mxu0
      %v5700 = vadd.f32 0.0, %v5699
      %5701 = vmatmul.f32.gmra.mxu0 %v5670
      %v5702 = vpop.f32.mrf.mxu0
      %v5703 = vadd.f32 0.0, %v5702
      %5704 = vdwg.mxu0
      %5705 = vmatpush.msra.mxu0 0.0
      %5706 = vmatpush.msra.mxu0 0.0
      %5707 = vmatpush.msra.mxu0 0.0
      %5708 = vmatpush.msra.mxu0 0.0
      %5709 = vmatpush.msra.mxu0 0.0
      %5710 = vmatpush.msra.mxu0 0.0
      %5711 = vmatpush.msra.mxu0 0.0
      %5712 = vmatpush.msra.mxu0 0.0
      %5713 = vmatpush.msra.mxu0 0.0
      %5714 = vmatpush.msra.mxu0 0.0
      %5715 = vmatpush.msra.mxu0 0.0
      %5716 = vmatpush.msra.mxu0 0.0
      %5717 = vmatpush.msra.mxu0 0.0
      %5718 = vmatpush.msra.mxu0 0.0
      %5719 = vmatpush.msra.mxu0 0.0
      %5720 = vmatpush.msra.mxu0 %v5674
      %5721 = vmatmul.f32.gmra.mxu0 %v5667
      %v5722 = vpop.f32.mrf.mxu0
      %v5723 = vadd.f32 0.0, %v5722
      %5724 = vmatmul.f32.gmra.mxu0 %v5670
      %v5725 = vpop.f32.mrf.mxu0
      %v5726 = vadd.f32 0.0, %v5725
      %5727 = vdwg.mxu0
      %5728 = vmatpush.msra.mxu0 0.0
      %5729 = vmatpush.msra.mxu0 0.0
      %5730 = vmatpush.msra.mxu0 0.0
      %5731 = vmatpush.msra.mxu0 0.0
      %5732 = vmatpush.msra.mxu0 0.0
      %5733 = vmatpush.msra.mxu0 0.0
      %5734 = vmatpush.msra.mxu0 0.0
      %5735 = vmatpush.msra.mxu0 0.0
      %5736 = vmatpush.msra.mxu0 0.0
      %5737 = vmatpush.msra.mxu0 0.0
      %5738 = vmatpush.msra.mxu0 0.0
      %5739 = vmatpush.msra.mxu0 0.0
      %5740 = vmatpush.msra.mxu0 0.0
      %5741 = vmatpush.msra.mxu0 0.0
      %5742 = vmatpush.msra.mxu0 0.0
      %5743 = vmatpush.msra.mxu0 %v5676
      %5744 = vmatmul.f32.gmra.mxu0 %v5667
      %v5745 = vpop.f32.mrf.mxu0
      %v5746 = vadd.f32 0.0, %v5745
      %5747 = vmatmul.f32.gmra.mxu0 %v5670
      %v5748 = vpop.f32.mrf.mxu0
      %v5749 = vadd.f32 0.0, %v5748
      %5750 = vdwg.mxu0
      %5751 = vmatpush.msra.mxu0 0.0
      %5752 = vmatpush.msra.mxu0 0.0
      %5753 = vmatpush.msra.mxu0 0.0
      %5754 = vmatpush.msra.mxu0 0.0
      %5755 = vmatpush.msra.mxu0 0.0
      %5756 = vmatpush.msra.mxu0 0.0
      %5757 = vmatpush.msra.mxu0 0.0
      %5758 = vmatpush.msra.mxu0 0.0
      %5759 = vmatpush.msra.mxu0 0.0
      %5760 = vmatpush.msra.mxu0 0.0
      %5761 = vmatpush.msra.mxu0 0.0
      %5762 = vmatpush.msra.mxu0 0.0
      %5763 = vmatpush.msra.mxu0 0.0
      %5764 = vmatpush.msra.mxu0 0.0
      %5765 = vmatpush.msra.mxu0 0.0
      %5766 = vmatpush.msra.mxu0 %v5678
      %5767 = vmatmul.f32.gmra.mxu0 %v5667
      %v5768 = vpop.f32.mrf.mxu0
      %v5769 = vadd.f32 0.0, %v5768
      %5770 = vmatmul.f32.gmra.mxu0 %v5670
      %v5771 = vpop.f32.mrf.mxu0
      %v5772 = vadd.f32 0.0, %v5771
      %5773 = vdwg.mxu0
      %5774 = vmatpush.msra.mxu0 0.0
      %5775 = vmatpush.msra.mxu0 0.0
      %5776 = vmatpush.msra.mxu0 0.0
      %5777 = vmatpush.msra.mxu0 0.0
      %5778 = vmatpush.msra.mxu0 0.0
      %5779 = vmatpush.msra.mxu0 0.0
      %5780 = vmatpush.msra.mxu0 0.0
      %5781 = vmatpush.msra.mxu0 0.0
      %5782 = vmatpush.msra.mxu0 0.0
      %5783 = vmatpush.msra.mxu0 0.0
      %5784 = vmatpush.msra.mxu0 0.0
      %5785 = vmatpush.msra.mxu0 0.0
      %5786 = vmatpush.msra.mxu0 0.0
      %5787 = vmatpush.msra.mxu0 0.0
      %5788 = vmatpush.msra.mxu0 0.0
      %5789 = vmatpush.msra.mxu0 %v5680
      %5790 = vmatmul.f32.gmra.mxu0 %v5667
      %v5791 = vpop.f32.mrf.mxu0
      %v5792 = vadd.f32 0.0, %v5791
      %5793 = vmatmul.f32.gmra.mxu0 %v5670
      %v5794 = vpop.f32.mrf.mxu0
      %v5795 = vadd.f32 0.0, %v5794
      %5796 = vdwg.mxu0
      %v5797 = vadd.f32 %v5552, %v5700
      %v5798 = vadd.f32 %v5575, %v5723
      %v5799 = vadd.f32 %v5598, %v5746
      %v5800 = vadd.f32 %v5621, %v5769
      %v5801 = vadd.f32 %v5644, %v5792
      %v5802 = vadd.f32 %v5555, %v5703
      %v5803 = vadd.f32 %v5578, %v5726
      %v5804 = vadd.f32 %v5601, %v5749
      %v5805 = vadd.f32 %v5624, %v5772
      %v5806 = vadd.f32 %v5647, %v5795
      %s5807 = scalar_lea.vmem %s3, 48
      %v5808 = vld [vmem:[%s5807] sm:$0xff]
      %v5809 = vld [vmem:[%s5807 + $0x8] sm:$0xff]
      %5810 = vrot.lane.b32.xlu0 %v5354, 122
      %v5811 = vpop.permute.xlu0 %5810
      %5812 = vrot.lane.b32.xlu0 %v5355, 122
      %v5813 = vpop.permute.xlu0 %5812
      %5814 = vrot.lane.b32.xlu0 %v5356, 122
      %v5815 = vpop.permute.xlu0 %5814
      %5816 = vrot.lane.b32.xlu0 %v5357, 122
      %v5817 = vpop.permute.xlu0 %5816
      %5818 = vrot.lane.b32.xlu0 %v5358, 122
      %v5819 = vpop.permute.xlu0 %5818
      %vm5820 = vcmask 998400
      %v5821 = vsel %vm5820, %v5811, %v5813
      %v5822 = vsel %vm5820, %v5813, %v5815
      %v5823 = vsel %vm5820, %v5815, %v5817
      %v5824 = vsel %vm5820, %v5817, %v5819
      %v5826 = vsel %vm5385, %v5808, 0
      %v5829 = vsel %vm5385, %v5809, 0
      %v5831 = vsel %vm5392, %v5821, 0
      %v5833 = vsel %vm5392, %v5822, 0
      %v5835 = vsel %vm5392, %v5823, 0
      %v5837 = vsel %vm5392, %v5824, 0
      %v5839 = vsel %vm5392, %v5819, 0
      %5841 = vmatpush.msra.mxu0 0.0
      %5842 = vmatpush.msra.mxu0 0.0
      %5843 = vmatpush.msra.mxu0 0.0
      %5844 = vmatpush.msra.mxu0 0.0
      %5845 = vmatpush.msra.mxu0 0.0
      %5846 = vmatpush.msra.mxu0 0.0
      %5847 = vmatpush.msra.mxu0 0.0
      %5848 = vmatpush.msra.mxu0 0.0
      %5849 = vmatpush.msra.mxu0 0.0
      %5850 = vmatpush.msra.mxu0 0.0
      %5851 = vmatpush.msra.mxu0 0.0
      %5852 = vmatpush.msra.mxu0 0.0
      %5853 = vmatpush.msra.mxu0 0.0
      %5854 = vmatpush.msra.mxu0 0.0
      %5855 = vmatpush.msra.mxu0 0.0
      %5856 = vmatpush.msra.mxu0 %v5831
      %5857 = vmatmul.f32.gmra.mxu0 %v5826
      %v5858 = vpop.f32.mrf.mxu0
      %v5859 = vadd.f32 0.0, %v5858
      %5860 = vmatmul.f32.gmra.mxu0 %v5829
      %v5861 = vpop.f32.mrf.mxu0
      %v5862 = vadd.f32 0.0, %v5861
      %5863 = vdwg.mxu0
      %5864 = vmatpush.msra.mxu0 0.0
      %5865 = vmatpush.msra.mxu0 0.0
      %5866 = vmatpush.msra.mxu0 0.0
      %5867 = vmatpush.msra.mxu0 0.0
      %5868 = vmatpush.msra.mxu0 0.0
      %5869 = vmatpush.msra.mxu0 0.0
      %5870 = vmatpush.msra.mxu0 0.0
      %5871 = vmatpush.msra.mxu0 0.0
      %5872 = vmatpush.msra.mxu0 0.0
      %5873 = vmatpush.msra.mxu0 0.0
      %5874 = vmatpush.msra.mxu0 0.0
      %5875 = vmatpush.msra.mxu0 0.0
      %5876 = vmatpush.msra.mxu0 0.0
      %5877 = vmatpush.msra.mxu0 0.0
      %5878 = vmatpush.msra.mxu0 0.0
      %5879 = vmatpush.msra.mxu0 %v5833
      %5880 = vmatmul.f32.gmra.mxu0 %v5826
      %v5881 = vpop.f32.mrf.mxu0
      %v5882 = vadd.f32 0.0, %v5881
      %5883 = vmatmul.f32.gmra.mxu0 %v5829
      %v5884 = vpop.f32.mrf.mxu0
      %v5885 = vadd.f32 0.0, %v5884
      %5886 = vdwg.mxu0
      %5887 = vmatpush.msra.mxu0 0.0
      %5888 = vmatpush.msra.mxu0 0.0
      %5889 = vmatpush.msra.mxu0 0.0
      %5890 = vmatpush.msra.mxu0 0.0
      %5891 = vmatpush.msra.mxu0 0.0
      %5892 = vmatpush.msra.mxu0 0.0
      %5893 = vmatpush.msra.mxu0 0.0
      %5894 = vmatpush.msra.mxu0 0.0
      %5895 = vmatpush.msra.mxu0 0.0
      %5896 = vmatpush.msra.mxu0 0.0
      %5897 = vmatpush.msra.mxu0 0.0
      %5898 = vmatpush.msra.mxu0 0.0
      %5899 = vmatpush.msra.mxu0 0.0
      %5900 = vmatpush.msra.mxu0 0.0
      %5901 = vmatpush.msra.mxu0 0.0
      %5902 = vmatpush.msra.mxu0 %v5835
      %5903 = vmatmul.f32.gmra.mxu0 %v5826
      %v5904 = vpop.f32.mrf.mxu0
      %v5905 = vadd.f32 0.0, %v5904
      %5906 = vmatmul.f32.gmra.mxu0 %v5829
      %v5907 = vpop.f32.mrf.mxu0
      %v5908 = vadd.f32 0.0, %v5907
      %5909 = vdwg.mxu0
      %5910 = vmatpush.msra.mxu0 0.0
      %5911 = vmatpush.msra.mxu0 0.0
      %5912 = vmatpush.msra.mxu0 0.0
      %5913 = vmatpush.msra.mxu0 0.0
      %5914 = vmatpush.msra.mxu0 0.0
      %5915 = vmatpush.msra.mxu0 0.0
      %5916 = vmatpush.msra.mxu0 0.0
      %5917 = vmatpush.msra.mxu0 0.0
      %5918 = vmatpush.msra.mxu0 0.0
      %5919 = vmatpush.msra.mxu0 0.0
      %5920 = vmatpush.msra.mxu0 0.0
      %5921 = vmatpush.msra.mxu0 0.0
      %5922 = vmatpush.msra.mxu0 0.0
      %5923 = vmatpush.msra.mxu0 0.0
      %5924 = vmatpush.msra.mxu0 0.0
      %5925 = vmatpush.msra.mxu0 %v5837
      %5926 = vmatmul.f32.gmra.mxu0 %v5826
      %v5927 = vpop.f32.mrf.mxu0
      %v5928 = vadd.f32 0.0, %v5927
      %5929 = vmatmul.f32.gmra.mxu0 %v5829
      %v5930 = vpop.f32.mrf.mxu0
      %v5931 = vadd.f32 0.0, %v5930
      %5932 = vdwg.mxu0
      %5933 = vmatpush.msra.mxu0 0.0
      %5934 = vmatpush.msra.mxu0 0.0
      %5935 = vmatpush.msra.mxu0 0.0
      %5936 = vmatpush.msra.mxu0 0.0
      %5937 = vmatpush.msra.mxu0 0.0
      %5938 = vmatpush.msra.mxu0 0.0
      %5939 = vmatpush.msra.mxu0 0.0
      %5940 = vmatpush.msra.mxu0 0.0
      %5941 = vmatpush.msra.mxu0 0.0
      %5942 = vmatpush.msra.mxu0 0.0
      %5943 = vmatpush.msra.mxu0 0.0
      %5944 = vmatpush.msra.mxu0 0.0
      %5945 = vmatpush.msra.mxu0 0.0
      %5946 = vmatpush.msra.mxu0 0.0
      %5947 = vmatpush.msra.mxu0 0.0
      %5948 = vmatpush.msra.mxu0 %v5839
      %5949 = vmatmul.f32.gmra.mxu0 %v5826
      %v5950 = vpop.f32.mrf.mxu0
      %v5951 = vadd.f32 0.0, %v5950
      %5952 = vmatmul.f32.gmra.mxu0 %v5829
      %v5953 = vpop.f32.mrf.mxu0
      %v5954 = vadd.f32 0.0, %v5953
      %5955 = vdwg.mxu0
      %v5956 = vadd.f32 %v5797, %v5859
      %v5957 = vadd.f32 %v5798, %v5882
      %v5958 = vadd.f32 %v5799, %v5905
      %v5959 = vadd.f32 %v5800, %v5928
      %v5960 = vadd.f32 %v5801, %v5951
      %v5961 = vadd.f32 %v5802, %v5862
      %v5962 = vadd.f32 %v5803, %v5885
      %v5963 = vadd.f32 %v5804, %v5908
      %v5964 = vadd.f32 %v5805, %v5931
      %v5965 = vadd.f32 %v5806, %v5954
      %s5966 = scalar_lea.vmem %s3, 64
      %v5967 = vld [vmem:[%s5966] sm:$0xff]
      %v5968 = vld [vmem:[%s5966 + $0x8] sm:$0xff]
      %5969 = vrot.lane.b32.xlu0 %v5354, 120
      %v5970 = vpop.permute.xlu0 %5969
      %5971 = vrot.lane.b32.xlu0 %v5355, 120
      %v5972 = vpop.permute.xlu0 %5971
      %5973 = vrot.lane.b32.xlu0 %v5356, 120
      %v5974 = vpop.permute.xlu0 %5973
      %5975 = vrot.lane.b32.xlu0 %v5357, 120
      %v5976 = vpop.permute.xlu0 %5975
      %5977 = vrot.lane.b32.xlu0 %v5358, 120
      %v5978 = vpop.permute.xlu0 %5977
      %vm5979 = vcmask 982016
      %v5980 = vsel %vm5979, %v5970, %v5972
      %v5981 = vsel %vm5979, %v5972, %v5974
      %v5982 = vsel %vm5979, %v5974, %v5976
      %v5983 = vsel %vm5979, %v5976, %v5978
      %v5985 = vsel %vm5385, %v5967, 0
      %v5988 = vsel %vm5385, %v5968, 0
      %v5990 = vsel %vm5392, %v5980, 0
      %v5992 = vsel %vm5392, %v5981, 0
      %v5994 = vsel %vm5392, %v5982, 0
      %v5996 = vsel %vm5392, %v5983, 0
      %v5998 = vsel %vm5392, %v5978, 0
      %6000 = vmatpush.msra.mxu0 0.0
      %6001 = vmatpush.msra.mxu0 0.0
      %6002 = vmatpush.msra.mxu0 0.0
      %6003 = vmatpush.msra.mxu0 0.0
      %6004 = vmatpush.msra.mxu0 0.0
      %6005 = vmatpush.msra.mxu0 0.0
      %6006 = vmatpush.msra.mxu0 0.0
      %6007 = vmatpush.msra.mxu0 0.0
      %6008 = vmatpush.msra.mxu0 0.0
      %6009 = vmatpush.msra.mxu0 0.0
      %6010 = vmatpush.msra.mxu0 0.0
      %6011 = vmatpush.msra.mxu0 0.0
      %6012 = vmatpush.msra.mxu0 0.0
      %6013 = vmatpush.msra.mxu0 0.0
      %6014 = vmatpush.msra.mxu0 0.0
      %6015 = vmatpush.msra.mxu0 %v5990
      %6016 = vmatmul.f32.gmra.mxu0 %v5985
      %v6017 = vpop.f32.mrf.mxu0
      %v6018 = vadd.f32 0.0, %v6017
      %6019 = vmatmul.f32.gmra.mxu0 %v5988
      %v6020 = vpop.f32.mrf.mxu0
      %v6021 = vadd.f32 0.0, %v6020
      %6022 = vdwg.mxu0
      %6023 = vmatpush.msra.mxu0 0.0
      %6024 = vmatpush.msra.mxu0 0.0
      %6025 = vmatpush.msra.mxu0 0.0
      %6026 = vmatpush.msra.mxu0 0.0
      %6027 = vmatpush.msra.mxu0 0.0
      %6028 = vmatpush.msra.mxu0 0.0
      %6029 = vmatpush.msra.mxu0 0.0
      %6030 = vmatpush.msra.mxu0 0.0
      %6031 = vmatpush.msra.mxu0 0.0
      %6032 = vmatpush.msra.mxu0 0.0
      %6033 = vmatpush.msra.mxu0 0.0
      %6034 = vmatpush.msra.mxu0 0.0
      %6035 = vmatpush.msra.mxu0 0.0
      %6036 = vmatpush.msra.mxu0 0.0
      %6037 = vmatpush.msra.mxu0 0.0
      %6038 = vmatpush.msra.mxu0 %v5992
      %6039 = vmatmul.f32.gmra.mxu0 %v5985
      %v6040 = vpop.f32.mrf.mxu0
      %v6041 = vadd.f32 0.0, %v6040
      %6042 = vmatmul.f32.gmra.mxu0 %v5988
      %v6043 = vpop.f32.mrf.mxu0
      %v6044 = vadd.f32 0.0, %v6043
      %6045 = vdwg.mxu0
      %6046 = vmatpush.msra.mxu0 0.0
      %6047 = vmatpush.msra.mxu0 0.0
      %6048 = vmatpush.msra.mxu0 0.0
      %6049 = vmatpush.msra.mxu0 0.0
      %6050 = vmatpush.msra.mxu0 0.0
      %6051 = vmatpush.msra.mxu0 0.0
      %6052 = vmatpush.msra.mxu0 0.0
      %6053 = vmatpush.msra.mxu0 0.0
      %6054 = vmatpush.msra.mxu0 0.0
      %6055 = vmatpush.msra.mxu0 0.0
      %6056 = vmatpush.msra.mxu0 0.0
      %6057 = vmatpush.msra.mxu0 0.0
      %6058 = vmatpush.msra.mxu0 0.0
      %6059 = vmatpush.msra.mxu0 0.0
      %6060 = vmatpush.msra.mxu0 0.0
      %6061 = vmatpush.msra.mxu0 %v5994
      %6062 = vmatmul.f32.gmra.mxu0 %v5985
      %v6063 = vpop.f32.mrf.mxu0
      %v6064 = vadd.f32 0.0, %v6063
      %6065 = vmatmul.f32.gmra.mxu0 %v5988
      %v6066 = vpop.f32.mrf.mxu0
      %v6067 = vadd.f32 0.0, %v6066
      %6068 = vdwg.mxu0
      %6069 = vmatpush.msra.mxu0 0.0
      %6070 = vmatpush.msra.mxu0 0.0
      %6071 = vmatpush.msra.mxu0 0.0
      %6072 = vmatpush.msra.mxu0 0.0
      %6073 = vmatpush.msra.mxu0 0.0
      %6074 = vmatpush.msra.mxu0 0.0
      %6075 = vmatpush.msra.mxu0 0.0
      %6076 = vmatpush.msra.mxu0 0.0
      %6077 = vmatpush.msra.mxu0 0.0
      %6078 = vmatpush.msra.mxu0 0.0
      %6079 = vmatpush.msra.mxu0 0.0
      %6080 = vmatpush.msra.mxu0 0.0
      %6081 = vmatpush.msra.mxu0 0.0
      %6082 = vmatpush.msra.mxu0 0.0
      %6083 = vmatpush.msra.mxu0 0.0
      %6084 = vmatpush.msra.mxu0 %v5996
      %6085 = vmatmul.f32.gmra.mxu0 %v5985
      %v6086 = vpop.f32.mrf.mxu0
      %v6087 = vadd.f32 0.0, %v6086
      %6088 = vmatmul.f32.gmra.mxu0 %v5988
      %v6089 = vpop.f32.mrf.mxu0
      %v6090 = vadd.f32 0.0, %v6089
      %6091 = vdwg.mxu0
      %6092 = vmatpush.msra.mxu0 0.0
      %6093 = vmatpush.msra.mxu0 0.0
      %6094 = vmatpush.msra.mxu0 0.0
      %6095 = vmatpush.msra.mxu0 0.0
      %6096 = vmatpush.msra.mxu0 0.0
      %6097 = vmatpush.msra.mxu0 0.0
      %6098 = vmatpush.msra.mxu0 0.0
      %6099 = vmatpush.msra.mxu0 0.0
      %6100 = vmatpush.msra.mxu0 0.0
      %6101 = vmatpush.msra.mxu0 0.0
      %6102 = vmatpush.msra.mxu0 0.0
      %6103 = vmatpush.msra.mxu0 0.0
      %6104 = vmatpush.msra.mxu0 0.0
      %6105 = vmatpush.msra.mxu0 0.0
      %6106 = vmatpush.msra.mxu0 0.0
      %6107 = vmatpush.msra.mxu0 %v5998
      %6108 = vmatmul.f32.gmra.mxu0 %v5985
      %v6109 = vpop.f32.mrf.mxu0
      %v6110 = vadd.f32 0.0, %v6109
      %6111 = vmatmul.f32.gmra.mxu0 %v5988
      %v6112 = vpop.f32.mrf.mxu0
      %v6113 = vadd.f32 0.0, %v6112
      %6114 = vdwg.mxu0
      %v6115 = vadd.f32 %v5956, %v6018
      %v6116 = vadd.f32 %v5957, %v6041
      %v6117 = vadd.f32 %v5958, %v6064
      %v6118 = vadd.f32 %v5959, %v6087
      %v6119 = vadd.f32 %v5960, %v6110
      %v6120 = vadd.f32 %v5961, %v6021
      %v6121 = vadd.f32 %v5962, %v6044
      %v6122 = vadd.f32 %v5963, %v6067
      %v6123 = vadd.f32 %v5964, %v6090
      %v6124 = vadd.f32 %v5965, %v6113
      %s6125 = scalar_lea.vmem %s3, 80
      %v6126 = vld [vmem:[%s6125] sm:$0xff]
      %v6127 = vld [vmem:[%s6125 + $0x8] sm:$0xff]
      %6129 = vrot.lane.b32.xlu0 %v5354, 64
      %v6130 = vpop.permute.xlu0 %6129
      %6131 = vrot.lane.b32.xlu0 %v5355, 64
      %v6132 = vpop.permute.xlu0 %6131
      %6133 = vrot.lane.b32.xlu0 %v5356, 64
      %v6134 = vpop.permute.xlu0 %6133
      %6135 = vrot.lane.b32.xlu0 %v5357, 64
      %v6136 = vpop.permute.xlu0 %6135
      %6137 = vrot.lane.b32.xlu0 %v5358, 64
      %v6138 = vpop.permute.xlu0 %6137
      %6139 = vrot.lane.b32.xlu0 %v5359, 64
      %v6140 = vpop.permute.xlu0 %6139
      %v6141 = vsel %vm2262, %v6130, %v6132
      %v6142 = vsel %vm2262, %v6132, %v6134
      %v6143 = vsel %vm2262, %v6134, %v6136
      %v6144 = vsel %vm2262, %v6136, %v6138
      %v6145 = vsel %vm2262, %v6138, %v6140
      %v6147 = vsel %vm5385, %v6126, 0
      %v6150 = vsel %vm5385, %v6127, 0
      %v6152 = vsel %vm5392, %v6141, 0
      %v6154 = vsel %vm5392, %v6142, 0
      %v6156 = vsel %vm5392, %v6143, 0
      %v6158 = vsel %vm5392, %v6144, 0
      %v6160 = vsel %vm5392, %v6145, 0
      %6162 = vmatpush.msra.mxu0 0.0
      %6163 = vmatpush.msra.mxu0 0.0
      %6164 = vmatpush.msra.mxu0 0.0
      %6165 = vmatpush.msra.mxu0 0.0
      %6166 = vmatpush.msra.mxu0 0.0
      %6167 = vmatpush.msra.mxu0 0.0
      %6168 = vmatpush.msra.mxu0 0.0
      %6169 = vmatpush.msra.mxu0 0.0
      %6170 = vmatpush.msra.mxu0 0.0
      %6171 = vmatpush.msra.mxu0 0.0
      %6172 = vmatpush.msra.mxu0 0.0
      %6173 = vmatpush.msra.mxu0 0.0
      %6174 = vmatpush.msra.mxu0 0.0
      %6175 = vmatpush.msra.mxu0 0.0
      %6176 = vmatpush.msra.mxu0 0.0
      %6177 = vmatpush.msra.mxu0 %v6152
      %6178 = vmatmul.f32.gmra.mxu0 %v6147
      %v6179 = vpop.f32.mrf.mxu0
      %v6180 = vadd.f32 0.0, %v6179
      %6181 = vmatmul.f32.gmra.mxu0 %v6150
      %v6182 = vpop.f32.mrf.mxu0
      %v6183 = vadd.f32 0.0, %v6182
      %6184 = vdwg.mxu0
      %6185 = vmatpush.msra.mxu0 0.0
      %6186 = vmatpush.msra.mxu0 0.0
      %6187 = vmatpush.msra.mxu0 0.0
      %6188 = vmatpush.msra.mxu0 0.0
      %6189 = vmatpush.msra.mxu0 0.0
      %6190 = vmatpush.msra.mxu0 0.0
      %6191 = vmatpush.msra.mxu0 0.0
      %6192 = vmatpush.msra.mxu0 0.0
      %6193 = vmatpush.msra.mxu0 0.0
      %6194 = vmatpush.msra.mxu0 0.0
      %6195 = vmatpush.msra.mxu0 0.0
      %6196 = vmatpush.msra.mxu0 0.0
      %6197 = vmatpush.msra.mxu0 0.0
      %6198 = vmatpush.msra.mxu0 0.0
      %6199 = vmatpush.msra.mxu0 0.0
      %6200 = vmatpush.msra.mxu0 %v6154
      %6201 = vmatmul.f32.gmra.mxu0 %v6147
      %v6202 = vpop.f32.mrf.mxu0
      %v6203 = vadd.f32 0.0, %v6202
      %6204 = vmatmul.f32.gmra.mxu0 %v6150
      %v6205 = vpop.f32.mrf.mxu0
      %v6206 = vadd.f32 0.0, %v6205
      %6207 = vdwg.mxu0
      %6208 = vmatpush.msra.mxu0 0.0
      %6209 = vmatpush.msra.mxu0 0.0
      %6210 = vmatpush.msra.mxu0 0.0
      %6211 = vmatpush.msra.mxu0 0.0
      %6212 = vmatpush.msra.mxu0 0.0
      %6213 = vmatpush.msra.mxu0 0.0
      %6214 = vmatpush.msra.mxu0 0.0
      %6215 = vmatpush.msra.mxu0 0.0
      %6216 = vmatpush.msra.mxu0 0.0
      %6217 = vmatpush.msra.mxu0 0.0
      %6218 = vmatpush.msra.mxu0 0.0
      %6219 = vmatpush.msra.mxu0 0.0
      %6220 = vmatpush.msra.mxu0 0.0
      %6221 = vmatpush.msra.mxu0 0.0
      %6222 = vmatpush.msra.mxu0 0.0
      %6223 = vmatpush.msra.mxu0 %v6156
      %6224 = vmatmul.f32.gmra.mxu0 %v6147
      %v6225 = vpop.f32.mrf.mxu0
      %v6226 = vadd.f32 0.0, %v6225
      %6227 = vmatmul.f32.gmra.mxu0 %v6150
      %v6228 = vpop.f32.mrf.mxu0
      %v6229 = vadd.f32 0.0, %v6228
      %6230 = vdwg.mxu0
      %6231 = vmatpush.msra.mxu0 0.0
      %6232 = vmatpush.msra.mxu0 0.0
      %6233 = vmatpush.msra.mxu0 0.0
      %6234 = vmatpush.msra.mxu0 0.0
      %6235 = vmatpush.msra.mxu0 0.0
      %6236 = vmatpush.msra.mxu0 0.0
      %6237 = vmatpush.msra.mxu0 0.0
      %6238 = vmatpush.msra.mxu0 0.0
      %6239 = vmatpush.msra.mxu0 0.0
      %6240 = vmatpush.msra.mxu0 0.0
      %6241 = vmatpush.msra.mxu0 0.0
      %6242 = vmatpush.msra.mxu0 0.0
      %6243 = vmatpush.msra.mxu0 0.0
      %6244 = vmatpush.msra.mxu0 0.0
      %6245 = vmatpush.msra.mxu0 0.0
      %6246 = vmatpush.msra.mxu0 %v6158
      %6247 = vmatmul.f32.gmra.mxu0 %v6147
      %v6248 = vpop.f32.mrf.mxu0
      %v6249 = vadd.f32 0.0, %v6248
      %6250 = vmatmul.f32.gmra.mxu0 %v6150
      %v6251 = vpop.f32.mrf.mxu0
      %v6252 = vadd.f32 0.0, %v6251
      %6253 = vdwg.mxu0
      %6254 = vmatpush.msra.mxu0 0.0
      %6255 = vmatpush.msra.mxu0 0.0
      %6256 = vmatpush.msra.mxu0 0.0
      %6257 = vmatpush.msra.mxu0 0.0
      %6258 = vmatpush.msra.mxu0 0.0
      %6259 = vmatpush.msra.mxu0 0.0
      %6260 = vmatpush.msra.mxu0 0.0
      %6261 = vmatpush.msra.mxu0 0.0
      %6262 = vmatpush.msra.mxu0 0.0
      %6263 = vmatpush.msra.mxu0 0.0
      %6264 = vmatpush.msra.mxu0 0.0
      %6265 = vmatpush.msra.mxu0 0.0
      %6266 = vmatpush.msra.mxu0 0.0
      %6267 = vmatpush.msra.mxu0 0.0
      %6268 = vmatpush.msra.mxu0 0.0
      %6269 = vmatpush.msra.mxu0 %v6160
      %6270 = vmatmul.f32.gmra.mxu0 %v6147
      %v6271 = vpop.f32.mrf.mxu0
      %v6272 = vadd.f32 0.0, %v6271
      %6273 = vmatmul.f32.gmra.mxu0 %v6150
      %v6274 = vpop.f32.mrf.mxu0
      %v6275 = vadd.f32 0.0, %v6274
      %6276 = vdwg.mxu0
      %v6277 = vadd.f32 %v6115, %v6180
      %v6278 = vadd.f32 %v6116, %v6203
      %v6279 = vadd.f32 %v6117, %v6226
      %v6280 = vadd.f32 %v6118, %v6249
      %v6281 = vadd.f32 %v6119, %v6272
      %v6282 = vadd.f32 %v6120, %v6183
      %v6283 = vadd.f32 %v6121, %v6206
      %v6284 = vadd.f32 %v6122, %v6229
      %v6285 = vadd.f32 %v6123, %v6252
      %v6286 = vadd.f32 %v6124, %v6275
      %s6287 = scalar_lea.vmem %s3, 96
      %v6288 = vld [vmem:[%s6287] sm:$0xff]
      %v6289 = vld [vmem:[%s6287 + $0x8] sm:$0xff]
      %6290 = vrot.lane.b32.xlu0 %v5354, 62
      %v6291 = vpop.permute.xlu0 %6290
      %6292 = vrot.lane.b32.xlu0 %v5355, 62
      %v6293 = vpop.permute.xlu0 %6292
      %6294 = vrot.lane.b32.xlu0 %v5356, 62
      %v6295 = vpop.permute.xlu0 %6294
      %6296 = vrot.lane.b32.xlu0 %v5357, 62
      %v6297 = vpop.permute.xlu0 %6296
      %6298 = vrot.lane.b32.xlu0 %v5358, 62
      %v6299 = vpop.permute.xlu0 %6298
      %6300 = vrot.lane.b32.xlu0 %v5359, 62
      %v6301 = vpop.permute.xlu0 %6300
      %v6302 = vsel %vm2672, %v6291, %v6293
      %v6303 = vsel %vm2672, %v6293, %v6295
      %v6304 = vsel %vm2672, %v6295, %v6297
      %v6305 = vsel %vm2672, %v6297, %v6299
      %v6306 = vsel %vm2672, %v6299, %v6301
      %v6308 = vsel %vm5385, %v6288, 0
      %v6311 = vsel %vm5385, %v6289, 0
      %v6313 = vsel %vm5392, %v6302, 0
      %v6315 = vsel %vm5392, %v6303, 0
      %v6317 = vsel %vm5392, %v6304, 0
      %v6319 = vsel %vm5392, %v6305, 0
      %v6321 = vsel %vm5392, %v6306, 0
      %6323 = vmatpush.msra.mxu0 0.0
      %6324 = vmatpush.msra.mxu0 0.0
      %6325 = vmatpush.msra.mxu0 0.0
      %6326 = vmatpush.msra.mxu0 0.0
      %6327 = vmatpush.msra.mxu0 0.0
      %6328 = vmatpush.msra.mxu0 0.0
      %6329 = vmatpush.msra.mxu0 0.0
      %6330 = vmatpush.msra.mxu0 0.0
      %6331 = vmatpush.msra.mxu0 0.0
      %6332 = vmatpush.msra.mxu0 0.0
      %6333 = vmatpush.msra.mxu0 0.0
      %6334 = vmatpush.msra.mxu0 0.0
      %6335 = vmatpush.msra.mxu0 0.0
      %6336 = vmatpush.msra.mxu0 0.0
      %6337 = vmatpush.msra.mxu0 0.0
      %6338 = vmatpush.msra.mxu0 %v6313
      %6339 = vmatmul.f32.gmra.mxu0 %v6308
      %v6340 = vpop.f32.mrf.mxu0
      %v6341 = vadd.f32 0.0, %v6340
      %6342 = vmatmul.f32.gmra.mxu0 %v6311
      %v6343 = vpop.f32.mrf.mxu0
      %v6344 = vadd.f32 0.0, %v6343
      %6345 = vdwg.mxu0
      %6346 = vmatpush.msra.mxu0 0.0
      %6347 = vmatpush.msra.mxu0 0.0
      %6348 = vmatpush.msra.mxu0 0.0
      %6349 = vmatpush.msra.mxu0 0.0
      %6350 = vmatpush.msra.mxu0 0.0
      %6351 = vmatpush.msra.mxu0 0.0
      %6352 = vmatpush.msra.mxu0 0.0
      %6353 = vmatpush.msra.mxu0 0.0
      %6354 = vmatpush.msra.mxu0 0.0
      %6355 = vmatpush.msra.mxu0 0.0
      %6356 = vmatpush.msra.mxu0 0.0
      %6357 = vmatpush.msra.mxu0 0.0
      %6358 = vmatpush.msra.mxu0 0.0
      %6359 = vmatpush.msra.mxu0 0.0
      %6360 = vmatpush.msra.mxu0 0.0
      %6361 = vmatpush.msra.mxu0 %v6315
      %6362 = vmatmul.f32.gmra.mxu0 %v6308
      %v6363 = vpop.f32.mrf.mxu0
      %v6364 = vadd.f32 0.0, %v6363
      %6365 = vmatmul.f32.gmra.mxu0 %v6311
      %v6366 = vpop.f32.mrf.mxu0
      %v6367 = vadd.f32 0.0, %v6366
      %6368 = vdwg.mxu0
      %6369 = vmatpush.msra.mxu0 0.0
      %6370 = vmatpush.msra.mxu0 0.0
      %6371 = vmatpush.msra.mxu0 0.0
      %6372 = vmatpush.msra.mxu0 0.0
      %6373 = vmatpush.msra.mxu0 0.0
      %6374 = vmatpush.msra.mxu0 0.0
      %6375 = vmatpush.msra.mxu0 0.0
      %6376 = vmatpush.msra.mxu0 0.0
      %6377 = vmatpush.msra.mxu0 0.0
      %6378 = vmatpush.msra.mxu0 0.0
      %6379 = vmatpush.msra.mxu0 0.0
      %6380 = vmatpush.msra.mxu0 0.0
      %6381 = vmatpush.msra.mxu0 0.0
      %6382 = vmatpush.msra.mxu0 0.0
      %6383 = vmatpush.msra.mxu0 0.0
      %6384 = vmatpush.msra.mxu0 %v6317
      %6385 = vmatmul.f32.gmra.mxu0 %v6308
      %v6386 = vpop.f32.mrf.mxu0
      %v6387 = vadd.f32 0.0, %v6386
      %6388 = vmatmul.f32.gmra.mxu0 %v6311
      %v6389 = vpop.f32.mrf.mxu0
      %v6390 = vadd.f32 0.0, %v6389
      %6391 = vdwg.mxu0
      %6392 = vmatpush.msra.mxu0 0.0
      %6393 = vmatpush.msra.mxu0 0.0
      %6394 = vmatpush.msra.mxu0 0.0
      %6395 = vmatpush.msra.mxu0 0.0
      %6396 = vmatpush.msra.mxu0 0.0
      %6397 = vmatpush.msra.mxu0 0.0
      %6398 = vmatpush.msra.mxu0 0.0
      %6399 = vmatpush.msra.mxu0 0.0
      %6400 = vmatpush.msra.mxu0 0.0
      %6401 = vmatpush.msra.mxu0 0.0
      %6402 = vmatpush.msra.mxu0 0.0
      %6403 = vmatpush.msra.mxu0 0.0
      %6404 = vmatpush.msra.mxu0 0.0
      %6405 = vmatpush.msra.mxu0 0.0
      %6406 = vmatpush.msra.mxu0 0.0
      %6407 = vmatpush.msra.mxu0 %v6319
      %6408 = vmatmul.f32.gmra.mxu0 %v6308
      %v6409 = vpop.f32.mrf.mxu0
      %v6410 = vadd.f32 0.0, %v6409
      %6411 = vmatmul.f32.gmra.mxu0 %v6311
      %v6412 = vpop.f32.mrf.mxu0
      %v6413 = vadd.f32 0.0, %v6412
      %6414 = vdwg.mxu0
      %6415 = vmatpush.msra.mxu0 0.0
      %6416 = vmatpush.msra.mxu0 0.0
      %6417 = vmatpush.msra.mxu0 0.0
      %6418 = vmatpush.msra.mxu0 0.0
      %6419 = vmatpush.msra.mxu0 0.0
      %6420 = vmatpush.msra.mxu0 0.0
      %6421 = vmatpush.msra.mxu0 0.0
      %6422 = vmatpush.msra.mxu0 0.0
      %6423 = vmatpush.msra.mxu0 0.0
      %6424 = vmatpush.msra.mxu0 0.0
      %6425 = vmatpush.msra.mxu0 0.0
      %6426 = vmatpush.msra.mxu0 0.0
      %6427 = vmatpush.msra.mxu0 0.0
      %6428 = vmatpush.msra.mxu0 0.0
      %6429 = vmatpush.msra.mxu0 0.0
      %6430 = vmatpush.msra.mxu0 %v6321
      %6431 = vmatmul.f32.gmra.mxu0 %v6308
      %v6432 = vpop.f32.mrf.mxu0
      %v6433 = vadd.f32 0.0, %v6432
      %6434 = vmatmul.f32.gmra.mxu0 %v6311
      %v6435 = vpop.f32.mrf.mxu0
      %v6436 = vadd.f32 0.0, %v6435
      %6437 = vdwg.mxu0
      %v6438 = vadd.f32 %v6277, %v6341
      %v6439 = vadd.f32 %v6278, %v6364
      %v6440 = vadd.f32 %v6279, %v6387
      %v6441 = vadd.f32 %v6280, %v6410
      %v6442 = vadd.f32 %v6281, %v6433
      %v6443 = vadd.f32 %v6282, %v6344
      %v6444 = vadd.f32 %v6283, %v6367
      %v6445 = vadd.f32 %v6284, %v6390
      %v6446 = vadd.f32 %v6285, %v6413
      %v6447 = vadd.f32 %v6286, %v6436
      %s6448 = scalar_lea.vmem %s3, 112
      %v6449 = vld [vmem:[%s6448] sm:$0xff]
      %v6450 = vld [vmem:[%s6448 + $0x8] sm:$0xff]
      %6451 = vrot.lane.b32.xlu0 %v5354, 60
      %v6452 = vpop.permute.xlu0 %6451
      %6453 = vrot.lane.b32.xlu0 %v5355, 60
      %v6454 = vpop.permute.xlu0 %6453
      %6455 = vrot.lane.b32.xlu0 %v5356, 60
      %v6456 = vpop.permute.xlu0 %6455
      %6457 = vrot.lane.b32.xlu0 %v5357, 60
      %v6458 = vpop.permute.xlu0 %6457
      %6459 = vrot.lane.b32.xlu0 %v5358, 60
      %v6460 = vpop.permute.xlu0 %6459
      %6461 = vrot.lane.b32.xlu0 %v5359, 60
      %v6462 = vpop.permute.xlu0 %6461
      %v6463 = vsel %vm3082, %v6452, %v6454
      %v6464 = vsel %vm3082, %v6454, %v6456
      %v6465 = vsel %vm3082, %v6456, %v6458
      %v6466 = vsel %vm3082, %v6458, %v6460
      %v6467 = vsel %vm3082, %v6460, %v6462
      %v6469 = vsel %vm5385, %v6449, 0
      %v6472 = vsel %vm5385, %v6450, 0
      %v6474 = vsel %vm5392, %v6463, 0
      %v6476 = vsel %vm5392, %v6464, 0
      %v6478 = vsel %vm5392, %v6465, 0
      %v6480 = vsel %vm5392, %v6466, 0
      %v6482 = vsel %vm5392, %v6467, 0
      %6484 = vmatpush.msra.mxu0 0.0
      %6485 = vmatpush.msra.mxu0 0.0
      %6486 = vmatpush.msra.mxu0 0.0
      %6487 = vmatpush.msra.mxu0 0.0
      %6488 = vmatpush.msra.mxu0 0.0
      %6489 = vmatpush.msra.mxu0 0.0
      %6490 = vmatpush.msra.mxu0 0.0
      %6491 = vmatpush.msra.mxu0 0.0
      %6492 = vmatpush.msra.mxu0 0.0
      %6493 = vmatpush.msra.mxu0 0.0
      %6494 = vmatpush.msra.mxu0 0.0
      %6495 = vmatpush.msra.mxu0 0.0
      %6496 = vmatpush.msra.mxu0 0.0
      %6497 = vmatpush.msra.mxu0 0.0
      %6498 = vmatpush.msra.mxu0 0.0
      %6499 = vmatpush.msra.mxu0 %v6474
      %6500 = vmatmul.f32.gmra.mxu0 %v6469
      %v6501 = vpop.f32.mrf.mxu0
      %v6502 = vadd.f32 0.0, %v6501
      %6503 = vmatmul.f32.gmra.mxu0 %v6472
      %v6504 = vpop.f32.mrf.mxu0
      %v6505 = vadd.f32 0.0, %v6504
      %6506 = vdwg.mxu0
      %6507 = vmatpush.msra.mxu0 0.0
      %6508 = vmatpush.msra.mxu0 0.0
      %6509 = vmatpush.msra.mxu0 0.0
      %6510 = vmatpush.msra.mxu0 0.0
      %6511 = vmatpush.msra.mxu0 0.0
      %6512 = vmatpush.msra.mxu0 0.0
      %6513 = vmatpush.msra.mxu0 0.0
      %6514 = vmatpush.msra.mxu0 0.0
      %6515 = vmatpush.msra.mxu0 0.0
      %6516 = vmatpush.msra.mxu0 0.0
      %6517 = vmatpush.msra.mxu0 0.0
      %6518 = vmatpush.msra.mxu0 0.0
      %6519 = vmatpush.msra.mxu0 0.0
      %6520 = vmatpush.msra.mxu0 0.0
      %6521 = vmatpush.msra.mxu0 0.0
      %6522 = vmatpush.msra.mxu0 %v6476
      %6523 = vmatmul.f32.gmra.mxu0 %v6469
      %v6524 = vpop.f32.mrf.mxu0
      %v6525 = vadd.f32 0.0, %v6524
      %6526 = vmatmul.f32.gmra.mxu0 %v6472
      %v6527 = vpop.f32.mrf.mxu0
      %v6528 = vadd.f32 0.0, %v6527
      %6529 = vdwg.mxu0
      %6530 = vmatpush.msra.mxu0 0.0
      %6531 = vmatpush.msra.mxu0 0.0
      %6532 = vmatpush.msra.mxu0 0.0
      %6533 = vmatpush.msra.mxu0 0.0
      %6534 = vmatpush.msra.mxu0 0.0
      %6535 = vmatpush.msra.mxu0 0.0
      %6536 = vmatpush.msra.mxu0 0.0
      %6537 = vmatpush.msra.mxu0 0.0
      %6538 = vmatpush.msra.mxu0 0.0
      %6539 = vmatpush.msra.mxu0 0.0
      %6540 = vmatpush.msra.mxu0 0.0
      %6541 = vmatpush.msra.mxu0 0.0
      %6542 = vmatpush.msra.mxu0 0.0
      %6543 = vmatpush.msra.mxu0 0.0
      %6544 = vmatpush.msra.mxu0 0.0
      %6545 = vmatpush.msra.mxu0 %v6478
      %6546 = vmatmul.f32.gmra.mxu0 %v6469
      %v6547 = vpop.f32.mrf.mxu0
      %v6548 = vadd.f32 0.0, %v6547
      %6549 = vmatmul.f32.gmra.mxu0 %v6472
      %v6550 = vpop.f32.mrf.mxu0
      %v6551 = vadd.f32 0.0, %v6550
      %6552 = vdwg.mxu0
      %6553 = vmatpush.msra.mxu0 0.0
      %6554 = vmatpush.msra.mxu0 0.0
      %6555 = vmatpush.msra.mxu0 0.0
      %6556 = vmatpush.msra.mxu0 0.0
      %6557 = vmatpush.msra.mxu0 0.0
      %6558 = vmatpush.msra.mxu0 0.0
      %6559 = vmatpush.msra.mxu0 0.0
      %6560 = vmatpush.msra.mxu0 0.0
      %6561 = vmatpush.msra.mxu0 0.0
      %6562 = vmatpush.msra.mxu0 0.0
      %6563 = vmatpush.msra.mxu0 0.0
      %6564 = vmatpush.msra.mxu0 0.0
      %6565 = vmatpush.msra.mxu0 0.0
      %6566 = vmatpush.msra.mxu0 0.0
      %6567 = vmatpush.msra.mxu0 0.0
      %6568 = vmatpush.msra.mxu0 %v6480
      %6569 = vmatmul.f32.gmra.mxu0 %v6469
      %v6570 = vpop.f32.mrf.mxu0
      %v6571 = vadd.f32 0.0, %v6570
      %6572 = vmatmul.f32.gmra.mxu0 %v6472
      %v6573 = vpop.f32.mrf.mxu0
      %v6574 = vadd.f32 0.0, %v6573
      %6575 = vdwg.mxu0
      %6576 = vmatpush.msra.mxu0 0.0
      %6577 = vmatpush.msra.mxu0 0.0
      %6578 = vmatpush.msra.mxu0 0.0
      %6579 = vmatpush.msra.mxu0 0.0
      %6580 = vmatpush.msra.mxu0 0.0
      %6581 = vmatpush.msra.mxu0 0.0
      %6582 = vmatpush.msra.mxu0 0.0
      %6583 = vmatpush.msra.mxu0 0.0
      %6584 = vmatpush.msra.mxu0 0.0
      %6585 = vmatpush.msra.mxu0 0.0
      %6586 = vmatpush.msra.mxu0 0.0
      %6587 = vmatpush.msra.mxu0 0.0
      %6588 = vmatpush.msra.mxu0 0.0
      %6589 = vmatpush.msra.mxu0 0.0
      %6590 = vmatpush.msra.mxu0 0.0
      %6591 = vmatpush.msra.mxu0 %v6482
      %6592 = vmatmul.f32.gmra.mxu0 %v6469
      %v6593 = vpop.f32.mrf.mxu0
      %v6594 = vadd.f32 0.0, %v6593
      %6595 = vmatmul.f32.gmra.mxu0 %v6472
      %v6596 = vpop.f32.mrf.mxu0
      %v6597 = vadd.f32 0.0, %v6596
      %6598 = vdwg.mxu0
      %v6599 = vadd.f32 %v6438, %v6502
      %v6600 = vadd.f32 %v6439, %v6525
      %v6601 = vadd.f32 %v6440, %v6548
      %v6602 = vadd.f32 %v6441, %v6571
      %v6603 = vadd.f32 %v6442, %v6594
      %v6604 = vadd.f32 %v6443, %v6505
      %v6605 = vadd.f32 %v6444, %v6528
      %v6606 = vadd.f32 %v6445, %v6551
      %v6607 = vadd.f32 %v6446, %v6574
      %v6608 = vadd.f32 %v6447, %v6597
      %s6609 = scalar_lea.vmem %s3, 128
      %v6610 = vld [vmem:[%s6609] sm:$0xff]
      %v6611 = vld [vmem:[%s6609 + $0x8] sm:$0xff]
      %6612 = vrot.lane.b32.xlu0 %v5354, 58
      %v6613 = vpop.permute.xlu0 %6612
      %6614 = vrot.lane.b32.xlu0 %v5355, 58
      %v6615 = vpop.permute.xlu0 %6614
      %6616 = vrot.lane.b32.xlu0 %v5356, 58
      %v6617 = vpop.permute.xlu0 %6616
      %6618 = vrot.lane.b32.xlu0 %v5357, 58
      %v6619 = vpop.permute.xlu0 %6618
      %6620 = vrot.lane.b32.xlu0 %v5358, 58
      %v6621 = vpop.permute.xlu0 %6620
      %6622 = vrot.lane.b32.xlu0 %v5359, 58
      %v6623 = vpop.permute.xlu0 %6622
      %vm6624 = vcmask 474112
      %v6625 = vsel %vm6624, %v6613, %v6615
      %v6626 = vsel %vm6624, %v6615, %v6617
      %v6627 = vsel %vm6624, %v6617, %v6619
      %v6628 = vsel %vm6624, %v6619, %v6621
      %v6629 = vsel %vm6624, %v6621, %v6623
      %v6631 = vsel %vm5385, %v6610, 0
      %v6634 = vsel %vm5385, %v6611, 0
      %v6636 = vsel %vm5392, %v6625, 0
      %v6638 = vsel %vm5392, %v6626, 0
      %v6640 = vsel %vm5392, %v6627, 0
      %v6642 = vsel %vm5392, %v6628, 0
      %v6644 = vsel %vm5392, %v6629, 0
      %6646 = vmatpush.msra.mxu0 0.0
      %6647 = vmatpush.msra.mxu0 0.0
      %6648 = vmatpush.msra.mxu0 0.0
      %6649 = vmatpush.msra.mxu0 0.0
      %6650 = vmatpush.msra.mxu0 0.0
      %6651 = vmatpush.msra.mxu0 0.0
      %6652 = vmatpush.msra.mxu0 0.0
      %6653 = vmatpush.msra.mxu0 0.0
      %6654 = vmatpush.msra.mxu0 0.0
      %6655 = vmatpush.msra.mxu0 0.0
      %6656 = vmatpush.msra.mxu0 0.0
      %6657 = vmatpush.msra.mxu0 0.0
      %6658 = vmatpush.msra.mxu0 0.0
      %6659 = vmatpush.msra.mxu0 0.0
      %6660 = vmatpush.msra.mxu0 0.0
      %6661 = vmatpush.msra.mxu0 %v6636
      %6662 = vmatmul.f32.gmra.mxu0 %v6631
      %v6663 = vpop.f32.mrf.mxu0
      %v6664 = vadd.f32 0.0, %v6663
      %6665 = vmatmul.f32.gmra.mxu0 %v6634
      %v6666 = vpop.f32.mrf.mxu0
      %v6667 = vadd.f32 0.0, %v6666
      %6668 = vdwg.mxu0
      %6669 = vmatpush.msra.mxu0 0.0
      %6670 = vmatpush.msra.mxu0 0.0
      %6671 = vmatpush.msra.mxu0 0.0
      %6672 = vmatpush.msra.mxu0 0.0
      %6673 = vmatpush.msra.mxu0 0.0
      %6674 = vmatpush.msra.mxu0 0.0
      %6675 = vmatpush.msra.mxu0 0.0
      %6676 = vmatpush.msra.mxu0 0.0
      %6677 = vmatpush.msra.mxu0 0.0
      %6678 = vmatpush.msra.mxu0 0.0
      %6679 = vmatpush.msra.mxu0 0.0
      %6680 = vmatpush.msra.mxu0 0.0
      %6681 = vmatpush.msra.mxu0 0.0
      %6682 = vmatpush.msra.mxu0 0.0
      %6683 = vmatpush.msra.mxu0 0.0
      %6684 = vmatpush.msra.mxu0 %v6638
      %6685 = vmatmul.f32.gmra.mxu0 %v6631
      %v6686 = vpop.f32.mrf.mxu0
      %v6687 = vadd.f32 0.0, %v6686
      %6688 = vmatmul.f32.gmra.mxu0 %v6634
      %v6689 = vpop.f32.mrf.mxu0
      %v6690 = vadd.f32 0.0, %v6689
      %6691 = vdwg.mxu0
      %6692 = vmatpush.msra.mxu0 0.0
      %6693 = vmatpush.msra.mxu0 0.0
      %6694 = vmatpush.msra.mxu0 0.0
      %6695 = vmatpush.msra.mxu0 0.0
      %6696 = vmatpush.msra.mxu0 0.0
      %6697 = vmatpush.msra.mxu0 0.0
      %6698 = vmatpush.msra.mxu0 0.0
      %6699 = vmatpush.msra.mxu0 0.0
      %6700 = vmatpush.msra.mxu0 0.0
      %6701 = vmatpush.msra.mxu0 0.0
      %6702 = vmatpush.msra.mxu0 0.0
      %6703 = vmatpush.msra.mxu0 0.0
      %6704 = vmatpush.msra.mxu0 0.0
      %6705 = vmatpush.msra.mxu0 0.0
      %6706 = vmatpush.msra.mxu0 0.0
      %6707 = vmatpush.msra.mxu0 %v6640
      %6708 = vmatmul.f32.gmra.mxu0 %v6631
      %v6709 = vpop.f32.mrf.mxu0
      %v6710 = vadd.f32 0.0, %v6709
      %6711 = vmatmul.f32.gmra.mxu0 %v6634
      %v6712 = vpop.f32.mrf.mxu0
      %v6713 = vadd.f32 0.0, %v6712
      %6714 = vdwg.mxu0
      %6715 = vmatpush.msra.mxu0 0.0
      %6716 = vmatpush.msra.mxu0 0.0
      %6717 = vmatpush.msra.mxu0 0.0
      %6718 = vmatpush.msra.mxu0 0.0
      %6719 = vmatpush.msra.mxu0 0.0
      %6720 = vmatpush.msra.mxu0 0.0
      %6721 = vmatpush.msra.mxu0 0.0
      %6722 = vmatpush.msra.mxu0 0.0
      %6723 = vmatpush.msra.mxu0 0.0
      %6724 = vmatpush.msra.mxu0 0.0
      %6725 = vmatpush.msra.mxu0 0.0
      %6726 = vmatpush.msra.mxu0 0.0
      %6727 = vmatpush.msra.mxu0 0.0
      %6728 = vmatpush.msra.mxu0 0.0
      %6729 = vmatpush.msra.mxu0 0.0
      %6730 = vmatpush.msra.mxu0 %v6642
      %6731 = vmatmul.f32.gmra.mxu0 %v6631
      %v6732 = vpop.f32.mrf.mxu0
      %v6733 = vadd.f32 0.0, %v6732
      %6734 = vmatmul.f32.gmra.mxu0 %v6634
      %v6735 = vpop.f32.mrf.mxu0
      %v6736 = vadd.f32 0.0, %v6735
      %6737 = vdwg.mxu0
      %6738 = vmatpush.msra.mxu0 0.0
      %6739 = vmatpush.msra.mxu0 0.0
      %6740 = vmatpush.msra.mxu0 0.0
      %6741 = vmatpush.msra.mxu0 0.0
      %6742 = vmatpush.msra.mxu0 0.0
      %6743 = vmatpush.msra.mxu0 0.0
      %6744 = vmatpush.msra.mxu0 0.0
      %6745 = vmatpush.msra.mxu0 0.0
      %6746 = vmatpush.msra.mxu0 0.0
      %6747 = vmatpush.msra.mxu0 0.0
      %6748 = vmatpush.msra.mxu0 0.0
      %6749 = vmatpush.msra.mxu0 0.0
      %6750 = vmatpush.msra.mxu0 0.0
      %6751 = vmatpush.msra.mxu0 0.0
      %6752 = vmatpush.msra.mxu0 0.0
      %6753 = vmatpush.msra.mxu0 %v6644
      %6754 = vmatmul.f32.gmra.mxu0 %v6631
      %v6755 = vpop.f32.mrf.mxu0
      %v6756 = vadd.f32 0.0, %v6755
      %6757 = vmatmul.f32.gmra.mxu0 %v6634
      %v6758 = vpop.f32.mrf.mxu0
      %v6759 = vadd.f32 0.0, %v6758
      %6760 = vdwg.mxu0
      %v6761 = vadd.f32 %v6599, %v6664
      %v6762 = vadd.f32 %v6600, %v6687
      %v6763 = vadd.f32 %v6601, %v6710
      %v6764 = vadd.f32 %v6602, %v6733
      %v6765 = vadd.f32 %v6603, %v6756
      %v6766 = vadd.f32 %v6604, %v6667
      %v6767 = vadd.f32 %v6605, %v6690
      %v6768 = vadd.f32 %v6606, %v6713
      %v6769 = vadd.f32 %v6607, %v6736
      %v6770 = vadd.f32 %v6608, %v6759
      %s6771 = scalar_lea.vmem %s3, 144
      %v6772 = vld [vmem:[%s6771] sm:$0xff]
      %v6773 = vld [vmem:[%s6771 + $0x8] sm:$0xff]
      %6774 = vrot.lane.b32.xlu0 %v5354, 56
      %v6775 = vpop.permute.xlu0 %6774
      %6776 = vrot.lane.b32.xlu0 %v5355, 56
      %v6777 = vpop.permute.xlu0 %6776
      %6778 = vrot.lane.b32.xlu0 %v5356, 56
      %v6779 = vpop.permute.xlu0 %6778
      %6780 = vrot.lane.b32.xlu0 %v5357, 56
      %v6781 = vpop.permute.xlu0 %6780
      %6782 = vrot.lane.b32.xlu0 %v5358, 56
      %v6783 = vpop.permute.xlu0 %6782
      %6784 = vrot.lane.b32.xlu0 %v5359, 56
      %v6785 = vpop.permute.xlu0 %6784
      %vm6786 = vcmask 457728
      %v6787 = vsel %vm6786, %v6775, %v6777
      %v6788 = vsel %vm6786, %v6777, %v6779
      %v6789 = vsel %vm6786, %v6779, %v6781
      %v6790 = vsel %vm6786, %v6781, %v6783
      %v6791 = vsel %vm6786, %v6783, %v6785
      %v6793 = vsel %vm5385, %v6772, 0
      %v6796 = vsel %vm5385, %v6773, 0
      %v6798 = vsel %vm5392, %v6787, 0
      %v6800 = vsel %vm5392, %v6788, 0
      %v6802 = vsel %vm5392, %v6789, 0
      %v6804 = vsel %vm5392, %v6790, 0
      %v6806 = vsel %vm5392, %v6791, 0
      %6808 = vmatpush.msra.mxu0 0.0
      %6809 = vmatpush.msra.mxu0 0.0
      %6810 = vmatpush.msra.mxu0 0.0
      %6811 = vmatpush.msra.mxu0 0.0
      %6812 = vmatpush.msra.mxu0 0.0
      %6813 = vmatpush.msra.mxu0 0.0
      %6814 = vmatpush.msra.mxu0 0.0
      %6815 = vmatpush.msra.mxu0 0.0
      %6816 = vmatpush.msra.mxu0 0.0
      %6817 = vmatpush.msra.mxu0 0.0
      %6818 = vmatpush.msra.mxu0 0.0
      %6819 = vmatpush.msra.mxu0 0.0
      %6820 = vmatpush.msra.mxu0 0.0
      %6821 = vmatpush.msra.mxu0 0.0
      %6822 = vmatpush.msra.mxu0 0.0
      %6823 = vmatpush.msra.mxu0 %v6798
      %6824 = vmatmul.f32.gmra.mxu0 %v6793
      %v6825 = vpop.f32.mrf.mxu0
      %v6826 = vadd.f32 0.0, %v6825
      %6827 = vmatmul.f32.gmra.mxu0 %v6796
      %v6828 = vpop.f32.mrf.mxu0
      %v6829 = vadd.f32 0.0, %v6828
      %6830 = vdwg.mxu0
      %6831 = vmatpush.msra.mxu0 0.0
      %6832 = vmatpush.msra.mxu0 0.0
      %6833 = vmatpush.msra.mxu0 0.0
      %6834 = vmatpush.msra.mxu0 0.0
      %6835 = vmatpush.msra.mxu0 0.0
      %6836 = vmatpush.msra.mxu0 0.0
      %6837 = vmatpush.msra.mxu0 0.0
      %6838 = vmatpush.msra.mxu0 0.0
      %6839 = vmatpush.msra.mxu0 0.0
      %6840 = vmatpush.msra.mxu0 0.0
      %6841 = vmatpush.msra.mxu0 0.0
      %6842 = vmatpush.msra.mxu0 0.0
      %6843 = vmatpush.msra.mxu0 0.0
      %6844 = vmatpush.msra.mxu0 0.0
      %6845 = vmatpush.msra.mxu0 0.0
      %6846 = vmatpush.msra.mxu0 %v6800
      %6847 = vmatmul.f32.gmra.mxu0 %v6793
      %v6848 = vpop.f32.mrf.mxu0
      %v6849 = vadd.f32 0.0, %v6848
      %6850 = vmatmul.f32.gmra.mxu0 %v6796
      %v6851 = vpop.f32.mrf.mxu0
      %v6852 = vadd.f32 0.0, %v6851
      %6853 = vdwg.mxu0
      %6854 = vmatpush.msra.mxu0 0.0
      %6855 = vmatpush.msra.mxu0 0.0
      %6856 = vmatpush.msra.mxu0 0.0
      %6857 = vmatpush.msra.mxu0 0.0
      %6858 = vmatpush.msra.mxu0 0.0
      %6859 = vmatpush.msra.mxu0 0.0
      %6860 = vmatpush.msra.mxu0 0.0
      %6861 = vmatpush.msra.mxu0 0.0
      %6862 = vmatpush.msra.mxu0 0.0
      %6863 = vmatpush.msra.mxu0 0.0
      %6864 = vmatpush.msra.mxu0 0.0
      %6865 = vmatpush.msra.mxu0 0.0
      %6866 = vmatpush.msra.mxu0 0.0
      %6867 = vmatpush.msra.mxu0 0.0
      %6868 = vmatpush.msra.mxu0 0.0
      %6869 = vmatpush.msra.mxu0 %v6802
      %6870 = vmatmul.f32.gmra.mxu0 %v6793
      %v6871 = vpop.f32.mrf.mxu0
      %v6872 = vadd.f32 0.0, %v6871
      %6873 = vmatmul.f32.gmra.mxu0 %v6796
      %v6874 = vpop.f32.mrf.mxu0
      %v6875 = vadd.f32 0.0, %v6874
      %6876 = vdwg.mxu0
      %6877 = vmatpush.msra.mxu0 0.0
      %6878 = vmatpush.msra.mxu0 0.0
      %6879 = vmatpush.msra.mxu0 0.0
      %6880 = vmatpush.msra.mxu0 0.0
      %6881 = vmatpush.msra.mxu0 0.0
      %6882 = vmatpush.msra.mxu0 0.0
      %6883 = vmatpush.msra.mxu0 0.0
      %6884 = vmatpush.msra.mxu0 0.0
      %6885 = vmatpush.msra.mxu0 0.0
      %6886 = vmatpush.msra.mxu0 0.0
      %6887 = vmatpush.msra.mxu0 0.0
      %6888 = vmatpush.msra.mxu0 0.0
      %6889 = vmatpush.msra.mxu0 0.0
      %6890 = vmatpush.msra.mxu0 0.0
      %6891 = vmatpush.msra.mxu0 0.0
      %6892 = vmatpush.msra.mxu0 %v6804
      %6893 = vmatmul.f32.gmra.mxu0 %v6793
      %v6894 = vpop.f32.mrf.mxu0
      %v6895 = vadd.f32 0.0, %v6894
      %6896 = vmatmul.f32.gmra.mxu0 %v6796
      %v6897 = vpop.f32.mrf.mxu0
      %v6898 = vadd.f32 0.0, %v6897
      %6899 = vdwg.mxu0
      %6900 = vmatpush.msra.mxu0 0.0
      %6901 = vmatpush.msra.mxu0 0.0
      %6902 = vmatpush.msra.mxu0 0.0
      %6903 = vmatpush.msra.mxu0 0.0
      %6904 = vmatpush.msra.mxu0 0.0
      %6905 = vmatpush.msra.mxu0 0.0
      %6906 = vmatpush.msra.mxu0 0.0
      %6907 = vmatpush.msra.mxu0 0.0
      %6908 = vmatpush.msra.mxu0 0.0
      %6909 = vmatpush.msra.mxu0 0.0
      %6910 = vmatpush.msra.mxu0 0.0
      %6911 = vmatpush.msra.mxu0 0.0
      %6912 = vmatpush.msra.mxu0 0.0
      %6913 = vmatpush.msra.mxu0 0.0
      %6914 = vmatpush.msra.mxu0 0.0
      %6915 = vmatpush.msra.mxu0 %v6806
      %6916 = vmatmul.f32.gmra.mxu0 %v6793
      %v6917 = vpop.f32.mrf.mxu0
      %v6918 = vadd.f32 0.0, %v6917
      %6919 = vmatmul.f32.gmra.mxu0 %v6796
      %v6920 = vpop.f32.mrf.mxu0
      %v6921 = vadd.f32 0.0, %v6920
      %6922 = vdwg.mxu0
      %v6923 = vadd.f32 %v6761, %v6826
      %v6924 = vadd.f32 %v6762, %v6849
      %v6925 = vadd.f32 %v6763, %v6872
      %v6926 = vadd.f32 %v6764, %v6895
      %v6927 = vadd.f32 %v6765, %v6918
      %v6928 = vadd.f32 %v6766, %v6829
      %v6929 = vadd.f32 %v6767, %v6852
      %v6930 = vadd.f32 %v6768, %v6875
      %v6931 = vadd.f32 %v6769, %v6898
      %v6932 = vadd.f32 %v6770, %v6921
      %s6933 = scalar_lea.vmem %s3, 160
      %v6934 = vld [vmem:[%s6933] sm:$0xff]
      %v6935 = vld [vmem:[%s6933 + $0x8] sm:$0xff]
      %v6937 = vsel %vm5385, %v6934, 0
      %v6940 = vsel %vm5385, %v6935, 0
      %v6942 = vsel %vm5392, %v5359, 0
      %6944 = vmatpush.msra.mxu0 0.0
      %6945 = vmatpush.msra.mxu0 0.0
      %6946 = vmatpush.msra.mxu0 0.0
      %6947 = vmatpush.msra.mxu0 0.0
      %6948 = vmatpush.msra.mxu0 0.0
      %6949 = vmatpush.msra.mxu0 0.0
      %6950 = vmatpush.msra.mxu0 0.0
      %6951 = vmatpush.msra.mxu0 0.0
      %6952 = vmatpush.msra.mxu0 0.0
      %6953 = vmatpush.msra.mxu0 0.0
      %6954 = vmatpush.msra.mxu0 0.0
      %6955 = vmatpush.msra.mxu0 0.0
      %6956 = vmatpush.msra.mxu0 0.0
      %6957 = vmatpush.msra.mxu0 0.0
      %6958 = vmatpush.msra.mxu0 0.0
      %6959 = vmatpush.msra.mxu0 %v5526
      %6960 = vmatmul.f32.gmra.mxu0 %v6937
      %v6961 = vpop.f32.mrf.mxu0
      %v6962 = vadd.f32 0.0, %v6961
      %6963 = vmatmul.f32.gmra.mxu0 %v6940
      %v6964 = vpop.f32.mrf.mxu0
      %v6965 = vadd.f32 0.0, %v6964
      %6966 = vdwg.mxu0
      %6967 = vmatpush.msra.mxu0 0.0
      %6968 = vmatpush.msra.mxu0 0.0
      %6969 = vmatpush.msra.mxu0 0.0
      %6970 = vmatpush.msra.mxu0 0.0
      %6971 = vmatpush.msra.mxu0 0.0
      %6972 = vmatpush.msra.mxu0 0.0
      %6973 = vmatpush.msra.mxu0 0.0
      %6974 = vmatpush.msra.mxu0 0.0
      %6975 = vmatpush.msra.mxu0 0.0
      %6976 = vmatpush.msra.mxu0 0.0
      %6977 = vmatpush.msra.mxu0 0.0
      %6978 = vmatpush.msra.mxu0 0.0
      %6979 = vmatpush.msra.mxu0 0.0
      %6980 = vmatpush.msra.mxu0 0.0
      %6981 = vmatpush.msra.mxu0 0.0
      %6982 = vmatpush.msra.mxu0 %v5528
      %6983 = vmatmul.f32.gmra.mxu0 %v6937
      %v6984 = vpop.f32.mrf.mxu0
      %v6985 = vadd.f32 0.0, %v6984
      %6986 = vmatmul.f32.gmra.mxu0 %v6940
      %v6987 = vpop.f32.mrf.mxu0
      %v6988 = vadd.f32 0.0, %v6987
      %6989 = vdwg.mxu0
      %6990 = vmatpush.msra.mxu0 0.0
      %6991 = vmatpush.msra.mxu0 0.0
      %6992 = vmatpush.msra.mxu0 0.0
      %6993 = vmatpush.msra.mxu0 0.0
      %6994 = vmatpush.msra.mxu0 0.0
      %6995 = vmatpush.msra.mxu0 0.0
      %6996 = vmatpush.msra.mxu0 0.0
      %6997 = vmatpush.msra.mxu0 0.0
      %6998 = vmatpush.msra.mxu0 0.0
      %6999 = vmatpush.msra.mxu0 0.0
      %7000 = vmatpush.msra.mxu0 0.0
      %7001 = vmatpush.msra.mxu0 0.0
      %7002 = vmatpush.msra.mxu0 0.0
      %7003 = vmatpush.msra.mxu0 0.0
      %7004 = vmatpush.msra.mxu0 0.0
      %7005 = vmatpush.msra.mxu0 %v5530
      %7006 = vmatmul.f32.gmra.mxu0 %v6937
      %v7007 = vpop.f32.mrf.mxu0
      %v7008 = vadd.f32 0.0, %v7007
      %7009 = vmatmul.f32.gmra.mxu0 %v6940
      %v7010 = vpop.f32.mrf.mxu0
      %v7011 = vadd.f32 0.0, %v7010
      %7012 = vdwg.mxu0
      %7013 = vmatpush.msra.mxu0 0.0
      %7014 = vmatpush.msra.mxu0 0.0
      %7015 = vmatpush.msra.mxu0 0.0
      %7016 = vmatpush.msra.mxu0 0.0
      %7017 = vmatpush.msra.mxu0 0.0
      %7018 = vmatpush.msra.mxu0 0.0
      %7019 = vmatpush.msra.mxu0 0.0
      %7020 = vmatpush.msra.mxu0 0.0
      %7021 = vmatpush.msra.mxu0 0.0
      %7022 = vmatpush.msra.mxu0 0.0
      %7023 = vmatpush.msra.mxu0 0.0
      %7024 = vmatpush.msra.mxu0 0.0
      %7025 = vmatpush.msra.mxu0 0.0
      %7026 = vmatpush.msra.mxu0 0.0
      %7027 = vmatpush.msra.mxu0 0.0
      %7028 = vmatpush.msra.mxu0 %v5532
      %7029 = vmatmul.f32.gmra.mxu0 %v6937
      %v7030 = vpop.f32.mrf.mxu0
      %v7031 = vadd.f32 0.0, %v7030
      %7032 = vmatmul.f32.gmra.mxu0 %v6940
      %v7033 = vpop.f32.mrf.mxu0
      %v7034 = vadd.f32 0.0, %v7033
      %7035 = vdwg.mxu0
      %7036 = vmatpush.msra.mxu0 0.0
      %7037 = vmatpush.msra.mxu0 0.0
      %7038 = vmatpush.msra.mxu0 0.0
      %7039 = vmatpush.msra.mxu0 0.0
      %7040 = vmatpush.msra.mxu0 0.0
      %7041 = vmatpush.msra.mxu0 0.0
      %7042 = vmatpush.msra.mxu0 0.0
      %7043 = vmatpush.msra.mxu0 0.0
      %7044 = vmatpush.msra.mxu0 0.0
      %7045 = vmatpush.msra.mxu0 0.0
      %7046 = vmatpush.msra.mxu0 0.0
      %7047 = vmatpush.msra.mxu0 0.0
      %7048 = vmatpush.msra.mxu0 0.0
      %7049 = vmatpush.msra.mxu0 0.0
      %7050 = vmatpush.msra.mxu0 0.0
      %7051 = vmatpush.msra.mxu0 %v6942
      %7052 = vmatmul.f32.gmra.mxu0 %v6937
      %v7053 = vpop.f32.mrf.mxu0
      %v7054 = vadd.f32 0.0, %v7053
      %7055 = vmatmul.f32.gmra.mxu0 %v6940
      %v7056 = vpop.f32.mrf.mxu0
      %v7057 = vadd.f32 0.0, %v7056
      %7058 = vdwg.mxu0
      %v7059 = vadd.f32 %v6923, %v6962
      %v7060 = vadd.f32 %v6924, %v6985
      %v7061 = vadd.f32 %v6925, %v7008
      %v7062 = vadd.f32 %v6926, %v7031
      %v7063 = vadd.f32 %v6927, %v7054
      %v7064 = vadd.f32 %v6928, %v6965
      %v7065 = vadd.f32 %v6929, %v6988
      %v7066 = vadd.f32 %v6930, %v7011
      %v7067 = vadd.f32 %v6931, %v7034
      %v7068 = vadd.f32 %v6932, %v7057
      %s7069 = scalar_lea.vmem %s3, 176
      %v7070 = vld [vmem:[%s7069] sm:$0xff]
      %v7071 = vld [vmem:[%s7069 + $0x8] sm:$0xff]
      %7072 = vrot.lane.b32.xlu0 %v5359, 126
      %v7073 = vpop.permute.xlu0 %7072
      %v7074 = vsel %vm631, %v5380, %v7073
      %v7076 = vsel %vm5385, %v7070, 0
      %v7079 = vsel %vm5385, %v7071, 0
      %v7081 = vsel %vm5392, %v7074, 0
      %v7083 = vsel %vm5392, %v7073, 0
      %7085 = vmatpush.msra.mxu0 0.0
      %7086 = vmatpush.msra.mxu0 0.0
      %7087 = vmatpush.msra.mxu0 0.0
      %7088 = vmatpush.msra.mxu0 0.0
      %7089 = vmatpush.msra.mxu0 0.0
      %7090 = vmatpush.msra.mxu0 0.0
      %7091 = vmatpush.msra.mxu0 0.0
      %7092 = vmatpush.msra.mxu0 0.0
      %7093 = vmatpush.msra.mxu0 0.0
      %7094 = vmatpush.msra.mxu0 0.0
      %7095 = vmatpush.msra.mxu0 0.0
      %7096 = vmatpush.msra.mxu0 0.0
      %7097 = vmatpush.msra.mxu0 0.0
      %7098 = vmatpush.msra.mxu0 0.0
      %7099 = vmatpush.msra.mxu0 0.0
      %7100 = vmatpush.msra.mxu0 %v5395
      %7101 = vmatmul.f32.gmra.mxu0 %v7076
      %v7102 = vpop.f32.mrf.mxu0
      %v7103 = vadd.f32 0.0, %v7102
      %7104 = vmatmul.f32.gmra.mxu0 %v7079
      %v7105 = vpop.f32.mrf.mxu0
      %v7106 = vadd.f32 0.0, %v7105
      %7107 = vdwg.mxu0
      %7108 = vmatpush.msra.mxu0 0.0
      %7109 = vmatpush.msra.mxu0 0.0
      %7110 = vmatpush.msra.mxu0 0.0
      %7111 = vmatpush.msra.mxu0 0.0
      %7112 = vmatpush.msra.mxu0 0.0
      %7113 = vmatpush.msra.mxu0 0.0
      %7114 = vmatpush.msra.mxu0 0.0
      %7115 = vmatpush.msra.mxu0 0.0
      %7116 = vmatpush.msra.mxu0 0.0
      %7117 = vmatpush.msra.mxu0 0.0
      %7118 = vmatpush.msra.mxu0 0.0
      %7119 = vmatpush.msra.mxu0 0.0
      %7120 = vmatpush.msra.mxu0 0.0
      %7121 = vmatpush.msra.mxu0 0.0
      %7122 = vmatpush.msra.mxu0 0.0
      %7123 = vmatpush.msra.mxu0 %v5397
      %7124 = vmatmul.f32.gmra.mxu0 %v7076
      %v7125 = vpop.f32.mrf.mxu0
      %v7126 = vadd.f32 0.0, %v7125
      %7127 = vmatmul.f32.gmra.mxu0 %v7079
      %v7128 = vpop.f32.mrf.mxu0
      %v7129 = vadd.f32 0.0, %v7128
      %7130 = vdwg.mxu0
      %7131 = vmatpush.msra.mxu0 0.0
      %7132 = vmatpush.msra.mxu0 0.0
      %7133 = vmatpush.msra.mxu0 0.0
      %7134 = vmatpush.msra.mxu0 0.0
      %7135 = vmatpush.msra.mxu0 0.0
      %7136 = vmatpush.msra.mxu0 0.0
      %7137 = vmatpush.msra.mxu0 0.0
      %7138 = vmatpush.msra.mxu0 0.0
      %7139 = vmatpush.msra.mxu0 0.0
      %7140 = vmatpush.msra.mxu0 0.0
      %7141 = vmatpush.msra.mxu0 0.0
      %7142 = vmatpush.msra.mxu0 0.0
      %7143 = vmatpush.msra.mxu0 0.0
      %7144 = vmatpush.msra.mxu0 0.0
      %7145 = vmatpush.msra.mxu0 0.0
      %7146 = vmatpush.msra.mxu0 %v5399
      %7147 = vmatmul.f32.gmra.mxu0 %v7076
      %v7148 = vpop.f32.mrf.mxu0
      %v7149 = vadd.f32 0.0, %v7148
      %7150 = vmatmul.f32.gmra.mxu0 %v7079
      %v7151 = vpop.f32.mrf.mxu0
      %v7152 = vadd.f32 0.0, %v7151
      %7153 = vdwg.mxu0
      %7154 = vmatpush.msra.mxu0 0.0
      %7155 = vmatpush.msra.mxu0 0.0
      %7156 = vmatpush.msra.mxu0 0.0
      %7157 = vmatpush.msra.mxu0 0.0
      %7158 = vmatpush.msra.mxu0 0.0
      %7159 = vmatpush.msra.mxu0 0.0
      %7160 = vmatpush.msra.mxu0 0.0
      %7161 = vmatpush.msra.mxu0 0.0
      %7162 = vmatpush.msra.mxu0 0.0
      %7163 = vmatpush.msra.mxu0 0.0
      %7164 = vmatpush.msra.mxu0 0.0
      %7165 = vmatpush.msra.mxu0 0.0
      %7166 = vmatpush.msra.mxu0 0.0
      %7167 = vmatpush.msra.mxu0 0.0
      %7168 = vmatpush.msra.mxu0 0.0
      %7169 = vmatpush.msra.mxu0 %v7081
      %7170 = vmatmul.f32.gmra.mxu0 %v7076
      %v7171 = vpop.f32.mrf.mxu0
      %v7172 = vadd.f32 0.0, %v7171
      %7173 = vmatmul.f32.gmra.mxu0 %v7079
      %v7174 = vpop.f32.mrf.mxu0
      %v7175 = vadd.f32 0.0, %v7174
      %7176 = vdwg.mxu0
      %7177 = vmatpush.msra.mxu0 0.0
      %7178 = vmatpush.msra.mxu0 0.0
      %7179 = vmatpush.msra.mxu0 0.0
      %7180 = vmatpush.msra.mxu0 0.0
      %7181 = vmatpush.msra.mxu0 0.0
      %7182 = vmatpush.msra.mxu0 0.0
      %7183 = vmatpush.msra.mxu0 0.0
      %7184 = vmatpush.msra.mxu0 0.0
      %7185 = vmatpush.msra.mxu0 0.0
      %7186 = vmatpush.msra.mxu0 0.0
      %7187 = vmatpush.msra.mxu0 0.0
      %7188 = vmatpush.msra.mxu0 0.0
      %7189 = vmatpush.msra.mxu0 0.0
      %7190 = vmatpush.msra.mxu0 0.0
      %7191 = vmatpush.msra.mxu0 0.0
      %7192 = vmatpush.msra.mxu0 %v7083
      %7193 = vmatmul.f32.gmra.mxu0 %v7076
      %v7194 = vpop.f32.mrf.mxu0
      %v7195 = vadd.f32 0.0, %v7194
      %7196 = vmatmul.f32.gmra.mxu0 %v7079
      %v7197 = vpop.f32.mrf.mxu0
      %v7198 = vadd.f32 0.0, %v7197
      %7199 = vdwg.mxu0
      %v7200 = vadd.f32 %v7059, %v7103
      %v7201 = vadd.f32 %v7060, %v7126
      %v7202 = vadd.f32 %v7061, %v7149
      %v7203 = vadd.f32 %v7062, %v7172
      %v7204 = vadd.f32 %v7063, %v7195
      %v7205 = vadd.f32 %v7064, %v7106
      %v7206 = vadd.f32 %v7065, %v7129
      %v7207 = vadd.f32 %v7066, %v7152
      %v7208 = vadd.f32 %v7067, %v7175
      %v7209 = vadd.f32 %v7068, %v7198
      %s7210 = scalar_lea.vmem %s3, 192
      %v7211 = vld [vmem:[%s7210] sm:$0xff]
      %v7212 = vld [vmem:[%s7210 + $0x8] sm:$0xff]
      %7213 = vrot.lane.b32.xlu0 %v5359, 124
      %v7214 = vpop.permute.xlu0 %7213
      %v7215 = vsel %vm1033, %v5661, %v7214
      %v7217 = vsel %vm5385, %v7211, 0
      %v7220 = vsel %vm5385, %v7212, 0
      %v7222 = vsel %vm5392, %v7215, 0
      %v7224 = vsel %vm5392, %v7214, 0
      %7226 = vmatpush.msra.mxu0 0.0
      %7227 = vmatpush.msra.mxu0 0.0
      %7228 = vmatpush.msra.mxu0 0.0
      %7229 = vmatpush.msra.mxu0 0.0
      %7230 = vmatpush.msra.mxu0 0.0
      %7231 = vmatpush.msra.mxu0 0.0
      %7232 = vmatpush.msra.mxu0 0.0
      %7233 = vmatpush.msra.mxu0 0.0
      %7234 = vmatpush.msra.mxu0 0.0
      %7235 = vmatpush.msra.mxu0 0.0
      %7236 = vmatpush.msra.mxu0 0.0
      %7237 = vmatpush.msra.mxu0 0.0
      %7238 = vmatpush.msra.mxu0 0.0
      %7239 = vmatpush.msra.mxu0 0.0
      %7240 = vmatpush.msra.mxu0 0.0
      %7241 = vmatpush.msra.mxu0 %v5674
      %7242 = vmatmul.f32.gmra.mxu0 %v7217
      %v7243 = vpop.f32.mrf.mxu0
      %v7244 = vadd.f32 0.0, %v7243
      %7245 = vmatmul.f32.gmra.mxu0 %v7220
      %v7246 = vpop.f32.mrf.mxu0
      %v7247 = vadd.f32 0.0, %v7246
      %7248 = vdwg.mxu0
      %7249 = vmatpush.msra.mxu0 0.0
      %7250 = vmatpush.msra.mxu0 0.0
      %7251 = vmatpush.msra.mxu0 0.0
      %7252 = vmatpush.msra.mxu0 0.0
      %7253 = vmatpush.msra.mxu0 0.0
      %7254 = vmatpush.msra.mxu0 0.0
      %7255 = vmatpush.msra.mxu0 0.0
      %7256 = vmatpush.msra.mxu0 0.0
      %7257 = vmatpush.msra.mxu0 0.0
      %7258 = vmatpush.msra.mxu0 0.0
      %7259 = vmatpush.msra.mxu0 0.0
      %7260 = vmatpush.msra.mxu0 0.0
      %7261 = vmatpush.msra.mxu0 0.0
      %7262 = vmatpush.msra.mxu0 0.0
      %7263 = vmatpush.msra.mxu0 0.0
      %7264 = vmatpush.msra.mxu0 %v5676
      %7265 = vmatmul.f32.gmra.mxu0 %v7217
      %v7266 = vpop.f32.mrf.mxu0
      %v7267 = vadd.f32 0.0, %v7266
      %7268 = vmatmul.f32.gmra.mxu0 %v7220
      %v7269 = vpop.f32.mrf.mxu0
      %v7270 = vadd.f32 0.0, %v7269
      %7271 = vdwg.mxu0
      %7272 = vmatpush.msra.mxu0 0.0
      %7273 = vmatpush.msra.mxu0 0.0
      %7274 = vmatpush.msra.mxu0 0.0
      %7275 = vmatpush.msra.mxu0 0.0
      %7276 = vmatpush.msra.mxu0 0.0
      %7277 = vmatpush.msra.mxu0 0.0
      %7278 = vmatpush.msra.mxu0 0.0
      %7279 = vmatpush.msra.mxu0 0.0
      %7280 = vmatpush.msra.mxu0 0.0
      %7281 = vmatpush.msra.mxu0 0.0
      %7282 = vmatpush.msra.mxu0 0.0
      %7283 = vmatpush.msra.mxu0 0.0
      %7284 = vmatpush.msra.mxu0 0.0
      %7285 = vmatpush.msra.mxu0 0.0
      %7286 = vmatpush.msra.mxu0 0.0
      %7287 = vmatpush.msra.mxu0 %v5678
      %7288 = vmatmul.f32.gmra.mxu0 %v7217
      %v7289 = vpop.f32.mrf.mxu0
      %v7290 = vadd.f32 0.0, %v7289
      %7291 = vmatmul.f32.gmra.mxu0 %v7220
      %v7292 = vpop.f32.mrf.mxu0
      %v7293 = vadd.f32 0.0, %v7292
      %7294 = vdwg.mxu0
      %7295 = vmatpush.msra.mxu0 0.0
      %7296 = vmatpush.msra.mxu0 0.0
      %7297 = vmatpush.msra.mxu0 0.0
      %7298 = vmatpush.msra.mxu0 0.0
      %7299 = vmatpush.msra.mxu0 0.0
      %7300 = vmatpush.msra.mxu0 0.0
      %7301 = vmatpush.msra.mxu0 0.0
      %7302 = vmatpush.msra.mxu0 0.0
      %7303 = vmatpush.msra.mxu0 0.0
      %7304 = vmatpush.msra.mxu0 0.0
      %7305 = vmatpush.msra.mxu0 0.0
      %7306 = vmatpush.msra.mxu0 0.0
      %7307 = vmatpush.msra.mxu0 0.0
      %7308 = vmatpush.msra.mxu0 0.0
      %7309 = vmatpush.msra.mxu0 0.0
      %7310 = vmatpush.msra.mxu0 %v7222
      %7311 = vmatmul.f32.gmra.mxu0 %v7217
      %v7312 = vpop.f32.mrf.mxu0
      %v7313 = vadd.f32 0.0, %v7312
      %7314 = vmatmul.f32.gmra.mxu0 %v7220
      %v7315 = vpop.f32.mrf.mxu0
      %v7316 = vadd.f32 0.0, %v7315
      %7317 = vdwg.mxu0
      %7318 = vmatpush.msra.mxu0 0.0
      %7319 = vmatpush.msra.mxu0 0.0
      %7320 = vmatpush.msra.mxu0 0.0
      %7321 = vmatpush.msra.mxu0 0.0
      %7322 = vmatpush.msra.mxu0 0.0
      %7323 = vmatpush.msra.mxu0 0.0
      %7324 = vmatpush.msra.mxu0 0.0
      %7325 = vmatpush.msra.mxu0 0.0
      %7326 = vmatpush.msra.mxu0 0.0
      %7327 = vmatpush.msra.mxu0 0.0
      %7328 = vmatpush.msra.mxu0 0.0
      %7329 = vmatpush.msra.mxu0 0.0
      %7330 = vmatpush.msra.mxu0 0.0
      %7331 = vmatpush.msra.mxu0 0.0
      %7332 = vmatpush.msra.mxu0 0.0
      %7333 = vmatpush.msra.mxu0 %v7224
      %7334 = vmatmul.f32.gmra.mxu0 %v7217
      %v7335 = vpop.f32.mrf.mxu0
      %v7336 = vadd.f32 0.0, %v7335
      %7337 = vmatmul.f32.gmra.mxu0 %v7220
      %v7338 = vpop.f32.mrf.mxu0
      %v7339 = vadd.f32 0.0, %v7338
      %7340 = vdwg.mxu0
      %v7341 = vadd.f32 %v7200, %v7244
      %v7342 = vadd.f32 %v7201, %v7267
      %v7343 = vadd.f32 %v7202, %v7290
      %v7344 = vadd.f32 %v7203, %v7313
      %v7345 = vadd.f32 %v7204, %v7336
      %v7346 = vadd.f32 %v7205, %v7247
      %v7347 = vadd.f32 %v7206, %v7270
      %v7348 = vadd.f32 %v7207, %v7293
      %v7349 = vadd.f32 %v7208, %v7316
      %v7350 = vadd.f32 %v7209, %v7339
      %s7351 = scalar_lea.vmem %s3, 208
      %v7352 = vld [vmem:[%s7351] sm:$0xff]
      %v7353 = vld [vmem:[%s7351 + $0x8] sm:$0xff]
      %7354 = vrot.lane.b32.xlu0 %v5359, 122
      %v7355 = vpop.permute.xlu0 %7354
      %v7356 = vsel %vm5820, %v5819, %v7355
      %v7358 = vsel %vm5385, %v7352, 0
      %v7361 = vsel %vm5385, %v7353, 0
      %v7363 = vsel %vm5392, %v7356, 0
      %v7365 = vsel %vm5392, %v7355, 0
      %7367 = vmatpush.msra.mxu0 0.0
      %7368 = vmatpush.msra.mxu0 0.0
      %7369 = vmatpush.msra.mxu0 0.0
      %7370 = vmatpush.msra.mxu0 0.0
      %7371 = vmatpush.msra.mxu0 0.0
      %7372 = vmatpush.msra.mxu0 0.0
      %7373 = vmatpush.msra.mxu0 0.0
      %7374 = vmatpush.msra.mxu0 0.0
      %7375 = vmatpush.msra.mxu0 0.0
      %7376 = vmatpush.msra.mxu0 0.0
      %7377 = vmatpush.msra.mxu0 0.0
      %7378 = vmatpush.msra.mxu0 0.0
      %7379 = vmatpush.msra.mxu0 0.0
      %7380 = vmatpush.msra.mxu0 0.0
      %7381 = vmatpush.msra.mxu0 0.0
      %7382 = vmatpush.msra.mxu0 %v5833
      %7383 = vmatmul.f32.gmra.mxu0 %v7358
      %v7384 = vpop.f32.mrf.mxu0
      %v7385 = vadd.f32 0.0, %v7384
      %7386 = vmatmul.f32.gmra.mxu0 %v7361
      %v7387 = vpop.f32.mrf.mxu0
      %v7388 = vadd.f32 0.0, %v7387
      %7389 = vdwg.mxu0
      %7390 = vmatpush.msra.mxu0 0.0
      %7391 = vmatpush.msra.mxu0 0.0
      %7392 = vmatpush.msra.mxu0 0.0
      %7393 = vmatpush.msra.mxu0 0.0
      %7394 = vmatpush.msra.mxu0 0.0
      %7395 = vmatpush.msra.mxu0 0.0
      %7396 = vmatpush.msra.mxu0 0.0
      %7397 = vmatpush.msra.mxu0 0.0
      %7398 = vmatpush.msra.mxu0 0.0
      %7399 = vmatpush.msra.mxu0 0.0
      %7400 = vmatpush.msra.mxu0 0.0
      %7401 = vmatpush.msra.mxu0 0.0
      %7402 = vmatpush.msra.mxu0 0.0
      %7403 = vmatpush.msra.mxu0 0.0
      %7404 = vmatpush.msra.mxu0 0.0
      %7405 = vmatpush.msra.mxu0 %v5835
      %7406 = vmatmul.f32.gmra.mxu0 %v7358
      %v7407 = vpop.f32.mrf.mxu0
      %v7408 = vadd.f32 0.0, %v7407
      %7409 = vmatmul.f32.gmra.mxu0 %v7361
      %v7410 = vpop.f32.mrf.mxu0
      %v7411 = vadd.f32 0.0, %v7410
      %7412 = vdwg.mxu0
      %7413 = vmatpush.msra.mxu0 0.0
      %7414 = vmatpush.msra.mxu0 0.0
      %7415 = vmatpush.msra.mxu0 0.0
      %7416 = vmatpush.msra.mxu0 0.0
      %7417 = vmatpush.msra.mxu0 0.0
      %7418 = vmatpush.msra.mxu0 0.0
      %7419 = vmatpush.msra.mxu0 0.0
      %7420 = vmatpush.msra.mxu0 0.0
      %7421 = vmatpush.msra.mxu0 0.0
      %7422 = vmatpush.msra.mxu0 0.0
      %7423 = vmatpush.msra.mxu0 0.0
      %7424 = vmatpush.msra.mxu0 0.0
      %7425 = vmatpush.msra.mxu0 0.0
      %7426 = vmatpush.msra.mxu0 0.0
      %7427 = vmatpush.msra.mxu0 0.0
      %7428 = vmatpush.msra.mxu0 %v5837
      %7429 = vmatmul.f32.gmra.mxu0 %v7358
      %v7430 = vpop.f32.mrf.mxu0
      %v7431 = vadd.f32 0.0, %v7430
      %7432 = vmatmul.f32.gmra.mxu0 %v7361
      %v7433 = vpop.f32.mrf.mxu0
      %v7434 = vadd.f32 0.0, %v7433
      %7435 = vdwg.mxu0
      %7436 = vmatpush.msra.mxu0 0.0
      %7437 = vmatpush.msra.mxu0 0.0
      %7438 = vmatpush.msra.mxu0 0.0
      %7439 = vmatpush.msra.mxu0 0.0
      %7440 = vmatpush.msra.mxu0 0.0
      %7441 = vmatpush.msra.mxu0 0.0
      %7442 = vmatpush.msra.mxu0 0.0
      %7443 = vmatpush.msra.mxu0 0.0
      %7444 = vmatpush.msra.mxu0 0.0
      %7445 = vmatpush.msra.mxu0 0.0
      %7446 = vmatpush.msra.mxu0 0.0
      %7447 = vmatpush.msra.mxu0 0.0
      %7448 = vmatpush.msra.mxu0 0.0
      %7449 = vmatpush.msra.mxu0 0.0
      %7450 = vmatpush.msra.mxu0 0.0
      %7451 = vmatpush.msra.mxu0 %v7363
      %7452 = vmatmul.f32.gmra.mxu0 %v7358
      %v7453 = vpop.f32.mrf.mxu0
      %v7454 = vadd.f32 0.0, %v7453
      %7455 = vmatmul.f32.gmra.mxu0 %v7361
      %v7456 = vpop.f32.mrf.mxu0
      %v7457 = vadd.f32 0.0, %v7456
      %7458 = vdwg.mxu0
      %7459 = vmatpush.msra.mxu0 0.0
      %7460 = vmatpush.msra.mxu0 0.0
      %7461 = vmatpush.msra.mxu0 0.0
      %7462 = vmatpush.msra.mxu0 0.0
      %7463 = vmatpush.msra.mxu0 0.0
      %7464 = vmatpush.msra.mxu0 0.0
      %7465 = vmatpush.msra.mxu0 0.0
      %7466 = vmatpush.msra.mxu0 0.0
      %7467 = vmatpush.msra.mxu0 0.0
      %7468 = vmatpush.msra.mxu0 0.0
      %7469 = vmatpush.msra.mxu0 0.0
      %7470 = vmatpush.msra.mxu0 0.0
      %7471 = vmatpush.msra.mxu0 0.0
      %7472 = vmatpush.msra.mxu0 0.0
      %7473 = vmatpush.msra.mxu0 0.0
      %7474 = vmatpush.msra.mxu0 %v7365
      %7475 = vmatmul.f32.gmra.mxu0 %v7358
      %v7476 = vpop.f32.mrf.mxu0
      %v7477 = vadd.f32 0.0, %v7476
      %7478 = vmatmul.f32.gmra.mxu0 %v7361
      %v7479 = vpop.f32.mrf.mxu0
      %v7480 = vadd.f32 0.0, %v7479
      %7481 = vdwg.mxu0
      %v7482 = vadd.f32 %v7341, %v7385
      %v7483 = vadd.f32 %v7342, %v7408
      %v7484 = vadd.f32 %v7343, %v7431
      %v7485 = vadd.f32 %v7344, %v7454
      %v7486 = vadd.f32 %v7345, %v7477
      %v7487 = vadd.f32 %v7346, %v7388
      %v7488 = vadd.f32 %v7347, %v7411
      %v7489 = vadd.f32 %v7348, %v7434
      %v7490 = vadd.f32 %v7349, %v7457
      %v7491 = vadd.f32 %v7350, %v7480
      %s7492 = scalar_lea.vmem %s3, 224
      %v7493 = vld [vmem:[%s7492] sm:$0xff]
      %v7494 = vld [vmem:[%s7492 + $0x8] sm:$0xff]
      %7495 = vrot.lane.b32.xlu0 %v5359, 120
      %v7496 = vpop.permute.xlu0 %7495
      %v7497 = vsel %vm5979, %v5978, %v7496
      %v7499 = vsel %vm5385, %v7493, 0
      %v7502 = vsel %vm5385, %v7494, 0
      %v7504 = vsel %vm5392, %v7497, 0
      %v7506 = vsel %vm5392, %v7496, 0
      %7508 = vmatpush.msra.mxu0 0.0
      %7509 = vmatpush.msra.mxu0 0.0
      %7510 = vmatpush.msra.mxu0 0.0
      %7511 = vmatpush.msra.mxu0 0.0
      %7512 = vmatpush.msra.mxu0 0.0
      %7513 = vmatpush.msra.mxu0 0.0
      %7514 = vmatpush.msra.mxu0 0.0
      %7515 = vmatpush.msra.mxu0 0.0
      %7516 = vmatpush.msra.mxu0 0.0
      %7517 = vmatpush.msra.mxu0 0.0
      %7518 = vmatpush.msra.mxu0 0.0
      %7519 = vmatpush.msra.mxu0 0.0
      %7520 = vmatpush.msra.mxu0 0.0
      %7521 = vmatpush.msra.mxu0 0.0
      %7522 = vmatpush.msra.mxu0 0.0
      %7523 = vmatpush.msra.mxu0 %v5992
      %7524 = vmatmul.f32.gmra.mxu0 %v7499
      %v7525 = vpop.f32.mrf.mxu0
      %v7526 = vadd.f32 0.0, %v7525
      %7527 = vmatmul.f32.gmra.mxu0 %v7502
      %v7528 = vpop.f32.mrf.mxu0
      %v7529 = vadd.f32 0.0, %v7528
      %7530 = vdwg.mxu0
      %7531 = vmatpush.msra.mxu0 0.0
      %7532 = vmatpush.msra.mxu0 0.0
      %7533 = vmatpush.msra.mxu0 0.0
      %7534 = vmatpush.msra.mxu0 0.0
      %7535 = vmatpush.msra.mxu0 0.0
      %7536 = vmatpush.msra.mxu0 0.0
      %7537 = vmatpush.msra.mxu0 0.0
      %7538 = vmatpush.msra.mxu0 0.0
      %7539 = vmatpush.msra.mxu0 0.0
      %7540 = vmatpush.msra.mxu0 0.0
      %7541 = vmatpush.msra.mxu0 0.0
      %7542 = vmatpush.msra.mxu0 0.0
      %7543 = vmatpush.msra.mxu0 0.0
      %7544 = vmatpush.msra.mxu0 0.0
      %7545 = vmatpush.msra.mxu0 0.0
      %7546 = vmatpush.msra.mxu0 %v5994
      %7547 = vmatmul.f32.gmra.mxu0 %v7499
      %v7548 = vpop.f32.mrf.mxu0
      %v7549 = vadd.f32 0.0, %v7548
      %7550 = vmatmul.f32.gmra.mxu0 %v7502
      %v7551 = vpop.f32.mrf.mxu0
      %v7552 = vadd.f32 0.0, %v7551
      %7553 = vdwg.mxu0
      %7554 = vmatpush.msra.mxu0 0.0
      %7555 = vmatpush.msra.mxu0 0.0
      %7556 = vmatpush.msra.mxu0 0.0
      %7557 = vmatpush.msra.mxu0 0.0
      %7558 = vmatpush.msra.mxu0 0.0
      %7559 = vmatpush.msra.mxu0 0.0
      %7560 = vmatpush.msra.mxu0 0.0
      %7561 = vmatpush.msra.mxu0 0.0
      %7562 = vmatpush.msra.mxu0 0.0
      %7563 = vmatpush.msra.mxu0 0.0
      %7564 = vmatpush.msra.mxu0 0.0
      %7565 = vmatpush.msra.mxu0 0.0
      %7566 = vmatpush.msra.mxu0 0.0
      %7567 = vmatpush.msra.mxu0 0.0
      %7568 = vmatpush.msra.mxu0 0.0
      %7569 = vmatpush.msra.mxu0 %v5996
      %7570 = vmatmul.f32.gmra.mxu0 %v7499
      %v7571 = vpop.f32.mrf.mxu0
      %v7572 = vadd.f32 0.0, %v7571
      %7573 = vmatmul.f32.gmra.mxu0 %v7502
      %v7574 = vpop.f32.mrf.mxu0
      %v7575 = vadd.f32 0.0, %v7574
      %7576 = vdwg.mxu0
      %7577 = vmatpush.msra.mxu0 0.0
      %7578 = vmatpush.msra.mxu0 0.0
      %7579 = vmatpush.msra.mxu0 0.0
      %7580 = vmatpush.msra.mxu0 0.0
      %7581 = vmatpush.msra.mxu0 0.0
      %7582 = vmatpush.msra.mxu0 0.0
      %7583 = vmatpush.msra.mxu0 0.0
      %7584 = vmatpush.msra.mxu0 0.0
      %7585 = vmatpush.msra.mxu0 0.0
      %7586 = vmatpush.msra.mxu0 0.0
      %7587 = vmatpush.msra.mxu0 0.0
      %7588 = vmatpush.msra.mxu0 0.0
      %7589 = vmatpush.msra.mxu0 0.0
      %7590 = vmatpush.msra.mxu0 0.0
      %7591 = vmatpush.msra.mxu0 0.0
      %7592 = vmatpush.msra.mxu0 %v7504
      %7593 = vmatmul.f32.gmra.mxu0 %v7499
      %v7594 = vpop.f32.mrf.mxu0
      %v7595 = vadd.f32 0.0, %v7594
      %7596 = vmatmul.f32.gmra.mxu0 %v7502
      %v7597 = vpop.f32.mrf.mxu0
      %v7598 = vadd.f32 0.0, %v7597
      %7599 = vdwg.mxu0
      %7600 = vmatpush.msra.mxu0 0.0
      %7601 = vmatpush.msra.mxu0 0.0
      %7602 = vmatpush.msra.mxu0 0.0
      %7603 = vmatpush.msra.mxu0 0.0
      %7604 = vmatpush.msra.mxu0 0.0
      %7605 = vmatpush.msra.mxu0 0.0
      %7606 = vmatpush.msra.mxu0 0.0
      %7607 = vmatpush.msra.mxu0 0.0
      %7608 = vmatpush.msra.mxu0 0.0
      %7609 = vmatpush.msra.mxu0 0.0
      %7610 = vmatpush.msra.mxu0 0.0
      %7611 = vmatpush.msra.mxu0 0.0
      %7612 = vmatpush.msra.mxu0 0.0
      %7613 = vmatpush.msra.mxu0 0.0
      %7614 = vmatpush.msra.mxu0 0.0
      %7615 = vmatpush.msra.mxu0 %v7506
      %7616 = vmatmul.f32.gmra.mxu0 %v7499
      %v7617 = vpop.f32.mrf.mxu0
      %v7618 = vadd.f32 0.0, %v7617
      %7619 = vmatmul.f32.gmra.mxu0 %v7502
      %v7620 = vpop.f32.mrf.mxu0
      %v7621 = vadd.f32 0.0, %v7620
      %7622 = vdwg.mxu0
      %v7623 = vadd.f32 %v7482, %v7526
      %v7624 = vadd.f32 %v7483, %v7549
      %v7625 = vadd.f32 %v7484, %v7572
      %v7626 = vadd.f32 %v7485, %v7595
      %v7627 = vadd.f32 %v7486, %v7618
      %v7628 = vadd.f32 %v7487, %v7529
      %v7629 = vadd.f32 %v7488, %v7552
      %v7630 = vadd.f32 %v7489, %v7575
      %v7631 = vadd.f32 %v7490, %v7598
      %v7632 = vadd.f32 %v7491, %v7621
      %s7633 = scalar_lea.vmem %s3, 240
      %v7634 = vld [vmem:[%s7633] sm:$0xff]
      %v7635 = vld [vmem:[%s7633 + $0x8] sm:$0xff]
      %7637 = vrot.lane.b32.xlu0 %v5360, 64
      %v7638 = vpop.permute.xlu0 %7637
      %v7639 = vsel %vm2262, %v6140, %v7638
      %v7641 = vsel %vm5385, %v7634, 0
      %v7644 = vsel %vm5385, %v7635, 0
      %v7646 = vsel %vm5392, %v7639, 0
      %7648 = vmatpush.msra.mxu0 0.0
      %7649 = vmatpush.msra.mxu0 0.0
      %7650 = vmatpush.msra.mxu0 0.0
      %7651 = vmatpush.msra.mxu0 0.0
      %7652 = vmatpush.msra.mxu0 0.0
      %7653 = vmatpush.msra.mxu0 0.0
      %7654 = vmatpush.msra.mxu0 0.0
      %7655 = vmatpush.msra.mxu0 0.0
      %7656 = vmatpush.msra.mxu0 0.0
      %7657 = vmatpush.msra.mxu0 0.0
      %7658 = vmatpush.msra.mxu0 0.0
      %7659 = vmatpush.msra.mxu0 0.0
      %7660 = vmatpush.msra.mxu0 0.0
      %7661 = vmatpush.msra.mxu0 0.0
      %7662 = vmatpush.msra.mxu0 0.0
      %7663 = vmatpush.msra.mxu0 %v6154
      %7664 = vmatmul.f32.gmra.mxu0 %v7641
      %v7665 = vpop.f32.mrf.mxu0
      %v7666 = vadd.f32 0.0, %v7665
      %7667 = vmatmul.f32.gmra.mxu0 %v7644
      %v7668 = vpop.f32.mrf.mxu0
      %v7669 = vadd.f32 0.0, %v7668
      %7670 = vdwg.mxu0
      %7671 = vmatpush.msra.mxu0 0.0
      %7672 = vmatpush.msra.mxu0 0.0
      %7673 = vmatpush.msra.mxu0 0.0
      %7674 = vmatpush.msra.mxu0 0.0
      %7675 = vmatpush.msra.mxu0 0.0
      %7676 = vmatpush.msra.mxu0 0.0
      %7677 = vmatpush.msra.mxu0 0.0
      %7678 = vmatpush.msra.mxu0 0.0
      %7679 = vmatpush.msra.mxu0 0.0
      %7680 = vmatpush.msra.mxu0 0.0
      %7681 = vmatpush.msra.mxu0 0.0
      %7682 = vmatpush.msra.mxu0 0.0
      %7683 = vmatpush.msra.mxu0 0.0
      %7684 = vmatpush.msra.mxu0 0.0
      %7685 = vmatpush.msra.mxu0 0.0
      %7686 = vmatpush.msra.mxu0 %v6156
      %7687 = vmatmul.f32.gmra.mxu0 %v7641
      %v7688 = vpop.f32.mrf.mxu0
      %v7689 = vadd.f32 0.0, %v7688
      %7690 = vmatmul.f32.gmra.mxu0 %v7644
      %v7691 = vpop.f32.mrf.mxu0
      %v7692 = vadd.f32 0.0, %v7691
      %7693 = vdwg.mxu0
      %7694 = vmatpush.msra.mxu0 0.0
      %7695 = vmatpush.msra.mxu0 0.0
      %7696 = vmatpush.msra.mxu0 0.0
      %7697 = vmatpush.msra.mxu0 0.0
      %7698 = vmatpush.msra.mxu0 0.0
      %7699 = vmatpush.msra.mxu0 0.0
      %7700 = vmatpush.msra.mxu0 0.0
      %7701 = vmatpush.msra.mxu0 0.0
      %7702 = vmatpush.msra.mxu0 0.0
      %7703 = vmatpush.msra.mxu0 0.0
      %7704 = vmatpush.msra.mxu0 0.0
      %7705 = vmatpush.msra.mxu0 0.0
      %7706 = vmatpush.msra.mxu0 0.0
      %7707 = vmatpush.msra.mxu0 0.0
      %7708 = vmatpush.msra.mxu0 0.0
      %7709 = vmatpush.msra.mxu0 %v6158
      %7710 = vmatmul.f32.gmra.mxu0 %v7641
      %v7711 = vpop.f32.mrf.mxu0
      %v7712 = vadd.f32 0.0, %v7711
      %7713 = vmatmul.f32.gmra.mxu0 %v7644
      %v7714 = vpop.f32.mrf.mxu0
      %v7715 = vadd.f32 0.0, %v7714
      %7716 = vdwg.mxu0
      %7717 = vmatpush.msra.mxu0 0.0
      %7718 = vmatpush.msra.mxu0 0.0
      %7719 = vmatpush.msra.mxu0 0.0
      %7720 = vmatpush.msra.mxu0 0.0
      %7721 = vmatpush.msra.mxu0 0.0
      %7722 = vmatpush.msra.mxu0 0.0
      %7723 = vmatpush.msra.mxu0 0.0
      %7724 = vmatpush.msra.mxu0 0.0
      %7725 = vmatpush.msra.mxu0 0.0
      %7726 = vmatpush.msra.mxu0 0.0
      %7727 = vmatpush.msra.mxu0 0.0
      %7728 = vmatpush.msra.mxu0 0.0
      %7729 = vmatpush.msra.mxu0 0.0
      %7730 = vmatpush.msra.mxu0 0.0
      %7731 = vmatpush.msra.mxu0 0.0
      %7732 = vmatpush.msra.mxu0 %v6160
      %7733 = vmatmul.f32.gmra.mxu0 %v7641
      %v7734 = vpop.f32.mrf.mxu0
      %v7735 = vadd.f32 0.0, %v7734
      %7736 = vmatmul.f32.gmra.mxu0 %v7644
      %v7737 = vpop.f32.mrf.mxu0
      %v7738 = vadd.f32 0.0, %v7737
      %7739 = vdwg.mxu0
      %7740 = vmatpush.msra.mxu0 0.0
      %7741 = vmatpush.msra.mxu0 0.0
      %7742 = vmatpush.msra.mxu0 0.0
      %7743 = vmatpush.msra.mxu0 0.0
      %7744 = vmatpush.msra.mxu0 0.0
      %7745 = vmatpush.msra.mxu0 0.0
      %7746 = vmatpush.msra.mxu0 0.0
      %7747 = vmatpush.msra.mxu0 0.0
      %7748 = vmatpush.msra.mxu0 0.0
      %7749 = vmatpush.msra.mxu0 0.0
      %7750 = vmatpush.msra.mxu0 0.0
      %7751 = vmatpush.msra.mxu0 0.0
      %7752 = vmatpush.msra.mxu0 0.0
      %7753 = vmatpush.msra.mxu0 0.0
      %7754 = vmatpush.msra.mxu0 0.0
      %7755 = vmatpush.msra.mxu0 %v7646
      %7756 = vmatmul.f32.gmra.mxu0 %v7641
      %v7757 = vpop.f32.mrf.mxu0
      %v7758 = vadd.f32 0.0, %v7757
      %7759 = vmatmul.f32.gmra.mxu0 %v7644
      %v7760 = vpop.f32.mrf.mxu0
      %v7761 = vadd.f32 0.0, %v7760
      %7762 = vdwg.mxu0
      %v7763 = vadd.f32 %v7623, %v7666
      %v7764 = vadd.f32 %v7624, %v7689
      %v7765 = vadd.f32 %v7625, %v7712
      %v7766 = vadd.f32 %v7626, %v7735
      %v7767 = vadd.f32 %v7627, %v7758
      %v7768 = vadd.f32 %v7628, %v7669
      %v7769 = vadd.f32 %v7629, %v7692
      %v7770 = vadd.f32 %v7630, %v7715
      %v7771 = vadd.f32 %v7631, %v7738
      %v7772 = vadd.f32 %v7632, %v7761
      %s7773 = scalar_lea.vmem %s3, 256
      %v7774 = vld [vmem:[%s7773] sm:$0xff]
      %v7775 = vld [vmem:[%s7773 + $0x8] sm:$0xff]
      %7776 = vrot.lane.b32.xlu0 %v5360, 62
      %v7777 = vpop.permute.xlu0 %7776
      %v7778 = vsel %vm2672, %v6301, %v7777
      %v7780 = vsel %vm5385, %v7774, 0
      %v7783 = vsel %vm5385, %v7775, 0
      %v7785 = vsel %vm5392, %v7778, 0
      %7787 = vmatpush.msra.mxu0 0.0
      %7788 = vmatpush.msra.mxu0 0.0
      %7789 = vmatpush.msra.mxu0 0.0
      %7790 = vmatpush.msra.mxu0 0.0
      %7791 = vmatpush.msra.mxu0 0.0
      %7792 = vmatpush.msra.mxu0 0.0
      %7793 = vmatpush.msra.mxu0 0.0
      %7794 = vmatpush.msra.mxu0 0.0
      %7795 = vmatpush.msra.mxu0 0.0
      %7796 = vmatpush.msra.mxu0 0.0
      %7797 = vmatpush.msra.mxu0 0.0
      %7798 = vmatpush.msra.mxu0 0.0
      %7799 = vmatpush.msra.mxu0 0.0
      %7800 = vmatpush.msra.mxu0 0.0
      %7801 = vmatpush.msra.mxu0 0.0
      %7802 = vmatpush.msra.mxu0 %v6315
      %7803 = vmatmul.f32.gmra.mxu0 %v7780
      %v7804 = vpop.f32.mrf.mxu0
      %v7805 = vadd.f32 0.0, %v7804
      %7806 = vmatmul.f32.gmra.mxu0 %v7783
      %v7807 = vpop.f32.mrf.mxu0
      %v7808 = vadd.f32 0.0, %v7807
      %7809 = vdwg.mxu0
      %7810 = vmatpush.msra.mxu0 0.0
      %7811 = vmatpush.msra.mxu0 0.0
      %7812 = vmatpush.msra.mxu0 0.0
      %7813 = vmatpush.msra.mxu0 0.0
      %7814 = vmatpush.msra.mxu0 0.0
      %7815 = vmatpush.msra.mxu0 0.0
      %7816 = vmatpush.msra.mxu0 0.0
      %7817 = vmatpush.msra.mxu0 0.0
      %7818 = vmatpush.msra.mxu0 0.0
      %7819 = vmatpush.msra.mxu0 0.0
      %7820 = vmatpush.msra.mxu0 0.0
      %7821 = vmatpush.msra.mxu0 0.0
      %7822 = vmatpush.msra.mxu0 0.0
      %7823 = vmatpush.msra.mxu0 0.0
      %7824 = vmatpush.msra.mxu0 0.0
      %7825 = vmatpush.msra.mxu0 %v6317
      %7826 = vmatmul.f32.gmra.mxu0 %v7780
      %v7827 = vpop.f32.mrf.mxu0
      %v7828 = vadd.f32 0.0, %v7827
      %7829 = vmatmul.f32.gmra.mxu0 %v7783
      %v7830 = vpop.f32.mrf.mxu0
      %v7831 = vadd.f32 0.0, %v7830
      %7832 = vdwg.mxu0
      %7833 = vmatpush.msra.mxu0 0.0
      %7834 = vmatpush.msra.mxu0 0.0
      %7835 = vmatpush.msra.mxu0 0.0
      %7836 = vmatpush.msra.mxu0 0.0
      %7837 = vmatpush.msra.mxu0 0.0
      %7838 = vmatpush.msra.mxu0 0.0
      %7839 = vmatpush.msra.mxu0 0.0
      %7840 = vmatpush.msra.mxu0 0.0
      %7841 = vmatpush.msra.mxu0 0.0
      %7842 = vmatpush.msra.mxu0 0.0
      %7843 = vmatpush.msra.mxu0 0.0
      %7844 = vmatpush.msra.mxu0 0.0
      %7845 = vmatpush.msra.mxu0 0.0
      %7846 = vmatpush.msra.mxu0 0.0
      %7847 = vmatpush.msra.mxu0 0.0
      %7848 = vmatpush.msra.mxu0 %v6319
      %7849 = vmatmul.f32.gmra.mxu0 %v7780
      %v7850 = vpop.f32.mrf.mxu0
      %v7851 = vadd.f32 0.0, %v7850
      %7852 = vmatmul.f32.gmra.mxu0 %v7783
      %v7853 = vpop.f32.mrf.mxu0
      %v7854 = vadd.f32 0.0, %v7853
      %7855 = vdwg.mxu0
      %7856 = vmatpush.msra.mxu0 0.0
      %7857 = vmatpush.msra.mxu0 0.0
      %7858 = vmatpush.msra.mxu0 0.0
      %7859 = vmatpush.msra.mxu0 0.0
      %7860 = vmatpush.msra.mxu0 0.0
      %7861 = vmatpush.msra.mxu0 0.0
      %7862 = vmatpush.msra.mxu0 0.0
      %7863 = vmatpush.msra.mxu0 0.0
      %7864 = vmatpush.msra.mxu0 0.0
      %7865 = vmatpush.msra.mxu0 0.0
      %7866 = vmatpush.msra.mxu0 0.0
      %7867 = vmatpush.msra.mxu0 0.0
      %7868 = vmatpush.msra.mxu0 0.0
      %7869 = vmatpush.msra.mxu0 0.0
      %7870 = vmatpush.msra.mxu0 0.0
      %7871 = vmatpush.msra.mxu0 %v6321
      %7872 = vmatmul.f32.gmra.mxu0 %v7780
      %v7873 = vpop.f32.mrf.mxu0
      %v7874 = vadd.f32 0.0, %v7873
      %7875 = vmatmul.f32.gmra.mxu0 %v7783
      %v7876 = vpop.f32.mrf.mxu0
      %v7877 = vadd.f32 0.0, %v7876
      %7878 = vdwg.mxu0
      %7879 = vmatpush.msra.mxu0 0.0
      %7880 = vmatpush.msra.mxu0 0.0
      %7881 = vmatpush.msra.mxu0 0.0
      %7882 = vmatpush.msra.mxu0 0.0
      %7883 = vmatpush.msra.mxu0 0.0
      %7884 = vmatpush.msra.mxu0 0.0
      %7885 = vmatpush.msra.mxu0 0.0
      %7886 = vmatpush.msra.mxu0 0.0
      %7887 = vmatpush.msra.mxu0 0.0
      %7888 = vmatpush.msra.mxu0 0.0
      %7889 = vmatpush.msra.mxu0 0.0
      %7890 = vmatpush.msra.mxu0 0.0
      %7891 = vmatpush.msra.mxu0 0.0
      %7892 = vmatpush.msra.mxu0 0.0
      %7893 = vmatpush.msra.mxu0 0.0
      %7894 = vmatpush.msra.mxu0 %v7785
      %7895 = vmatmul.f32.gmra.mxu0 %v7780
      %v7896 = vpop.f32.mrf.mxu0
      %v7897 = vadd.f32 0.0, %v7896
      %7898 = vmatmul.f32.gmra.mxu0 %v7783
      %v7899 = vpop.f32.mrf.mxu0
      %v7900 = vadd.f32 0.0, %v7899
      %7901 = vdwg.mxu0
      %v7902 = vadd.f32 %v7763, %v7805
      %v7903 = vadd.f32 %v7764, %v7828
      %v7904 = vadd.f32 %v7765, %v7851
      %v7905 = vadd.f32 %v7766, %v7874
      %v7906 = vadd.f32 %v7767, %v7897
      %v7907 = vadd.f32 %v7768, %v7808
      %v7908 = vadd.f32 %v7769, %v7831
      %v7909 = vadd.f32 %v7770, %v7854
      %v7910 = vadd.f32 %v7771, %v7877
      %v7911 = vadd.f32 %v7772, %v7900
      %s7912 = scalar_lea.vmem %s3, 272
      %v7913 = vld [vmem:[%s7912] sm:$0xff]
      %v7914 = vld [vmem:[%s7912 + $0x8] sm:$0xff]
      %7915 = vrot.lane.b32.xlu0 %v5360, 60
      %v7916 = vpop.permute.xlu0 %7915
      %v7917 = vsel %vm3082, %v6462, %v7916
      %v7919 = vsel %vm5385, %v7913, 0
      %v7922 = vsel %vm5385, %v7914, 0
      %v7924 = vsel %vm5392, %v7917, 0
      %7926 = vmatpush.msra.mxu0 0.0
      %7927 = vmatpush.msra.mxu0 0.0
      %7928 = vmatpush.msra.mxu0 0.0
      %7929 = vmatpush.msra.mxu0 0.0
      %7930 = vmatpush.msra.mxu0 0.0
      %7931 = vmatpush.msra.mxu0 0.0
      %7932 = vmatpush.msra.mxu0 0.0
      %7933 = vmatpush.msra.mxu0 0.0
      %7934 = vmatpush.msra.mxu0 0.0
      %7935 = vmatpush.msra.mxu0 0.0
      %7936 = vmatpush.msra.mxu0 0.0
      %7937 = vmatpush.msra.mxu0 0.0
      %7938 = vmatpush.msra.mxu0 0.0
      %7939 = vmatpush.msra.mxu0 0.0
      %7940 = vmatpush.msra.mxu0 0.0
      %7941 = vmatpush.msra.mxu0 %v6476
      %7942 = vmatmul.f32.gmra.mxu0 %v7919
      %v7943 = vpop.f32.mrf.mxu0
      %v7944 = vadd.f32 0.0, %v7943
      %7945 = vmatmul.f32.gmra.mxu0 %v7922
      %v7946 = vpop.f32.mrf.mxu0
      %v7947 = vadd.f32 0.0, %v7946
      %7948 = vdwg.mxu0
      %7949 = vmatpush.msra.mxu0 0.0
      %7950 = vmatpush.msra.mxu0 0.0
      %7951 = vmatpush.msra.mxu0 0.0
      %7952 = vmatpush.msra.mxu0 0.0
      %7953 = vmatpush.msra.mxu0 0.0
      %7954 = vmatpush.msra.mxu0 0.0
      %7955 = vmatpush.msra.mxu0 0.0
      %7956 = vmatpush.msra.mxu0 0.0
      %7957 = vmatpush.msra.mxu0 0.0
      %7958 = vmatpush.msra.mxu0 0.0
      %7959 = vmatpush.msra.mxu0 0.0
      %7960 = vmatpush.msra.mxu0 0.0
      %7961 = vmatpush.msra.mxu0 0.0
      %7962 = vmatpush.msra.mxu0 0.0
      %7963 = vmatpush.msra.mxu0 0.0
      %7964 = vmatpush.msra.mxu0 %v6478
      %7965 = vmatmul.f32.gmra.mxu0 %v7919
      %v7966 = vpop.f32.mrf.mxu0
      %v7967 = vadd.f32 0.0, %v7966
      %7968 = vmatmul.f32.gmra.mxu0 %v7922
      %v7969 = vpop.f32.mrf.mxu0
      %v7970 = vadd.f32 0.0, %v7969
      %7971 = vdwg.mxu0
      %7972 = vmatpush.msra.mxu0 0.0
      %7973 = vmatpush.msra.mxu0 0.0
      %7974 = vmatpush.msra.mxu0 0.0
      %7975 = vmatpush.msra.mxu0 0.0
      %7976 = vmatpush.msra.mxu0 0.0
      %7977 = vmatpush.msra.mxu0 0.0
      %7978 = vmatpush.msra.mxu0 0.0
      %7979 = vmatpush.msra.mxu0 0.0
      %7980 = vmatpush.msra.mxu0 0.0
      %7981 = vmatpush.msra.mxu0 0.0
      %7982 = vmatpush.msra.mxu0 0.0
      %7983 = vmatpush.msra.mxu0 0.0
      %7984 = vmatpush.msra.mxu0 0.0
      %7985 = vmatpush.msra.mxu0 0.0
      %7986 = vmatpush.msra.mxu0 0.0
      %7987 = vmatpush.msra.mxu0 %v6480
      %7988 = vmatmul.f32.gmra.mxu0 %v7919
      %v7989 = vpop.f32.mrf.mxu0
      %v7990 = vadd.f32 0.0, %v7989
      %7991 = vmatmul.f32.gmra.mxu0 %v7922
      %v7992 = vpop.f32.mrf.mxu0
      %v7993 = vadd.f32 0.0, %v7992
      %7994 = vdwg.mxu0
      %7995 = vmatpush.msra.mxu0 0.0
      %7996 = vmatpush.msra.mxu0 0.0
      %7997 = vmatpush.msra.mxu0 0.0
      %7998 = vmatpush.msra.mxu0 0.0
      %7999 = vmatpush.msra.mxu0 0.0
      %8000 = vmatpush.msra.mxu0 0.0
      %8001 = vmatpush.msra.mxu0 0.0
      %8002 = vmatpush.msra.mxu0 0.0
      %8003 = vmatpush.msra.mxu0 0.0
      %8004 = vmatpush.msra.mxu0 0.0
      %8005 = vmatpush.msra.mxu0 0.0
      %8006 = vmatpush.msra.mxu0 0.0
      %8007 = vmatpush.msra.mxu0 0.0
      %8008 = vmatpush.msra.mxu0 0.0
      %8009 = vmatpush.msra.mxu0 0.0
      %8010 = vmatpush.msra.mxu0 %v6482
      %8011 = vmatmul.f32.gmra.mxu0 %v7919
      %v8012 = vpop.f32.mrf.mxu0
      %v8013 = vadd.f32 0.0, %v8012
      %8014 = vmatmul.f32.gmra.mxu0 %v7922
      %v8015 = vpop.f32.mrf.mxu0
      %v8016 = vadd.f32 0.0, %v8015
      %8017 = vdwg.mxu0
      %8018 = vmatpush.msra.mxu0 0.0
      %8019 = vmatpush.msra.mxu0 0.0
      %8020 = vmatpush.msra.mxu0 0.0
      %8021 = vmatpush.msra.mxu0 0.0
      %8022 = vmatpush.msra.mxu0 0.0
      %8023 = vmatpush.msra.mxu0 0.0
      %8024 = vmatpush.msra.mxu0 0.0
      %8025 = vmatpush.msra.mxu0 0.0
      %8026 = vmatpush.msra.mxu0 0.0
      %8027 = vmatpush.msra.mxu0 0.0
      %8028 = vmatpush.msra.mxu0 0.0
      %8029 = vmatpush.msra.mxu0 0.0
      %8030 = vmatpush.msra.mxu0 0.0
      %8031 = vmatpush.msra.mxu0 0.0
      %8032 = vmatpush.msra.mxu0 0.0
      %8033 = vmatpush.msra.mxu0 %v7924
      %8034 = vmatmul.f32.gmra.mxu0 %v7919
      %v8035 = vpop.f32.mrf.mxu0
      %v8036 = vadd.f32 0.0, %v8035
      %8037 = vmatmul.f32.gmra.mxu0 %v7922
      %v8038 = vpop.f32.mrf.mxu0
      %v8039 = vadd.f32 0.0, %v8038
      %8040 = vdwg.mxu0
      %v8041 = vadd.f32 %v7902, %v7944
      %v8042 = vadd.f32 %v7903, %v7967
      %v8043 = vadd.f32 %v7904, %v7990
      %v8044 = vadd.f32 %v7905, %v8013
      %v8045 = vadd.f32 %v7906, %v8036
      %v8046 = vadd.f32 %v7907, %v7947
      %v8047 = vadd.f32 %v7908, %v7970
      %v8048 = vadd.f32 %v7909, %v7993
      %v8049 = vadd.f32 %v7910, %v8016
      %v8050 = vadd.f32 %v7911, %v8039
      %s8051 = scalar_lea.vmem %s3, 288
      %v8052 = vld [vmem:[%s8051] sm:$0xff]
      %v8053 = vld [vmem:[%s8051 + $0x8] sm:$0xff]
      %8054 = vrot.lane.b32.xlu0 %v5360, 58
      %v8055 = vpop.permute.xlu0 %8054
      %v8056 = vsel %vm6624, %v6623, %v8055
      %v8058 = vsel %vm5385, %v8052, 0
      %v8061 = vsel %vm5385, %v8053, 0
      %v8063 = vsel %vm5392, %v8056, 0
      %8065 = vmatpush.msra.mxu0 0.0
      %8066 = vmatpush.msra.mxu0 0.0
      %8067 = vmatpush.msra.mxu0 0.0
      %8068 = vmatpush.msra.mxu0 0.0
      %8069 = vmatpush.msra.mxu0 0.0
      %8070 = vmatpush.msra.mxu0 0.0
      %8071 = vmatpush.msra.mxu0 0.0
      %8072 = vmatpush.msra.mxu0 0.0
      %8073 = vmatpush.msra.mxu0 0.0
      %8074 = vmatpush.msra.mxu0 0.0
      %8075 = vmatpush.msra.mxu0 0.0
      %8076 = vmatpush.msra.mxu0 0.0
      %8077 = vmatpush.msra.mxu0 0.0
      %8078 = vmatpush.msra.mxu0 0.0
      %8079 = vmatpush.msra.mxu0 0.0
      %8080 = vmatpush.msra.mxu0 %v6638
      %8081 = vmatmul.f32.gmra.mxu0 %v8058
      %v8082 = vpop.f32.mrf.mxu0
      %v8083 = vadd.f32 0.0, %v8082
      %8084 = vmatmul.f32.gmra.mxu0 %v8061
      %v8085 = vpop.f32.mrf.mxu0
      %v8086 = vadd.f32 0.0, %v8085
      %8087 = vdwg.mxu0
      %8088 = vmatpush.msra.mxu0 0.0
      %8089 = vmatpush.msra.mxu0 0.0
      %8090 = vmatpush.msra.mxu0 0.0
      %8091 = vmatpush.msra.mxu0 0.0
      %8092 = vmatpush.msra.mxu0 0.0
      %8093 = vmatpush.msra.mxu0 0.0
      %8094 = vmatpush.msra.mxu0 0.0
      %8095 = vmatpush.msra.mxu0 0.0
      %8096 = vmatpush.msra.mxu0 0.0
      %8097 = vmatpush.msra.mxu0 0.0
      %8098 = vmatpush.msra.mxu0 0.0
      %8099 = vmatpush.msra.mxu0 0.0
      %8100 = vmatpush.msra.mxu0 0.0
      %8101 = vmatpush.msra.mxu0 0.0
      %8102 = vmatpush.msra.mxu0 0.0
      %8103 = vmatpush.msra.mxu0 %v6640
      %8104 = vmatmul.f32.gmra.mxu0 %v8058
      %v8105 = vpop.f32.mrf.mxu0
      %v8106 = vadd.f32 0.0, %v8105
      %8107 = vmatmul.f32.gmra.mxu0 %v8061
      %v8108 = vpop.f32.mrf.mxu0
      %v8109 = vadd.f32 0.0, %v8108
      %8110 = vdwg.mxu0
      %8111 = vmatpush.msra.mxu0 0.0
      %8112 = vmatpush.msra.mxu0 0.0
      %8113 = vmatpush.msra.mxu0 0.0
      %8114 = vmatpush.msra.mxu0 0.0
      %8115 = vmatpush.msra.mxu0 0.0
      %8116 = vmatpush.msra.mxu0 0.0
      %8117 = vmatpush.msra.mxu0 0.0
      %8118 = vmatpush.msra.mxu0 0.0
      %8119 = vmatpush.msra.mxu0 0.0
      %8120 = vmatpush.msra.mxu0 0.0
      %8121 = vmatpush.msra.mxu0 0.0
      %8122 = vmatpush.msra.mxu0 0.0
      %8123 = vmatpush.msra.mxu0 0.0
      %8124 = vmatpush.msra.mxu0 0.0
      %8125 = vmatpush.msra.mxu0 0.0
      %8126 = vmatpush.msra.mxu0 %v6642
      %8127 = vmatmul.f32.gmra.mxu0 %v8058
      %v8128 = vpop.f32.mrf.mxu0
      %v8129 = vadd.f32 0.0, %v8128
      %8130 = vmatmul.f32.gmra.mxu0 %v8061
      %v8131 = vpop.f32.mrf.mxu0
      %v8132 = vadd.f32 0.0, %v8131
      %8133 = vdwg.mxu0
      %8134 = vmatpush.msra.mxu0 0.0
      %8135 = vmatpush.msra.mxu0 0.0
      %8136 = vmatpush.msra.mxu0 0.0
      %8137 = vmatpush.msra.mxu0 0.0
      %8138 = vmatpush.msra.mxu0 0.0
      %8139 = vmatpush.msra.mxu0 0.0
      %8140 = vmatpush.msra.mxu0 0.0
      %8141 = vmatpush.msra.mxu0 0.0
      %8142 = vmatpush.msra.mxu0 0.0
      %8143 = vmatpush.msra.mxu0 0.0
      %8144 = vmatpush.msra.mxu0 0.0
      %8145 = vmatpush.msra.mxu0 0.0
      %8146 = vmatpush.msra.mxu0 0.0
      %8147 = vmatpush.msra.mxu0 0.0
      %8148 = vmatpush.msra.mxu0 0.0
      %8149 = vmatpush.msra.mxu0 %v6644
      %8150 = vmatmul.f32.gmra.mxu0 %v8058
      %v8151 = vpop.f32.mrf.mxu0
      %v8152 = vadd.f32 0.0, %v8151
      %8153 = vmatmul.f32.gmra.mxu0 %v8061
      %v8154 = vpop.f32.mrf.mxu0
      %v8155 = vadd.f32 0.0, %v8154
      %8156 = vdwg.mxu0
      %8157 = vmatpush.msra.mxu0 0.0
      %8158 = vmatpush.msra.mxu0 0.0
      %8159 = vmatpush.msra.mxu0 0.0
      %8160 = vmatpush.msra.mxu0 0.0
      %8161 = vmatpush.msra.mxu0 0.0
      %8162 = vmatpush.msra.mxu0 0.0
      %8163 = vmatpush.msra.mxu0 0.0
      %8164 = vmatpush.msra.mxu0 0.0
      %8165 = vmatpush.msra.mxu0 0.0
      %8166 = vmatpush.msra.mxu0 0.0
      %8167 = vmatpush.msra.mxu0 0.0
      %8168 = vmatpush.msra.mxu0 0.0
      %8169 = vmatpush.msra.mxu0 0.0
      %8170 = vmatpush.msra.mxu0 0.0
      %8171 = vmatpush.msra.mxu0 0.0
      %8172 = vmatpush.msra.mxu0 %v8063
      %8173 = vmatmul.f32.gmra.mxu0 %v8058
      %v8174 = vpop.f32.mrf.mxu0
      %v8175 = vadd.f32 0.0, %v8174
      %8176 = vmatmul.f32.gmra.mxu0 %v8061
      %v8177 = vpop.f32.mrf.mxu0
      %v8178 = vadd.f32 0.0, %v8177
      %8179 = vdwg.mxu0
      %v8180 = vadd.f32 %v8041, %v8083
      %v8181 = vadd.f32 %v8042, %v8106
      %v8182 = vadd.f32 %v8043, %v8129
      %v8183 = vadd.f32 %v8044, %v8152
      %v8184 = vadd.f32 %v8045, %v8175
      %v8185 = vadd.f32 %v8046, %v8086
      %v8186 = vadd.f32 %v8047, %v8109
      %v8187 = vadd.f32 %v8048, %v8132
      %v8188 = vadd.f32 %v8049, %v8155
      %v8189 = vadd.f32 %v8050, %v8178
      %s8190 = scalar_lea.vmem %s3, 304
      %v8191 = vld [vmem:[%s8190] sm:$0xff]
      %v8192 = vld [vmem:[%s8190 + $0x8] sm:$0xff]
      %8193 = vrot.lane.b32.xlu0 %v5360, 56
      %v8194 = vpop.permute.xlu0 %8193
      %v8195 = vsel %vm6786, %v6785, %v8194
      %v8197 = vsel %vm5385, %v8191, 0
      %v8200 = vsel %vm5385, %v8192, 0
      %v8202 = vsel %vm5392, %v8195, 0
      %8204 = vmatpush.msra.mxu0 0.0
      %8205 = vmatpush.msra.mxu0 0.0
      %8206 = vmatpush.msra.mxu0 0.0
      %8207 = vmatpush.msra.mxu0 0.0
      %8208 = vmatpush.msra.mxu0 0.0
      %8209 = vmatpush.msra.mxu0 0.0
      %8210 = vmatpush.msra.mxu0 0.0
      %8211 = vmatpush.msra.mxu0 0.0
      %8212 = vmatpush.msra.mxu0 0.0
      %8213 = vmatpush.msra.mxu0 0.0
      %8214 = vmatpush.msra.mxu0 0.0
      %8215 = vmatpush.msra.mxu0 0.0
      %8216 = vmatpush.msra.mxu0 0.0
      %8217 = vmatpush.msra.mxu0 0.0
      %8218 = vmatpush.msra.mxu0 0.0
      %8219 = vmatpush.msra.mxu0 %v6800
      %8220 = vmatmul.f32.gmra.mxu0 %v8197
      %v8221 = vpop.f32.mrf.mxu0
      %v8222 = vadd.f32 0.0, %v8221
      %8223 = vmatmul.f32.gmra.mxu0 %v8200
      %v8224 = vpop.f32.mrf.mxu0
      %v8225 = vadd.f32 0.0, %v8224
      %8226 = vdwg.mxu0
      %8227 = vmatpush.msra.mxu0 0.0
      %8228 = vmatpush.msra.mxu0 0.0
      %8229 = vmatpush.msra.mxu0 0.0
      %8230 = vmatpush.msra.mxu0 0.0
      %8231 = vmatpush.msra.mxu0 0.0
      %8232 = vmatpush.msra.mxu0 0.0
      %8233 = vmatpush.msra.mxu0 0.0
      %8234 = vmatpush.msra.mxu0 0.0
      %8235 = vmatpush.msra.mxu0 0.0
      %8236 = vmatpush.msra.mxu0 0.0
      %8237 = vmatpush.msra.mxu0 0.0
      %8238 = vmatpush.msra.mxu0 0.0
      %8239 = vmatpush.msra.mxu0 0.0
      %8240 = vmatpush.msra.mxu0 0.0
      %8241 = vmatpush.msra.mxu0 0.0
      %8242 = vmatpush.msra.mxu0 %v6802
      %8243 = vmatmul.f32.gmra.mxu0 %v8197
      %v8244 = vpop.f32.mrf.mxu0
      %v8245 = vadd.f32 0.0, %v8244
      %8246 = vmatmul.f32.gmra.mxu0 %v8200
      %v8247 = vpop.f32.mrf.mxu0
      %v8248 = vadd.f32 0.0, %v8247
      %8249 = vdwg.mxu0
      %8250 = vmatpush.msra.mxu0 0.0
      %8251 = vmatpush.msra.mxu0 0.0
      %8252 = vmatpush.msra.mxu0 0.0
      %8253 = vmatpush.msra.mxu0 0.0
      %8254 = vmatpush.msra.mxu0 0.0
      %8255 = vmatpush.msra.mxu0 0.0
      %8256 = vmatpush.msra.mxu0 0.0
      %8257 = vmatpush.msra.mxu0 0.0
      %8258 = vmatpush.msra.mxu0 0.0
      %8259 = vmatpush.msra.mxu0 0.0
      %8260 = vmatpush.msra.mxu0 0.0
      %8261 = vmatpush.msra.mxu0 0.0
      %8262 = vmatpush.msra.mxu0 0.0
      %8263 = vmatpush.msra.mxu0 0.0
      %8264 = vmatpush.msra.mxu0 0.0
      %8265 = vmatpush.msra.mxu0 %v6804
      %8266 = vmatmul.f32.gmra.mxu0 %v8197
      %v8267 = vpop.f32.mrf.mxu0
      %v8268 = vadd.f32 0.0, %v8267
      %8269 = vmatmul.f32.gmra.mxu0 %v8200
      %v8270 = vpop.f32.mrf.mxu0
      %v8271 = vadd.f32 0.0, %v8270
      %8272 = vdwg.mxu0
      %8273 = vmatpush.msra.mxu0 0.0
      %8274 = vmatpush.msra.mxu0 0.0
      %8275 = vmatpush.msra.mxu0 0.0
      %8276 = vmatpush.msra.mxu0 0.0
      %8277 = vmatpush.msra.mxu0 0.0
      %8278 = vmatpush.msra.mxu0 0.0
      %8279 = vmatpush.msra.mxu0 0.0
      %8280 = vmatpush.msra.mxu0 0.0
      %8281 = vmatpush.msra.mxu0 0.0
      %8282 = vmatpush.msra.mxu0 0.0
      %8283 = vmatpush.msra.mxu0 0.0
      %8284 = vmatpush.msra.mxu0 0.0
      %8285 = vmatpush.msra.mxu0 0.0
      %8286 = vmatpush.msra.mxu0 0.0
      %8287 = vmatpush.msra.mxu0 0.0
      %8288 = vmatpush.msra.mxu0 %v6806
      %8289 = vmatmul.f32.gmra.mxu0 %v8197
      %v8290 = vpop.f32.mrf.mxu0
      %v8291 = vadd.f32 0.0, %v8290
      %8292 = vmatmul.f32.gmra.mxu0 %v8200
      %v8293 = vpop.f32.mrf.mxu0
      %v8294 = vadd.f32 0.0, %v8293
      %8295 = vdwg.mxu0
      %8296 = vmatpush.msra.mxu0 0.0
      %8297 = vmatpush.msra.mxu0 0.0
      %8298 = vmatpush.msra.mxu0 0.0
      %8299 = vmatpush.msra.mxu0 0.0
      %8300 = vmatpush.msra.mxu0 0.0
      %8301 = vmatpush.msra.mxu0 0.0
      %8302 = vmatpush.msra.mxu0 0.0
      %8303 = vmatpush.msra.mxu0 0.0
      %8304 = vmatpush.msra.mxu0 0.0
      %8305 = vmatpush.msra.mxu0 0.0
      %8306 = vmatpush.msra.mxu0 0.0
      %8307 = vmatpush.msra.mxu0 0.0
      %8308 = vmatpush.msra.mxu0 0.0
      %8309 = vmatpush.msra.mxu0 0.0
      %8310 = vmatpush.msra.mxu0 0.0
      %8311 = vmatpush.msra.mxu0 %v8202
      %8312 = vmatmul.f32.gmra.mxu0 %v8197
      %v8313 = vpop.f32.mrf.mxu0
      %v8314 = vadd.f32 0.0, %v8313
      %8315 = vmatmul.f32.gmra.mxu0 %v8200
      %v8316 = vpop.f32.mrf.mxu0
      %v8317 = vadd.f32 0.0, %v8316
      %8318 = vdwg.mxu0
      %v8319 = vadd.f32 %v8180, %v8222
      %v8320 = vadd.f32 %v8181, %v8245
      %v8321 = vadd.f32 %v8182, %v8268
      %v8322 = vadd.f32 %v8183, %v8291
      %v8323 = vadd.f32 %v8184, %v8314
      %v8324 = vadd.f32 %v8185, %v8225
      %v8325 = vadd.f32 %v8186, %v8248
      %v8326 = vadd.f32 %v8187, %v8271
      %v8327 = vadd.f32 %v8188, %v8294
      %v8328 = vadd.f32 %v8189, %v8317
      %s8329 = scalar_lea.vmem %s3, 320
      %v8330 = vld [vmem:[%s8329] sm:$0xff]
      %v8331 = vld [vmem:[%s8329 + $0x8] sm:$0xff]
      %v8333 = vsel %vm5385, %v8330, 0
      %v8336 = vsel %vm5385, %v8331, 0
      %v8338 = vsel %vm5392, %v5360, 0
      %8340 = vmatpush.msra.mxu0 0.0
      %8341 = vmatpush.msra.mxu0 0.0
      %8342 = vmatpush.msra.mxu0 0.0
      %8343 = vmatpush.msra.mxu0 0.0
      %8344 = vmatpush.msra.mxu0 0.0
      %8345 = vmatpush.msra.mxu0 0.0
      %8346 = vmatpush.msra.mxu0 0.0
      %8347 = vmatpush.msra.mxu0 0.0
      %8348 = vmatpush.msra.mxu0 0.0
      %8349 = vmatpush.msra.mxu0 0.0
      %8350 = vmatpush.msra.mxu0 0.0
      %8351 = vmatpush.msra.mxu0 0.0
      %8352 = vmatpush.msra.mxu0 0.0
      %8353 = vmatpush.msra.mxu0 0.0
      %8354 = vmatpush.msra.mxu0 0.0
      %8355 = vmatpush.msra.mxu0 %v5528
      %8356 = vmatmul.f32.gmra.mxu0 %v8333
      %v8357 = vpop.f32.mrf.mxu0
      %v8358 = vadd.f32 0.0, %v8357
      %8359 = vmatmul.f32.gmra.mxu0 %v8336
      %v8360 = vpop.f32.mrf.mxu0
      %v8361 = vadd.f32 0.0, %v8360
      %8362 = vdwg.mxu0
      %8363 = vmatpush.msra.mxu0 0.0
      %8364 = vmatpush.msra.mxu0 0.0
      %8365 = vmatpush.msra.mxu0 0.0
      %8366 = vmatpush.msra.mxu0 0.0
      %8367 = vmatpush.msra.mxu0 0.0
      %8368 = vmatpush.msra.mxu0 0.0
      %8369 = vmatpush.msra.mxu0 0.0
      %8370 = vmatpush.msra.mxu0 0.0
      %8371 = vmatpush.msra.mxu0 0.0
      %8372 = vmatpush.msra.mxu0 0.0
      %8373 = vmatpush.msra.mxu0 0.0
      %8374 = vmatpush.msra.mxu0 0.0
      %8375 = vmatpush.msra.mxu0 0.0
      %8376 = vmatpush.msra.mxu0 0.0
      %8377 = vmatpush.msra.mxu0 0.0
      %8378 = vmatpush.msra.mxu0 %v5530
      %8379 = vmatmul.f32.gmra.mxu0 %v8333
      %v8380 = vpop.f32.mrf.mxu0
      %v8381 = vadd.f32 0.0, %v8380
      %8382 = vmatmul.f32.gmra.mxu0 %v8336
      %v8383 = vpop.f32.mrf.mxu0
      %v8384 = vadd.f32 0.0, %v8383
      %8385 = vdwg.mxu0
      %8386 = vmatpush.msra.mxu0 0.0
      %8387 = vmatpush.msra.mxu0 0.0
      %8388 = vmatpush.msra.mxu0 0.0
      %8389 = vmatpush.msra.mxu0 0.0
      %8390 = vmatpush.msra.mxu0 0.0
      %8391 = vmatpush.msra.mxu0 0.0
      %8392 = vmatpush.msra.mxu0 0.0
      %8393 = vmatpush.msra.mxu0 0.0
      %8394 = vmatpush.msra.mxu0 0.0
      %8395 = vmatpush.msra.mxu0 0.0
      %8396 = vmatpush.msra.mxu0 0.0
      %8397 = vmatpush.msra.mxu0 0.0
      %8398 = vmatpush.msra.mxu0 0.0
      %8399 = vmatpush.msra.mxu0 0.0
      %8400 = vmatpush.msra.mxu0 0.0
      %8401 = vmatpush.msra.mxu0 %v5532
      %8402 = vmatmul.f32.gmra.mxu0 %v8333
      %v8403 = vpop.f32.mrf.mxu0
      %v8404 = vadd.f32 0.0, %v8403
      %8405 = vmatmul.f32.gmra.mxu0 %v8336
      %v8406 = vpop.f32.mrf.mxu0
      %v8407 = vadd.f32 0.0, %v8406
      %8408 = vdwg.mxu0
      %8409 = vmatpush.msra.mxu0 0.0
      %8410 = vmatpush.msra.mxu0 0.0
      %8411 = vmatpush.msra.mxu0 0.0
      %8412 = vmatpush.msra.mxu0 0.0
      %8413 = vmatpush.msra.mxu0 0.0
      %8414 = vmatpush.msra.mxu0 0.0
      %8415 = vmatpush.msra.mxu0 0.0
      %8416 = vmatpush.msra.mxu0 0.0
      %8417 = vmatpush.msra.mxu0 0.0
      %8418 = vmatpush.msra.mxu0 0.0
      %8419 = vmatpush.msra.mxu0 0.0
      %8420 = vmatpush.msra.mxu0 0.0
      %8421 = vmatpush.msra.mxu0 0.0
      %8422 = vmatpush.msra.mxu0 0.0
      %8423 = vmatpush.msra.mxu0 0.0
      %8424 = vmatpush.msra.mxu0 %v6942
      %8425 = vmatmul.f32.gmra.mxu0 %v8333
      %v8426 = vpop.f32.mrf.mxu0
      %v8427 = vadd.f32 0.0, %v8426
      %8428 = vmatmul.f32.gmra.mxu0 %v8336
      %v8429 = vpop.f32.mrf.mxu0
      %v8430 = vadd.f32 0.0, %v8429
      %8431 = vdwg.mxu0
      %8432 = vmatpush.msra.mxu0 0.0
      %8433 = vmatpush.msra.mxu0 0.0
      %8434 = vmatpush.msra.mxu0 0.0
      %8435 = vmatpush.msra.mxu0 0.0
      %8436 = vmatpush.msra.mxu0 0.0
      %8437 = vmatpush.msra.mxu0 0.0
      %8438 = vmatpush.msra.mxu0 0.0
      %8439 = vmatpush.msra.mxu0 0.0
      %8440 = vmatpush.msra.mxu0 0.0
      %8441 = vmatpush.msra.mxu0 0.0
      %8442 = vmatpush.msra.mxu0 0.0
      %8443 = vmatpush.msra.mxu0 0.0
      %8444 = vmatpush.msra.mxu0 0.0
      %8445 = vmatpush.msra.mxu0 0.0
      %8446 = vmatpush.msra.mxu0 0.0
      %8447 = vmatpush.msra.mxu0 %v8338
      %8448 = vmatmul.f32.gmra.mxu0 %v8333
      %v8449 = vpop.f32.mrf.mxu0
      %v8450 = vadd.f32 0.0, %v8449
      %8451 = vmatmul.f32.gmra.mxu0 %v8336
      %v8452 = vpop.f32.mrf.mxu0
      %v8453 = vadd.f32 0.0, %v8452
      %8454 = vdwg.mxu0
      %v8455 = vadd.f32 %v8319, %v8358
      %v8456 = vadd.f32 %v8320, %v8381
      %v8457 = vadd.f32 %v8321, %v8404
      %v8458 = vadd.f32 %v8322, %v8427
      %v8459 = vadd.f32 %v8323, %v8450
      %v8460 = vadd.f32 %v8324, %v8361
      %v8461 = vadd.f32 %v8325, %v8384
      %v8462 = vadd.f32 %v8326, %v8407
      %v8463 = vadd.f32 %v8327, %v8430
      %v8464 = vadd.f32 %v8328, %v8453
      %s8465 = scalar_lea.vmem %s3, 336
      %v8466 = vld [vmem:[%s8465] sm:$0xff]
      %v8467 = vld [vmem:[%s8465 + $0x8] sm:$0xff]
      %8468 = vrot.lane.b32.xlu0 %v5360, 126
      %v8469 = vpop.permute.xlu0 %8468
      %v8470 = vsel %vm631, %v7073, %v8469
      %v8472 = vsel %vm5385, %v8466, 0
      %v8475 = vsel %vm5385, %v8467, 0
      %v8477 = vsel %vm5392, %v8470, 0
      %v8479 = vsel %vm5392, %v8469, 0
      %8481 = vmatpush.msra.mxu0 0.0
      %8482 = vmatpush.msra.mxu0 0.0
      %8483 = vmatpush.msra.mxu0 0.0
      %8484 = vmatpush.msra.mxu0 0.0
      %8485 = vmatpush.msra.mxu0 0.0
      %8486 = vmatpush.msra.mxu0 0.0
      %8487 = vmatpush.msra.mxu0 0.0
      %8488 = vmatpush.msra.mxu0 0.0
      %8489 = vmatpush.msra.mxu0 0.0
      %8490 = vmatpush.msra.mxu0 0.0
      %8491 = vmatpush.msra.mxu0 0.0
      %8492 = vmatpush.msra.mxu0 0.0
      %8493 = vmatpush.msra.mxu0 0.0
      %8494 = vmatpush.msra.mxu0 0.0
      %8495 = vmatpush.msra.mxu0 0.0
      %8496 = vmatpush.msra.mxu0 %v5397
      %8497 = vmatmul.f32.gmra.mxu0 %v8472
      %v8498 = vpop.f32.mrf.mxu0
      %v8499 = vadd.f32 0.0, %v8498
      %8500 = vmatmul.f32.gmra.mxu0 %v8475
      %v8501 = vpop.f32.mrf.mxu0
      %v8502 = vadd.f32 0.0, %v8501
      %8503 = vdwg.mxu0
      %8504 = vmatpush.msra.mxu0 0.0
      %8505 = vmatpush.msra.mxu0 0.0
      %8506 = vmatpush.msra.mxu0 0.0
      %8507 = vmatpush.msra.mxu0 0.0
      %8508 = vmatpush.msra.mxu0 0.0
      %8509 = vmatpush.msra.mxu0 0.0
      %8510 = vmatpush.msra.mxu0 0.0
      %8511 = vmatpush.msra.mxu0 0.0
      %8512 = vmatpush.msra.mxu0 0.0
      %8513 = vmatpush.msra.mxu0 0.0
      %8514 = vmatpush.msra.mxu0 0.0
      %8515 = vmatpush.msra.mxu0 0.0
      %8516 = vmatpush.msra.mxu0 0.0
      %8517 = vmatpush.msra.mxu0 0.0
      %8518 = vmatpush.msra.mxu0 0.0
      %8519 = vmatpush.msra.mxu0 %v5399
      %8520 = vmatmul.f32.gmra.mxu0 %v8472
      %v8521 = vpop.f32.mrf.mxu0
      %v8522 = vadd.f32 0.0, %v8521
      %8523 = vmatmul.f32.gmra.mxu0 %v8475
      %v8524 = vpop.f32.mrf.mxu0
      %v8525 = vadd.f32 0.0, %v8524
      %8526 = vdwg.mxu0
      %8527 = vmatpush.msra.mxu0 0.0
      %8528 = vmatpush.msra.mxu0 0.0
      %8529 = vmatpush.msra.mxu0 0.0
      %8530 = vmatpush.msra.mxu0 0.0
      %8531 = vmatpush.msra.mxu0 0.0
      %8532 = vmatpush.msra.mxu0 0.0
      %8533 = vmatpush.msra.mxu0 0.0
      %8534 = vmatpush.msra.mxu0 0.0
      %8535 = vmatpush.msra.mxu0 0.0
      %8536 = vmatpush.msra.mxu0 0.0
      %8537 = vmatpush.msra.mxu0 0.0
      %8538 = vmatpush.msra.mxu0 0.0
      %8539 = vmatpush.msra.mxu0 0.0
      %8540 = vmatpush.msra.mxu0 0.0
      %8541 = vmatpush.msra.mxu0 0.0
      %8542 = vmatpush.msra.mxu0 %v7081
      %8543 = vmatmul.f32.gmra.mxu0 %v8472
      %v8544 = vpop.f32.mrf.mxu0
      %v8545 = vadd.f32 0.0, %v8544
      %8546 = vmatmul.f32.gmra.mxu0 %v8475
      %v8547 = vpop.f32.mrf.mxu0
      %v8548 = vadd.f32 0.0, %v8547
      %8549 = vdwg.mxu0
      %8550 = vmatpush.msra.mxu0 0.0
      %8551 = vmatpush.msra.mxu0 0.0
      %8552 = vmatpush.msra.mxu0 0.0
      %8553 = vmatpush.msra.mxu0 0.0
      %8554 = vmatpush.msra.mxu0 0.0
      %8555 = vmatpush.msra.mxu0 0.0
      %8556 = vmatpush.msra.mxu0 0.0
      %8557 = vmatpush.msra.mxu0 0.0
      %8558 = vmatpush.msra.mxu0 0.0
      %8559 = vmatpush.msra.mxu0 0.0
      %8560 = vmatpush.msra.mxu0 0.0
      %8561 = vmatpush.msra.mxu0 0.0
      %8562 = vmatpush.msra.mxu0 0.0
      %8563 = vmatpush.msra.mxu0 0.0
      %8564 = vmatpush.msra.mxu0 0.0
      %8565 = vmatpush.msra.mxu0 %v8477
      %8566 = vmatmul.f32.gmra.mxu0 %v8472
      %v8567 = vpop.f32.mrf.mxu0
      %v8568 = vadd.f32 0.0, %v8567
      %8569 = vmatmul.f32.gmra.mxu0 %v8475
      %v8570 = vpop.f32.mrf.mxu0
      %v8571 = vadd.f32 0.0, %v8570
      %8572 = vdwg.mxu0
      %8573 = vmatpush.msra.mxu0 0.0
      %8574 = vmatpush.msra.mxu0 0.0
      %8575 = vmatpush.msra.mxu0 0.0
      %8576 = vmatpush.msra.mxu0 0.0
      %8577 = vmatpush.msra.mxu0 0.0
      %8578 = vmatpush.msra.mxu0 0.0
      %8579 = vmatpush.msra.mxu0 0.0
      %8580 = vmatpush.msra.mxu0 0.0
      %8581 = vmatpush.msra.mxu0 0.0
      %8582 = vmatpush.msra.mxu0 0.0
      %8583 = vmatpush.msra.mxu0 0.0
      %8584 = vmatpush.msra.mxu0 0.0
      %8585 = vmatpush.msra.mxu0 0.0
      %8586 = vmatpush.msra.mxu0 0.0
      %8587 = vmatpush.msra.mxu0 0.0
      %8588 = vmatpush.msra.mxu0 %v8479
      %8589 = vmatmul.f32.gmra.mxu0 %v8472
      %v8590 = vpop.f32.mrf.mxu0
      %v8591 = vadd.f32 0.0, %v8590
      %8592 = vmatmul.f32.gmra.mxu0 %v8475
      %v8593 = vpop.f32.mrf.mxu0
      %v8594 = vadd.f32 0.0, %v8593
      %8595 = vdwg.mxu0
      %v8596 = vadd.f32 %v8455, %v8499
      %v8597 = vadd.f32 %v8456, %v8522
      %v8598 = vadd.f32 %v8457, %v8545
      %v8599 = vadd.f32 %v8458, %v8568
      %v8600 = vadd.f32 %v8459, %v8591
      %v8601 = vadd.f32 %v8460, %v8502
      %v8602 = vadd.f32 %v8461, %v8525
      %v8603 = vadd.f32 %v8462, %v8548
      %v8604 = vadd.f32 %v8463, %v8571
      %v8605 = vadd.f32 %v8464, %v8594
      %s8606 = scalar_lea.vmem %s3, 352
      %v8607 = vld [vmem:[%s8606] sm:$0xff]
      %v8608 = vld [vmem:[%s8606 + $0x8] sm:$0xff]
      %8609 = vrot.lane.b32.xlu0 %v5360, 124
      %v8610 = vpop.permute.xlu0 %8609
      %v8611 = vsel %vm1033, %v7214, %v8610
      %v8613 = vsel %vm5385, %v8607, 0
      %v8616 = vsel %vm5385, %v8608, 0
      %v8618 = vsel %vm5392, %v8611, 0
      %v8620 = vsel %vm5392, %v8610, 0
      %8622 = vmatpush.msra.mxu0 0.0
      %8623 = vmatpush.msra.mxu0 0.0
      %8624 = vmatpush.msra.mxu0 0.0
      %8625 = vmatpush.msra.mxu0 0.0
      %8626 = vmatpush.msra.mxu0 0.0
      %8627 = vmatpush.msra.mxu0 0.0
      %8628 = vmatpush.msra.mxu0 0.0
      %8629 = vmatpush.msra.mxu0 0.0
      %8630 = vmatpush.msra.mxu0 0.0
      %8631 = vmatpush.msra.mxu0 0.0
      %8632 = vmatpush.msra.mxu0 0.0
      %8633 = vmatpush.msra.mxu0 0.0
      %8634 = vmatpush.msra.mxu0 0.0
      %8635 = vmatpush.msra.mxu0 0.0
      %8636 = vmatpush.msra.mxu0 0.0
      %8637 = vmatpush.msra.mxu0 %v5676
      %8638 = vmatmul.f32.gmra.mxu0 %v8613
      %v8639 = vpop.f32.mrf.mxu0
      %v8640 = vadd.f32 0.0, %v8639
      %8641 = vmatmul.f32.gmra.mxu0 %v8616
      %v8642 = vpop.f32.mrf.mxu0
      %v8643 = vadd.f32 0.0, %v8642
      %8644 = vdwg.mxu0
      %8645 = vmatpush.msra.mxu0 0.0
      %8646 = vmatpush.msra.mxu0 0.0
      %8647 = vmatpush.msra.mxu0 0.0
      %8648 = vmatpush.msra.mxu0 0.0
      %8649 = vmatpush.msra.mxu0 0.0
      %8650 = vmatpush.msra.mxu0 0.0
      %8651 = vmatpush.msra.mxu0 0.0
      %8652 = vmatpush.msra.mxu0 0.0
      %8653 = vmatpush.msra.mxu0 0.0
      %8654 = vmatpush.msra.mxu0 0.0
      %8655 = vmatpush.msra.mxu0 0.0
      %8656 = vmatpush.msra.mxu0 0.0
      %8657 = vmatpush.msra.mxu0 0.0
      %8658 = vmatpush.msra.mxu0 0.0
      %8659 = vmatpush.msra.mxu0 0.0
      %8660 = vmatpush.msra.mxu0 %v5678
      %8661 = vmatmul.f32.gmra.mxu0 %v8613
      %v8662 = vpop.f32.mrf.mxu0
      %v8663 = vadd.f32 0.0, %v8662
      %8664 = vmatmul.f32.gmra.mxu0 %v8616
      %v8665 = vpop.f32.mrf.mxu0
      %v8666 = vadd.f32 0.0, %v8665
      %8667 = vdwg.mxu0
      %8668 = vmatpush.msra.mxu0 0.0
      %8669 = vmatpush.msra.mxu0 0.0
      %8670 = vmatpush.msra.mxu0 0.0
      %8671 = vmatpush.msra.mxu0 0.0
      %8672 = vmatpush.msra.mxu0 0.0
      %8673 = vmatpush.msra.mxu0 0.0
      %8674 = vmatpush.msra.mxu0 0.0
      %8675 = vmatpush.msra.mxu0 0.0
      %8676 = vmatpush.msra.mxu0 0.0
      %8677 = vmatpush.msra.mxu0 0.0
      %8678 = vmatpush.msra.mxu0 0.0
      %8679 = vmatpush.msra.mxu0 0.0
      %8680 = vmatpush.msra.mxu0 0.0
      %8681 = vmatpush.msra.mxu0 0.0
      %8682 = vmatpush.msra.mxu0 0.0
      %8683 = vmatpush.msra.mxu0 %v7222
      %8684 = vmatmul.f32.gmra.mxu0 %v8613
      %v8685 = vpop.f32.mrf.mxu0
      %v8686 = vadd.f32 0.0, %v8685
      %8687 = vmatmul.f32.gmra.mxu0 %v8616
      %v8688 = vpop.f32.mrf.mxu0
      %v8689 = vadd.f32 0.0, %v8688
      %8690 = vdwg.mxu0
      %8691 = vmatpush.msra.mxu0 0.0
      %8692 = vmatpush.msra.mxu0 0.0
      %8693 = vmatpush.msra.mxu0 0.0
      %8694 = vmatpush.msra.mxu0 0.0
      %8695 = vmatpush.msra.mxu0 0.0
      %8696 = vmatpush.msra.mxu0 0.0
      %8697 = vmatpush.msra.mxu0 0.0
      %8698 = vmatpush.msra.mxu0 0.0
      %8699 = vmatpush.msra.mxu0 0.0
      %8700 = vmatpush.msra.mxu0 0.0
      %8701 = vmatpush.msra.mxu0 0.0
      %8702 = vmatpush.msra.mxu0 0.0
      %8703 = vmatpush.msra.mxu0 0.0
      %8704 = vmatpush.msra.mxu0 0.0
      %8705 = vmatpush.msra.mxu0 0.0
      %8706 = vmatpush.msra.mxu0 %v8618
      %8707 = vmatmul.f32.gmra.mxu0 %v8613
      %v8708 = vpop.f32.mrf.mxu0
      %v8709 = vadd.f32 0.0, %v8708
      %8710 = vmatmul.f32.gmra.mxu0 %v8616
      %v8711 = vpop.f32.mrf.mxu0
      %v8712 = vadd.f32 0.0, %v8711
      %8713 = vdwg.mxu0
      %8714 = vmatpush.msra.mxu0 0.0
      %8715 = vmatpush.msra.mxu0 0.0
      %8716 = vmatpush.msra.mxu0 0.0
      %8717 = vmatpush.msra.mxu0 0.0
      %8718 = vmatpush.msra.mxu0 0.0
      %8719 = vmatpush.msra.mxu0 0.0
      %8720 = vmatpush.msra.mxu0 0.0
      %8721 = vmatpush.msra.mxu0 0.0
      %8722 = vmatpush.msra.mxu0 0.0
      %8723 = vmatpush.msra.mxu0 0.0
      %8724 = vmatpush.msra.mxu0 0.0
      %8725 = vmatpush.msra.mxu0 0.0
      %8726 = vmatpush.msra.mxu0 0.0
      %8727 = vmatpush.msra.mxu0 0.0
      %8728 = vmatpush.msra.mxu0 0.0
      %8729 = vmatpush.msra.mxu0 %v8620
      %8730 = vmatmul.f32.gmra.mxu0 %v8613
      %v8731 = vpop.f32.mrf.mxu0
      %v8732 = vadd.f32 0.0, %v8731
      %8733 = vmatmul.f32.gmra.mxu0 %v8616
      %v8734 = vpop.f32.mrf.mxu0
      %v8735 = vadd.f32 0.0, %v8734
      %8736 = vdwg.mxu0
      %v8737 = vadd.f32 %v8596, %v8640
      %v8738 = vadd.f32 %v8597, %v8663
      %v8739 = vadd.f32 %v8598, %v8686
      %v8740 = vadd.f32 %v8599, %v8709
      %v8741 = vadd.f32 %v8600, %v8732
      %v8742 = vadd.f32 %v8601, %v8643
      %v8743 = vadd.f32 %v8602, %v8666
      %v8744 = vadd.f32 %v8603, %v8689
      %v8745 = vadd.f32 %v8604, %v8712
      %v8746 = vadd.f32 %v8605, %v8735
      %s8747 = scalar_lea.vmem %s3, 368
      %v8748 = vld [vmem:[%s8747] sm:$0xff]
      %v8749 = vld [vmem:[%s8747 + $0x8] sm:$0xff]
      %8750 = vrot.lane.b32.xlu0 %v5360, 122
      %v8751 = vpop.permute.xlu0 %8750
      %v8752 = vsel %vm5820, %v7355, %v8751
      %v8754 = vsel %vm5385, %v8748, 0
      %v8757 = vsel %vm5385, %v8749, 0
      %v8759 = vsel %vm5392, %v8752, 0
      %v8761 = vsel %vm5392, %v8751, 0
      %8763 = vmatpush.msra.mxu0 0.0
      %8764 = vmatpush.msra.mxu0 0.0
      %8765 = vmatpush.msra.mxu0 0.0
      %8766 = vmatpush.msra.mxu0 0.0
      %8767 = vmatpush.msra.mxu0 0.0
      %8768 = vmatpush.msra.mxu0 0.0
      %8769 = vmatpush.msra.mxu0 0.0
      %8770 = vmatpush.msra.mxu0 0.0
      %8771 = vmatpush.msra.mxu0 0.0
      %8772 = vmatpush.msra.mxu0 0.0
      %8773 = vmatpush.msra.mxu0 0.0
      %8774 = vmatpush.msra.mxu0 0.0
      %8775 = vmatpush.msra.mxu0 0.0
      %8776 = vmatpush.msra.mxu0 0.0
      %8777 = vmatpush.msra.mxu0 0.0
      %8778 = vmatpush.msra.mxu0 %v5835
      %8779 = vmatmul.f32.gmra.mxu0 %v8754
      %v8780 = vpop.f32.mrf.mxu0
      %v8781 = vadd.f32 0.0, %v8780
      %8782 = vmatmul.f32.gmra.mxu0 %v8757
      %v8783 = vpop.f32.mrf.mxu0
      %v8784 = vadd.f32 0.0, %v8783
      %8785 = vdwg.mxu0
      %8786 = vmatpush.msra.mxu0 0.0
      %8787 = vmatpush.msra.mxu0 0.0
      %8788 = vmatpush.msra.mxu0 0.0
      %8789 = vmatpush.msra.mxu0 0.0
      %8790 = vmatpush.msra.mxu0 0.0
      %8791 = vmatpush.msra.mxu0 0.0
      %8792 = vmatpush.msra.mxu0 0.0
      %8793 = vmatpush.msra.mxu0 0.0
      %8794 = vmatpush.msra.mxu0 0.0
      %8795 = vmatpush.msra.mxu0 0.0
      %8796 = vmatpush.msra.mxu0 0.0
      %8797 = vmatpush.msra.mxu0 0.0
      %8798 = vmatpush.msra.mxu0 0.0
      %8799 = vmatpush.msra.mxu0 0.0
      %8800 = vmatpush.msra.mxu0 0.0
      %8801 = vmatpush.msra.mxu0 %v5837
      %8802 = vmatmul.f32.gmra.mxu0 %v8754
      %v8803 = vpop.f32.mrf.mxu0
      %v8804 = vadd.f32 0.0, %v8803
      %8805 = vmatmul.f32.gmra.mxu0 %v8757
      %v8806 = vpop.f32.mrf.mxu0
      %v8807 = vadd.f32 0.0, %v8806
      %8808 = vdwg.mxu0
      %8809 = vmatpush.msra.mxu0 0.0
      %8810 = vmatpush.msra.mxu0 0.0
      %8811 = vmatpush.msra.mxu0 0.0
      %8812 = vmatpush.msra.mxu0 0.0
      %8813 = vmatpush.msra.mxu0 0.0
      %8814 = vmatpush.msra.mxu0 0.0
      %8815 = vmatpush.msra.mxu0 0.0
      %8816 = vmatpush.msra.mxu0 0.0
      %8817 = vmatpush.msra.mxu0 0.0
      %8818 = vmatpush.msra.mxu0 0.0
      %8819 = vmatpush.msra.mxu0 0.0
      %8820 = vmatpush.msra.mxu0 0.0
      %8821 = vmatpush.msra.mxu0 0.0
      %8822 = vmatpush.msra.mxu0 0.0
      %8823 = vmatpush.msra.mxu0 0.0
      %8824 = vmatpush.msra.mxu0 %v7363
      %8825 = vmatmul.f32.gmra.mxu0 %v8754
      %v8826 = vpop.f32.mrf.mxu0
      %v8827 = vadd.f32 0.0, %v8826
      %8828 = vmatmul.f32.gmra.mxu0 %v8757
      %v8829 = vpop.f32.mrf.mxu0
      %v8830 = vadd.f32 0.0, %v8829
      %8831 = vdwg.mxu0
      %8832 = vmatpush.msra.mxu0 0.0
      %8833 = vmatpush.msra.mxu0 0.0
      %8834 = vmatpush.msra.mxu0 0.0
      %8835 = vmatpush.msra.mxu0 0.0
      %8836 = vmatpush.msra.mxu0 0.0
      %8837 = vmatpush.msra.mxu0 0.0
      %8838 = vmatpush.msra.mxu0 0.0
      %8839 = vmatpush.msra.mxu0 0.0
      %8840 = vmatpush.msra.mxu0 0.0
      %8841 = vmatpush.msra.mxu0 0.0
      %8842 = vmatpush.msra.mxu0 0.0
      %8843 = vmatpush.msra.mxu0 0.0
      %8844 = vmatpush.msra.mxu0 0.0
      %8845 = vmatpush.msra.mxu0 0.0
      %8846 = vmatpush.msra.mxu0 0.0
      %8847 = vmatpush.msra.mxu0 %v8759
      %8848 = vmatmul.f32.gmra.mxu0 %v8754
      %v8849 = vpop.f32.mrf.mxu0
      %v8850 = vadd.f32 0.0, %v8849
      %8851 = vmatmul.f32.gmra.mxu0 %v8757
      %v8852 = vpop.f32.mrf.mxu0
      %v8853 = vadd.f32 0.0, %v8852
      %8854 = vdwg.mxu0
      %8855 = vmatpush.msra.mxu0 0.0
      %8856 = vmatpush.msra.mxu0 0.0
      %8857 = vmatpush.msra.mxu0 0.0
      %8858 = vmatpush.msra.mxu0 0.0
      %8859 = vmatpush.msra.mxu0 0.0
      %8860 = vmatpush.msra.mxu0 0.0
      %8861 = vmatpush.msra.mxu0 0.0
      %8862 = vmatpush.msra.mxu0 0.0
      %8863 = vmatpush.msra.mxu0 0.0
      %8864 = vmatpush.msra.mxu0 0.0
      %8865 = vmatpush.msra.mxu0 0.0
      %8866 = vmatpush.msra.mxu0 0.0
      %8867 = vmatpush.msra.mxu0 0.0
      %8868 = vmatpush.msra.mxu0 0.0
      %8869 = vmatpush.msra.mxu0 0.0
      %8870 = vmatpush.msra.mxu0 %v8761
      %8871 = vmatmul.f32.gmra.mxu0 %v8754
      %v8872 = vpop.f32.mrf.mxu0
      %v8873 = vadd.f32 0.0, %v8872
      %8874 = vmatmul.f32.gmra.mxu0 %v8757
      %v8875 = vpop.f32.mrf.mxu0
      %v8876 = vadd.f32 0.0, %v8875
      %8877 = vdwg.mxu0
      %v8878 = vadd.f32 %v8737, %v8781
      %v8879 = vadd.f32 %v8738, %v8804
      %v8880 = vadd.f32 %v8739, %v8827
      %v8881 = vadd.f32 %v8740, %v8850
      %v8882 = vadd.f32 %v8741, %v8873
      %v8883 = vadd.f32 %v8742, %v8784
      %v8884 = vadd.f32 %v8743, %v8807
      %v8885 = vadd.f32 %v8744, %v8830
      %v8886 = vadd.f32 %v8745, %v8853
      %v8887 = vadd.f32 %v8746, %v8876
      %s8888 = scalar_lea.vmem %s3, 384
      %v8889 = vld [vmem:[%s8888] sm:$0xff]
      %v8890 = vld [vmem:[%s8888 + $0x8] sm:$0xff]
      %8891 = vrot.lane.b32.xlu0 %v5360, 120
      %v8892 = vpop.permute.xlu0 %8891
      %v8893 = vsel %vm5979, %v7496, %v8892
      %v8895 = vsel %vm5385, %v8889, 0
      %v8898 = vsel %vm5385, %v8890, 0
      %v8900 = vsel %vm5392, %v8893, 0
      %v8902 = vsel %vm5392, %v8892, 0
      %8904 = vmatpush.msra.mxu0 0.0
      %8905 = vmatpush.msra.mxu0 0.0
      %8906 = vmatpush.msra.mxu0 0.0
      %8907 = vmatpush.msra.mxu0 0.0
      %8908 = vmatpush.msra.mxu0 0.0
      %8909 = vmatpush.msra.mxu0 0.0
      %8910 = vmatpush.msra.mxu0 0.0
      %8911 = vmatpush.msra.mxu0 0.0
      %8912 = vmatpush.msra.mxu0 0.0
      %8913 = vmatpush.msra.mxu0 0.0
      %8914 = vmatpush.msra.mxu0 0.0
      %8915 = vmatpush.msra.mxu0 0.0
      %8916 = vmatpush.msra.mxu0 0.0
      %8917 = vmatpush.msra.mxu0 0.0
      %8918 = vmatpush.msra.mxu0 0.0
      %8919 = vmatpush.msra.mxu0 %v5994
      %8920 = vmatmul.f32.gmra.mxu0 %v8895
      %v8921 = vpop.f32.mrf.mxu0
      %v8922 = vadd.f32 0.0, %v8921
      %8923 = vmatmul.f32.gmra.mxu0 %v8898
      %v8924 = vpop.f32.mrf.mxu0
      %v8925 = vadd.f32 0.0, %v8924
      %8926 = vdwg.mxu0
      %8927 = vmatpush.msra.mxu0 0.0
      %8928 = vmatpush.msra.mxu0 0.0
      %8929 = vmatpush.msra.mxu0 0.0
      %8930 = vmatpush.msra.mxu0 0.0
      %8931 = vmatpush.msra.mxu0 0.0
      %8932 = vmatpush.msra.mxu0 0.0
      %8933 = vmatpush.msra.mxu0 0.0
      %8934 = vmatpush.msra.mxu0 0.0
      %8935 = vmatpush.msra.mxu0 0.0
      %8936 = vmatpush.msra.mxu0 0.0
      %8937 = vmatpush.msra.mxu0 0.0
      %8938 = vmatpush.msra.mxu0 0.0
      %8939 = vmatpush.msra.mxu0 0.0
      %8940 = vmatpush.msra.mxu0 0.0
      %8941 = vmatpush.msra.mxu0 0.0
      %8942 = vmatpush.msra.mxu0 %v5996
      %8943 = vmatmul.f32.gmra.mxu0 %v8895
      %v8944 = vpop.f32.mrf.mxu0
      %v8945 = vadd.f32 0.0, %v8944
      %8946 = vmatmul.f32.gmra.mxu0 %v8898
      %v8947 = vpop.f32.mrf.mxu0
      %v8948 = vadd.f32 0.0, %v8947
      %8949 = vdwg.mxu0
      %8950 = vmatpush.msra.mxu0 0.0
      %8951 = vmatpush.msra.mxu0 0.0
      %8952 = vmatpush.msra.mxu0 0.0
      %8953 = vmatpush.msra.mxu0 0.0
      %8954 = vmatpush.msra.mxu0 0.0
      %8955 = vmatpush.msra.mxu0 0.0
      %8956 = vmatpush.msra.mxu0 0.0
      %8957 = vmatpush.msra.mxu0 0.0
      %8958 = vmatpush.msra.mxu0 0.0
      %8959 = vmatpush.msra.mxu0 0.0
      %8960 = vmatpush.msra.mxu0 0.0
      %8961 = vmatpush.msra.mxu0 0.0
      %8962 = vmatpush.msra.mxu0 0.0
      %8963 = vmatpush.msra.mxu0 0.0
      %8964 = vmatpush.msra.mxu0 0.0
      %8965 = vmatpush.msra.mxu0 %v7504
      %8966 = vmatmul.f32.gmra.mxu0 %v8895
      %v8967 = vpop.f32.mrf.mxu0
      %v8968 = vadd.f32 0.0, %v8967
      %8969 = vmatmul.f32.gmra.mxu0 %v8898
      %v8970 = vpop.f32.mrf.mxu0
      %v8971 = vadd.f32 0.0, %v8970
      %8972 = vdwg.mxu0
      %8973 = vmatpush.msra.mxu0 0.0
      %8974 = vmatpush.msra.mxu0 0.0
      %8975 = vmatpush.msra.mxu0 0.0
      %8976 = vmatpush.msra.mxu0 0.0
      %8977 = vmatpush.msra.mxu0 0.0
      %8978 = vmatpush.msra.mxu0 0.0
      %8979 = vmatpush.msra.mxu0 0.0
      %8980 = vmatpush.msra.mxu0 0.0
      %8981 = vmatpush.msra.mxu0 0.0
      %8982 = vmatpush.msra.mxu0 0.0
      %8983 = vmatpush.msra.mxu0 0.0
      %8984 = vmatpush.msra.mxu0 0.0
      %8985 = vmatpush.msra.mxu0 0.0
      %8986 = vmatpush.msra.mxu0 0.0
      %8987 = vmatpush.msra.mxu0 0.0
      %8988 = vmatpush.msra.mxu0 %v8900
      %8989 = vmatmul.f32.gmra.mxu0 %v8895
      %v8990 = vpop.f32.mrf.mxu0
      %v8991 = vadd.f32 0.0, %v8990
      %8992 = vmatmul.f32.gmra.mxu0 %v8898
      %v8993 = vpop.f32.mrf.mxu0
      %v8994 = vadd.f32 0.0, %v8993
      %8995 = vdwg.mxu0
      %8996 = vmatpush.msra.mxu0 0.0
      %8997 = vmatpush.msra.mxu0 0.0
      %8998 = vmatpush.msra.mxu0 0.0
      %8999 = vmatpush.msra.mxu0 0.0
      %9000 = vmatpush.msra.mxu0 0.0
      %9001 = vmatpush.msra.mxu0 0.0
      %9002 = vmatpush.msra.mxu0 0.0
      %9003 = vmatpush.msra.mxu0 0.0
      %9004 = vmatpush.msra.mxu0 0.0
      %9005 = vmatpush.msra.mxu0 0.0
      %9006 = vmatpush.msra.mxu0 0.0
      %9007 = vmatpush.msra.mxu0 0.0
      %9008 = vmatpush.msra.mxu0 0.0
      %9009 = vmatpush.msra.mxu0 0.0
      %9010 = vmatpush.msra.mxu0 0.0
      %9011 = vmatpush.msra.mxu0 %v8902
      %9012 = vmatmul.f32.gmra.mxu0 %v8895
      %v9013 = vpop.f32.mrf.mxu0
      %v9014 = vadd.f32 0.0, %v9013
      %9015 = vmatmul.f32.gmra.mxu0 %v8898
      %v9016 = vpop.f32.mrf.mxu0
      %v9017 = vadd.f32 0.0, %v9016
      %9018 = vdwg.mxu0
      %v9019 = vadd.f32 %v8878, %v8922
      %v9020 = vadd.f32 %v8879, %v8945
      %v9021 = vadd.f32 %v8880, %v8968
      %v9022 = vadd.f32 %v8881, %v8991
      %v9023 = vadd.f32 %v8882, %v9014
      %v9024 = vadd.f32 %v8883, %v8925
      %v9025 = vadd.f32 %v8884, %v8948
      %v9026 = vadd.f32 %v8885, %v8971
      %v9027 = vadd.f32 %v8886, %v8994
      %v9028 = vadd.f32 %v8887, %v9017
      %v9029 = vld [vmem:[%s4] sm:$0xff]
      %v9030 = vld [vmem:[%s4 + $0x8] sm:$0xff]
      %9032 = vset.pattern.permute.xlu0 0
      %9033 = vperm.xlu0 %9032, %v9029
      %v9034 = vpop.permute.xlu0 %9033
      %9037 = vset.pattern.permute.xlu0 0
      %9038 = vperm.xlu0 %9037, %v9030
      %v9039 = vpop.permute.xlu0 %9038
      %v9041 = vadd.f32 %v9019, %v9034
      %v9042 = vadd.f32 %v9020, %v9034
      %v9043 = vadd.f32 %v9021, %v9034
      %v9044 = vadd.f32 %v9022, %v9034
      %v9045 = vadd.f32 %v9023, %v9034
      %v9046 = vadd.f32 %v9024, %v9039
      %v9047 = vadd.f32 %v9025, %v9039
      %v9048 = vadd.f32 %v9026, %v9039
      %v9049 = vadd.f32 %v9027, %v9039
      %v9050 = vadd.f32 %v9028, %v9039
      %v9051 = vmax.f32 %v9041, 0.0
      %v9052 = vmax.f32 %v9042, 0.0
      %v9053 = vmax.f32 %v9043, 0.0
      %v9054 = vmax.f32 %v9044, 0.0
      %v9055 = vmax.f32 %v9045, 0.0
      %v9056 = vmax.f32 %v9046, 0.0
      %v9057 = vmax.f32 %v9047, 0.0
      %v9058 = vmax.f32 %v9048, 0.0
      %v9059 = vmax.f32 %v9049, 0.0
      %v9060 = vmax.f32 %v9050, 0.0
      %9071 = vrot.lane.b32.xlu0 %v9051, 126
      %v9072 = vpop.permute.xlu0 %9071
      %9073 = vrot.lane.b32.xlu0 %v9052, 126
      %v9074 = vpop.permute.xlu0 %9073
      %9075 = vrot.lane.b32.xlu0 %v9053, 126
      %v9076 = vpop.permute.xlu0 %9075
      %9077 = vrot.lane.b32.xlu0 %v9054, 126
      %v9078 = vpop.permute.xlu0 %9077
      %9079 = vrot.lane.b32.xlu0 %v9055, 126
      %v9080 = vpop.permute.xlu0 %9079
      %9081 = vrot.lane.b32.xlu0 %v9056, 126
      %v9082 = vpop.permute.xlu0 %9081
      %9083 = vrot.lane.b32.xlu0 %v9057, 126
      %v9084 = vpop.permute.xlu0 %9083
      %9085 = vrot.lane.b32.xlu0 %v9058, 126
      %v9086 = vpop.permute.xlu0 %9085
      %9087 = vrot.lane.b32.xlu0 %v9059, 126
      %v9088 = vpop.permute.xlu0 %9087
      %9089 = vrot.lane.b32.xlu0 %v9060, 126
      %v9090 = vpop.permute.xlu0 %9089
      %v9091 = vsel %vm631, %v9072, %v9074
      %v9092 = vsel %vm631, %v9074, %v9076
      %v9093 = vsel %vm631, %v9076, %v9078
      %v9094 = vsel %vm631, %v9078, %v9080
      %v9095 = vsel %vm631, %v9082, %v9084
      %v9096 = vsel %vm631, %v9084, %v9086
      %v9097 = vsel %vm631, %v9086, %v9088
      %v9098 = vsel %vm631, %v9088, %v9090
      %v9109 = vmax.f32 %v9051, %v9091
      %v9110 = vmax.f32 %v9052, %v9092
      %v9111 = vmax.f32 %v9053, %v9093
      %v9112 = vmax.f32 %v9054, %v9094
      %v9113 = vmax.f32 %v9055, %v9080
      %v9114 = vmax.f32 %v9056, %v9095
      %v9115 = vmax.f32 %v9057, %v9096
      %v9116 = vmax.f32 %v9058, %v9097
      %v9117 = vmax.f32 %v9059, %v9098
      %v9118 = vmax.f32 %v9060, %v9090
      %9129 = vrot.lane.b32.xlu0 %v9109, 64
      %v9130 = vpop.permute.xlu0 %9129
      %9131 = vrot.lane.b32.xlu0 %v9110, 64
      %v9132 = vpop.permute.xlu0 %9131
      %9133 = vrot.lane.b32.xlu0 %v9111, 64
      %v9134 = vpop.permute.xlu0 %9133
      %9135 = vrot.lane.b32.xlu0 %v9112, 64
      %v9136 = vpop.permute.xlu0 %9135
      %9137 = vrot.lane.b32.xlu0 %v9113, 64
      %v9138 = vpop.permute.xlu0 %9137
      %9139 = vrot.lane.b32.xlu0 %v9114, 64
      %v9140 = vpop.permute.xlu0 %9139
      %9141 = vrot.lane.b32.xlu0 %v9115, 64
      %v9142 = vpop.permute.xlu0 %9141
      %9143 = vrot.lane.b32.xlu0 %v9116, 64
      %v9144 = vpop.permute.xlu0 %9143
      %9145 = vrot.lane.b32.xlu0 %v9117, 64
      %v9146 = vpop.permute.xlu0 %9145
      %9147 = vrot.lane.b32.xlu0 %v9118, 64
      %v9148 = vpop.permute.xlu0 %9147
      %v9149 = vsel %vm2262, %v9130, %v9132
      %v9150 = vsel %vm2262, %v9132, %v9134
      %v9151 = vsel %vm2262, %v9134, %v9136
      %v9152 = vsel %vm2262, %v9136, %v9138
      %v9153 = vsel %vm2262, %v9140, %v9142
      %v9154 = vsel %vm2262, %v9142, %v9144
      %v9155 = vsel %vm2262, %v9144, %v9146
      %v9156 = vsel %vm2262, %v9146, %v9148
      %v9167 = vmax.f32 %v9109, %v9149
      %v9168 = vmax.f32 %v9110, %v9150
      %v9169 = vmax.f32 %v9111, %v9151
      %v9170 = vmax.f32 %v9112, %v9152
      %v9171 = vmax.f32 %v9113, %v9138
      %v9172 = vmax.f32 %v9114, %v9153
      %v9173 = vmax.f32 %v9115, %v9154
      %v9174 = vmax.f32 %v9116, %v9155
      %v9175 = vmax.f32 %v9117, %v9156
      %v9176 = vmax.f32 %v9118, %v9148
      %v9177 = vlaneseq
      %v9178 = vshrl.u32 %v9177, 7
      %v9179 = vadd.s32 %v9178, 8
      %v9180 = vadd.s32 %v9178, 16
      %v9181 = vlaneseq
      %v9182 = vand.u32 %v9181, 127
      %v9183 = vmul.u32 %v9182, 4
      %vm9184 = vcmp.eq.s32.totalorder %v9178, %v9183
      %vm9185 = vcmp.eq.s32.totalorder %v9179, %v9183
      %vm9186 = vcmp.eq.s32.totalorder %v9180, %v9183
      %v9187 = vsel %vm9184, 1, 0
      %v9188 = vsel %vm9185, 1, 0
      %v9189 = vsel %vm9186, 1, 0
      %v9190 = vcvt.s32.f32 %v9187
      %v9191 = vcvt.s32.f32 %v9188
      %v9192 = vcvt.s32.f32 %v9189
      %v9193 = vsub.s32 %v9182, 5
      %v9194 = vmul.u32 %v9193, 4
      %vm9195 = vcmp.eq.s32.totalorder %v9178, %v9194
      %vm9196 = vcmp.eq.s32.totalorder %v9179, %v9194
      %vm9197 = vcmp.eq.s32.totalorder %v9180, %v9194
      %v9198 = vsel %vm9195, 1, 0
      %v9199 = vsel %vm9196, 1, 0
      %v9200 = vsel %vm9197, 1, 0
      %v9201 = vcvt.s32.f32 %v9198
      %v9202 = vcvt.s32.f32 %v9199
      %v9203 = vcvt.s32.f32 %v9200
      %vm9204 = vcmask 138240
      %v9206 = vsel %vm9204, %v9168, 0
      %v9209 = vsel %vm9204, %v9173, 0
      %vm9211 = vcmask 1040384
      %v9213 = vsel %vm9211, %v9203, 0
      %9215 = vmatpush.msra.mxu0 0.0
      %9216 = vmatpush.msra.mxu0 0.0
      %9217 = vmatpush.msra.mxu0 0.0
      %9218 = vmatpush.msra.mxu0 0.0
      %9219 = vmatpush.msra.mxu0 0.0
      %9220 = vmatpush.msra.mxu0 0.0
      %9221 = vmatpush.msra.mxu0 0.0
      %9222 = vmatpush.msra.mxu0 0.0
      %9223 = vmatpush.msra.mxu0 0.0
      %9224 = vmatpush.msra.mxu0 0.0
      %9225 = vmatpush.msra.mxu0 0.0
      %9226 = vmatpush.msra.mxu0 0.0
      %9227 = vmatpush.msra.mxu0 0.0
      %9228 = vmatpush.msra.mxu0 %v9213
      %9229 = vmatpush.msra.mxu0 %v9202
      %9230 = vmatpush.msra.mxu0 %v9201
      %9231 = vmatmul.f32.gmra.mxu0 %v9206
      %v9232 = vpop.f32.mrf.mxu0
      %v9233 = vadd.f32 0.0, %v9232
      %9234 = vmatmul.f32.gmra.mxu0 %v9209
      %v9235 = vpop.f32.mrf.mxu0
      %v9236 = vadd.f32 0.0, %v9235
      %9237 = vdwg.mxu0
      %v9239 = vsel %vm9204, %v9167, 0
      %v9242 = vsel %vm9204, %v9172, 0
      %v9245 = vsel %vm9211, %v9192, 0
      %9247 = vmatpush.msra.mxu0 0.0
      %9248 = vmatpush.msra.mxu0 0.0
      %9249 = vmatpush.msra.mxu0 0.0
      %9250 = vmatpush.msra.mxu0 0.0
      %9251 = vmatpush.msra.mxu0 0.0
      %9252 = vmatpush.msra.mxu0 0.0
      %9253 = vmatpush.msra.mxu0 0.0
      %9254 = vmatpush.msra.mxu0 0.0
      %9255 = vmatpush.msra.mxu0 0.0
      %9256 = vmatpush.msra.mxu0 0.0
      %9257 = vmatpush.msra.mxu0 0.0
      %9258 = vmatpush.msra.mxu0 0.0
      %9259 = vmatpush.msra.mxu0 0.0
      %9260 = vmatpush.msra.mxu0 %v9245
      %9261 = vmatpush.msra.mxu0 %v9191
      %9262 = vmatpush.msra.mxu0 %v9190
      %9263 = vmatmul.f32.gmra.mxu0 %v9239
      %v9264 = vpop.f32.mrf.mxu0
      %v9265 = vadd.f32 %v9233, %v9264
      %9266 = vmatmul.f32.gmra.mxu0 %v9242
      %v9267 = vpop.f32.mrf.mxu0
      %v9268 = vadd.f32 %v9236, %v9267
      %9269 = vdwg.mxu0
      %v9270 = vsub.s32 %v9182, 10
      %v9271 = vmul.u32 %v9270, 4
      %vm9272 = vcmp.eq.s32.totalorder %v9178, %v9271
      %vm9273 = vcmp.eq.s32.totalorder %v9179, %v9271
      %vm9274 = vcmp.eq.s32.totalorder %v9180, %v9271
      %v9275 = vsel %vm9272, 1, 0
      %v9276 = vsel %vm9273, 1, 0
      %v9277 = vsel %vm9274, 1, 0
      %v9278 = vcvt.s32.f32 %v9275
      %v9279 = vcvt.s32.f32 %v9276
      %v9280 = vcvt.s32.f32 %v9277
      %v9282 = vsel %vm9204, %v9169, 0
      %v9285 = vsel %vm9204, %v9174, 0
      %v9288 = vsel %vm9211, %v9280, 0
      %9290 = vmatpush.msra.mxu0 0.0
      %9291 = vmatpush.msra.mxu0 0.0
      %9292 = vmatpush.msra.mxu0 0.0
      %9293 = vmatpush.msra.mxu0 0.0
      %9294 = vmatpush.msra.mxu0 0.0
      %9295 = vmatpush.msra.mxu0 0.0
      %9296 = vmatpush.msra.mxu0 0.0
      %9297 = vmatpush.msra.mxu0 0.0
      %9298 = vmatpush.msra.mxu0 0.0
      %9299 = vmatpush.msra.mxu0 0.0
      %9300 = vmatpush.msra.mxu0 0.0
      %9301 = vmatpush.msra.mxu0 0.0
      %9302 = vmatpush.msra.mxu0 0.0
      %9303 = vmatpush.msra.mxu0 %v9288
      %9304 = vmatpush.msra.mxu0 %v9279
      %9305 = vmatpush.msra.mxu0 %v9278
      %9306 = vmatmul.f32.gmra.mxu0 %v9282
      %v9307 = vpop.f32.mrf.mxu0
      %v9308 = vadd.f32 0.0, %v9307
      %9309 = vmatmul.f32.gmra.mxu0 %v9285
      %v9310 = vpop.f32.mrf.mxu0
      %v9311 = vadd.f32 0.0, %v9310
      %9312 = vdwg.mxu0
      %v9313 = vadd.f32 %v9265, %v9308
      %v9314 = vadd.f32 %v9268, %v9311
      %v9315 = vsub.s32 %v9182, 15
      %v9316 = vmul.u32 %v9315, 4
      %vm9317 = vcmp.eq.s32.totalorder %v9178, %v9316
      %vm9318 = vcmp.eq.s32.totalorder %v9179, %v9316
      %vm9319 = vcmp.eq.s32.totalorder %v9180, %v9316
      %v9320 = vsel %vm9317, 1, 0
      %v9321 = vsel %vm9318, 1, 0
      %v9322 = vsel %vm9319, 1, 0
      %v9323 = vcvt.s32.f32 %v9320
      %v9324 = vcvt.s32.f32 %v9321
      %v9325 = vcvt.s32.f32 %v9322
      %v9327 = vsel %vm9204, %v9170, 0
      %v9330 = vsel %vm9204, %v9175, 0
      %v9333 = vsel %vm9211, %v9325, 0
      %9335 = vmatpush.msra.mxu0 0.0
      %9336 = vmatpush.msra.mxu0 0.0
      %9337 = vmatpush.msra.mxu0 0.0
      %9338 = vmatpush.msra.mxu0 0.0
      %9339 = vmatpush.msra.mxu0 0.0
      %9340 = vmatpush.msra.mxu0 0.0
      %9341 = vmatpush.msra.mxu0 0.0
      %9342 = vmatpush.msra.mxu0 0.0
      %9343 = vmatpush.msra.mxu0 0.0
      %9344 = vmatpush.msra.mxu0 0.0
      %9345 = vmatpush.msra.mxu0 0.0
      %9346 = vmatpush.msra.mxu0 0.0
      %9347 = vmatpush.msra.mxu0 0.0
      %9348 = vmatpush.msra.mxu0 %v9333
      %9349 = vmatpush.msra.mxu0 %v9324
      %9350 = vmatpush.msra.mxu0 %v9323
      %9351 = vmatmul.f32.gmra.mxu0 %v9327
      %v9352 = vpop.f32.mrf.mxu0
      %v9353 = vadd.f32 0.0, %v9352
      %9354 = vmatmul.f32.gmra.mxu0 %v9330
      %v9355 = vpop.f32.mrf.mxu0
      %v9356 = vadd.f32 0.0, %v9355
      %9357 = vdwg.mxu0
      %v9358 = vadd.f32 %v9313, %v9353
      %v9359 = vadd.f32 %v9314, %v9356
      %v9360 = vsub.s32 %v9182, 20
      %v9361 = vmul.u32 %v9360, 4
      %vm9362 = vcmp.eq.s32.totalorder %v9178, %v9361
      %vm9363 = vcmp.eq.s32.totalorder %v9179, %v9361
      %vm9364 = vcmp.eq.s32.totalorder %v9180, %v9361
      %v9365 = vsel %vm9362, 1, 0
      %v9366 = vsel %vm9363, 1, 0
      %v9367 = vsel %vm9364, 1, 0
      %v9368 = vcvt.s32.f32 %v9365
      %v9369 = vcvt.s32.f32 %v9366
      %v9370 = vcvt.s32.f32 %v9367
      %v9372 = vsel %vm9204, %v9171, 0
      %v9375 = vsel %vm9204, %v9176, 0
      %v9378 = vsel %vm9211, %v9370, 0
      %9380 = vmatpush.msra.mxu0 0.0
      %9381 = vmatpush.msra.mxu0 0.0
      %9382 = vmatpush.msra.mxu0 0.0
      %9383 = vmatpush.msra.mxu0 0.0
      %9384 = vmatpush.msra.mxu0 0.0
      %9385 = vmatpush.msra.mxu0 0.0
      %9386 = vmatpush.msra.mxu0 0.0
      %9387 = vmatpush.msra.mxu0 0.0
      %9388 = vmatpush.msra.mxu0 0.0
      %9389 = vmatpush.msra.mxu0 0.0
      %9390 = vmatpush.msra.mxu0 0.0
      %9391 = vmatpush.msra.mxu0 0.0
      %9392 = vmatpush.msra.mxu0 0.0
      %9393 = vmatpush.msra.mxu0 %v9378
      %9394 = vmatpush.msra.mxu0 %v9369
      %9395 = vmatpush.msra.mxu0 %v9368
      %9396 = vmatmul.f32.gmra.mxu0 %v9372
      %v9397 = vpop.f32.mrf.mxu0
      %v9398 = vadd.f32 0.0, %v9397
      %9399 = vmatmul.f32.gmra.mxu0 %v9375
      %v9400 = vpop.f32.mrf.mxu0
      %v9401 = vadd.f32 0.0, %v9400
      %9402 = vdwg.mxu0
      %v9403 = vadd.f32 %v9358, %v9398
      %v9404 = vadd.f32 %v9359, %v9401
      %vm9405 = vcmask 203776
      %9406 = vst.msk [vmem:[%s224] sm:$0xff] %vm9405, %v9403
      %9407 = vst.msk [vmem:[%s224 + $0x8] sm:$0xff] %vm9405, %v9404
      %p9408 = scmp.lt.s32.totalorder %s16, 1
      %s9409 = scalar_select %p9408, %s16, 1
      %s9410 = smul.addr %s9409, 2
      %s9411 = smul.addr %s9410, 8
      %s9412 = scalar_lea.vmem %s5, %s9411
      // Predicated region
      $region41: #{_lenet_forward_impl.1} parent=39 // pred_check
        %p9413 = pneg %p144
      $region42: #{_lenet_forward_impl.1} parent=39 // pred_check_branch
        %9415 = sbr.rel (%p9413) target = $region44
      $region43: #{_lenet_forward_impl.1} parent=39 // pred_region
        _
      $region44: #{_lenet_forward_impl.1} parent=39 // pred_fallthru
        _
    $region40: #{_lenet_forward_impl.1} parent=5 // pred_fallthru
      _
    %p9416 = scmp.le.s32.totalorder 2, %s11
    // Predicated region
    $region45: #{_lenet_forward_impl.1} parent=5 // pred_check
      %p9417 = pneg %p9416
    $region46: #{_lenet_forward_impl.1} parent=5 // pred_check_branch
      %9419 = sbr.rel (%p9417) target = $region48
    $region47: #{_lenet_forward_impl.1} parent=5 // pred_region
      %s9420 = ssub.s32 %s11, 2
      // Predicated region
      $region49: #{_lenet_forward_impl.1} parent=47 // pred_check
        %p9421 = pneg %p150
      $region50: #{_lenet_forward_impl.1} parent=47 // pred_check_branch
        %9423 = sbr.rel (%p9421) target = $region52
      $region51: #{_lenet_forward_impl.1} parent=47 // pred_region
        %p9424 = scmp.lt.s32.totalorder %s17, 1
        %s9425 = scalar_select %p9424, %s17, 1
        %s9426 = smul.addr %s9425, 2
        %s9427 = smul.addr %s9426, 8
        %s9428 = scalar_lea.vmem %s5, %s9427
      $region52: #{_lenet_forward_impl.1} parent=47 // pred_fallthru
        _
    $region48: #{_lenet_forward_impl.1} parent=5 // pred_fallthru
      _
  $region6: #{_lenet_forward_impl.1} parent=0 // loop_footer
    %s15 = sadd.s32 1, %s11
  $region7: #{_lenet_forward_impl.1} parent=0 // loop_footer_branch
    %10 = sbr.rel target = $region3
  $region8: #{_lenet_forward_impl.1} parent=0 // loop_exit
    _

</llo_original>
